<compile_context>
chip_gen: v6e
topology: v6e:2x2x1
jax: 0.10.0
libtpu: 0.0.40
codegen_flags: <defaults>
</compile_context>

<pallas_src>
import functools

import jax
import jax.numpy as jnp
from jax import lax
from jax.experimental import pallas as pl
from jax.experimental.pallas import tpu as pltpu

LANE = 128


def _enti_kernel(s_chunk, n_chunks, unroll, compute_dtype, exact,
                 bert_ref, mask_t_ref, size_ref,
                 w_pool_ref, w_size_ref, w_cls_ref, b_ref,
                 out_ref, pool_ref):
    # bert_ref   : (Bblk, S, H)   f32
    # mask_t_ref : (Bblk, S, E)   f32   (mask transposed: S on the sublane axis)
    # size_ref   : (Bblk, E, Dp)  f32
    # w_pool_ref : (H, Lp)   w_size_ref : (Dp, Lp)   w_cls_ref : (H, Lp)
    # b_ref      : (1, Lp)   (-inf in padded label columns)
    # out_ref    : (Bblk, E, Lp)
    # pool_ref   : VMEM scratch (Bblk*E, H) f32
    Bblk, S, H = bert_ref.shape
    E = mask_t_ref.shape[2]
    Lp = out_ref.shape[2]
    Dp = size_ref.shape[2]

    neg_big = jnp.asarray(-1e10, compute_dtype)
    zero = jnp.asarray(0.0, compute_dtype)

    # ---- masked max-pool over the sequence, one batch element at a time -----
    # Mask is passed transposed ([S, E]) so the reduction runs over the leading
    # (sublane) axis: pure VPU max over 2-D slices, no cross-lane reduce.
    # TODO(synk): verify via bundle dump that the [Sc, E] lane->sublane relayout
    # implied by `neg[:, :, None]` lands on the XLU and not a VMEM round trip;
    # if it round-trips, add an explicit transpose of the mask tile.
    for b in range(Bblk):                               # static; Bblk is small
        def chunk_max(start, _b=b):
            bert_c = bert_ref[_b, pl.ds(start, s_chunk), :].astype(compute_dtype)  # [Sc,H]
            mask_c = mask_t_ref[_b, pl.ds(start, s_chunk), :]                      # [Sc,E]
            neg = jnp.where(mask_c == 0.0, neg_big, zero)                          # [Sc,E]
            return jnp.max(neg[:, :, None] + bert_c[:, None, :], axis=0)           # [E,H]

        if n_chunks == 1:
            pool_b = chunk_max(0)
        else:
            def body(c, acc):
                start = pl.multiple_of(c * s_chunk, s_chunk)
                return jnp.maximum(acc, chunk_max(start))
            pool_b = lax.fori_loop(0, n_chunks, body,
                                   jnp.full((E, H), -jnp.inf, compute_dtype),
                                   unroll=unroll)
        pool_ref[b * E:(b + 1) * E, :] = pool_b.astype(jnp.float32)

    # ---- one big matmul over all Bblk*E rows (fills the MXU M dimension) ----
    pool = pool_ref[...]                                        # [Bblk*E, H]
    size_flat = size_ref[...].reshape(Bblk * E, Dp)             # [Bblk*E, Dp]
    logits = (
        jnp.dot(pool, w_pool_ref[...], preferred_element_type=jnp.float32)
        + jnp.dot(size_flat, w_size_ref[...], preferred_element_type=jnp.float32)
        + b_ref[...]
    )                                                           # [Bblk*E, Lp]

    # CLS term: one [Bblk, H] x [H, Lp] matmul, broadcast-added over E spans.
    cls_rows = bert_ref[:, 0:1, :].reshape(Bblk, H)             # [Bblk, H]
    cls_logits = jnp.dot(cls_rows, w_cls_ref[...],
                         preferred_element_type=jnp.float32)    # [Bblk, Lp]

    logits = logits.reshape(Bblk, E, Lp) + cls_logits[:, None, :]

    # softmax over the padded label axis; padded columns are -inf -> exp == 0,
    # so the result restricted to the real L columns equals the exact softmax.
    m_max = jnp.max(logits, axis=-1, keepdims=True)
    ex = jnp.exp(logits - m_max)
    denom = jnp.sum(ex, axis=-1, keepdims=True)
    if exact:
        out_ref[...] = ex / denom
    else:
        out_ref[...] = ex * pl.reciprocal(denom, approx=True)


def _pick_s_chunk(S, E, H, itemsize, temp_budget_bytes):
    """Largest divisor of S whose [Sc, E, H] broadcast temp fits the budget."""
    cap = max(1, temp_budget_bytes // (E * H * itemsize))
    if S <= cap:
        return S, 1
    for d in range(min(S, cap), 0, -1):
        if S % d == 0:
            return d, S // d
    return 1, S


def _pick_bblk(B, S, H, E, Dp, Lp, block_budget_bytes):
    """Batch block size: target 256 MXU rows, stay within the VMEM budget."""
    # double-buffered f32 per-batch block bytes (bert + mask + size + out)
    per_b = 2 * 4 * (S * H + S * E + E * Dp + E * Lp)
    target_rows = 256                    # fills v6e/v7x MXU M; 128-multiple for v5e
    bblk = max(1, min(B, -(-target_rows // E)))
    while bblk > 1 and bblk * per_b > block_budget_bytes:
        bblk -= 1
    while B % bblk:
        bblk -= 1
    # v7x: keep >= 2 grid steps (both TensorCores busy) when it doesn't starve MXU rows
    if bblk == B and B > 1:
        half = bblk // 2
        while half > 1 and B % half:
            half -= 1
        if half >= 1 and B % half == 0 and half * E >= 128:
            bblk = half
    return bblk


def enti_bert_softmax_forward(bert_output, enti_mask, size_embeddings,
                              w_fnn, b_fnn, *,
                              pool_dtype=jnp.float32, exact_softmax=True):
    """Inference path: returns softmax(logits) with shape [B, E, L]."""
    B, S, H = bert_output.shape
    _, E, _ = enti_mask.shape
    D_sz = size_embeddings.shape[-1]
    L = b_fnn.shape[-1]

    Lp = ((L + LANE - 1) // LANE) * LANE          # lane-dense label dim
    Dp = ((D_sz + LANE - 1) // LANE) * LANE       # aligned K dim for size matmul

    # Split the (2H + D_sz, L) weight into its concat components:
    # entity_rep = [pool (H), size_emb (D_sz), cls (H)]
    w_pool = w_fnn[:H, :]
    w_size = w_fnn[H:H + D_sz, :]
    w_cls = w_fnn[H + D_sz:, :]

    # Zero-pad weight columns / K rows (contributes exactly 0); pad bias with
    # -inf so padded logit columns vanish in the softmax.
    w_pool_p = jnp.pad(w_pool, ((0, 0), (0, Lp - L)))
    w_cls_p = jnp.pad(w_cls, ((0, 0), (0, Lp - L)))
    w_size_p = jnp.pad(w_size, ((0, Dp - D_sz), (0, Lp - L)))
    b_p = jnp.concatenate(
        [b_fnn, jnp.full((Lp - L,), -jnp.inf, b_fnn.dtype)]).reshape(1, Lp)
    size_p = jnp.pad(size_embeddings, ((0, 0), (0, 0), (0, Dp - D_sz)))

    # Transpose mask so the sequence axis is the sublane axis inside the kernel.
    mask_t = jnp.transpose(enti_mask, (0, 2, 1))  # [B, S, E]

    # Block the batch axis so one grid step feeds Bblk*E rows to the MXU.
    # Budgets sized for v7x (64 MiB physical VMEM, 48 MiB limit requested);
    # v5e/v6e have 128 MiB so they are comfortably within limits as well.
    bblk = _pick_bblk(B, S, H, E, Dp, Lp, block_budget_bytes=28 << 20)
    itemsize = jnp.dtype(pool_dtype).itemsize
    s_chunk, n_chunks = _pick_s_chunk(S, E, H, itemsize, temp_budget_bytes=8 << 20)
    unroll = max(1, min(4, n_chunks))

    kernel = functools.partial(_enti_kernel, s_chunk, n_chunks, unroll,
                               pool_dtype, exact_softmax)

    out_p = pl.pallas_call(
        kernel,
        out_shape=jax.ShapeDtypeStruct((B, E, Lp), jnp.float32),
        grid_spec=pltpu.PrefetchScalarGridSpec(
            num_scalar_prefetch=0,
            grid=(B // bblk,),
            in_specs=[
                pl.BlockSpec((bblk, S, H), lambda g: (g, 0, 0)),
                pl.BlockSpec((bblk, S, E), lambda g: (g, 0, 0)),
                pl.BlockSpec((bblk, E, Dp), lambda g: (g, 0, 0)),
                # TODO(synk): constant-index weights could be single-buffered
                # (pipeline_mode=pl.Buffered(1)) to save a little VMEM on v7x.
                pl.BlockSpec((H, Lp), lambda g: (0, 0)),
                pl.BlockSpec((Dp, Lp), lambda g: (0, 0)),
                pl.BlockSpec((H, Lp), lambda g: (0, 0)),
                pl.BlockSpec((1, Lp), lambda g: (0, 0)),
            ],
            out_specs=pl.BlockSpec((bblk, E, Lp), lambda g: (g, 0, 0)),
            scratch_shapes=[pltpu.VMEM((bblk * E, H), jnp.float32)],
        ),
        compiler_params=pltpu.CompilerParams(
            dimension_semantics=("parallel",),
            vmem_limit_bytes=48 * 1024 * 1024,
        ),
    )(bert_output, mask_t, size_p, w_pool_p, w_size_p, w_cls_p, b_p)

    return out_p[:, :, :L]


def _reference(bert_output, enti_mask, size_embeddings, w_fnn, b_fnn):
    """Pure-JAX reference mirroring the PyTorch enti_consert inference path."""
    B, S, H = bert_output.shape
    E = enti_mask.shape[1]
    m = (enti_mask[..., None] == 0.0).astype(jnp.float32) * -1e10       # [B,E,S,1]
    spans = m + bert_output[:, None, :, :]                               # [B,E,S,H]
    pool = jnp.max(spans, axis=2)                                        # [B,E,H]
    cls = jnp.broadcast_to(bert_output[:, 0][:, None, :], (B, E, H))     # [B,E,H]
    rep = jnp.concatenate([pool, size_embeddings, cls], axis=2)          # [B,E,2H+100]
    logits = rep @ w_fnn + b_fnn                                         # [B,E,L]
    return jax.nn.softmax(logits, axis=2)


if __name__ == "__main__":
    # Small shapes consistent with the module.
    B, S, H = 2, 256, 32         # batch, seq_len, hidden_size
    E = 8                        # number of entity spans
    D_SZ = 100                   # size-embedding dim (Embedding(30, 100))
    L = 5                        # num_labels

    key = jax.random.PRNGKey(0)
    k_bert, k_mask, k_size, k_emb, k_w, k_b = jax.random.split(key, 6)

    # Synthetic BERT encoder output
    bert_output = jax.random.normal(k_bert, (B, S, H), dtype=jnp.float32)

    # Entity span masks: 0/1 floats, guarantee at least one active position per span
    enti_mask = (jax.random.uniform(k_mask, (B, E, S)) > 0.5).astype(jnp.float32)
    enti_mask = enti_mask.at[:, :, 0].set(1.0)

    # Entity sizes and their embedding lookup (glue in plain JAX)
    enti_size = jax.random.randint(k_size, (B, E), 0, 30)
    size_table = jax.random.normal(k_emb, (30, D_SZ), dtype=jnp.float32) * 0.02
    size_embeddings = size_table[enti_size]                              # [B, E, 100]

    # enti_FNN: Linear(2*H + 100, num_labels) — deterministic init
    w_fnn = jax.random.normal(k_w, (2 * H + D_SZ, L), dtype=jnp.float32) * 0.05
    b_fnn = jax.random.normal(k_b, (L,), dtype=jnp.float32) * 0.01

    # crf_mask (passthrough in the torch output tuple)
    crf_mask = jnp.ones((B, E), dtype=jnp.float32)

    ref = _reference(bert_output, enti_mask, size_embeddings, w_fnn, b_fnn)

    # Exact f32 path (default): matches the torch reference to 1e-5.
    out = enti_bert_softmax_forward(bert_output, enti_mask, size_embeddings,
                                    w_fnn, b_fnn)
    out = jax.block_until_ready(out)
    assert out.shape == (B, E, L)
    assert jnp.allclose(out, ref, atol=1e-5, rtol=1e-5), "mismatch vs reference (f32)"

    # Fast path for v6e/v7x: bf16 masked max + approx softmax reciprocal
    # (smoke test only; trades the 1e-5 parity for VPU/HBM throughput).
    out_fast = enti_bert_softmax_forward(bert_output, enti_mask, size_embeddings,
                                         w_fnn, b_fnn,
                                         pool_dtype=jnp.bfloat16,
                                         exact_softmax=False)
    out_fast = jax.block_until_ready(out_fast)
    assert out_fast.shape == (B, E, L)
    assert jnp.allclose(out_fast, ref, atol=1e-2), "mismatch vs reference (bf16 fast path)"

    # Output tuple mirrors the torch module: (softmax_result, crf_mask)
    _ = (out, crf_mask)
    print("KERNEL_OK")
</pallas_src>

<mosaic_0001>
module attributes {stable_mosaic.version = 11 : i64} {
  func.func @_enti_kernel(%arg0: i32, %arg1: memref<2x256x32xf32, #tpu.memory_space<vmem>>, %arg2: memref<2x256x8xf32, #tpu.memory_space<vmem>>, %arg3: memref<2x8x128xf32, #tpu.memory_space<vmem>>, %arg4: memref<32x128xf32, #tpu.memory_space<vmem>>, %arg5: memref<128x128xf32, #tpu.memory_space<vmem>>, %arg6: memref<32x128xf32, #tpu.memory_space<vmem>>, %arg7: memref<1x128xf32, #tpu.memory_space<vmem>>, %arg8: memref<2x8x128xf32, #tpu.memory_space<vmem>>, %arg9: memref<16x32xf32, #tpu.memory_space<vmem>>) attributes {dimension_semantics = [#tpu.dimension_semantics<parallel>], iteration_bounds = array<i64: 1>, scalar_prefetch = 0 : i64, scratch_operands = 1 : i64, tpu.core_type = #tpu.core_type<tc>, window_params = [{transform_indices = @transform_0, window_bounds = array<i64: 2, 256, 32>}, {transform_indices = @transform_1, window_bounds = array<i64: 2, 256, 8>}, {transform_indices = @transform_2, window_bounds = array<i64: 2, 8, 128>}, {pipeline_mode = #tpu.pipeline_mode<synchronous>, transform_indices = @transform_3, window_bounds = array<i64: 32, 128>}, {pipeline_mode = #tpu.pipeline_mode<synchronous>, transform_indices = @transform_4, window_bounds = array<i64: 128, 128>}, {pipeline_mode = #tpu.pipeline_mode<synchronous>, transform_indices = @transform_5, window_bounds = array<i64: 32, 128>}, {pipeline_mode = #tpu.pipeline_mode<synchronous>, transform_indices = @transform_6, window_bounds = array<i64: 1, 128>}, {transform_indices = @transform_7, window_bounds = array<i64: 2, 8, 128>}]} {
    %c0 = arith.constant 0 : index
    %c0_0 = arith.constant 0 : index
    %c0_1 = arith.constant 0 : index
    %0 = vector.load %arg1[%c0, %c0_0, %c0_1] : memref<2x256x32xf32, #tpu.memory_space<vmem>>, vector<1x256x32xf32>
    %1 = vector.shape_cast %0 : vector<1x256x32xf32> to vector<256x32xf32>
    %c0_2 = arith.constant 0 : index
    %c0_3 = arith.constant 0 : index
    %c0_4 = arith.constant 0 : index
    %2 = vector.load %arg2[%c0_2, %c0_3, %c0_4] : memref<2x256x8xf32, #tpu.memory_space<vmem>>, vector<1x256x8xf32>
    %3 = vector.shape_cast %2 : vector<1x256x8xf32> to vector<256x8xf32>
    %cst = arith.constant 0.000000e+00 : f32
    %4 = vector.broadcast %cst : f32 to vector<256x8xf32>
    %5 = arith.cmpf oeq, %3, %4 : vector<256x8xf32>
    %cst_5 = arith.constant -1.000000e+10 : f32
    %cst_6 = arith.constant 0.000000e+00 : f32
    %6 = vector.broadcast %cst_5 : f32 to vector<256x8xf32>
    %7 = vector.broadcast %cst_6 : f32 to vector<256x8xf32>
    %8 = arith.select %5, %6, %7 : vector<256x8xi1>, vector<256x8xf32>
    %9 = vector.shape_cast %8 : vector<256x8xf32> to vector<256x8x1xf32>
    %10 = vector.shape_cast %1 : vector<256x32xf32> to vector<256x1x32xf32>
    %11 = vector.broadcast %9 : vector<256x8x1xf32> to vector<256x8x32xf32>
    %12 = vector.broadcast %10 : vector<256x1x32xf32> to vector<256x8x32xf32>
    %13 = arith.addf %11, %12 : vector<256x8x32xf32>
    %cst_7 = arith.constant dense<0xFF800000> : vector<8x32xf32>
    %14 = vector.multi_reduction <maximumf>, %13, %cst_7 [0] : vector<256x8x32xf32> to vector<8x32xf32>
    %c0_8 = arith.constant 0 : index
    %c0_9 = arith.constant 0 : index
    %15 = vector.load %arg9[%c0_8, %c0_9] : memref<16x32xf32, #tpu.memory_space<vmem>>, vector<8x32xf32>
    tpu.vector_store %arg9[%c0_8, %c0_9], %14 {strides = array<i32>} : memref<16x32xf32, #tpu.memory_space<vmem>>, vector<8x32xf32>,
    %c1 = arith.constant 1 : index
    %c0_10 = arith.constant 0 : index
    %c0_11 = arith.constant 0 : index
    %16 = vector.load %arg1[%c1, %c0_10, %c0_11] : memref<2x256x32xf32, #tpu.memory_space<vmem>>, vector<1x256x32xf32>
    %17 = vector.shape_cast %16 : vector<1x256x32xf32> to vector<256x32xf32>
    %c1_12 = arith.constant 1 : index
    %c0_13 = arith.constant 0 : index
    %c0_14 = arith.constant 0 : index
    %18 = vector.load %arg2[%c1_12, %c0_13, %c0_14] : memref<2x256x8xf32, #tpu.memory_space<vmem>>, vector<1x256x8xf32>
    %19 = vector.shape_cast %18 : vector<1x256x8xf32> to vector<256x8xf32>
    %cst_15 = arith.constant 0.000000e+00 : f32
    %20 = vector.broadcast %cst_15 : f32 to vector<256x8xf32>
    %21 = arith.cmpf oeq, %19, %20 : vector<256x8xf32>
    %cst_16 = arith.constant -1.000000e+10 : f32
    %cst_17 = arith.constant 0.000000e+00 : f32
    %22 = vector.broadcast %cst_16 : f32 to vector<256x8xf32>
    %23 = vector.broadcast %cst_17 : f32 to vector<256x8xf32>
    %24 = arith.select %21, %22, %23 : vector<256x8xi1>, vector<256x8xf32>
    %25 = vector.shape_cast %24 : vector<256x8xf32> to vector<256x8x1xf32>
    %26 = vector.shape_cast %17 : vector<256x32xf32> to vector<256x1x32xf32>
    %27 = vector.broadcast %25 : vector<256x8x1xf32> to vector<256x8x32xf32>
    %28 = vector.broadcast %26 : vector<256x1x32xf32> to vector<256x8x32xf32>
    %29 = arith.addf %27, %28 : vector<256x8x32xf32>
    %cst_18 = arith.constant dense<0xFF800000> : vector<8x32xf32>
    %30 = vector.multi_reduction <maximumf>, %29, %cst_18 [0] : vector<256x8x32xf32> to vector<8x32xf32>
    %c8 = arith.constant 8 : index
    %c0_19 = arith.constant 0 : index
    %31 = vector.load %arg9[%c8, %c0_19] : memref<16x32xf32, #tpu.memory_space<vmem>>, vector<8x32xf32>
    tpu.vector_store %arg9[%c8, %c0_19], %30 {strides = array<i32>} : memref<16x32xf32, #tpu.memory_space<vmem>>, vector<8x32xf32>,
    %c0_20 = arith.constant 0 : index
    %c0_21 = arith.constant 0 : index
    %32 = vector.load %arg9[%c0_20, %c0_21] : memref<16x32xf32, #tpu.memory_space<vmem>>, vector<16x32xf32>
    %c0_22 = arith.constant 0 : index
    %c0_23 = arith.constant 0 : index
    %c0_24 = arith.constant 0 : index
    %33 = vector.load %arg3[%c0_22, %c0_23, %c0_24] : memref<2x8x128xf32, #tpu.memory_space<vmem>>, vector<2x8x128xf32>
    %34 = vector.shape_cast %33 : vector<2x8x128xf32> to vector<16x128xf32>
    %c0_25 = arith.constant 0 : index
    %c0_26 = arith.constant 0 : index
    %35 = vector.load %arg4[%c0_25, %c0_26] : memref<32x128xf32, #tpu.memory_space<vmem>>, vector<32x128xf32>
    %cst_27 = arith.constant dense<0.000000e+00> : vector<16x128xf32>
    %36 = tpu.matmul %32, %35, %cst_27 {dimension_numbers = #tpu.dot_dimension_numbers<[1], [0], [0], [1], [0, 0, 1, 1], [], []>} : vector<16x32xf32>, vector<32x128xf32>, vector<16x128xf32> -> vector<16x128xf32>
    %c0_28 = arith.constant 0 : index
    %c0_29 = arith.constant 0 : index
    %37 = vector.load %arg5[%c0_28, %c0_29] : memref<128x128xf32, #tpu.memory_space<vmem>>, vector<128x128xf32>
    %cst_30 = arith.constant dense<0.000000e+00> : vector<16x128xf32>
    %38 = tpu.matmul %34, %37, %cst_30 {dimension_numbers = #tpu.dot_dimension_numbers<[1], [0], [0], [1], [0, 0, 1, 1], [], []>} : vector<16x128xf32>, vector<128x128xf32>, vector<16x128xf32> -> vector<16x128xf32>
    %39 = arith.addf %36, %38 : vector<16x128xf32>
    %c0_31 = arith.constant 0 : index
    %c0_32 = arith.constant 0 : index
    %40 = vector.load %arg7[%c0_31, %c0_32] : memref<1x128xf32, #tpu.memory_space<vmem>>, vector<1x128xf32>
    %41 = vector.broadcast %40 : vector<1x128xf32> to vector<16x128xf32>
    %42 = arith.addf %39, %41 : vector<16x128xf32>
    %c0_33 = arith.constant 0 : index
    %c0_34 = arith.constant 0 : index
    %c0_35 = arith.constant 0 : index
    %43 = vector.load %arg1[%c0_33, %c0_34, %c0_35] : memref<2x256x32xf32, #tpu.memory_space<vmem>>, vector<2x1x32xf32>
    %44 = vector.shape_cast %43 : vector<2x1x32xf32> to vector<2x32xf32>
    %c0_36 = arith.constant 0 : index
    %c0_37 = arith.constant 0 : index
    %45 = vector.load %arg6[%c0_36, %c0_37] : memref<32x128xf32, #tpu.memory_space<vmem>>, vector<32x128xf32>
    %cst_38 = arith.constant dense<0.000000e+00> : vector<2x128xf32>
    %46 = tpu.matmul %44, %45, %cst_38 {dimension_numbers = #tpu.dot_dimension_numbers<[1], [0], [0], [1], [0, 0, 1, 1], [], []>} : vector<2x32xf32>, vector<32x128xf32>, vector<2x128xf32> -> vector<2x128xf32>
    %47 = vector.shape_cast %42 : vector<16x128xf32> to vector<2x8x128xf32>
    %48 = vector.shape_cast %46 : vector<2x128xf32> to vector<2x1x128xf32>
    %49 = vector.broadcast %48 : vector<2x1x128xf32> to vector<2x8x128xf32>
    %50 = arith.addf %47, %49 : vector<2x8x128xf32>
    %cst_39 = arith.constant dense<0xFF800000> : vector<2x8xf32>
    %51 = vector.multi_reduction <maximumf>, %50, %cst_39 [2] : vector<2x8x128xf32> to vector<2x8xf32>
    %52 = vector.shape_cast %51 : vector<2x8xf32> to vector<2x8x1xf32>
    %53 = vector.broadcast %52 : vector<2x8x1xf32> to vector<2x8x128xf32>
    %54 = arith.subf %50, %53 : vector<2x8x128xf32>
    %55 = math.exp %54 : vector<2x8x128xf32>
    %cst_40 = arith.constant dense<0.000000e+00> : vector<2x8xf32>
    %56 = vector.multi_reduction <add>, %55, %cst_40 [2] : vector<2x8x128xf32> to vector<2x8xf32>
    %57 = vector.shape_cast %56 : vector<2x8xf32> to vector<2x8x1xf32>
    %58 = vector.broadcast %57 : vector<2x8x1xf32> to vector<2x8x128xf32>
    %59 = arith.divf %55, %58 : vector<2x8x128xf32>
    %c0_41 = arith.constant 0 : index
    %c0_42 = arith.constant 0 : index
    %c0_43 = arith.constant 0 : index
    %60 = vector.load %arg8[%c0_41, %c0_42, %c0_43] : memref<2x8x128xf32, #tpu.memory_space<vmem>>, vector<2x8x128xf32>
    tpu.vector_store %arg8[%c0_41, %c0_42, %c0_43], %59 {strides = array<i32>} : memref<2x8x128xf32, #tpu.memory_space<vmem>>, vector<2x8x128xf32>,
    return
  }
  func.func @transform_0(%arg0: i32) -> (i32, i32, i32) {
    %c0_i32 = arith.constant 0 : i32
    %c0_i32_0 = arith.constant 0 : i32
    %c0_i32_1 = arith.constant 0 : i32
    return %arg0, %c0_i32, %c0_i32_0 : i32, i32, i32
  }
  func.func @transform_1(%arg0: i32) -> (i32, i32, i32) {
    %c0_i32 = arith.constant 0 : i32
    %c0_i32_0 = arith.constant 0 : i32
    %c0_i32_1 = arith.constant 0 : i32
    return %arg0, %c0_i32, %c0_i32_0 : i32, i32, i32
  }
  func.func @transform_2(%arg0: i32) -> (i32, i32, i32) {
    %c0_i32 = arith.constant 0 : i32
    %c0_i32_0 = arith.constant 0 : i32
    %c0_i32_1 = arith.constant 0 : i32
    return %arg0, %c0_i32, %c0_i32_0 : i32, i32, i32
  }
  func.func @transform_3(%arg0: i32) -> (i32, i32) {
    %c0_i32 = arith.constant 0 : i32
    %c0_i32_0 = arith.constant 0 : i32
    %c0_i32_1 = arith.constant 0 : i32
    return %c0_i32, %c0_i32_0 : i32, i32
  }
  func.func @transform_4(%arg0: i32) -> (i32, i32) {
    %c0_i32 = arith.constant 0 : i32
    %c0_i32_0 = arith.constant 0 : i32
    %c0_i32_1 = arith.constant 0 : i32
    return %c0_i32, %c0_i32_0 : i32, i32
  }
  func.func @transform_5(%arg0: i32) -> (i32, i32) {
    %c0_i32 = arith.constant 0 : i32
    %c0_i32_0 = arith.constant 0 : i32
    %c0_i32_1 = arith.constant 0 : i32
    return %c0_i32, %c0_i32_0 : i32, i32
  }
  func.func @transform_6(%arg0: i32) -> (i32, i32) {
    %c0_i32 = arith.constant 0 : i32
    %c0_i32_0 = arith.constant 0 : i32
    %c0_i32_1 = arith.constant 0 : i32
    return %c0_i32, %c0_i32_0 : i32, i32
  }
  func.func @transform_7(%arg0: i32) -> (i32, i32, i32) {
    %c0_i32 = arith.constant 0 : i32
    %c0_i32_0 = arith.constant 0 : i32
    %c0_i32_1 = arith.constant 0 : i32
    return %arg0, %c0_i32, %c0_i32_0 : i32, i32, i32
  }
}

</mosaic_0001>

<llo_original>
// kernel: tpu_custom_call.1
$region0: #{tpu_custom_call.1}
  #allocation0 [shape = 'u32[]', space=smem, size = 0x4, offset = 0x4, fixed_abs, tag = 'smem constant byte address 0x4 - core index']
  #allocation1 [shape = 'u32[144,128]{1,0:T(1,128)}', space=vmem, size = 0x12000, scoped, tag = 'internal scratch']
  #allocation2 [shape = 'f32[16,32]{1,0:T(8,128)}', space=vmem, size = 0x2000, scoped, tag = 'scratch operand']
  %s0 = inlined_call_operand.vmem [shape: f32[2,256,32], index: 0, kind: input, shape index: {}]
  %s1 = inlined_call_operand.vmem [shape: f32[2,256,8], index: 1, kind: input, shape index: {}]
  %s2 = inlined_call_operand.vmem [shape: f32[2,8,128], index: 2, kind: input, shape index: {}]
  %s3 = inlined_call_operand.vmem [shape: f32[32,128], index: 3, kind: input, shape index: {}]
  %s4 = inlined_call_operand.vmem [shape: f32[128,128], index: 4, kind: input, shape index: {}]
  %s5 = inlined_call_operand.vmem [shape: f32[32,128], index: 5, kind: input, shape index: {}]
  %s6 = inlined_call_operand.vmem [shape: f32[1,128], index: 6, kind: input, shape index: {}]
  %s7 = inlined_call_operand.hbm [shape: f32[2,8,128], index: 7, kind: output, shape index: {}]
  %s8 = sld [smem:[#allocation0]]
  $region38: #{tpu_custom_call.1} parent=0
    _
  %s10 = ssub.s32 1, %s8
  %s11 = scalar_select 0, %s10, %s8
  $region1: #{tpu_custom_call.1} parent=0
    #allocation3 [shape = 'u8[8192]{0}', space=vmem, size = 0x2000, scoped, tag = 'output window, operand 0, single buffered']
    #allocation4 [shape = 's32[1]{0}', space=sflag, size = 0x4, scoped, tag = 'scoped memory for tpu_custom_call.1']
    %12 = vsyncpa [#allocation4], 0
    // Predicated region
    $region2: #{tpu_custom_call.1} parent=1 // pred_check
      _
    $region3: #{tpu_custom_call.1} parent=1 // pred_check_branch
      %14 = sbr.rel (0) target = $region5
    $region4: #{tpu_custom_call.1} parent=1 // pred_region
      _
    $region5: #{tpu_custom_call.1} parent=1 // pred_fallthru
      _
    // Predicated region
    $region6: #{tpu_custom_call.1} parent=1 // pred_check
      _
    $region7: #{tpu_custom_call.1} parent=1 // pred_check_branch
      %16 = sbr.rel (0) target = $region9
    $region8: #{tpu_custom_call.1} parent=1 // pred_region
      _
    $region9: #{tpu_custom_call.1} parent=1 // pred_fallthru
      _
    // Predicated region
    $region10: #{tpu_custom_call.1} parent=1 // pred_check
      _
    $region11: #{tpu_custom_call.1} parent=1 // pred_check_branch
      %18 = sbr.rel (0) target = $region13
    $region12: #{tpu_custom_call.1} parent=1 // pred_region
      _
    $region13: #{tpu_custom_call.1} parent=1 // pred_fallthru
      _
    // Predicated region
    $region14: #{tpu_custom_call.1} parent=1 // pred_check
      _
    $region15: #{tpu_custom_call.1} parent=1 // pred_check_branch
      %20 = sbr.rel (0) target = $region17
    $region16: #{tpu_custom_call.1} parent=1 // pred_region
      _
    $region17: #{tpu_custom_call.1} parent=1 // pred_fallthru
      _
    // Predicated region
    $region18: #{tpu_custom_call.1} parent=1 // pred_check
      _
    $region19: #{tpu_custom_call.1} parent=1 // pred_check_branch
      %22 = sbr.rel (0) target = $region21
    $region20: #{tpu_custom_call.1} parent=1 // pred_region
      _
    $region21: #{tpu_custom_call.1} parent=1 // pred_fallthru
      _
    // Predicated region
    $region22: #{tpu_custom_call.1} parent=1 // pred_check
      _
    $region23: #{tpu_custom_call.1} parent=1 // pred_check_branch
      %24 = sbr.rel (0) target = $region25
    $region24: #{tpu_custom_call.1} parent=1 // pred_region
      _
    $region25: #{tpu_custom_call.1} parent=1 // pred_fallthru
      _
    // Predicated region
    $region26: #{tpu_custom_call.1} parent=1 // pred_check
      _
    $region27: #{tpu_custom_call.1} parent=1 // pred_check_branch
      %26 = sbr.rel (0) target = $region29
    $region28: #{tpu_custom_call.1} parent=1 // pred_region
      _
    $region29: #{tpu_custom_call.1} parent=1 // pred_fallthru
      _
    %v27 = vld [vmem:[%s0] sm:$0xff]
    %v28 = vld [vmem:[%s0 + $0x8] sm:$0xff]
    %v29 = vld [vmem:[%s0 + $0x10] sm:$0xff]
    %v30 = vld [vmem:[%s0 + $0x18] sm:$0xff]
    %v31 = vld [vmem:[%s0 + $0x20] sm:$0xff]
    %v32 = vld [vmem:[%s0 + $0x28] sm:$0xff]
    %v33 = vld [vmem:[%s0 + $0x30] sm:$0xff]
    %v34 = vld [vmem:[%s0 + $0x38] sm:$0xff]
    %v35 = vld [vmem:[%s0 + $0x40] sm:$0xff]
    %v36 = vld [vmem:[%s0 + $0x48] sm:$0xff]
    %v37 = vld [vmem:[%s0 + $0x50] sm:$0xff]
    %v38 = vld [vmem:[%s0 + $0x58] sm:$0xff]
    %v39 = vld [vmem:[%s0 + $0x60] sm:$0xff]
    %v40 = vld [vmem:[%s0 + $0x68] sm:$0xff]
    %v41 = vld [vmem:[%s0 + $0x70] sm:$0xff]
    %v42 = vld [vmem:[%s0 + $0x78] sm:$0xff]
    %v43 = vld [vmem:[%s0 + $0x80] sm:$0xff]
    %v44 = vld [vmem:[%s0 + $0x88] sm:$0xff]
    %v45 = vld [vmem:[%s0 + $0x90] sm:$0xff]
    %v46 = vld [vmem:[%s0 + $0x98] sm:$0xff]
    %v47 = vld [vmem:[%s0 + $0xa0] sm:$0xff]
    %v48 = vld [vmem:[%s0 + $0xa8] sm:$0xff]
    %v49 = vld [vmem:[%s0 + $0xb0] sm:$0xff]
    %v50 = vld [vmem:[%s0 + $0xb8] sm:$0xff]
    %v51 = vld [vmem:[%s0 + $0xc0] sm:$0xff]
    %v52 = vld [vmem:[%s0 + $0xc8] sm:$0xff]
    %v53 = vld [vmem:[%s0 + $0xd0] sm:$0xff]
    %v54 = vld [vmem:[%s0 + $0xd8] sm:$0xff]
    %v55 = vld [vmem:[%s0 + $0xe0] sm:$0xff]
    %v56 = vld [vmem:[%s0 + $0xe8] sm:$0xff]
    %v57 = vld [vmem:[%s0 + $0xf0] sm:$0xff]
    %v58 = vld [vmem:[%s0 + $0xf8] sm:$0xff]
    %v59 = vld [vmem:[%s1] sm:$0xff]
    %v60 = vld [vmem:[%s1 + $0x8] sm:$0xff]
    %v61 = vld [vmem:[%s1 + $0x10] sm:$0xff]
    %v62 = vld [vmem:[%s1 + $0x18] sm:$0xff]
    %v63 = vld [vmem:[%s1 + $0x20] sm:$0xff]
    %v64 = vld [vmem:[%s1 + $0x28] sm:$0xff]
    %v65 = vld [vmem:[%s1 + $0x30] sm:$0xff]
    %v66 = vld [vmem:[%s1 + $0x38] sm:$0xff]
    %v67 = vld [vmem:[%s1 + $0x40] sm:$0xff]
    %v68 = vld [vmem:[%s1 + $0x48] sm:$0xff]
    %v69 = vld [vmem:[%s1 + $0x50] sm:$0xff]
    %v70 = vld [vmem:[%s1 + $0x58] sm:$0xff]
    %v71 = vld [vmem:[%s1 + $0x60] sm:$0xff]
    %v72 = vld [vmem:[%s1 + $0x68] sm:$0xff]
    %v73 = vld [vmem:[%s1 + $0x70] sm:$0xff]
    %v74 = vld [vmem:[%s1 + $0x78] sm:$0xff]
    %v75 = vld [vmem:[%s1 + $0x80] sm:$0xff]
    %v76 = vld [vmem:[%s1 + $0x88] sm:$0xff]
    %v77 = vld [vmem:[%s1 + $0x90] sm:$0xff]
    %v78 = vld [vmem:[%s1 + $0x98] sm:$0xff]
    %v79 = vld [vmem:[%s1 + $0xa0] sm:$0xff]
    %v80 = vld [vmem:[%s1 + $0xa8] sm:$0xff]
    %v81 = vld [vmem:[%s1 + $0xb0] sm:$0xff]
    %v82 = vld [vmem:[%s1 + $0xb8] sm:$0xff]
    %v83 = vld [vmem:[%s1 + $0xc0] sm:$0xff]
    %v84 = vld [vmem:[%s1 + $0xc8] sm:$0xff]
    %v85 = vld [vmem:[%s1 + $0xd0] sm:$0xff]
    %v86 = vld [vmem:[%s1 + $0xd8] sm:$0xff]
    %v87 = vld [vmem:[%s1 + $0xe0] sm:$0xff]
    %v88 = vld [vmem:[%s1 + $0xe8] sm:$0xff]
    %v89 = vld [vmem:[%s1 + $0xf0] sm:$0xff]
    %v90 = vld [vmem:[%s1 + $0xf8] sm:$0xff]
    %vm91 = vcmp.eq.f32.partialorder %v59, 0.0
    %vm92 = vcmp.eq.f32.partialorder %v60, 0.0
    %vm93 = vcmp.eq.f32.partialorder %v61, 0.0
    %vm94 = vcmp.eq.f32.partialorder %v62, 0.0
    %vm95 = vcmp.eq.f32.partialorder %v63, 0.0
    %vm96 = vcmp.eq.f32.partialorder %v64, 0.0
    %vm97 = vcmp.eq.f32.partialorder %v65, 0.0
    %vm98 = vcmp.eq.f32.partialorder %v66, 0.0
    %vm99 = vcmp.eq.f32.partialorder %v67, 0.0
    %vm100 = vcmp.eq.f32.partialorder %v68, 0.0
    %vm101 = vcmp.eq.f32.partialorder %v69, 0.0
    %vm102 = vcmp.eq.f32.partialorder %v70, 0.0
    %vm103 = vcmp.eq.f32.partialorder %v71, 0.0
    %vm104 = vcmp.eq.f32.partialorder %v72, 0.0
    %vm105 = vcmp.eq.f32.partialorder %v73, 0.0
    %vm106 = vcmp.eq.f32.partialorder %v74, 0.0
    %vm107 = vcmp.eq.f32.partialorder %v75, 0.0
    %vm108 = vcmp.eq.f32.partialorder %v76, 0.0
    %vm109 = vcmp.eq.f32.partialorder %v77, 0.0
    %vm110 = vcmp.eq.f32.partialorder %v78, 0.0
    %vm111 = vcmp.eq.f32.partialorder %v79, 0.0
    %vm112 = vcmp.eq.f32.partialorder %v80, 0.0
    %vm113 = vcmp.eq.f32.partialorder %v81, 0.0
    %vm114 = vcmp.eq.f32.partialorder %v82, 0.0
    %vm115 = vcmp.eq.f32.partialorder %v83, 0.0
    %vm116 = vcmp.eq.f32.partialorder %v84, 0.0
    %vm117 = vcmp.eq.f32.partialorder %v85, 0.0
    %vm118 = vcmp.eq.f32.partialorder %v86, 0.0
    %vm119 = vcmp.eq.f32.partialorder %v87, 0.0
    %vm120 = vcmp.eq.f32.partialorder %v88, 0.0
    %vm121 = vcmp.eq.f32.partialorder %v89, 0.0
    %vm122 = vcmp.eq.f32.partialorder %v90, 0.0
    %v123 = vsel %vm91, -1e+10, 0.0
    %v124 = vsel %vm92, -1e+10, 0.0
    %v125 = vsel %vm93, -1e+10, 0.0
    %v126 = vsel %vm94, -1e+10, 0.0
    %v127 = vsel %vm95, -1e+10, 0.0
    %v128 = vsel %vm96, -1e+10, 0.0
    %v129 = vsel %vm97, -1e+10, 0.0
    %v130 = vsel %vm98, -1e+10, 0.0
    %v131 = vsel %vm99, -1e+10, 0.0
    %v132 = vsel %vm100, -1e+10, 0.0
    %v133 = vsel %vm101, -1e+10, 0.0
    %v134 = vsel %vm102, -1e+10, 0.0
    %v135 = vsel %vm103, -1e+10, 0.0
    %v136 = vsel %vm104, -1e+10, 0.0
    %v137 = vsel %vm105, -1e+10, 0.0
    %v138 = vsel %vm106, -1e+10, 0.0
    %v139 = vsel %vm107, -1e+10, 0.0
    %v140 = vsel %vm108, -1e+10, 0.0
    %v141 = vsel %vm109, -1e+10, 0.0
    %v142 = vsel %vm110, -1e+10, 0.0
    %v143 = vsel %vm111, -1e+10, 0.0
    %v144 = vsel %vm112, -1e+10, 0.0
    %v145 = vsel %vm113, -1e+10, 0.0
    %v146 = vsel %vm114, -1e+10, 0.0
    %v147 = vsel %vm115, -1e+10, 0.0
    %v148 = vsel %vm116, -1e+10, 0.0
    %v149 = vsel %vm117, -1e+10, 0.0
    %v150 = vsel %vm118, -1e+10, 0.0
    %v151 = vsel %vm119, -1e+10, 0.0
    %v152 = vsel %vm120, -1e+10, 0.0
    %v153 = vsel %vm121, -1e+10, 0.0
    %v154 = vsel %vm122, -1e+10, 0.0
    %v155 = vlaneseq
    %v156 = vshrl.u32 %v155, 7
    %v157 = vsub.s32 0, %v156
    %v158 = vrot.slane %v123, %v157
    %160 = vbcast.lane.b32.xlu0 %v158, 256
    %v161 = vpop.permute.xlu0 %160
    %v162 = vlaneseq
    %v163 = vshrl.u32 %v162, 7
    %v164 = vsub.s32 1, %v163
    %v165 = vrot.slane %v123, %v164
    %167 = vbcast.lane.b32.xlu0 %v165, 256
    %v168 = vpop.permute.xlu0 %167
    %v169 = vlaneseq
    %v170 = vshrl.u32 %v169, 7
    %v171 = vsub.s32 2, %v170
    %v172 = vrot.slane %v123, %v171
    %174 = vbcast.lane.b32.xlu0 %v172, 256
    %v175 = vpop.permute.xlu0 %174
    %v176 = vlaneseq
    %v177 = vshrl.u32 %v176, 7
    %v178 = vsub.s32 3, %v177
    %v179 = vrot.slane %v123, %v178
    %181 = vbcast.lane.b32.xlu0 %v179, 256
    %v182 = vpop.permute.xlu0 %181
    %v183 = vlaneseq
    %v184 = vshrl.u32 %v183, 7
    %v185 = vsub.s32 4, %v184
    %v186 = vrot.slane %v123, %v185
    %188 = vbcast.lane.b32.xlu0 %v186, 256
    %v189 = vpop.permute.xlu0 %188
    %v190 = vlaneseq
    %v191 = vshrl.u32 %v190, 7
    %v192 = vsub.s32 5, %v191
    %v193 = vrot.slane %v123, %v192
    %195 = vbcast.lane.b32.xlu0 %v193, 256
    %v196 = vpop.permute.xlu0 %195
    %v197 = vlaneseq
    %v198 = vshrl.u32 %v197, 7
    %v199 = vsub.s32 6, %v198
    %v200 = vrot.slane %v123, %v199
    %202 = vbcast.lane.b32.xlu0 %v200, 256
    %v203 = vpop.permute.xlu0 %202
    %v204 = vlaneseq
    %v205 = vshrl.u32 %v204, 7
    %v206 = vsub.s32 7, %v205
    %v207 = vrot.slane %v123, %v206
    %209 = vbcast.lane.b32.xlu0 %v207, 256
    %v210 = vpop.permute.xlu0 %209
    %v211 = vlaneseq
    %v212 = vshrl.u32 %v211, 7
    %v213 = vsub.s32 0, %v212
    %v214 = vrot.slane %v124, %v213
    %216 = vbcast.lane.b32.xlu0 %v214, 256
    %v217 = vpop.permute.xlu0 %216
    %v218 = vlaneseq
    %v219 = vshrl.u32 %v218, 7
    %v220 = vsub.s32 1, %v219
    %v221 = vrot.slane %v124, %v220
    %223 = vbcast.lane.b32.xlu0 %v221, 256
    %v224 = vpop.permute.xlu0 %223
    %v225 = vlaneseq
    %v226 = vshrl.u32 %v225, 7
    %v227 = vsub.s32 2, %v226
    %v228 = vrot.slane %v124, %v227
    %230 = vbcast.lane.b32.xlu0 %v228, 256
    %v231 = vpop.permute.xlu0 %230
    %v232 = vlaneseq
    %v233 = vshrl.u32 %v232, 7
    %v234 = vsub.s32 3, %v233
    %v235 = vrot.slane %v124, %v234
    %237 = vbcast.lane.b32.xlu0 %v235, 256
    %v238 = vpop.permute.xlu0 %237
    %v239 = vlaneseq
    %v240 = vshrl.u32 %v239, 7
    %v241 = vsub.s32 4, %v240
    %v242 = vrot.slane %v124, %v241
    %244 = vbcast.lane.b32.xlu0 %v242, 256
    %v245 = vpop.permute.xlu0 %244
    %v246 = vlaneseq
    %v247 = vshrl.u32 %v246, 7
    %v248 = vsub.s32 5, %v247
    %v249 = vrot.slane %v124, %v248
    %251 = vbcast.lane.b32.xlu0 %v249, 256
    %v252 = vpop.permute.xlu0 %251
    %v253 = vlaneseq
    %v254 = vshrl.u32 %v253, 7
    %v255 = vsub.s32 6, %v254
    %v256 = vrot.slane %v124, %v255
    %258 = vbcast.lane.b32.xlu0 %v256, 256
    %v259 = vpop.permute.xlu0 %258
    %v260 = vlaneseq
    %v261 = vshrl.u32 %v260, 7
    %v262 = vsub.s32 7, %v261
    %v263 = vrot.slane %v124, %v262
    %265 = vbcast.lane.b32.xlu0 %v263, 256
    %v266 = vpop.permute.xlu0 %265
    %v267 = vlaneseq
    %v268 = vshrl.u32 %v267, 7
    %v269 = vsub.s32 0, %v268
    %v270 = vrot.slane %v125, %v269
    %272 = vbcast.lane.b32.xlu0 %v270, 256
    %v273 = vpop.permute.xlu0 %272
    %v274 = vlaneseq
    %v275 = vshrl.u32 %v274, 7
    %v276 = vsub.s32 1, %v275
    %v277 = vrot.slane %v125, %v276
    %279 = vbcast.lane.b32.xlu0 %v277, 256
    %v280 = vpop.permute.xlu0 %279
    %v281 = vlaneseq
    %v282 = vshrl.u32 %v281, 7
    %v283 = vsub.s32 2, %v282
    %v284 = vrot.slane %v125, %v283
    %286 = vbcast.lane.b32.xlu0 %v284, 256
    %v287 = vpop.permute.xlu0 %286
    %v288 = vlaneseq
    %v289 = vshrl.u32 %v288, 7
    %v290 = vsub.s32 3, %v289
    %v291 = vrot.slane %v125, %v290
    %293 = vbcast.lane.b32.xlu0 %v291, 256
    %v294 = vpop.permute.xlu0 %293
    %v295 = vlaneseq
    %v296 = vshrl.u32 %v295, 7
    %v297 = vsub.s32 4, %v296
    %v298 = vrot.slane %v125, %v297
    %300 = vbcast.lane.b32.xlu0 %v298, 256
    %v301 = vpop.permute.xlu0 %300
    %v302 = vlaneseq
    %v303 = vshrl.u32 %v302, 7
    %v304 = vsub.s32 5, %v303
    %v305 = vrot.slane %v125, %v304
    %307 = vbcast.lane.b32.xlu0 %v305, 256
    %v308 = vpop.permute.xlu0 %307
    %v309 = vlaneseq
    %v310 = vshrl.u32 %v309, 7
    %v311 = vsub.s32 6, %v310
    %v312 = vrot.slane %v125, %v311
    %314 = vbcast.lane.b32.xlu0 %v312, 256
    %v315 = vpop.permute.xlu0 %314
    %v316 = vlaneseq
    %v317 = vshrl.u32 %v316, 7
    %v318 = vsub.s32 7, %v317
    %v319 = vrot.slane %v125, %v318
    %321 = vbcast.lane.b32.xlu0 %v319, 256
    %v322 = vpop.permute.xlu0 %321
    %v323 = vlaneseq
    %v324 = vshrl.u32 %v323, 7
    %v325 = vsub.s32 0, %v324
    %v326 = vrot.slane %v126, %v325
    %328 = vbcast.lane.b32.xlu0 %v326, 256
    %v329 = vpop.permute.xlu0 %328
    %v330 = vlaneseq
    %v331 = vshrl.u32 %v330, 7
    %v332 = vsub.s32 1, %v331
    %v333 = vrot.slane %v126, %v332
    %335 = vbcast.lane.b32.xlu0 %v333, 256
    %v336 = vpop.permute.xlu0 %335
    %v337 = vlaneseq
    %v338 = vshrl.u32 %v337, 7
    %v339 = vsub.s32 2, %v338
    %v340 = vrot.slane %v126, %v339
    %342 = vbcast.lane.b32.xlu0 %v340, 256
    %v343 = vpop.permute.xlu0 %342
    %v344 = vlaneseq
    %v345 = vshrl.u32 %v344, 7
    %v346 = vsub.s32 3, %v345
    %v347 = vrot.slane %v126, %v346
    %349 = vbcast.lane.b32.xlu0 %v347, 256
    %v350 = vpop.permute.xlu0 %349
    %v351 = vlaneseq
    %v352 = vshrl.u32 %v351, 7
    %v353 = vsub.s32 4, %v352
    %v354 = vrot.slane %v126, %v353
    %356 = vbcast.lane.b32.xlu0 %v354, 256
    %v357 = vpop.permute.xlu0 %356
    %v358 = vlaneseq
    %v359 = vshrl.u32 %v358, 7
    %v360 = vsub.s32 5, %v359
    %v361 = vrot.slane %v126, %v360
    %363 = vbcast.lane.b32.xlu0 %v361, 256
    %v364 = vpop.permute.xlu0 %363
    %v365 = vlaneseq
    %v366 = vshrl.u32 %v365, 7
    %v367 = vsub.s32 6, %v366
    %v368 = vrot.slane %v126, %v367
    %370 = vbcast.lane.b32.xlu0 %v368, 256
    %v371 = vpop.permute.xlu0 %370
    %v372 = vlaneseq
    %v373 = vshrl.u32 %v372, 7
    %v374 = vsub.s32 7, %v373
    %v375 = vrot.slane %v126, %v374
    %377 = vbcast.lane.b32.xlu0 %v375, 256
    %v378 = vpop.permute.xlu0 %377
    %v379 = vlaneseq
    %v380 = vshrl.u32 %v379, 7
    %v381 = vsub.s32 0, %v380
    %v382 = vrot.slane %v127, %v381
    %384 = vbcast.lane.b32.xlu0 %v382, 256
    %v385 = vpop.permute.xlu0 %384
    %v386 = vlaneseq
    %v387 = vshrl.u32 %v386, 7
    %v388 = vsub.s32 1, %v387
    %v389 = vrot.slane %v127, %v388
    %391 = vbcast.lane.b32.xlu0 %v389, 256
    %v392 = vpop.permute.xlu0 %391
    %v393 = vlaneseq
    %v394 = vshrl.u32 %v393, 7
    %v395 = vsub.s32 2, %v394
    %v396 = vrot.slane %v127, %v395
    %398 = vbcast.lane.b32.xlu0 %v396, 256
    %v399 = vpop.permute.xlu0 %398
    %v400 = vlaneseq
    %v401 = vshrl.u32 %v400, 7
    %v402 = vsub.s32 3, %v401
    %v403 = vrot.slane %v127, %v402
    %405 = vbcast.lane.b32.xlu0 %v403, 256
    %v406 = vpop.permute.xlu0 %405
    %v407 = vlaneseq
    %v408 = vshrl.u32 %v407, 7
    %v409 = vsub.s32 4, %v408
    %v410 = vrot.slane %v127, %v409
    %412 = vbcast.lane.b32.xlu0 %v410, 256
    %v413 = vpop.permute.xlu0 %412
    %v414 = vlaneseq
    %v415 = vshrl.u32 %v414, 7
    %v416 = vsub.s32 5, %v415
    %v417 = vrot.slane %v127, %v416
    %419 = vbcast.lane.b32.xlu0 %v417, 256
    %v420 = vpop.permute.xlu0 %419
    %v421 = vlaneseq
    %v422 = vshrl.u32 %v421, 7
    %v423 = vsub.s32 6, %v422
    %v424 = vrot.slane %v127, %v423
    %426 = vbcast.lane.b32.xlu0 %v424, 256
    %v427 = vpop.permute.xlu0 %426
    %v428 = vlaneseq
    %v429 = vshrl.u32 %v428, 7
    %v430 = vsub.s32 7, %v429
    %v431 = vrot.slane %v127, %v430
    %433 = vbcast.lane.b32.xlu0 %v431, 256
    %v434 = vpop.permute.xlu0 %433
    %v435 = vlaneseq
    %v436 = vshrl.u32 %v435, 7
    %v437 = vsub.s32 0, %v436
    %v438 = vrot.slane %v128, %v437
    %440 = vbcast.lane.b32.xlu0 %v438, 256
    %v441 = vpop.permute.xlu0 %440
    %v442 = vlaneseq
    %v443 = vshrl.u32 %v442, 7
    %v444 = vsub.s32 1, %v443
    %v445 = vrot.slane %v128, %v444
    %447 = vbcast.lane.b32.xlu0 %v445, 256
    %v448 = vpop.permute.xlu0 %447
    %v449 = vlaneseq
    %v450 = vshrl.u32 %v449, 7
    %v451 = vsub.s32 2, %v450
    %v452 = vrot.slane %v128, %v451
    %454 = vbcast.lane.b32.xlu0 %v452, 256
    %v455 = vpop.permute.xlu0 %454
    %v456 = vlaneseq
    %v457 = vshrl.u32 %v456, 7
    %v458 = vsub.s32 3, %v457
    %v459 = vrot.slane %v128, %v458
    %461 = vbcast.lane.b32.xlu0 %v459, 256
    %v462 = vpop.permute.xlu0 %461
    %v463 = vlaneseq
    %v464 = vshrl.u32 %v463, 7
    %v465 = vsub.s32 4, %v464
    %v466 = vrot.slane %v128, %v465
    %468 = vbcast.lane.b32.xlu0 %v466, 256
    %v469 = vpop.permute.xlu0 %468
    %v470 = vlaneseq
    %v471 = vshrl.u32 %v470, 7
    %v472 = vsub.s32 5, %v471
    %v473 = vrot.slane %v128, %v472
    %475 = vbcast.lane.b32.xlu0 %v473, 256
    %v476 = vpop.permute.xlu0 %475
    %v477 = vlaneseq
    %v478 = vshrl.u32 %v477, 7
    %v479 = vsub.s32 6, %v478
    %v480 = vrot.slane %v128, %v479
    %482 = vbcast.lane.b32.xlu0 %v480, 256
    %v483 = vpop.permute.xlu0 %482
    %v484 = vlaneseq
    %v485 = vshrl.u32 %v484, 7
    %v486 = vsub.s32 7, %v485
    %v487 = vrot.slane %v128, %v486
    %489 = vbcast.lane.b32.xlu0 %v487, 256
    %v490 = vpop.permute.xlu0 %489
    %v491 = vlaneseq
    %v492 = vshrl.u32 %v491, 7
    %v493 = vsub.s32 0, %v492
    %v494 = vrot.slane %v129, %v493
    %496 = vbcast.lane.b32.xlu0 %v494, 256
    %v497 = vpop.permute.xlu0 %496
    %v498 = vlaneseq
    %v499 = vshrl.u32 %v498, 7
    %v500 = vsub.s32 1, %v499
    %v501 = vrot.slane %v129, %v500
    %503 = vbcast.lane.b32.xlu0 %v501, 256
    %v504 = vpop.permute.xlu0 %503
    %v505 = vlaneseq
    %v506 = vshrl.u32 %v505, 7
    %v507 = vsub.s32 2, %v506
    %v508 = vrot.slane %v129, %v507
    %510 = vbcast.lane.b32.xlu0 %v508, 256
    %v511 = vpop.permute.xlu0 %510
    %v512 = vlaneseq
    %v513 = vshrl.u32 %v512, 7
    %v514 = vsub.s32 3, %v513
    %v515 = vrot.slane %v129, %v514
    %517 = vbcast.lane.b32.xlu0 %v515, 256
    %v518 = vpop.permute.xlu0 %517
    %v519 = vlaneseq
    %v520 = vshrl.u32 %v519, 7
    %v521 = vsub.s32 4, %v520
    %v522 = vrot.slane %v129, %v521
    %524 = vbcast.lane.b32.xlu0 %v522, 256
    %v525 = vpop.permute.xlu0 %524
    %v526 = vlaneseq
    %v527 = vshrl.u32 %v526, 7
    %v528 = vsub.s32 5, %v527
    %v529 = vrot.slane %v129, %v528
    %531 = vbcast.lane.b32.xlu0 %v529, 256
    %v532 = vpop.permute.xlu0 %531
    %v533 = vlaneseq
    %v534 = vshrl.u32 %v533, 7
    %v535 = vsub.s32 6, %v534
    %v536 = vrot.slane %v129, %v535
    %538 = vbcast.lane.b32.xlu0 %v536, 256
    %v539 = vpop.permute.xlu0 %538
    %v540 = vlaneseq
    %v541 = vshrl.u32 %v540, 7
    %v542 = vsub.s32 7, %v541
    %v543 = vrot.slane %v129, %v542
    %545 = vbcast.lane.b32.xlu0 %v543, 256
    %v546 = vpop.permute.xlu0 %545
    %v547 = vlaneseq
    %v548 = vshrl.u32 %v547, 7
    %v549 = vsub.s32 0, %v548
    %v550 = vrot.slane %v130, %v549
    %552 = vbcast.lane.b32.xlu0 %v550, 256
    %v553 = vpop.permute.xlu0 %552
    %v554 = vlaneseq
    %v555 = vshrl.u32 %v554, 7
    %v556 = vsub.s32 1, %v555
    %v557 = vrot.slane %v130, %v556
    %559 = vbcast.lane.b32.xlu0 %v557, 256
    %v560 = vpop.permute.xlu0 %559
    %v561 = vlaneseq
    %v562 = vshrl.u32 %v561, 7
    %v563 = vsub.s32 2, %v562
    %v564 = vrot.slane %v130, %v563
    %566 = vbcast.lane.b32.xlu0 %v564, 256
    %v567 = vpop.permute.xlu0 %566
    %v568 = vlaneseq
    %v569 = vshrl.u32 %v568, 7
    %v570 = vsub.s32 3, %v569
    %v571 = vrot.slane %v130, %v570
    %573 = vbcast.lane.b32.xlu0 %v571, 256
    %v574 = vpop.permute.xlu0 %573
    %v575 = vlaneseq
    %v576 = vshrl.u32 %v575, 7
    %v577 = vsub.s32 4, %v576
    %v578 = vrot.slane %v130, %v577
    %580 = vbcast.lane.b32.xlu0 %v578, 256
    %v581 = vpop.permute.xlu0 %580
    %v582 = vlaneseq
    %v583 = vshrl.u32 %v582, 7
    %v584 = vsub.s32 5, %v583
    %v585 = vrot.slane %v130, %v584
    %587 = vbcast.lane.b32.xlu0 %v585, 256
    %v588 = vpop.permute.xlu0 %587
    %v589 = vlaneseq
    %v590 = vshrl.u32 %v589, 7
    %v591 = vsub.s32 6, %v590
    %v592 = vrot.slane %v130, %v591
    %594 = vbcast.lane.b32.xlu0 %v592, 256
    %v595 = vpop.permute.xlu0 %594
    %v596 = vlaneseq
    %v597 = vshrl.u32 %v596, 7
    %v598 = vsub.s32 7, %v597
    %v599 = vrot.slane %v130, %v598
    %601 = vbcast.lane.b32.xlu0 %v599, 256
    %v602 = vpop.permute.xlu0 %601
    %v603 = vlaneseq
    %v604 = vshrl.u32 %v603, 7
    %v605 = vsub.s32 0, %v604
    %v606 = vrot.slane %v131, %v605
    %608 = vbcast.lane.b32.xlu0 %v606, 256
    %v609 = vpop.permute.xlu0 %608
    %v610 = vlaneseq
    %v611 = vshrl.u32 %v610, 7
    %v612 = vsub.s32 1, %v611
    %v613 = vrot.slane %v131, %v612
    %615 = vbcast.lane.b32.xlu0 %v613, 256
    %v616 = vpop.permute.xlu0 %615
    %v617 = vlaneseq
    %v618 = vshrl.u32 %v617, 7
    %v619 = vsub.s32 2, %v618
    %v620 = vrot.slane %v131, %v619
    %622 = vbcast.lane.b32.xlu0 %v620, 256
    %v623 = vpop.permute.xlu0 %622
    %v624 = vlaneseq
    %v625 = vshrl.u32 %v624, 7
    %v626 = vsub.s32 3, %v625
    %v627 = vrot.slane %v131, %v626
    %629 = vbcast.lane.b32.xlu0 %v627, 256
    %v630 = vpop.permute.xlu0 %629
    %v631 = vlaneseq
    %v632 = vshrl.u32 %v631, 7
    %v633 = vsub.s32 4, %v632
    %v634 = vrot.slane %v131, %v633
    %636 = vbcast.lane.b32.xlu0 %v634, 256
    %v637 = vpop.permute.xlu0 %636
    %v638 = vlaneseq
    %v639 = vshrl.u32 %v638, 7
    %v640 = vsub.s32 5, %v639
    %v641 = vrot.slane %v131, %v640
    %643 = vbcast.lane.b32.xlu0 %v641, 256
    %v644 = vpop.permute.xlu0 %643
    %v645 = vlaneseq
    %v646 = vshrl.u32 %v645, 7
    %v647 = vsub.s32 6, %v646
    %v648 = vrot.slane %v131, %v647
    %650 = vbcast.lane.b32.xlu0 %v648, 256
    %v651 = vpop.permute.xlu0 %650
    %v652 = vlaneseq
    %v653 = vshrl.u32 %v652, 7
    %v654 = vsub.s32 7, %v653
    %v655 = vrot.slane %v131, %v654
    %657 = vbcast.lane.b32.xlu0 %v655, 256
    %v658 = vpop.permute.xlu0 %657
    %v659 = vlaneseq
    %v660 = vshrl.u32 %v659, 7
    %v661 = vsub.s32 0, %v660
    %v662 = vrot.slane %v132, %v661
    %664 = vbcast.lane.b32.xlu0 %v662, 256
    %v665 = vpop.permute.xlu0 %664
    %v666 = vlaneseq
    %v667 = vshrl.u32 %v666, 7
    %v668 = vsub.s32 1, %v667
    %v669 = vrot.slane %v132, %v668
    %671 = vbcast.lane.b32.xlu0 %v669, 256
    %v672 = vpop.permute.xlu0 %671
    %v673 = vlaneseq
    %v674 = vshrl.u32 %v673, 7
    %v675 = vsub.s32 2, %v674
    %v676 = vrot.slane %v132, %v675
    %678 = vbcast.lane.b32.xlu0 %v676, 256
    %v679 = vpop.permute.xlu0 %678
    %v680 = vlaneseq
    %v681 = vshrl.u32 %v680, 7
    %v682 = vsub.s32 3, %v681
    %v683 = vrot.slane %v132, %v682
    %685 = vbcast.lane.b32.xlu0 %v683, 256
    %v686 = vpop.permute.xlu0 %685
    %v687 = vlaneseq
    %v688 = vshrl.u32 %v687, 7
    %v689 = vsub.s32 4, %v688
    %v690 = vrot.slane %v132, %v689
    %692 = vbcast.lane.b32.xlu0 %v690, 256
    %v693 = vpop.permute.xlu0 %692
    %v694 = vlaneseq
    %v695 = vshrl.u32 %v694, 7
    %v696 = vsub.s32 5, %v695
    %v697 = vrot.slane %v132, %v696
    %699 = vbcast.lane.b32.xlu0 %v697, 256
    %v700 = vpop.permute.xlu0 %699
    %v701 = vlaneseq
    %v702 = vshrl.u32 %v701, 7
    %v703 = vsub.s32 6, %v702
    %v704 = vrot.slane %v132, %v703
    %706 = vbcast.lane.b32.xlu0 %v704, 256
    %v707 = vpop.permute.xlu0 %706
    %v708 = vlaneseq
    %v709 = vshrl.u32 %v708, 7
    %v710 = vsub.s32 7, %v709
    %v711 = vrot.slane %v132, %v710
    %713 = vbcast.lane.b32.xlu0 %v711, 256
    %v714 = vpop.permute.xlu0 %713
    %v715 = vlaneseq
    %v716 = vshrl.u32 %v715, 7
    %v717 = vsub.s32 0, %v716
    %v718 = vrot.slane %v133, %v717
    %720 = vbcast.lane.b32.xlu0 %v718, 256
    %v721 = vpop.permute.xlu0 %720
    %v722 = vlaneseq
    %v723 = vshrl.u32 %v722, 7
    %v724 = vsub.s32 1, %v723
    %v725 = vrot.slane %v133, %v724
    %727 = vbcast.lane.b32.xlu0 %v725, 256
    %v728 = vpop.permute.xlu0 %727
    %v729 = vlaneseq
    %v730 = vshrl.u32 %v729, 7
    %v731 = vsub.s32 2, %v730
    %v732 = vrot.slane %v133, %v731
    %734 = vbcast.lane.b32.xlu0 %v732, 256
    %v735 = vpop.permute.xlu0 %734
    %v736 = vlaneseq
    %v737 = vshrl.u32 %v736, 7
    %v738 = vsub.s32 3, %v737
    %v739 = vrot.slane %v133, %v738
    %741 = vbcast.lane.b32.xlu0 %v739, 256
    %v742 = vpop.permute.xlu0 %741
    %v743 = vlaneseq
    %v744 = vshrl.u32 %v743, 7
    %v745 = vsub.s32 4, %v744
    %v746 = vrot.slane %v133, %v745
    %748 = vbcast.lane.b32.xlu0 %v746, 256
    %v749 = vpop.permute.xlu0 %748
    %v750 = vlaneseq
    %v751 = vshrl.u32 %v750, 7
    %v752 = vsub.s32 5, %v751
    %v753 = vrot.slane %v133, %v752
    %755 = vbcast.lane.b32.xlu0 %v753, 256
    %v756 = vpop.permute.xlu0 %755
    %v757 = vlaneseq
    %v758 = vshrl.u32 %v757, 7
    %v759 = vsub.s32 6, %v758
    %v760 = vrot.slane %v133, %v759
    %762 = vbcast.lane.b32.xlu0 %v760, 256
    %v763 = vpop.permute.xlu0 %762
    %v764 = vlaneseq
    %v765 = vshrl.u32 %v764, 7
    %v766 = vsub.s32 7, %v765
    %v767 = vrot.slane %v133, %v766
    %769 = vbcast.lane.b32.xlu0 %v767, 256
    %v770 = vpop.permute.xlu0 %769
    %v771 = vlaneseq
    %v772 = vshrl.u32 %v771, 7
    %v773 = vsub.s32 0, %v772
    %v774 = vrot.slane %v134, %v773
    %776 = vbcast.lane.b32.xlu0 %v774, 256
    %v777 = vpop.permute.xlu0 %776
    %v778 = vlaneseq
    %v779 = vshrl.u32 %v778, 7
    %v780 = vsub.s32 1, %v779
    %v781 = vrot.slane %v134, %v780
    %783 = vbcast.lane.b32.xlu0 %v781, 256
    %v784 = vpop.permute.xlu0 %783
    %v785 = vlaneseq
    %v786 = vshrl.u32 %v785, 7
    %v787 = vsub.s32 2, %v786
    %v788 = vrot.slane %v134, %v787
    %790 = vbcast.lane.b32.xlu0 %v788, 256
    %v791 = vpop.permute.xlu0 %790
    %v792 = vlaneseq
    %v793 = vshrl.u32 %v792, 7
    %v794 = vsub.s32 3, %v793
    %v795 = vrot.slane %v134, %v794
    %797 = vbcast.lane.b32.xlu0 %v795, 256
    %v798 = vpop.permute.xlu0 %797
    %v799 = vlaneseq
    %v800 = vshrl.u32 %v799, 7
    %v801 = vsub.s32 4, %v800
    %v802 = vrot.slane %v134, %v801
    %804 = vbcast.lane.b32.xlu0 %v802, 256
    %v805 = vpop.permute.xlu0 %804
    %v806 = vlaneseq
    %v807 = vshrl.u32 %v806, 7
    %v808 = vsub.s32 5, %v807
    %v809 = vrot.slane %v134, %v808
    %811 = vbcast.lane.b32.xlu0 %v809, 256
    %v812 = vpop.permute.xlu0 %811
    %v813 = vlaneseq
    %v814 = vshrl.u32 %v813, 7
    %v815 = vsub.s32 6, %v814
    %v816 = vrot.slane %v134, %v815
    %818 = vbcast.lane.b32.xlu0 %v816, 256
    %v819 = vpop.permute.xlu0 %818
    %v820 = vlaneseq
    %v821 = vshrl.u32 %v820, 7
    %v822 = vsub.s32 7, %v821
    %v823 = vrot.slane %v134, %v822
    %825 = vbcast.lane.b32.xlu0 %v823, 256
    %v826 = vpop.permute.xlu0 %825
    %v827 = vlaneseq
    %v828 = vshrl.u32 %v827, 7
    %v829 = vsub.s32 0, %v828
    %v830 = vrot.slane %v135, %v829
    %832 = vbcast.lane.b32.xlu0 %v830, 256
    %v833 = vpop.permute.xlu0 %832
    %v834 = vlaneseq
    %v835 = vshrl.u32 %v834, 7
    %v836 = vsub.s32 1, %v835
    %v837 = vrot.slane %v135, %v836
    %839 = vbcast.lane.b32.xlu0 %v837, 256
    %v840 = vpop.permute.xlu0 %839
    %v841 = vlaneseq
    %v842 = vshrl.u32 %v841, 7
    %v843 = vsub.s32 2, %v842
    %v844 = vrot.slane %v135, %v843
    %846 = vbcast.lane.b32.xlu0 %v844, 256
    %v847 = vpop.permute.xlu0 %846
    %v848 = vlaneseq
    %v849 = vshrl.u32 %v848, 7
    %v850 = vsub.s32 3, %v849
    %v851 = vrot.slane %v135, %v850
    %853 = vbcast.lane.b32.xlu0 %v851, 256
    %v854 = vpop.permute.xlu0 %853
    %v855 = vlaneseq
    %v856 = vshrl.u32 %v855, 7
    %v857 = vsub.s32 4, %v856
    %v858 = vrot.slane %v135, %v857
    %860 = vbcast.lane.b32.xlu0 %v858, 256
    %v861 = vpop.permute.xlu0 %860
    %v862 = vlaneseq
    %v863 = vshrl.u32 %v862, 7
    %v864 = vsub.s32 5, %v863
    %v865 = vrot.slane %v135, %v864
    %867 = vbcast.lane.b32.xlu0 %v865, 256
    %v868 = vpop.permute.xlu0 %867
    %v869 = vlaneseq
    %v870 = vshrl.u32 %v869, 7
    %v871 = vsub.s32 6, %v870
    %v872 = vrot.slane %v135, %v871
    %874 = vbcast.lane.b32.xlu0 %v872, 256
    %v875 = vpop.permute.xlu0 %874
    %v876 = vlaneseq
    %v877 = vshrl.u32 %v876, 7
    %v878 = vsub.s32 7, %v877
    %v879 = vrot.slane %v135, %v878
    %881 = vbcast.lane.b32.xlu0 %v879, 256
    %v882 = vpop.permute.xlu0 %881
    %v883 = vlaneseq
    %v884 = vshrl.u32 %v883, 7
    %v885 = vsub.s32 0, %v884
    %v886 = vrot.slane %v136, %v885
    %888 = vbcast.lane.b32.xlu0 %v886, 256
    %v889 = vpop.permute.xlu0 %888
    %v890 = vlaneseq
    %v891 = vshrl.u32 %v890, 7
    %v892 = vsub.s32 1, %v891
    %v893 = vrot.slane %v136, %v892
    %895 = vbcast.lane.b32.xlu0 %v893, 256
    %v896 = vpop.permute.xlu0 %895
    %v897 = vlaneseq
    %v898 = vshrl.u32 %v897, 7
    %v899 = vsub.s32 2, %v898
    %v900 = vrot.slane %v136, %v899
    %902 = vbcast.lane.b32.xlu0 %v900, 256
    %v903 = vpop.permute.xlu0 %902
    %v904 = vlaneseq
    %v905 = vshrl.u32 %v904, 7
    %v906 = vsub.s32 3, %v905
    %v907 = vrot.slane %v136, %v906
    %909 = vbcast.lane.b32.xlu0 %v907, 256
    %v910 = vpop.permute.xlu0 %909
    %v911 = vlaneseq
    %v912 = vshrl.u32 %v911, 7
    %v913 = vsub.s32 4, %v912
    %v914 = vrot.slane %v136, %v913
    %916 = vbcast.lane.b32.xlu0 %v914, 256
    %v917 = vpop.permute.xlu0 %916
    %v918 = vlaneseq
    %v919 = vshrl.u32 %v918, 7
    %v920 = vsub.s32 5, %v919
    %v921 = vrot.slane %v136, %v920
    %923 = vbcast.lane.b32.xlu0 %v921, 256
    %v924 = vpop.permute.xlu0 %923
    %v925 = vlaneseq
    %v926 = vshrl.u32 %v925, 7
    %v927 = vsub.s32 6, %v926
    %v928 = vrot.slane %v136, %v927
    %930 = vbcast.lane.b32.xlu0 %v928, 256
    %v931 = vpop.permute.xlu0 %930
    %v932 = vlaneseq
    %v933 = vshrl.u32 %v932, 7
    %v934 = vsub.s32 7, %v933
    %v935 = vrot.slane %v136, %v934
    %937 = vbcast.lane.b32.xlu0 %v935, 256
    %v938 = vpop.permute.xlu0 %937
    %v939 = vlaneseq
    %v940 = vshrl.u32 %v939, 7
    %v941 = vsub.s32 0, %v940
    %v942 = vrot.slane %v137, %v941
    %944 = vbcast.lane.b32.xlu0 %v942, 256
    %v945 = vpop.permute.xlu0 %944
    %v946 = vlaneseq
    %v947 = vshrl.u32 %v946, 7
    %v948 = vsub.s32 1, %v947
    %v949 = vrot.slane %v137, %v948
    %951 = vbcast.lane.b32.xlu0 %v949, 256
    %v952 = vpop.permute.xlu0 %951
    %v953 = vlaneseq
    %v954 = vshrl.u32 %v953, 7
    %v955 = vsub.s32 2, %v954
    %v956 = vrot.slane %v137, %v955
    %958 = vbcast.lane.b32.xlu0 %v956, 256
    %v959 = vpop.permute.xlu0 %958
    %v960 = vlaneseq
    %v961 = vshrl.u32 %v960, 7
    %v962 = vsub.s32 3, %v961
    %v963 = vrot.slane %v137, %v962
    %965 = vbcast.lane.b32.xlu0 %v963, 256
    %v966 = vpop.permute.xlu0 %965
    %v967 = vlaneseq
    %v968 = vshrl.u32 %v967, 7
    %v969 = vsub.s32 4, %v968
    %v970 = vrot.slane %v137, %v969
    %972 = vbcast.lane.b32.xlu0 %v970, 256
    %v973 = vpop.permute.xlu0 %972
    %v974 = vlaneseq
    %v975 = vshrl.u32 %v974, 7
    %v976 = vsub.s32 5, %v975
    %v977 = vrot.slane %v137, %v976
    %979 = vbcast.lane.b32.xlu0 %v977, 256
    %v980 = vpop.permute.xlu0 %979
    %v981 = vlaneseq
    %v982 = vshrl.u32 %v981, 7
    %v983 = vsub.s32 6, %v982
    %v984 = vrot.slane %v137, %v983
    %986 = vbcast.lane.b32.xlu0 %v984, 256
    %v987 = vpop.permute.xlu0 %986
    %v988 = vlaneseq
    %v989 = vshrl.u32 %v988, 7
    %v990 = vsub.s32 7, %v989
    %v991 = vrot.slane %v137, %v990
    %993 = vbcast.lane.b32.xlu0 %v991, 256
    %v994 = vpop.permute.xlu0 %993
    %v995 = vlaneseq
    %v996 = vshrl.u32 %v995, 7
    %v997 = vsub.s32 0, %v996
    %v998 = vrot.slane %v138, %v997
    %1000 = vbcast.lane.b32.xlu0 %v998, 256
    %v1001 = vpop.permute.xlu0 %1000
    %v1002 = vlaneseq
    %v1003 = vshrl.u32 %v1002, 7
    %v1004 = vsub.s32 1, %v1003
    %v1005 = vrot.slane %v138, %v1004
    %1007 = vbcast.lane.b32.xlu0 %v1005, 256
    %v1008 = vpop.permute.xlu0 %1007
    %v1009 = vlaneseq
    %v1010 = vshrl.u32 %v1009, 7
    %v1011 = vsub.s32 2, %v1010
    %v1012 = vrot.slane %v138, %v1011
    %1014 = vbcast.lane.b32.xlu0 %v1012, 256
    %v1015 = vpop.permute.xlu0 %1014
    %v1016 = vlaneseq
    %v1017 = vshrl.u32 %v1016, 7
    %v1018 = vsub.s32 3, %v1017
    %v1019 = vrot.slane %v138, %v1018
    %1021 = vbcast.lane.b32.xlu0 %v1019, 256
    %v1022 = vpop.permute.xlu0 %1021
    %v1023 = vlaneseq
    %v1024 = vshrl.u32 %v1023, 7
    %v1025 = vsub.s32 4, %v1024
    %v1026 = vrot.slane %v138, %v1025
    %1028 = vbcast.lane.b32.xlu0 %v1026, 256
    %v1029 = vpop.permute.xlu0 %1028
    %v1030 = vlaneseq
    %v1031 = vshrl.u32 %v1030, 7
    %v1032 = vsub.s32 5, %v1031
    %v1033 = vrot.slane %v138, %v1032
    %1035 = vbcast.lane.b32.xlu0 %v1033, 256
    %v1036 = vpop.permute.xlu0 %1035
    %v1037 = vlaneseq
    %v1038 = vshrl.u32 %v1037, 7
    %v1039 = vsub.s32 6, %v1038
    %v1040 = vrot.slane %v138, %v1039
    %1042 = vbcast.lane.b32.xlu0 %v1040, 256
    %v1043 = vpop.permute.xlu0 %1042
    %v1044 = vlaneseq
    %v1045 = vshrl.u32 %v1044, 7
    %v1046 = vsub.s32 7, %v1045
    %v1047 = vrot.slane %v138, %v1046
    %1049 = vbcast.lane.b32.xlu0 %v1047, 256
    %v1050 = vpop.permute.xlu0 %1049
    %v1051 = vlaneseq
    %v1052 = vshrl.u32 %v1051, 7
    %v1053 = vsub.s32 0, %v1052
    %v1054 = vrot.slane %v139, %v1053
    %1056 = vbcast.lane.b32.xlu0 %v1054, 256
    %v1057 = vpop.permute.xlu0 %1056
    %v1058 = vlaneseq
    %v1059 = vshrl.u32 %v1058, 7
    %v1060 = vsub.s32 1, %v1059
    %v1061 = vrot.slane %v139, %v1060
    %1063 = vbcast.lane.b32.xlu0 %v1061, 256
    %v1064 = vpop.permute.xlu0 %1063
    %v1065 = vlaneseq
    %v1066 = vshrl.u32 %v1065, 7
    %v1067 = vsub.s32 2, %v1066
    %v1068 = vrot.slane %v139, %v1067
    %1070 = vbcast.lane.b32.xlu0 %v1068, 256
    %v1071 = vpop.permute.xlu0 %1070
    %v1072 = vlaneseq
    %v1073 = vshrl.u32 %v1072, 7
    %v1074 = vsub.s32 3, %v1073
    %v1075 = vrot.slane %v139, %v1074
    %1077 = vbcast.lane.b32.xlu0 %v1075, 256
    %v1078 = vpop.permute.xlu0 %1077
    %v1079 = vlaneseq
    %v1080 = vshrl.u32 %v1079, 7
    %v1081 = vsub.s32 4, %v1080
    %v1082 = vrot.slane %v139, %v1081
    %1084 = vbcast.lane.b32.xlu0 %v1082, 256
    %v1085 = vpop.permute.xlu0 %1084
    %v1086 = vlaneseq
    %v1087 = vshrl.u32 %v1086, 7
    %v1088 = vsub.s32 5, %v1087
    %v1089 = vrot.slane %v139, %v1088
    %1091 = vbcast.lane.b32.xlu0 %v1089, 256
    %v1092 = vpop.permute.xlu0 %1091
    %v1093 = vlaneseq
    %v1094 = vshrl.u32 %v1093, 7
    %v1095 = vsub.s32 6, %v1094
    %v1096 = vrot.slane %v139, %v1095
    %1098 = vbcast.lane.b32.xlu0 %v1096, 256
    %v1099 = vpop.permute.xlu0 %1098
    %v1100 = vlaneseq
    %v1101 = vshrl.u32 %v1100, 7
    %v1102 = vsub.s32 7, %v1101
    %v1103 = vrot.slane %v139, %v1102
    %1105 = vbcast.lane.b32.xlu0 %v1103, 256
    %v1106 = vpop.permute.xlu0 %1105
    %v1107 = vlaneseq
    %v1108 = vshrl.u32 %v1107, 7
    %v1109 = vsub.s32 0, %v1108
    %v1110 = vrot.slane %v140, %v1109
    %1112 = vbcast.lane.b32.xlu0 %v1110, 256
    %v1113 = vpop.permute.xlu0 %1112
    %v1114 = vlaneseq
    %v1115 = vshrl.u32 %v1114, 7
    %v1116 = vsub.s32 1, %v1115
    %v1117 = vrot.slane %v140, %v1116
    %1119 = vbcast.lane.b32.xlu0 %v1117, 256
    %v1120 = vpop.permute.xlu0 %1119
    %v1121 = vlaneseq
    %v1122 = vshrl.u32 %v1121, 7
    %v1123 = vsub.s32 2, %v1122
    %v1124 = vrot.slane %v140, %v1123
    %1126 = vbcast.lane.b32.xlu0 %v1124, 256
    %v1127 = vpop.permute.xlu0 %1126
    %v1128 = vlaneseq
    %v1129 = vshrl.u32 %v1128, 7
    %v1130 = vsub.s32 3, %v1129
    %v1131 = vrot.slane %v140, %v1130
    %1133 = vbcast.lane.b32.xlu0 %v1131, 256
    %v1134 = vpop.permute.xlu0 %1133
    %v1135 = vlaneseq
    %v1136 = vshrl.u32 %v1135, 7
    %v1137 = vsub.s32 4, %v1136
    %v1138 = vrot.slane %v140, %v1137
    %1140 = vbcast.lane.b32.xlu0 %v1138, 256
    %v1141 = vpop.permute.xlu0 %1140
    %v1142 = vlaneseq
    %v1143 = vshrl.u32 %v1142, 7
    %v1144 = vsub.s32 5, %v1143
    %v1145 = vrot.slane %v140, %v1144
    %1147 = vbcast.lane.b32.xlu0 %v1145, 256
    %v1148 = vpop.permute.xlu0 %1147
    %v1149 = vlaneseq
    %v1150 = vshrl.u32 %v1149, 7
    %v1151 = vsub.s32 6, %v1150
    %v1152 = vrot.slane %v140, %v1151
    %1154 = vbcast.lane.b32.xlu0 %v1152, 256
    %v1155 = vpop.permute.xlu0 %1154
    %v1156 = vlaneseq
    %v1157 = vshrl.u32 %v1156, 7
    %v1158 = vsub.s32 7, %v1157
    %v1159 = vrot.slane %v140, %v1158
    %1161 = vbcast.lane.b32.xlu0 %v1159, 256
    %v1162 = vpop.permute.xlu0 %1161
    %v1163 = vlaneseq
    %v1164 = vshrl.u32 %v1163, 7
    %v1165 = vsub.s32 0, %v1164
    %v1166 = vrot.slane %v141, %v1165
    %1168 = vbcast.lane.b32.xlu0 %v1166, 256
    %v1169 = vpop.permute.xlu0 %1168
    %v1170 = vlaneseq
    %v1171 = vshrl.u32 %v1170, 7
    %v1172 = vsub.s32 1, %v1171
    %v1173 = vrot.slane %v141, %v1172
    %1175 = vbcast.lane.b32.xlu0 %v1173, 256
    %v1176 = vpop.permute.xlu0 %1175
    %v1177 = vlaneseq
    %v1178 = vshrl.u32 %v1177, 7
    %v1179 = vsub.s32 2, %v1178
    %v1180 = vrot.slane %v141, %v1179
    %1182 = vbcast.lane.b32.xlu0 %v1180, 256
    %v1183 = vpop.permute.xlu0 %1182
    %v1184 = vlaneseq
    %v1185 = vshrl.u32 %v1184, 7
    %v1186 = vsub.s32 3, %v1185
    %v1187 = vrot.slane %v141, %v1186
    %1189 = vbcast.lane.b32.xlu0 %v1187, 256
    %v1190 = vpop.permute.xlu0 %1189
    %v1191 = vlaneseq
    %v1192 = vshrl.u32 %v1191, 7
    %v1193 = vsub.s32 4, %v1192
    %v1194 = vrot.slane %v141, %v1193
    %1196 = vbcast.lane.b32.xlu0 %v1194, 256
    %v1197 = vpop.permute.xlu0 %1196
    %v1198 = vlaneseq
    %v1199 = vshrl.u32 %v1198, 7
    %v1200 = vsub.s32 5, %v1199
    %v1201 = vrot.slane %v141, %v1200
    %1203 = vbcast.lane.b32.xlu0 %v1201, 256
    %v1204 = vpop.permute.xlu0 %1203
    %v1205 = vlaneseq
    %v1206 = vshrl.u32 %v1205, 7
    %v1207 = vsub.s32 6, %v1206
    %v1208 = vrot.slane %v141, %v1207
    %1210 = vbcast.lane.b32.xlu0 %v1208, 256
    %v1211 = vpop.permute.xlu0 %1210
    %v1212 = vlaneseq
    %v1213 = vshrl.u32 %v1212, 7
    %v1214 = vsub.s32 7, %v1213
    %v1215 = vrot.slane %v141, %v1214
    %1217 = vbcast.lane.b32.xlu0 %v1215, 256
    %v1218 = vpop.permute.xlu0 %1217
    %v1219 = vlaneseq
    %v1220 = vshrl.u32 %v1219, 7
    %v1221 = vsub.s32 0, %v1220
    %v1222 = vrot.slane %v142, %v1221
    %1224 = vbcast.lane.b32.xlu0 %v1222, 256
    %v1225 = vpop.permute.xlu0 %1224
    %v1226 = vlaneseq
    %v1227 = vshrl.u32 %v1226, 7
    %v1228 = vsub.s32 1, %v1227
    %v1229 = vrot.slane %v142, %v1228
    %1231 = vbcast.lane.b32.xlu0 %v1229, 256
    %v1232 = vpop.permute.xlu0 %1231
    %v1233 = vlaneseq
    %v1234 = vshrl.u32 %v1233, 7
    %v1235 = vsub.s32 2, %v1234
    %v1236 = vrot.slane %v142, %v1235
    %1238 = vbcast.lane.b32.xlu0 %v1236, 256
    %v1239 = vpop.permute.xlu0 %1238
    %v1240 = vlaneseq
    %v1241 = vshrl.u32 %v1240, 7
    %v1242 = vsub.s32 3, %v1241
    %v1243 = vrot.slane %v142, %v1242
    %1245 = vbcast.lane.b32.xlu0 %v1243, 256
    %v1246 = vpop.permute.xlu0 %1245
    %v1247 = vlaneseq
    %v1248 = vshrl.u32 %v1247, 7
    %v1249 = vsub.s32 4, %v1248
    %v1250 = vrot.slane %v142, %v1249
    %1252 = vbcast.lane.b32.xlu0 %v1250, 256
    %v1253 = vpop.permute.xlu0 %1252
    %v1254 = vlaneseq
    %v1255 = vshrl.u32 %v1254, 7
    %v1256 = vsub.s32 5, %v1255
    %v1257 = vrot.slane %v142, %v1256
    %1259 = vbcast.lane.b32.xlu0 %v1257, 256
    %v1260 = vpop.permute.xlu0 %1259
    %v1261 = vlaneseq
    %v1262 = vshrl.u32 %v1261, 7
    %v1263 = vsub.s32 6, %v1262
    %v1264 = vrot.slane %v142, %v1263
    %1266 = vbcast.lane.b32.xlu0 %v1264, 256
    %v1267 = vpop.permute.xlu0 %1266
    %v1268 = vlaneseq
    %v1269 = vshrl.u32 %v1268, 7
    %v1270 = vsub.s32 7, %v1269
    %v1271 = vrot.slane %v142, %v1270
    %1273 = vbcast.lane.b32.xlu0 %v1271, 256
    %v1274 = vpop.permute.xlu0 %1273
    %v1275 = vlaneseq
    %v1276 = vshrl.u32 %v1275, 7
    %v1277 = vsub.s32 0, %v1276
    %v1278 = vrot.slane %v143, %v1277
    %1280 = vbcast.lane.b32.xlu0 %v1278, 256
    %v1281 = vpop.permute.xlu0 %1280
    %v1282 = vlaneseq
    %v1283 = vshrl.u32 %v1282, 7
    %v1284 = vsub.s32 1, %v1283
    %v1285 = vrot.slane %v143, %v1284
    %1287 = vbcast.lane.b32.xlu0 %v1285, 256
    %v1288 = vpop.permute.xlu0 %1287
    %v1289 = vlaneseq
    %v1290 = vshrl.u32 %v1289, 7
    %v1291 = vsub.s32 2, %v1290
    %v1292 = vrot.slane %v143, %v1291
    %1294 = vbcast.lane.b32.xlu0 %v1292, 256
    %v1295 = vpop.permute.xlu0 %1294
    %v1296 = vlaneseq
    %v1297 = vshrl.u32 %v1296, 7
    %v1298 = vsub.s32 3, %v1297
    %v1299 = vrot.slane %v143, %v1298
    %1301 = vbcast.lane.b32.xlu0 %v1299, 256
    %v1302 = vpop.permute.xlu0 %1301
    %v1303 = vlaneseq
    %v1304 = vshrl.u32 %v1303, 7
    %v1305 = vsub.s32 4, %v1304
    %v1306 = vrot.slane %v143, %v1305
    %1308 = vbcast.lane.b32.xlu0 %v1306, 256
    %v1309 = vpop.permute.xlu0 %1308
    %v1310 = vlaneseq
    %v1311 = vshrl.u32 %v1310, 7
    %v1312 = vsub.s32 5, %v1311
    %v1313 = vrot.slane %v143, %v1312
    %1315 = vbcast.lane.b32.xlu0 %v1313, 256
    %v1316 = vpop.permute.xlu0 %1315
    %v1317 = vlaneseq
    %v1318 = vshrl.u32 %v1317, 7
    %v1319 = vsub.s32 6, %v1318
    %v1320 = vrot.slane %v143, %v1319
    %1322 = vbcast.lane.b32.xlu0 %v1320, 256
    %v1323 = vpop.permute.xlu0 %1322
    %v1324 = vlaneseq
    %v1325 = vshrl.u32 %v1324, 7
    %v1326 = vsub.s32 7, %v1325
    %v1327 = vrot.slane %v143, %v1326
    %1329 = vbcast.lane.b32.xlu0 %v1327, 256
    %v1330 = vpop.permute.xlu0 %1329
    %v1331 = vlaneseq
    %v1332 = vshrl.u32 %v1331, 7
    %v1333 = vsub.s32 0, %v1332
    %v1334 = vrot.slane %v144, %v1333
    %1336 = vbcast.lane.b32.xlu0 %v1334, 256
    %v1337 = vpop.permute.xlu0 %1336
    %v1338 = vlaneseq
    %v1339 = vshrl.u32 %v1338, 7
    %v1340 = vsub.s32 1, %v1339
    %v1341 = vrot.slane %v144, %v1340
    %1343 = vbcast.lane.b32.xlu0 %v1341, 256
    %v1344 = vpop.permute.xlu0 %1343
    %v1345 = vlaneseq
    %v1346 = vshrl.u32 %v1345, 7
    %v1347 = vsub.s32 2, %v1346
    %v1348 = vrot.slane %v144, %v1347
    %1350 = vbcast.lane.b32.xlu0 %v1348, 256
    %v1351 = vpop.permute.xlu0 %1350
    %v1352 = vlaneseq
    %v1353 = vshrl.u32 %v1352, 7
    %v1354 = vsub.s32 3, %v1353
    %v1355 = vrot.slane %v144, %v1354
    %1357 = vbcast.lane.b32.xlu0 %v1355, 256
    %v1358 = vpop.permute.xlu0 %1357
    %v1359 = vlaneseq
    %v1360 = vshrl.u32 %v1359, 7
    %v1361 = vsub.s32 4, %v1360
    %v1362 = vrot.slane %v144, %v1361
    %1364 = vbcast.lane.b32.xlu0 %v1362, 256
    %v1365 = vpop.permute.xlu0 %1364
    %v1366 = vlaneseq
    %v1367 = vshrl.u32 %v1366, 7
    %v1368 = vsub.s32 5, %v1367
    %v1369 = vrot.slane %v144, %v1368
    %1371 = vbcast.lane.b32.xlu0 %v1369, 256
    %v1372 = vpop.permute.xlu0 %1371
    %v1373 = vlaneseq
    %v1374 = vshrl.u32 %v1373, 7
    %v1375 = vsub.s32 6, %v1374
    %v1376 = vrot.slane %v144, %v1375
    %1378 = vbcast.lane.b32.xlu0 %v1376, 256
    %v1379 = vpop.permute.xlu0 %1378
    %v1380 = vlaneseq
    %v1381 = vshrl.u32 %v1380, 7
    %v1382 = vsub.s32 7, %v1381
    %v1383 = vrot.slane %v144, %v1382
    %1385 = vbcast.lane.b32.xlu0 %v1383, 256
    %v1386 = vpop.permute.xlu0 %1385
    %v1387 = vlaneseq
    %v1388 = vshrl.u32 %v1387, 7
    %v1389 = vsub.s32 0, %v1388
    %v1390 = vrot.slane %v145, %v1389
    %1392 = vbcast.lane.b32.xlu0 %v1390, 256
    %v1393 = vpop.permute.xlu0 %1392
    %v1394 = vlaneseq
    %v1395 = vshrl.u32 %v1394, 7
    %v1396 = vsub.s32 1, %v1395
    %v1397 = vrot.slane %v145, %v1396
    %1399 = vbcast.lane.b32.xlu0 %v1397, 256
    %v1400 = vpop.permute.xlu0 %1399
    %v1401 = vlaneseq
    %v1402 = vshrl.u32 %v1401, 7
    %v1403 = vsub.s32 2, %v1402
    %v1404 = vrot.slane %v145, %v1403
    %1406 = vbcast.lane.b32.xlu0 %v1404, 256
    %v1407 = vpop.permute.xlu0 %1406
    %v1408 = vlaneseq
    %v1409 = vshrl.u32 %v1408, 7
    %v1410 = vsub.s32 3, %v1409
    %v1411 = vrot.slane %v145, %v1410
    %1413 = vbcast.lane.b32.xlu0 %v1411, 256
    %v1414 = vpop.permute.xlu0 %1413
    %v1415 = vlaneseq
    %v1416 = vshrl.u32 %v1415, 7
    %v1417 = vsub.s32 4, %v1416
    %v1418 = vrot.slane %v145, %v1417
    %1420 = vbcast.lane.b32.xlu0 %v1418, 256
    %v1421 = vpop.permute.xlu0 %1420
    %v1422 = vlaneseq
    %v1423 = vshrl.u32 %v1422, 7
    %v1424 = vsub.s32 5, %v1423
    %v1425 = vrot.slane %v145, %v1424
    %1427 = vbcast.lane.b32.xlu0 %v1425, 256
    %v1428 = vpop.permute.xlu0 %1427
    %v1429 = vlaneseq
    %v1430 = vshrl.u32 %v1429, 7
    %v1431 = vsub.s32 6, %v1430
    %v1432 = vrot.slane %v145, %v1431
    %1434 = vbcast.lane.b32.xlu0 %v1432, 256
    %v1435 = vpop.permute.xlu0 %1434
    %v1436 = vlaneseq
    %v1437 = vshrl.u32 %v1436, 7
    %v1438 = vsub.s32 7, %v1437
    %v1439 = vrot.slane %v145, %v1438
    %1441 = vbcast.lane.b32.xlu0 %v1439, 256
    %v1442 = vpop.permute.xlu0 %1441
    %v1443 = vlaneseq
    %v1444 = vshrl.u32 %v1443, 7
    %v1445 = vsub.s32 0, %v1444
    %v1446 = vrot.slane %v146, %v1445
    %1448 = vbcast.lane.b32.xlu0 %v1446, 256
    %v1449 = vpop.permute.xlu0 %1448
    %v1450 = vlaneseq
    %v1451 = vshrl.u32 %v1450, 7
    %v1452 = vsub.s32 1, %v1451
    %v1453 = vrot.slane %v146, %v1452
    %1455 = vbcast.lane.b32.xlu0 %v1453, 256
    %v1456 = vpop.permute.xlu0 %1455
    %v1457 = vlaneseq
    %v1458 = vshrl.u32 %v1457, 7
    %v1459 = vsub.s32 2, %v1458
    %v1460 = vrot.slane %v146, %v1459
    %1462 = vbcast.lane.b32.xlu0 %v1460, 256
    %v1463 = vpop.permute.xlu0 %1462
    %v1464 = vlaneseq
    %v1465 = vshrl.u32 %v1464, 7
    %v1466 = vsub.s32 3, %v1465
    %v1467 = vrot.slane %v146, %v1466
    %1469 = vbcast.lane.b32.xlu0 %v1467, 256
    %v1470 = vpop.permute.xlu0 %1469
    %v1471 = vlaneseq
    %v1472 = vshrl.u32 %v1471, 7
    %v1473 = vsub.s32 4, %v1472
    %v1474 = vrot.slane %v146, %v1473
    %1476 = vbcast.lane.b32.xlu0 %v1474, 256
    %v1477 = vpop.permute.xlu0 %1476
    %v1478 = vlaneseq
    %v1479 = vshrl.u32 %v1478, 7
    %v1480 = vsub.s32 5, %v1479
    %v1481 = vrot.slane %v146, %v1480
    %1483 = vbcast.lane.b32.xlu0 %v1481, 256
    %v1484 = vpop.permute.xlu0 %1483
    %v1485 = vlaneseq
    %v1486 = vshrl.u32 %v1485, 7
    %v1487 = vsub.s32 6, %v1486
    %v1488 = vrot.slane %v146, %v1487
    %1490 = vbcast.lane.b32.xlu0 %v1488, 256
    %v1491 = vpop.permute.xlu0 %1490
    %v1492 = vlaneseq
    %v1493 = vshrl.u32 %v1492, 7
    %v1494 = vsub.s32 7, %v1493
    %v1495 = vrot.slane %v146, %v1494
    %1497 = vbcast.lane.b32.xlu0 %v1495, 256
    %v1498 = vpop.permute.xlu0 %1497
    %v1499 = vlaneseq
    %v1500 = vshrl.u32 %v1499, 7
    %v1501 = vsub.s32 0, %v1500
    %v1502 = vrot.slane %v147, %v1501
    %1504 = vbcast.lane.b32.xlu0 %v1502, 256
    %v1505 = vpop.permute.xlu0 %1504
    %v1506 = vlaneseq
    %v1507 = vshrl.u32 %v1506, 7
    %v1508 = vsub.s32 1, %v1507
    %v1509 = vrot.slane %v147, %v1508
    %1511 = vbcast.lane.b32.xlu0 %v1509, 256
    %v1512 = vpop.permute.xlu0 %1511
    %v1513 = vlaneseq
    %v1514 = vshrl.u32 %v1513, 7
    %v1515 = vsub.s32 2, %v1514
    %v1516 = vrot.slane %v147, %v1515
    %1518 = vbcast.lane.b32.xlu0 %v1516, 256
    %v1519 = vpop.permute.xlu0 %1518
    %v1520 = vlaneseq
    %v1521 = vshrl.u32 %v1520, 7
    %v1522 = vsub.s32 3, %v1521
    %v1523 = vrot.slane %v147, %v1522
    %1525 = vbcast.lane.b32.xlu0 %v1523, 256
    %v1526 = vpop.permute.xlu0 %1525
    %v1527 = vlaneseq
    %v1528 = vshrl.u32 %v1527, 7
    %v1529 = vsub.s32 4, %v1528
    %v1530 = vrot.slane %v147, %v1529
    %1532 = vbcast.lane.b32.xlu0 %v1530, 256
    %v1533 = vpop.permute.xlu0 %1532
    %v1534 = vlaneseq
    %v1535 = vshrl.u32 %v1534, 7
    %v1536 = vsub.s32 5, %v1535
    %v1537 = vrot.slane %v147, %v1536
    %1539 = vbcast.lane.b32.xlu0 %v1537, 256
    %v1540 = vpop.permute.xlu0 %1539
    %v1541 = vlaneseq
    %v1542 = vshrl.u32 %v1541, 7
    %v1543 = vsub.s32 6, %v1542
    %v1544 = vrot.slane %v147, %v1543
    %1546 = vbcast.lane.b32.xlu0 %v1544, 256
    %v1547 = vpop.permute.xlu0 %1546
    %v1548 = vlaneseq
    %v1549 = vshrl.u32 %v1548, 7
    %v1550 = vsub.s32 7, %v1549
    %v1551 = vrot.slane %v147, %v1550
    %1553 = vbcast.lane.b32.xlu0 %v1551, 256
    %v1554 = vpop.permute.xlu0 %1553
    %v1555 = vlaneseq
    %v1556 = vshrl.u32 %v1555, 7
    %v1557 = vsub.s32 0, %v1556
    %v1558 = vrot.slane %v148, %v1557
    %1560 = vbcast.lane.b32.xlu0 %v1558, 256
    %v1561 = vpop.permute.xlu0 %1560
    %v1562 = vlaneseq
    %v1563 = vshrl.u32 %v1562, 7
    %v1564 = vsub.s32 1, %v1563
    %v1565 = vrot.slane %v148, %v1564
    %1567 = vbcast.lane.b32.xlu0 %v1565, 256
    %v1568 = vpop.permute.xlu0 %1567
    %v1569 = vlaneseq
    %v1570 = vshrl.u32 %v1569, 7
    %v1571 = vsub.s32 2, %v1570
    %v1572 = vrot.slane %v148, %v1571
    %1574 = vbcast.lane.b32.xlu0 %v1572, 256
    %v1575 = vpop.permute.xlu0 %1574
    %v1576 = vlaneseq
    %v1577 = vshrl.u32 %v1576, 7
    %v1578 = vsub.s32 3, %v1577
    %v1579 = vrot.slane %v148, %v1578
    %1581 = vbcast.lane.b32.xlu0 %v1579, 256
    %v1582 = vpop.permute.xlu0 %1581
    %v1583 = vlaneseq
    %v1584 = vshrl.u32 %v1583, 7
    %v1585 = vsub.s32 4, %v1584
    %v1586 = vrot.slane %v148, %v1585
    %1588 = vbcast.lane.b32.xlu0 %v1586, 256
    %v1589 = vpop.permute.xlu0 %1588
    %v1590 = vlaneseq
    %v1591 = vshrl.u32 %v1590, 7
    %v1592 = vsub.s32 5, %v1591
    %v1593 = vrot.slane %v148, %v1592
    %1595 = vbcast.lane.b32.xlu0 %v1593, 256
    %v1596 = vpop.permute.xlu0 %1595
    %v1597 = vlaneseq
    %v1598 = vshrl.u32 %v1597, 7
    %v1599 = vsub.s32 6, %v1598
    %v1600 = vrot.slane %v148, %v1599
    %1602 = vbcast.lane.b32.xlu0 %v1600, 256
    %v1603 = vpop.permute.xlu0 %1602
    %v1604 = vlaneseq
    %v1605 = vshrl.u32 %v1604, 7
    %v1606 = vsub.s32 7, %v1605
    %v1607 = vrot.slane %v148, %v1606
    %1609 = vbcast.lane.b32.xlu0 %v1607, 256
    %v1610 = vpop.permute.xlu0 %1609
    %v1611 = vlaneseq
    %v1612 = vshrl.u32 %v1611, 7
    %v1613 = vsub.s32 0, %v1612
    %v1614 = vrot.slane %v149, %v1613
    %1616 = vbcast.lane.b32.xlu0 %v1614, 256
    %v1617 = vpop.permute.xlu0 %1616
    %v1618 = vlaneseq
    %v1619 = vshrl.u32 %v1618, 7
    %v1620 = vsub.s32 1, %v1619
    %v1621 = vrot.slane %v149, %v1620
    %1623 = vbcast.lane.b32.xlu0 %v1621, 256
    %v1624 = vpop.permute.xlu0 %1623
    %v1625 = vlaneseq
    %v1626 = vshrl.u32 %v1625, 7
    %v1627 = vsub.s32 2, %v1626
    %v1628 = vrot.slane %v149, %v1627
    %1630 = vbcast.lane.b32.xlu0 %v1628, 256
    %v1631 = vpop.permute.xlu0 %1630
    %v1632 = vlaneseq
    %v1633 = vshrl.u32 %v1632, 7
    %v1634 = vsub.s32 3, %v1633
    %v1635 = vrot.slane %v149, %v1634
    %1637 = vbcast.lane.b32.xlu0 %v1635, 256
    %v1638 = vpop.permute.xlu0 %1637
    %v1639 = vlaneseq
    %v1640 = vshrl.u32 %v1639, 7
    %v1641 = vsub.s32 4, %v1640
    %v1642 = vrot.slane %v149, %v1641
    %1644 = vbcast.lane.b32.xlu0 %v1642, 256
    %v1645 = vpop.permute.xlu0 %1644
    %v1646 = vlaneseq
    %v1647 = vshrl.u32 %v1646, 7
    %v1648 = vsub.s32 5, %v1647
    %v1649 = vrot.slane %v149, %v1648
    %1651 = vbcast.lane.b32.xlu0 %v1649, 256
    %v1652 = vpop.permute.xlu0 %1651
    %v1653 = vlaneseq
    %v1654 = vshrl.u32 %v1653, 7
    %v1655 = vsub.s32 6, %v1654
    %v1656 = vrot.slane %v149, %v1655
    %1658 = vbcast.lane.b32.xlu0 %v1656, 256
    %v1659 = vpop.permute.xlu0 %1658
    %v1660 = vlaneseq
    %v1661 = vshrl.u32 %v1660, 7
    %v1662 = vsub.s32 7, %v1661
    %v1663 = vrot.slane %v149, %v1662
    %1665 = vbcast.lane.b32.xlu0 %v1663, 256
    %v1666 = vpop.permute.xlu0 %1665
    %v1667 = vlaneseq
    %v1668 = vshrl.u32 %v1667, 7
    %v1669 = vsub.s32 0, %v1668
    %v1670 = vrot.slane %v150, %v1669
    %1672 = vbcast.lane.b32.xlu0 %v1670, 256
    %v1673 = vpop.permute.xlu0 %1672
    %v1674 = vlaneseq
    %v1675 = vshrl.u32 %v1674, 7
    %v1676 = vsub.s32 1, %v1675
    %v1677 = vrot.slane %v150, %v1676
    %1679 = vbcast.lane.b32.xlu0 %v1677, 256
    %v1680 = vpop.permute.xlu0 %1679
    %v1681 = vlaneseq
    %v1682 = vshrl.u32 %v1681, 7
    %v1683 = vsub.s32 2, %v1682
    %v1684 = vrot.slane %v150, %v1683
    %1686 = vbcast.lane.b32.xlu0 %v1684, 256
    %v1687 = vpop.permute.xlu0 %1686
    %v1688 = vlaneseq
    %v1689 = vshrl.u32 %v1688, 7
    %v1690 = vsub.s32 3, %v1689
    %v1691 = vrot.slane %v150, %v1690
    %1693 = vbcast.lane.b32.xlu0 %v1691, 256
    %v1694 = vpop.permute.xlu0 %1693
    %v1695 = vlaneseq
    %v1696 = vshrl.u32 %v1695, 7
    %v1697 = vsub.s32 4, %v1696
    %v1698 = vrot.slane %v150, %v1697
    %1700 = vbcast.lane.b32.xlu0 %v1698, 256
    %v1701 = vpop.permute.xlu0 %1700
    %v1702 = vlaneseq
    %v1703 = vshrl.u32 %v1702, 7
    %v1704 = vsub.s32 5, %v1703
    %v1705 = vrot.slane %v150, %v1704
    %1707 = vbcast.lane.b32.xlu0 %v1705, 256
    %v1708 = vpop.permute.xlu0 %1707
    %v1709 = vlaneseq
    %v1710 = vshrl.u32 %v1709, 7
    %v1711 = vsub.s32 6, %v1710
    %v1712 = vrot.slane %v150, %v1711
    %1714 = vbcast.lane.b32.xlu0 %v1712, 256
    %v1715 = vpop.permute.xlu0 %1714
    %v1716 = vlaneseq
    %v1717 = vshrl.u32 %v1716, 7
    %v1718 = vsub.s32 7, %v1717
    %v1719 = vrot.slane %v150, %v1718
    %1721 = vbcast.lane.b32.xlu0 %v1719, 256
    %v1722 = vpop.permute.xlu0 %1721
    %v1723 = vlaneseq
    %v1724 = vshrl.u32 %v1723, 7
    %v1725 = vsub.s32 0, %v1724
    %v1726 = vrot.slane %v151, %v1725
    %1728 = vbcast.lane.b32.xlu0 %v1726, 256
    %v1729 = vpop.permute.xlu0 %1728
    %v1730 = vlaneseq
    %v1731 = vshrl.u32 %v1730, 7
    %v1732 = vsub.s32 1, %v1731
    %v1733 = vrot.slane %v151, %v1732
    %1735 = vbcast.lane.b32.xlu0 %v1733, 256
    %v1736 = vpop.permute.xlu0 %1735
    %v1737 = vlaneseq
    %v1738 = vshrl.u32 %v1737, 7
    %v1739 = vsub.s32 2, %v1738
    %v1740 = vrot.slane %v151, %v1739
    %1742 = vbcast.lane.b32.xlu0 %v1740, 256
    %v1743 = vpop.permute.xlu0 %1742
    %v1744 = vlaneseq
    %v1745 = vshrl.u32 %v1744, 7
    %v1746 = vsub.s32 3, %v1745
    %v1747 = vrot.slane %v151, %v1746
    %1749 = vbcast.lane.b32.xlu0 %v1747, 256
    %v1750 = vpop.permute.xlu0 %1749
    %v1751 = vlaneseq
    %v1752 = vshrl.u32 %v1751, 7
    %v1753 = vsub.s32 4, %v1752
    %v1754 = vrot.slane %v151, %v1753
    %1756 = vbcast.lane.b32.xlu0 %v1754, 256
    %v1757 = vpop.permute.xlu0 %1756
    %v1758 = vlaneseq
    %v1759 = vshrl.u32 %v1758, 7
    %v1760 = vsub.s32 5, %v1759
    %v1761 = vrot.slane %v151, %v1760
    %1763 = vbcast.lane.b32.xlu0 %v1761, 256
    %v1764 = vpop.permute.xlu0 %1763
    %v1765 = vlaneseq
    %v1766 = vshrl.u32 %v1765, 7
    %v1767 = vsub.s32 6, %v1766
    %v1768 = vrot.slane %v151, %v1767
    %1770 = vbcast.lane.b32.xlu0 %v1768, 256
    %v1771 = vpop.permute.xlu0 %1770
    %v1772 = vlaneseq
    %v1773 = vshrl.u32 %v1772, 7
    %v1774 = vsub.s32 7, %v1773
    %v1775 = vrot.slane %v151, %v1774
    %1777 = vbcast.lane.b32.xlu0 %v1775, 256
    %v1778 = vpop.permute.xlu0 %1777
    %v1779 = vlaneseq
    %v1780 = vshrl.u32 %v1779, 7
    %v1781 = vsub.s32 0, %v1780
    %v1782 = vrot.slane %v152, %v1781
    %1784 = vbcast.lane.b32.xlu0 %v1782, 256
    %v1785 = vpop.permute.xlu0 %1784
    %v1786 = vlaneseq
    %v1787 = vshrl.u32 %v1786, 7
    %v1788 = vsub.s32 1, %v1787
    %v1789 = vrot.slane %v152, %v1788
    %1791 = vbcast.lane.b32.xlu0 %v1789, 256
    %v1792 = vpop.permute.xlu0 %1791
    %v1793 = vlaneseq
    %v1794 = vshrl.u32 %v1793, 7
    %v1795 = vsub.s32 2, %v1794
    %v1796 = vrot.slane %v152, %v1795
    %1798 = vbcast.lane.b32.xlu0 %v1796, 256
    %v1799 = vpop.permute.xlu0 %1798
    %v1800 = vlaneseq
    %v1801 = vshrl.u32 %v1800, 7
    %v1802 = vsub.s32 3, %v1801
    %v1803 = vrot.slane %v152, %v1802
    %1805 = vbcast.lane.b32.xlu0 %v1803, 256
    %v1806 = vpop.permute.xlu0 %1805
    %v1807 = vlaneseq
    %v1808 = vshrl.u32 %v1807, 7
    %v1809 = vsub.s32 4, %v1808
    %v1810 = vrot.slane %v152, %v1809
    %1812 = vbcast.lane.b32.xlu0 %v1810, 256
    %v1813 = vpop.permute.xlu0 %1812
    %v1814 = vlaneseq
    %v1815 = vshrl.u32 %v1814, 7
    %v1816 = vsub.s32 5, %v1815
    %v1817 = vrot.slane %v152, %v1816
    %1819 = vbcast.lane.b32.xlu0 %v1817, 256
    %v1820 = vpop.permute.xlu0 %1819
    %v1821 = vlaneseq
    %v1822 = vshrl.u32 %v1821, 7
    %v1823 = vsub.s32 6, %v1822
    %v1824 = vrot.slane %v152, %v1823
    %1826 = vbcast.lane.b32.xlu0 %v1824, 256
    %v1827 = vpop.permute.xlu0 %1826
    %v1828 = vlaneseq
    %v1829 = vshrl.u32 %v1828, 7
    %v1830 = vsub.s32 7, %v1829
    %v1831 = vrot.slane %v152, %v1830
    %1833 = vbcast.lane.b32.xlu0 %v1831, 256
    %v1834 = vpop.permute.xlu0 %1833
    %v1835 = vlaneseq
    %v1836 = vshrl.u32 %v1835, 7
    %v1837 = vsub.s32 0, %v1836
    %v1838 = vrot.slane %v153, %v1837
    %1840 = vbcast.lane.b32.xlu0 %v1838, 256
    %v1841 = vpop.permute.xlu0 %1840
    %v1842 = vlaneseq
    %v1843 = vshrl.u32 %v1842, 7
    %v1844 = vsub.s32 1, %v1843
    %v1845 = vrot.slane %v153, %v1844
    %1847 = vbcast.lane.b32.xlu0 %v1845, 256
    %v1848 = vpop.permute.xlu0 %1847
    %v1849 = vlaneseq
    %v1850 = vshrl.u32 %v1849, 7
    %v1851 = vsub.s32 2, %v1850
    %v1852 = vrot.slane %v153, %v1851
    %1854 = vbcast.lane.b32.xlu0 %v1852, 256
    %v1855 = vpop.permute.xlu0 %1854
    %v1856 = vlaneseq
    %v1857 = vshrl.u32 %v1856, 7
    %v1858 = vsub.s32 3, %v1857
    %v1859 = vrot.slane %v153, %v1858
    %1861 = vbcast.lane.b32.xlu0 %v1859, 256
    %v1862 = vpop.permute.xlu0 %1861
    %v1863 = vlaneseq
    %v1864 = vshrl.u32 %v1863, 7
    %v1865 = vsub.s32 4, %v1864
    %v1866 = vrot.slane %v153, %v1865
    %1868 = vbcast.lane.b32.xlu0 %v1866, 256
    %v1869 = vpop.permute.xlu0 %1868
    %v1870 = vlaneseq
    %v1871 = vshrl.u32 %v1870, 7
    %v1872 = vsub.s32 5, %v1871
    %v1873 = vrot.slane %v153, %v1872
    %1875 = vbcast.lane.b32.xlu0 %v1873, 256
    %v1876 = vpop.permute.xlu0 %1875
    %v1877 = vlaneseq
    %v1878 = vshrl.u32 %v1877, 7
    %v1879 = vsub.s32 6, %v1878
    %v1880 = vrot.slane %v153, %v1879
    %1882 = vbcast.lane.b32.xlu0 %v1880, 256
    %v1883 = vpop.permute.xlu0 %1882
    %v1884 = vlaneseq
    %v1885 = vshrl.u32 %v1884, 7
    %v1886 = vsub.s32 7, %v1885
    %v1887 = vrot.slane %v153, %v1886
    %1889 = vbcast.lane.b32.xlu0 %v1887, 256
    %v1890 = vpop.permute.xlu0 %1889
    %v1891 = vlaneseq
    %v1892 = vshrl.u32 %v1891, 7
    %v1893 = vsub.s32 0, %v1892
    %v1894 = vrot.slane %v154, %v1893
    %1896 = vbcast.lane.b32.xlu0 %v1894, 256
    %v1897 = vpop.permute.xlu0 %1896
    %v1898 = vlaneseq
    %v1899 = vshrl.u32 %v1898, 7
    %v1900 = vsub.s32 1, %v1899
    %v1901 = vrot.slane %v154, %v1900
    %1903 = vbcast.lane.b32.xlu0 %v1901, 256
    %v1904 = vpop.permute.xlu0 %1903
    %v1905 = vlaneseq
    %v1906 = vshrl.u32 %v1905, 7
    %v1907 = vsub.s32 2, %v1906
    %v1908 = vrot.slane %v154, %v1907
    %1910 = vbcast.lane.b32.xlu0 %v1908, 256
    %v1911 = vpop.permute.xlu0 %1910
    %v1912 = vlaneseq
    %v1913 = vshrl.u32 %v1912, 7
    %v1914 = vsub.s32 3, %v1913
    %v1915 = vrot.slane %v154, %v1914
    %1917 = vbcast.lane.b32.xlu0 %v1915, 256
    %v1918 = vpop.permute.xlu0 %1917
    %v1919 = vlaneseq
    %v1920 = vshrl.u32 %v1919, 7
    %v1921 = vsub.s32 4, %v1920
    %v1922 = vrot.slane %v154, %v1921
    %1924 = vbcast.lane.b32.xlu0 %v1922, 256
    %v1925 = vpop.permute.xlu0 %1924
    %v1926 = vlaneseq
    %v1927 = vshrl.u32 %v1926, 7
    %v1928 = vsub.s32 5, %v1927
    %v1929 = vrot.slane %v154, %v1928
    %1931 = vbcast.lane.b32.xlu0 %v1929, 256
    %v1932 = vpop.permute.xlu0 %1931
    %v1933 = vlaneseq
    %v1934 = vshrl.u32 %v1933, 7
    %v1935 = vsub.s32 6, %v1934
    %v1936 = vrot.slane %v154, %v1935
    %1938 = vbcast.lane.b32.xlu0 %v1936, 256
    %v1939 = vpop.permute.xlu0 %1938
    %v1940 = vlaneseq
    %v1941 = vshrl.u32 %v1940, 7
    %v1942 = vsub.s32 7, %v1941
    %v1943 = vrot.slane %v154, %v1942
    %1945 = vbcast.lane.b32.xlu0 %v1943, 256
    %v1946 = vpop.permute.xlu0 %1945
    %v1979 = vcombine.high %v27, %v27
    %v1981 = vunpack.c.l.s4 1966171168
    %v1982 = vunpack.c.0.s8 %v1981
    %v1983 = vlaneseq
    %v1984 = vshrl.u32 %v1983, 7
    %v1985 = vsub.s32 %v1982, %v1984
    %v1986 = vrot.slane %v27, %v1985
    %v1988 = vunpack.c.l.s4 1966171168
    %v1989 = vunpack.c.0.s8 %v1988
    %v1990 = vlaneseq
    %v1991 = vshrl.u32 %v1990, 7
    %v1992 = vsub.s32 %v1989, %v1991
    %v1993 = vrot.slane %v1979, %v1992
    %v1994 = vcombine.high %v1986, %v1986
    %v1995 = vcombine.high %v1993, %v1993
    %v1997 = vunpack.c.l.s4 1966171168
    %v1998 = vunpack.c.0.s8 %v1997
    %v1999 = vlaneseq
    %v2000 = vshrl.u32 %v1999, 7
    %v2001 = vsub.s32 %v1998, %v2000
    %v2002 = vrot.slane %v1986, %v2001
    %v2004 = vunpack.c.l.s4 1966171168
    %v2005 = vunpack.c.0.s8 %v2004
    %v2006 = vlaneseq
    %v2007 = vshrl.u32 %v2006, 7
    %v2008 = vsub.s32 %v2005, %v2007
    %v2009 = vrot.slane %v1993, %v2008
    %v2011 = vunpack.c.l.s4 1966171168
    %v2012 = vunpack.c.0.s8 %v2011
    %v2013 = vlaneseq
    %v2014 = vshrl.u32 %v2013, 7
    %v2015 = vsub.s32 %v2012, %v2014
    %v2016 = vrot.slane %v1994, %v2015
    %v2018 = vunpack.c.l.s4 1966171168
    %v2019 = vunpack.c.0.s8 %v2018
    %v2020 = vlaneseq
    %v2021 = vshrl.u32 %v2020, 7
    %v2022 = vsub.s32 %v2019, %v2021
    %v2023 = vrot.slane %v1995, %v2022
    %v2024 = vcombine.high %v2002, %v2002
    %v2025 = vcombine.high %v2009, %v2009
    %v2026 = vcombine.high %v2016, %v2016
    %v2027 = vcombine.high %v2023, %v2023
    %v2028 = vcombine.high %v28, %v28
    %v2030 = vunpack.c.l.s4 1966171168
    %v2031 = vunpack.c.0.s8 %v2030
    %v2032 = vlaneseq
    %v2033 = vshrl.u32 %v2032, 7
    %v2034 = vsub.s32 %v2031, %v2033
    %v2035 = vrot.slane %v28, %v2034
    %v2037 = vunpack.c.l.s4 1966171168
    %v2038 = vunpack.c.0.s8 %v2037
    %v2039 = vlaneseq
    %v2040 = vshrl.u32 %v2039, 7
    %v2041 = vsub.s32 %v2038, %v2040
    %v2042 = vrot.slane %v2028, %v2041
    %v2043 = vcombine.high %v2035, %v2035
    %v2044 = vcombine.high %v2042, %v2042
    %v2046 = vunpack.c.l.s4 1966171168
    %v2047 = vunpack.c.0.s8 %v2046
    %v2048 = vlaneseq
    %v2049 = vshrl.u32 %v2048, 7
    %v2050 = vsub.s32 %v2047, %v2049
    %v2051 = vrot.slane %v2035, %v2050
    %v2053 = vunpack.c.l.s4 1966171168
    %v2054 = vunpack.c.0.s8 %v2053
    %v2055 = vlaneseq
    %v2056 = vshrl.u32 %v2055, 7
    %v2057 = vsub.s32 %v2054, %v2056
    %v2058 = vrot.slane %v2042, %v2057
    %v2060 = vunpack.c.l.s4 1966171168
    %v2061 = vunpack.c.0.s8 %v2060
    %v2062 = vlaneseq
    %v2063 = vshrl.u32 %v2062, 7
    %v2064 = vsub.s32 %v2061, %v2063
    %v2065 = vrot.slane %v2043, %v2064
    %v2067 = vunpack.c.l.s4 1966171168
    %v2068 = vunpack.c.0.s8 %v2067
    %v2069 = vlaneseq
    %v2070 = vshrl.u32 %v2069, 7
    %v2071 = vsub.s32 %v2068, %v2070
    %v2072 = vrot.slane %v2044, %v2071
    %v2073 = vcombine.high %v2051, %v2051
    %v2074 = vcombine.high %v2058, %v2058
    %v2075 = vcombine.high %v2065, %v2065
    %v2076 = vcombine.high %v2072, %v2072
    %v2077 = vcombine.high %v29, %v29
    %v2079 = vunpack.c.l.s4 1966171168
    %v2080 = vunpack.c.0.s8 %v2079
    %v2081 = vlaneseq
    %v2082 = vshrl.u32 %v2081, 7
    %v2083 = vsub.s32 %v2080, %v2082
    %v2084 = vrot.slane %v29, %v2083
    %v2086 = vunpack.c.l.s4 1966171168
    %v2087 = vunpack.c.0.s8 %v2086
    %v2088 = vlaneseq
    %v2089 = vshrl.u32 %v2088, 7
    %v2090 = vsub.s32 %v2087, %v2089
    %v2091 = vrot.slane %v2077, %v2090
    %v2092 = vcombine.high %v2084, %v2084
    %v2093 = vcombine.high %v2091, %v2091
    %v2095 = vunpack.c.l.s4 1966171168
    %v2096 = vunpack.c.0.s8 %v2095
    %v2097 = vlaneseq
    %v2098 = vshrl.u32 %v2097, 7
    %v2099 = vsub.s32 %v2096, %v2098
    %v2100 = vrot.slane %v2084, %v2099
    %v2102 = vunpack.c.l.s4 1966171168
    %v2103 = vunpack.c.0.s8 %v2102
    %v2104 = vlaneseq
    %v2105 = vshrl.u32 %v2104, 7
    %v2106 = vsub.s32 %v2103, %v2105
    %v2107 = vrot.slane %v2091, %v2106
    %v2109 = vunpack.c.l.s4 1966171168
    %v2110 = vunpack.c.0.s8 %v2109
    %v2111 = vlaneseq
    %v2112 = vshrl.u32 %v2111, 7
    %v2113 = vsub.s32 %v2110, %v2112
    %v2114 = vrot.slane %v2092, %v2113
    %v2116 = vunpack.c.l.s4 1966171168
    %v2117 = vunpack.c.0.s8 %v2116
    %v2118 = vlaneseq
    %v2119 = vshrl.u32 %v2118, 7
    %v2120 = vsub.s32 %v2117, %v2119
    %v2121 = vrot.slane %v2093, %v2120
    %v2122 = vcombine.high %v2100, %v2100
    %v2123 = vcombine.high %v2107, %v2107
    %v2124 = vcombine.high %v2114, %v2114
    %v2125 = vcombine.high %v2121, %v2121
    %v2126 = vcombine.high %v30, %v30
    %v2128 = vunpack.c.l.s4 1966171168
    %v2129 = vunpack.c.0.s8 %v2128
    %v2130 = vlaneseq
    %v2131 = vshrl.u32 %v2130, 7
    %v2132 = vsub.s32 %v2129, %v2131
    %v2133 = vrot.slane %v30, %v2132
    %v2135 = vunpack.c.l.s4 1966171168
    %v2136 = vunpack.c.0.s8 %v2135
    %v2137 = vlaneseq
    %v2138 = vshrl.u32 %v2137, 7
    %v2139 = vsub.s32 %v2136, %v2138
    %v2140 = vrot.slane %v2126, %v2139
    %v2141 = vcombine.high %v2133, %v2133
    %v2142 = vcombine.high %v2140, %v2140
    %v2144 = vunpack.c.l.s4 1966171168
    %v2145 = vunpack.c.0.s8 %v2144
    %v2146 = vlaneseq
    %v2147 = vshrl.u32 %v2146, 7
    %v2148 = vsub.s32 %v2145, %v2147
    %v2149 = vrot.slane %v2133, %v2148
    %v2151 = vunpack.c.l.s4 1966171168
    %v2152 = vunpack.c.0.s8 %v2151
    %v2153 = vlaneseq
    %v2154 = vshrl.u32 %v2153, 7
    %v2155 = vsub.s32 %v2152, %v2154
    %v2156 = vrot.slane %v2140, %v2155
    %v2158 = vunpack.c.l.s4 1966171168
    %v2159 = vunpack.c.0.s8 %v2158
    %v2160 = vlaneseq
    %v2161 = vshrl.u32 %v2160, 7
    %v2162 = vsub.s32 %v2159, %v2161
    %v2163 = vrot.slane %v2141, %v2162
    %v2165 = vunpack.c.l.s4 1966171168
    %v2166 = vunpack.c.0.s8 %v2165
    %v2167 = vlaneseq
    %v2168 = vshrl.u32 %v2167, 7
    %v2169 = vsub.s32 %v2166, %v2168
    %v2170 = vrot.slane %v2142, %v2169
    %v2171 = vcombine.high %v2149, %v2149
    %v2172 = vcombine.high %v2156, %v2156
    %v2173 = vcombine.high %v2163, %v2163
    %v2174 = vcombine.high %v2170, %v2170
    %v2175 = vcombine.high %v31, %v31
    %v2177 = vunpack.c.l.s4 1966171168
    %v2178 = vunpack.c.0.s8 %v2177
    %v2179 = vlaneseq
    %v2180 = vshrl.u32 %v2179, 7
    %v2181 = vsub.s32 %v2178, %v2180
    %v2182 = vrot.slane %v31, %v2181
    %v2184 = vunpack.c.l.s4 1966171168
    %v2185 = vunpack.c.0.s8 %v2184
    %v2186 = vlaneseq
    %v2187 = vshrl.u32 %v2186, 7
    %v2188 = vsub.s32 %v2185, %v2187
    %v2189 = vrot.slane %v2175, %v2188
    %v2190 = vcombine.high %v2182, %v2182
    %v2191 = vcombine.high %v2189, %v2189
    %v2193 = vunpack.c.l.s4 1966171168
    %v2194 = vunpack.c.0.s8 %v2193
    %v2195 = vlaneseq
    %v2196 = vshrl.u32 %v2195, 7
    %v2197 = vsub.s32 %v2194, %v2196
    %v2198 = vrot.slane %v2182, %v2197
    %v2200 = vunpack.c.l.s4 1966171168
    %v2201 = vunpack.c.0.s8 %v2200
    %v2202 = vlaneseq
    %v2203 = vshrl.u32 %v2202, 7
    %v2204 = vsub.s32 %v2201, %v2203
    %v2205 = vrot.slane %v2189, %v2204
    %v2207 = vunpack.c.l.s4 1966171168
    %v2208 = vunpack.c.0.s8 %v2207
    %v2209 = vlaneseq
    %v2210 = vshrl.u32 %v2209, 7
    %v2211 = vsub.s32 %v2208, %v2210
    %v2212 = vrot.slane %v2190, %v2211
    %v2214 = vunpack.c.l.s4 1966171168
    %v2215 = vunpack.c.0.s8 %v2214
    %v2216 = vlaneseq
    %v2217 = vshrl.u32 %v2216, 7
    %v2218 = vsub.s32 %v2215, %v2217
    %v2219 = vrot.slane %v2191, %v2218
    %v2220 = vcombine.high %v2198, %v2198
    %v2221 = vcombine.high %v2205, %v2205
    %v2222 = vcombine.high %v2212, %v2212
    %v2223 = vcombine.high %v2219, %v2219
    %v2224 = vcombine.high %v32, %v32
    %v2226 = vunpack.c.l.s4 1966171168
    %v2227 = vunpack.c.0.s8 %v2226
    %v2228 = vlaneseq
    %v2229 = vshrl.u32 %v2228, 7
    %v2230 = vsub.s32 %v2227, %v2229
    %v2231 = vrot.slane %v32, %v2230
    %v2233 = vunpack.c.l.s4 1966171168
    %v2234 = vunpack.c.0.s8 %v2233
    %v2235 = vlaneseq
    %v2236 = vshrl.u32 %v2235, 7
    %v2237 = vsub.s32 %v2234, %v2236
    %v2238 = vrot.slane %v2224, %v2237
    %v2239 = vcombine.high %v2231, %v2231
    %v2240 = vcombine.high %v2238, %v2238
    %v2242 = vunpack.c.l.s4 1966171168
    %v2243 = vunpack.c.0.s8 %v2242
    %v2244 = vlaneseq
    %v2245 = vshrl.u32 %v2244, 7
    %v2246 = vsub.s32 %v2243, %v2245
    %v2247 = vrot.slane %v2231, %v2246
    %v2249 = vunpack.c.l.s4 1966171168
    %v2250 = vunpack.c.0.s8 %v2249
    %v2251 = vlaneseq
    %v2252 = vshrl.u32 %v2251, 7
    %v2253 = vsub.s32 %v2250, %v2252
    %v2254 = vrot.slane %v2238, %v2253
    %v2256 = vunpack.c.l.s4 1966171168
    %v2257 = vunpack.c.0.s8 %v2256
    %v2258 = vlaneseq
    %v2259 = vshrl.u32 %v2258, 7
    %v2260 = vsub.s32 %v2257, %v2259
    %v2261 = vrot.slane %v2239, %v2260
    %v2263 = vunpack.c.l.s4 1966171168
    %v2264 = vunpack.c.0.s8 %v2263
    %v2265 = vlaneseq
    %v2266 = vshrl.u32 %v2265, 7
    %v2267 = vsub.s32 %v2264, %v2266
    %v2268 = vrot.slane %v2240, %v2267
    %v2269 = vcombine.high %v2247, %v2247
    %v2270 = vcombine.high %v2254, %v2254
    %v2271 = vcombine.high %v2261, %v2261
    %v2272 = vcombine.high %v2268, %v2268
    %v2273 = vcombine.high %v33, %v33
    %v2275 = vunpack.c.l.s4 1966171168
    %v2276 = vunpack.c.0.s8 %v2275
    %v2277 = vlaneseq
    %v2278 = vshrl.u32 %v2277, 7
    %v2279 = vsub.s32 %v2276, %v2278
    %v2280 = vrot.slane %v33, %v2279
    %v2282 = vunpack.c.l.s4 1966171168
    %v2283 = vunpack.c.0.s8 %v2282
    %v2284 = vlaneseq
    %v2285 = vshrl.u32 %v2284, 7
    %v2286 = vsub.s32 %v2283, %v2285
    %v2287 = vrot.slane %v2273, %v2286
    %v2288 = vcombine.high %v2280, %v2280
    %v2289 = vcombine.high %v2287, %v2287
    %v2291 = vunpack.c.l.s4 1966171168
    %v2292 = vunpack.c.0.s8 %v2291
    %v2293 = vlaneseq
    %v2294 = vshrl.u32 %v2293, 7
    %v2295 = vsub.s32 %v2292, %v2294
    %v2296 = vrot.slane %v2280, %v2295
    %v2298 = vunpack.c.l.s4 1966171168
    %v2299 = vunpack.c.0.s8 %v2298
    %v2300 = vlaneseq
    %v2301 = vshrl.u32 %v2300, 7
    %v2302 = vsub.s32 %v2299, %v2301
    %v2303 = vrot.slane %v2287, %v2302
    %v2305 = vunpack.c.l.s4 1966171168
    %v2306 = vunpack.c.0.s8 %v2305
    %v2307 = vlaneseq
    %v2308 = vshrl.u32 %v2307, 7
    %v2309 = vsub.s32 %v2306, %v2308
    %v2310 = vrot.slane %v2288, %v2309
    %v2312 = vunpack.c.l.s4 1966171168
    %v2313 = vunpack.c.0.s8 %v2312
    %v2314 = vlaneseq
    %v2315 = vshrl.u32 %v2314, 7
    %v2316 = vsub.s32 %v2313, %v2315
    %v2317 = vrot.slane %v2289, %v2316
    %v2318 = vcombine.high %v2296, %v2296
    %v2319 = vcombine.high %v2303, %v2303
    %v2320 = vcombine.high %v2310, %v2310
    %v2321 = vcombine.high %v2317, %v2317
    %v2322 = vcombine.high %v34, %v34
    %v2324 = vunpack.c.l.s4 1966171168
    %v2325 = vunpack.c.0.s8 %v2324
    %v2326 = vlaneseq
    %v2327 = vshrl.u32 %v2326, 7
    %v2328 = vsub.s32 %v2325, %v2327
    %v2329 = vrot.slane %v34, %v2328
    %v2331 = vunpack.c.l.s4 1966171168
    %v2332 = vunpack.c.0.s8 %v2331
    %v2333 = vlaneseq
    %v2334 = vshrl.u32 %v2333, 7
    %v2335 = vsub.s32 %v2332, %v2334
    %v2336 = vrot.slane %v2322, %v2335
    %v2337 = vcombine.high %v2329, %v2329
    %v2338 = vcombine.high %v2336, %v2336
    %v2340 = vunpack.c.l.s4 1966171168
    %v2341 = vunpack.c.0.s8 %v2340
    %v2342 = vlaneseq
    %v2343 = vshrl.u32 %v2342, 7
    %v2344 = vsub.s32 %v2341, %v2343
    %v2345 = vrot.slane %v2329, %v2344
    %v2347 = vunpack.c.l.s4 1966171168
    %v2348 = vunpack.c.0.s8 %v2347
    %v2349 = vlaneseq
    %v2350 = vshrl.u32 %v2349, 7
    %v2351 = vsub.s32 %v2348, %v2350
    %v2352 = vrot.slane %v2336, %v2351
    %v2354 = vunpack.c.l.s4 1966171168
    %v2355 = vunpack.c.0.s8 %v2354
    %v2356 = vlaneseq
    %v2357 = vshrl.u32 %v2356, 7
    %v2358 = vsub.s32 %v2355, %v2357
    %v2359 = vrot.slane %v2337, %v2358
    %v2361 = vunpack.c.l.s4 1966171168
    %v2362 = vunpack.c.0.s8 %v2361
    %v2363 = vlaneseq
    %v2364 = vshrl.u32 %v2363, 7
    %v2365 = vsub.s32 %v2362, %v2364
    %v2366 = vrot.slane %v2338, %v2365
    %v2367 = vcombine.high %v2345, %v2345
    %v2368 = vcombine.high %v2352, %v2352
    %v2369 = vcombine.high %v2359, %v2359
    %v2370 = vcombine.high %v2366, %v2366
    %v2371 = vcombine.high %v35, %v35
    %v2373 = vunpack.c.l.s4 1966171168
    %v2374 = vunpack.c.0.s8 %v2373
    %v2375 = vlaneseq
    %v2376 = vshrl.u32 %v2375, 7
    %v2377 = vsub.s32 %v2374, %v2376
    %v2378 = vrot.slane %v35, %v2377
    %v2380 = vunpack.c.l.s4 1966171168
    %v2381 = vunpack.c.0.s8 %v2380
    %v2382 = vlaneseq
    %v2383 = vshrl.u32 %v2382, 7
    %v2384 = vsub.s32 %v2381, %v2383
    %v2385 = vrot.slane %v2371, %v2384
    %v2386 = vcombine.high %v2378, %v2378
    %v2387 = vcombine.high %v2385, %v2385
    %v2389 = vunpack.c.l.s4 1966171168
    %v2390 = vunpack.c.0.s8 %v2389
    %v2391 = vlaneseq
    %v2392 = vshrl.u32 %v2391, 7
    %v2393 = vsub.s32 %v2390, %v2392
    %v2394 = vrot.slane %v2378, %v2393
    %v2396 = vunpack.c.l.s4 1966171168
    %v2397 = vunpack.c.0.s8 %v2396
    %v2398 = vlaneseq
    %v2399 = vshrl.u32 %v2398, 7
    %v2400 = vsub.s32 %v2397, %v2399
    %v2401 = vrot.slane %v2385, %v2400
    %v2403 = vunpack.c.l.s4 1966171168
    %v2404 = vunpack.c.0.s8 %v2403
    %v2405 = vlaneseq
    %v2406 = vshrl.u32 %v2405, 7
    %v2407 = vsub.s32 %v2404, %v2406
    %v2408 = vrot.slane %v2386, %v2407
    %v2410 = vunpack.c.l.s4 1966171168
    %v2411 = vunpack.c.0.s8 %v2410
    %v2412 = vlaneseq
    %v2413 = vshrl.u32 %v2412, 7
    %v2414 = vsub.s32 %v2411, %v2413
    %v2415 = vrot.slane %v2387, %v2414
    %v2416 = vcombine.high %v2394, %v2394
    %v2417 = vcombine.high %v2401, %v2401
    %v2418 = vcombine.high %v2408, %v2408
    %v2419 = vcombine.high %v2415, %v2415
    %v2420 = vcombine.high %v36, %v36
    %v2422 = vunpack.c.l.s4 1966171168
    %v2423 = vunpack.c.0.s8 %v2422
    %v2424 = vlaneseq
    %v2425 = vshrl.u32 %v2424, 7
    %v2426 = vsub.s32 %v2423, %v2425
    %v2427 = vrot.slane %v36, %v2426
    %v2429 = vunpack.c.l.s4 1966171168
    %v2430 = vunpack.c.0.s8 %v2429
    %v2431 = vlaneseq
    %v2432 = vshrl.u32 %v2431, 7
    %v2433 = vsub.s32 %v2430, %v2432
    %v2434 = vrot.slane %v2420, %v2433
    %v2435 = vcombine.high %v2427, %v2427
    %v2436 = vcombine.high %v2434, %v2434
    %v2438 = vunpack.c.l.s4 1966171168
    %v2439 = vunpack.c.0.s8 %v2438
    %v2440 = vlaneseq
    %v2441 = vshrl.u32 %v2440, 7
    %v2442 = vsub.s32 %v2439, %v2441
    %v2443 = vrot.slane %v2427, %v2442
    %v2445 = vunpack.c.l.s4 1966171168
    %v2446 = vunpack.c.0.s8 %v2445
    %v2447 = vlaneseq
    %v2448 = vshrl.u32 %v2447, 7
    %v2449 = vsub.s32 %v2446, %v2448
    %v2450 = vrot.slane %v2434, %v2449
    %v2452 = vunpack.c.l.s4 1966171168
    %v2453 = vunpack.c.0.s8 %v2452
    %v2454 = vlaneseq
    %v2455 = vshrl.u32 %v2454, 7
    %v2456 = vsub.s32 %v2453, %v2455
    %v2457 = vrot.slane %v2435, %v2456
    %v2459 = vunpack.c.l.s4 1966171168
    %v2460 = vunpack.c.0.s8 %v2459
    %v2461 = vlaneseq
    %v2462 = vshrl.u32 %v2461, 7
    %v2463 = vsub.s32 %v2460, %v2462
    %v2464 = vrot.slane %v2436, %v2463
    %v2465 = vcombine.high %v2443, %v2443
    %v2466 = vcombine.high %v2450, %v2450
    %v2467 = vcombine.high %v2457, %v2457
    %v2468 = vcombine.high %v2464, %v2464
    %v2469 = vcombine.high %v37, %v37
    %v2471 = vunpack.c.l.s4 1966171168
    %v2472 = vunpack.c.0.s8 %v2471
    %v2473 = vlaneseq
    %v2474 = vshrl.u32 %v2473, 7
    %v2475 = vsub.s32 %v2472, %v2474
    %v2476 = vrot.slane %v37, %v2475
    %v2478 = vunpack.c.l.s4 1966171168
    %v2479 = vunpack.c.0.s8 %v2478
    %v2480 = vlaneseq
    %v2481 = vshrl.u32 %v2480, 7
    %v2482 = vsub.s32 %v2479, %v2481
    %v2483 = vrot.slane %v2469, %v2482
    %v2484 = vcombine.high %v2476, %v2476
    %v2485 = vcombine.high %v2483, %v2483
    %v2487 = vunpack.c.l.s4 1966171168
    %v2488 = vunpack.c.0.s8 %v2487
    %v2489 = vlaneseq
    %v2490 = vshrl.u32 %v2489, 7
    %v2491 = vsub.s32 %v2488, %v2490
    %v2492 = vrot.slane %v2476, %v2491
    %v2494 = vunpack.c.l.s4 1966171168
    %v2495 = vunpack.c.0.s8 %v2494
    %v2496 = vlaneseq
    %v2497 = vshrl.u32 %v2496, 7
    %v2498 = vsub.s32 %v2495, %v2497
    %v2499 = vrot.slane %v2483, %v2498
    %v2501 = vunpack.c.l.s4 1966171168
    %v2502 = vunpack.c.0.s8 %v2501
    %v2503 = vlaneseq
    %v2504 = vshrl.u32 %v2503, 7
    %v2505 = vsub.s32 %v2502, %v2504
    %v2506 = vrot.slane %v2484, %v2505
    %v2508 = vunpack.c.l.s4 1966171168
    %v2509 = vunpack.c.0.s8 %v2508
    %v2510 = vlaneseq
    %v2511 = vshrl.u32 %v2510, 7
    %v2512 = vsub.s32 %v2509, %v2511
    %v2513 = vrot.slane %v2485, %v2512
    %v2514 = vcombine.high %v2492, %v2492
    %v2515 = vcombine.high %v2499, %v2499
    %v2516 = vcombine.high %v2506, %v2506
    %v2517 = vcombine.high %v2513, %v2513
    %v2518 = vcombine.high %v38, %v38
    %v2520 = vunpack.c.l.s4 1966171168
    %v2521 = vunpack.c.0.s8 %v2520
    %v2522 = vlaneseq
    %v2523 = vshrl.u32 %v2522, 7
    %v2524 = vsub.s32 %v2521, %v2523
    %v2525 = vrot.slane %v38, %v2524
    %v2527 = vunpack.c.l.s4 1966171168
    %v2528 = vunpack.c.0.s8 %v2527
    %v2529 = vlaneseq
    %v2530 = vshrl.u32 %v2529, 7
    %v2531 = vsub.s32 %v2528, %v2530
    %v2532 = vrot.slane %v2518, %v2531
    %v2533 = vcombine.high %v2525, %v2525
    %v2534 = vcombine.high %v2532, %v2532
    %v2536 = vunpack.c.l.s4 1966171168
    %v2537 = vunpack.c.0.s8 %v2536
    %v2538 = vlaneseq
    %v2539 = vshrl.u32 %v2538, 7
    %v2540 = vsub.s32 %v2537, %v2539
    %v2541 = vrot.slane %v2525, %v2540
    %v2543 = vunpack.c.l.s4 1966171168
    %v2544 = vunpack.c.0.s8 %v2543
    %v2545 = vlaneseq
    %v2546 = vshrl.u32 %v2545, 7
    %v2547 = vsub.s32 %v2544, %v2546
    %v2548 = vrot.slane %v2532, %v2547
    %v2550 = vunpack.c.l.s4 1966171168
    %v2551 = vunpack.c.0.s8 %v2550
    %v2552 = vlaneseq
    %v2553 = vshrl.u32 %v2552, 7
    %v2554 = vsub.s32 %v2551, %v2553
    %v2555 = vrot.slane %v2533, %v2554
    %v2557 = vunpack.c.l.s4 1966171168
    %v2558 = vunpack.c.0.s8 %v2557
    %v2559 = vlaneseq
    %v2560 = vshrl.u32 %v2559, 7
    %v2561 = vsub.s32 %v2558, %v2560
    %v2562 = vrot.slane %v2534, %v2561
    %v2563 = vcombine.high %v2541, %v2541
    %v2564 = vcombine.high %v2548, %v2548
    %v2565 = vcombine.high %v2555, %v2555
    %v2566 = vcombine.high %v2562, %v2562
    %v2567 = vcombine.high %v39, %v39
    %v2569 = vunpack.c.l.s4 1966171168
    %v2570 = vunpack.c.0.s8 %v2569
    %v2571 = vlaneseq
    %v2572 = vshrl.u32 %v2571, 7
    %v2573 = vsub.s32 %v2570, %v2572
    %v2574 = vrot.slane %v39, %v2573
    %v2576 = vunpack.c.l.s4 1966171168
    %v2577 = vunpack.c.0.s8 %v2576
    %v2578 = vlaneseq
    %v2579 = vshrl.u32 %v2578, 7
    %v2580 = vsub.s32 %v2577, %v2579
    %v2581 = vrot.slane %v2567, %v2580
    %v2582 = vcombine.high %v2574, %v2574
    %v2583 = vcombine.high %v2581, %v2581
    %v2585 = vunpack.c.l.s4 1966171168
    %v2586 = vunpack.c.0.s8 %v2585
    %v2587 = vlaneseq
    %v2588 = vshrl.u32 %v2587, 7
    %v2589 = vsub.s32 %v2586, %v2588
    %v2590 = vrot.slane %v2574, %v2589
    %v2592 = vunpack.c.l.s4 1966171168
    %v2593 = vunpack.c.0.s8 %v2592
    %v2594 = vlaneseq
    %v2595 = vshrl.u32 %v2594, 7
    %v2596 = vsub.s32 %v2593, %v2595
    %v2597 = vrot.slane %v2581, %v2596
    %v2599 = vunpack.c.l.s4 1966171168
    %v2600 = vunpack.c.0.s8 %v2599
    %v2601 = vlaneseq
    %v2602 = vshrl.u32 %v2601, 7
    %v2603 = vsub.s32 %v2600, %v2602
    %v2604 = vrot.slane %v2582, %v2603
    %v2606 = vunpack.c.l.s4 1966171168
    %v2607 = vunpack.c.0.s8 %v2606
    %v2608 = vlaneseq
    %v2609 = vshrl.u32 %v2608, 7
    %v2610 = vsub.s32 %v2607, %v2609
    %v2611 = vrot.slane %v2583, %v2610
    %v2612 = vcombine.high %v2590, %v2590
    %v2613 = vcombine.high %v2597, %v2597
    %v2614 = vcombine.high %v2604, %v2604
    %v2615 = vcombine.high %v2611, %v2611
    %v2616 = vcombine.high %v40, %v40
    %v2618 = vunpack.c.l.s4 1966171168
    %v2619 = vunpack.c.0.s8 %v2618
    %v2620 = vlaneseq
    %v2621 = vshrl.u32 %v2620, 7
    %v2622 = vsub.s32 %v2619, %v2621
    %v2623 = vrot.slane %v40, %v2622
    %v2625 = vunpack.c.l.s4 1966171168
    %v2626 = vunpack.c.0.s8 %v2625
    %v2627 = vlaneseq
    %v2628 = vshrl.u32 %v2627, 7
    %v2629 = vsub.s32 %v2626, %v2628
    %v2630 = vrot.slane %v2616, %v2629
    %v2631 = vcombine.high %v2623, %v2623
    %v2632 = vcombine.high %v2630, %v2630
    %v2634 = vunpack.c.l.s4 1966171168
    %v2635 = vunpack.c.0.s8 %v2634
    %v2636 = vlaneseq
    %v2637 = vshrl.u32 %v2636, 7
    %v2638 = vsub.s32 %v2635, %v2637
    %v2639 = vrot.slane %v2623, %v2638
    %v2641 = vunpack.c.l.s4 1966171168
    %v2642 = vunpack.c.0.s8 %v2641
    %v2643 = vlaneseq
    %v2644 = vshrl.u32 %v2643, 7
    %v2645 = vsub.s32 %v2642, %v2644
    %v2646 = vrot.slane %v2630, %v2645
    %v2648 = vunpack.c.l.s4 1966171168
    %v2649 = vunpack.c.0.s8 %v2648
    %v2650 = vlaneseq
    %v2651 = vshrl.u32 %v2650, 7
    %v2652 = vsub.s32 %v2649, %v2651
    %v2653 = vrot.slane %v2631, %v2652
    %v2655 = vunpack.c.l.s4 1966171168
    %v2656 = vunpack.c.0.s8 %v2655
    %v2657 = vlaneseq
    %v2658 = vshrl.u32 %v2657, 7
    %v2659 = vsub.s32 %v2656, %v2658
    %v2660 = vrot.slane %v2632, %v2659
    %v2661 = vcombine.high %v2639, %v2639
    %v2662 = vcombine.high %v2646, %v2646
    %v2663 = vcombine.high %v2653, %v2653
    %v2664 = vcombine.high %v2660, %v2660
    %v2665 = vcombine.high %v41, %v41
    %v2667 = vunpack.c.l.s4 1966171168
    %v2668 = vunpack.c.0.s8 %v2667
    %v2669 = vlaneseq
    %v2670 = vshrl.u32 %v2669, 7
    %v2671 = vsub.s32 %v2668, %v2670
    %v2672 = vrot.slane %v41, %v2671
    %v2674 = vunpack.c.l.s4 1966171168
    %v2675 = vunpack.c.0.s8 %v2674
    %v2676 = vlaneseq
    %v2677 = vshrl.u32 %v2676, 7
    %v2678 = vsub.s32 %v2675, %v2677
    %v2679 = vrot.slane %v2665, %v2678
    %v2680 = vcombine.high %v2672, %v2672
    %v2681 = vcombine.high %v2679, %v2679
    %v2683 = vunpack.c.l.s4 1966171168
    %v2684 = vunpack.c.0.s8 %v2683
    %v2685 = vlaneseq
    %v2686 = vshrl.u32 %v2685, 7
    %v2687 = vsub.s32 %v2684, %v2686
    %v2688 = vrot.slane %v2672, %v2687
    %v2690 = vunpack.c.l.s4 1966171168
    %v2691 = vunpack.c.0.s8 %v2690
    %v2692 = vlaneseq
    %v2693 = vshrl.u32 %v2692, 7
    %v2694 = vsub.s32 %v2691, %v2693
    %v2695 = vrot.slane %v2679, %v2694
    %v2697 = vunpack.c.l.s4 1966171168
    %v2698 = vunpack.c.0.s8 %v2697
    %v2699 = vlaneseq
    %v2700 = vshrl.u32 %v2699, 7
    %v2701 = vsub.s32 %v2698, %v2700
    %v2702 = vrot.slane %v2680, %v2701
    %v2704 = vunpack.c.l.s4 1966171168
    %v2705 = vunpack.c.0.s8 %v2704
    %v2706 = vlaneseq
    %v2707 = vshrl.u32 %v2706, 7
    %v2708 = vsub.s32 %v2705, %v2707
    %v2709 = vrot.slane %v2681, %v2708
    %v2710 = vcombine.high %v2688, %v2688
    %v2711 = vcombine.high %v2695, %v2695
    %v2712 = vcombine.high %v2702, %v2702
    %v2713 = vcombine.high %v2709, %v2709
    %v2714 = vcombine.high %v42, %v42
    %v2716 = vunpack.c.l.s4 1966171168
    %v2717 = vunpack.c.0.s8 %v2716
    %v2718 = vlaneseq
    %v2719 = vshrl.u32 %v2718, 7
    %v2720 = vsub.s32 %v2717, %v2719
    %v2721 = vrot.slane %v42, %v2720
    %v2723 = vunpack.c.l.s4 1966171168
    %v2724 = vunpack.c.0.s8 %v2723
    %v2725 = vlaneseq
    %v2726 = vshrl.u32 %v2725, 7
    %v2727 = vsub.s32 %v2724, %v2726
    %v2728 = vrot.slane %v2714, %v2727
    %v2729 = vcombine.high %v2721, %v2721
    %v2730 = vcombine.high %v2728, %v2728
    %v2732 = vunpack.c.l.s4 1966171168
    %v2733 = vunpack.c.0.s8 %v2732
    %v2734 = vlaneseq
    %v2735 = vshrl.u32 %v2734, 7
    %v2736 = vsub.s32 %v2733, %v2735
    %v2737 = vrot.slane %v2721, %v2736
    %v2739 = vunpack.c.l.s4 1966171168
    %v2740 = vunpack.c.0.s8 %v2739
    %v2741 = vlaneseq
    %v2742 = vshrl.u32 %v2741, 7
    %v2743 = vsub.s32 %v2740, %v2742
    %v2744 = vrot.slane %v2728, %v2743
    %v2746 = vunpack.c.l.s4 1966171168
    %v2747 = vunpack.c.0.s8 %v2746
    %v2748 = vlaneseq
    %v2749 = vshrl.u32 %v2748, 7
    %v2750 = vsub.s32 %v2747, %v2749
    %v2751 = vrot.slane %v2729, %v2750
    %v2753 = vunpack.c.l.s4 1966171168
    %v2754 = vunpack.c.0.s8 %v2753
    %v2755 = vlaneseq
    %v2756 = vshrl.u32 %v2755, 7
    %v2757 = vsub.s32 %v2754, %v2756
    %v2758 = vrot.slane %v2730, %v2757
    %v2759 = vcombine.high %v2737, %v2737
    %v2760 = vcombine.high %v2744, %v2744
    %v2761 = vcombine.high %v2751, %v2751
    %v2762 = vcombine.high %v2758, %v2758
    %v2763 = vcombine.high %v43, %v43
    %v2765 = vunpack.c.l.s4 1966171168
    %v2766 = vunpack.c.0.s8 %v2765
    %v2767 = vlaneseq
    %v2768 = vshrl.u32 %v2767, 7
    %v2769 = vsub.s32 %v2766, %v2768
    %v2770 = vrot.slane %v43, %v2769
    %v2772 = vunpack.c.l.s4 1966171168
    %v2773 = vunpack.c.0.s8 %v2772
    %v2774 = vlaneseq
    %v2775 = vshrl.u32 %v2774, 7
    %v2776 = vsub.s32 %v2773, %v2775
    %v2777 = vrot.slane %v2763, %v2776
    %v2778 = vcombine.high %v2770, %v2770
    %v2779 = vcombine.high %v2777, %v2777
    %v2781 = vunpack.c.l.s4 1966171168
    %v2782 = vunpack.c.0.s8 %v2781
    %v2783 = vlaneseq
    %v2784 = vshrl.u32 %v2783, 7
    %v2785 = vsub.s32 %v2782, %v2784
    %v2786 = vrot.slane %v2770, %v2785
    %v2788 = vunpack.c.l.s4 1966171168
    %v2789 = vunpack.c.0.s8 %v2788
    %v2790 = vlaneseq
    %v2791 = vshrl.u32 %v2790, 7
    %v2792 = vsub.s32 %v2789, %v2791
    %v2793 = vrot.slane %v2777, %v2792
    %v2795 = vunpack.c.l.s4 1966171168
    %v2796 = vunpack.c.0.s8 %v2795
    %v2797 = vlaneseq
    %v2798 = vshrl.u32 %v2797, 7
    %v2799 = vsub.s32 %v2796, %v2798
    %v2800 = vrot.slane %v2778, %v2799
    %v2802 = vunpack.c.l.s4 1966171168
    %v2803 = vunpack.c.0.s8 %v2802
    %v2804 = vlaneseq
    %v2805 = vshrl.u32 %v2804, 7
    %v2806 = vsub.s32 %v2803, %v2805
    %v2807 = vrot.slane %v2779, %v2806
    %v2808 = vcombine.high %v2786, %v2786
    %v2809 = vcombine.high %v2793, %v2793
    %v2810 = vcombine.high %v2800, %v2800
    %v2811 = vcombine.high %v2807, %v2807
    %v2812 = vcombine.high %v44, %v44
    %v2814 = vunpack.c.l.s4 1966171168
    %v2815 = vunpack.c.0.s8 %v2814
    %v2816 = vlaneseq
    %v2817 = vshrl.u32 %v2816, 7
    %v2818 = vsub.s32 %v2815, %v2817
    %v2819 = vrot.slane %v44, %v2818
    %v2821 = vunpack.c.l.s4 1966171168
    %v2822 = vunpack.c.0.s8 %v2821
    %v2823 = vlaneseq
    %v2824 = vshrl.u32 %v2823, 7
    %v2825 = vsub.s32 %v2822, %v2824
    %v2826 = vrot.slane %v2812, %v2825
    %v2827 = vcombine.high %v2819, %v2819
    %v2828 = vcombine.high %v2826, %v2826
    %v2830 = vunpack.c.l.s4 1966171168
    %v2831 = vunpack.c.0.s8 %v2830
    %v2832 = vlaneseq
    %v2833 = vshrl.u32 %v2832, 7
    %v2834 = vsub.s32 %v2831, %v2833
    %v2835 = vrot.slane %v2819, %v2834
    %v2837 = vunpack.c.l.s4 1966171168
    %v2838 = vunpack.c.0.s8 %v2837
    %v2839 = vlaneseq
    %v2840 = vshrl.u32 %v2839, 7
    %v2841 = vsub.s32 %v2838, %v2840
    %v2842 = vrot.slane %v2826, %v2841
    %v2844 = vunpack.c.l.s4 1966171168
    %v2845 = vunpack.c.0.s8 %v2844
    %v2846 = vlaneseq
    %v2847 = vshrl.u32 %v2846, 7
    %v2848 = vsub.s32 %v2845, %v2847
    %v2849 = vrot.slane %v2827, %v2848
    %v2851 = vunpack.c.l.s4 1966171168
    %v2852 = vunpack.c.0.s8 %v2851
    %v2853 = vlaneseq
    %v2854 = vshrl.u32 %v2853, 7
    %v2855 = vsub.s32 %v2852, %v2854
    %v2856 = vrot.slane %v2828, %v2855
    %v2857 = vcombine.high %v2835, %v2835
    %v2858 = vcombine.high %v2842, %v2842
    %v2859 = vcombine.high %v2849, %v2849
    %v2860 = vcombine.high %v2856, %v2856
    %v2861 = vcombine.high %v45, %v45
    %v2863 = vunpack.c.l.s4 1966171168
    %v2864 = vunpack.c.0.s8 %v2863
    %v2865 = vlaneseq
    %v2866 = vshrl.u32 %v2865, 7
    %v2867 = vsub.s32 %v2864, %v2866
    %v2868 = vrot.slane %v45, %v2867
    %v2870 = vunpack.c.l.s4 1966171168
    %v2871 = vunpack.c.0.s8 %v2870
    %v2872 = vlaneseq
    %v2873 = vshrl.u32 %v2872, 7
    %v2874 = vsub.s32 %v2871, %v2873
    %v2875 = vrot.slane %v2861, %v2874
    %v2876 = vcombine.high %v2868, %v2868
    %v2877 = vcombine.high %v2875, %v2875
    %v2879 = vunpack.c.l.s4 1966171168
    %v2880 = vunpack.c.0.s8 %v2879
    %v2881 = vlaneseq
    %v2882 = vshrl.u32 %v2881, 7
    %v2883 = vsub.s32 %v2880, %v2882
    %v2884 = vrot.slane %v2868, %v2883
    %v2886 = vunpack.c.l.s4 1966171168
    %v2887 = vunpack.c.0.s8 %v2886
    %v2888 = vlaneseq
    %v2889 = vshrl.u32 %v2888, 7
    %v2890 = vsub.s32 %v2887, %v2889
    %v2891 = vrot.slane %v2875, %v2890
    %v2893 = vunpack.c.l.s4 1966171168
    %v2894 = vunpack.c.0.s8 %v2893
    %v2895 = vlaneseq
    %v2896 = vshrl.u32 %v2895, 7
    %v2897 = vsub.s32 %v2894, %v2896
    %v2898 = vrot.slane %v2876, %v2897
    %v2900 = vunpack.c.l.s4 1966171168
    %v2901 = vunpack.c.0.s8 %v2900
    %v2902 = vlaneseq
    %v2903 = vshrl.u32 %v2902, 7
    %v2904 = vsub.s32 %v2901, %v2903
    %v2905 = vrot.slane %v2877, %v2904
    %v2906 = vcombine.high %v2884, %v2884
    %v2907 = vcombine.high %v2891, %v2891
    %v2908 = vcombine.high %v2898, %v2898
    %v2909 = vcombine.high %v2905, %v2905
    %v2910 = vcombine.high %v46, %v46
    %v2912 = vunpack.c.l.s4 1966171168
    %v2913 = vunpack.c.0.s8 %v2912
    %v2914 = vlaneseq
    %v2915 = vshrl.u32 %v2914, 7
    %v2916 = vsub.s32 %v2913, %v2915
    %v2917 = vrot.slane %v46, %v2916
    %v2919 = vunpack.c.l.s4 1966171168
    %v2920 = vunpack.c.0.s8 %v2919
    %v2921 = vlaneseq
    %v2922 = vshrl.u32 %v2921, 7
    %v2923 = vsub.s32 %v2920, %v2922
    %v2924 = vrot.slane %v2910, %v2923
    %v2925 = vcombine.high %v2917, %v2917
    %v2926 = vcombine.high %v2924, %v2924
    %v2928 = vunpack.c.l.s4 1966171168
    %v2929 = vunpack.c.0.s8 %v2928
    %v2930 = vlaneseq
    %v2931 = vshrl.u32 %v2930, 7
    %v2932 = vsub.s32 %v2929, %v2931
    %v2933 = vrot.slane %v2917, %v2932
    %v2935 = vunpack.c.l.s4 1966171168
    %v2936 = vunpack.c.0.s8 %v2935
    %v2937 = vlaneseq
    %v2938 = vshrl.u32 %v2937, 7
    %v2939 = vsub.s32 %v2936, %v2938
    %v2940 = vrot.slane %v2924, %v2939
    %v2942 = vunpack.c.l.s4 1966171168
    %v2943 = vunpack.c.0.s8 %v2942
    %v2944 = vlaneseq
    %v2945 = vshrl.u32 %v2944, 7
    %v2946 = vsub.s32 %v2943, %v2945
    %v2947 = vrot.slane %v2925, %v2946
    %v2949 = vunpack.c.l.s4 1966171168
    %v2950 = vunpack.c.0.s8 %v2949
    %v2951 = vlaneseq
    %v2952 = vshrl.u32 %v2951, 7
    %v2953 = vsub.s32 %v2950, %v2952
    %v2954 = vrot.slane %v2926, %v2953
    %v2955 = vcombine.high %v2933, %v2933
    %v2956 = vcombine.high %v2940, %v2940
    %v2957 = vcombine.high %v2947, %v2947
    %v2958 = vcombine.high %v2954, %v2954
    %v2959 = vcombine.high %v47, %v47
    %v2961 = vunpack.c.l.s4 1966171168
    %v2962 = vunpack.c.0.s8 %v2961
    %v2963 = vlaneseq
    %v2964 = vshrl.u32 %v2963, 7
    %v2965 = vsub.s32 %v2962, %v2964
    %v2966 = vrot.slane %v47, %v2965
    %v2968 = vunpack.c.l.s4 1966171168
    %v2969 = vunpack.c.0.s8 %v2968
    %v2970 = vlaneseq
    %v2971 = vshrl.u32 %v2970, 7
    %v2972 = vsub.s32 %v2969, %v2971
    %v2973 = vrot.slane %v2959, %v2972
    %v2974 = vcombine.high %v2966, %v2966
    %v2975 = vcombine.high %v2973, %v2973
    %v2977 = vunpack.c.l.s4 1966171168
    %v2978 = vunpack.c.0.s8 %v2977
    %v2979 = vlaneseq
    %v2980 = vshrl.u32 %v2979, 7
    %v2981 = vsub.s32 %v2978, %v2980
    %v2982 = vrot.slane %v2966, %v2981
    %v2984 = vunpack.c.l.s4 1966171168
    %v2985 = vunpack.c.0.s8 %v2984
    %v2986 = vlaneseq
    %v2987 = vshrl.u32 %v2986, 7
    %v2988 = vsub.s32 %v2985, %v2987
    %v2989 = vrot.slane %v2973, %v2988
    %v2991 = vunpack.c.l.s4 1966171168
    %v2992 = vunpack.c.0.s8 %v2991
    %v2993 = vlaneseq
    %v2994 = vshrl.u32 %v2993, 7
    %v2995 = vsub.s32 %v2992, %v2994
    %v2996 = vrot.slane %v2974, %v2995
    %v2998 = vunpack.c.l.s4 1966171168
    %v2999 = vunpack.c.0.s8 %v2998
    %v3000 = vlaneseq
    %v3001 = vshrl.u32 %v3000, 7
    %v3002 = vsub.s32 %v2999, %v3001
    %v3003 = vrot.slane %v2975, %v3002
    %v3004 = vcombine.high %v2982, %v2982
    %v3005 = vcombine.high %v2989, %v2989
    %v3006 = vcombine.high %v2996, %v2996
    %v3007 = vcombine.high %v3003, %v3003
    %v3008 = vcombine.high %v48, %v48
    %v3010 = vunpack.c.l.s4 1966171168
    %v3011 = vunpack.c.0.s8 %v3010
    %v3012 = vlaneseq
    %v3013 = vshrl.u32 %v3012, 7
    %v3014 = vsub.s32 %v3011, %v3013
    %v3015 = vrot.slane %v48, %v3014
    %v3017 = vunpack.c.l.s4 1966171168
    %v3018 = vunpack.c.0.s8 %v3017
    %v3019 = vlaneseq
    %v3020 = vshrl.u32 %v3019, 7
    %v3021 = vsub.s32 %v3018, %v3020
    %v3022 = vrot.slane %v3008, %v3021
    %v3023 = vcombine.high %v3015, %v3015
    %v3024 = vcombine.high %v3022, %v3022
    %v3026 = vunpack.c.l.s4 1966171168
    %v3027 = vunpack.c.0.s8 %v3026
    %v3028 = vlaneseq
    %v3029 = vshrl.u32 %v3028, 7
    %v3030 = vsub.s32 %v3027, %v3029
    %v3031 = vrot.slane %v3015, %v3030
    %v3033 = vunpack.c.l.s4 1966171168
    %v3034 = vunpack.c.0.s8 %v3033
    %v3035 = vlaneseq
    %v3036 = vshrl.u32 %v3035, 7
    %v3037 = vsub.s32 %v3034, %v3036
    %v3038 = vrot.slane %v3022, %v3037
    %v3040 = vunpack.c.l.s4 1966171168
    %v3041 = vunpack.c.0.s8 %v3040
    %v3042 = vlaneseq
    %v3043 = vshrl.u32 %v3042, 7
    %v3044 = vsub.s32 %v3041, %v3043
    %v3045 = vrot.slane %v3023, %v3044
    %v3047 = vunpack.c.l.s4 1966171168
    %v3048 = vunpack.c.0.s8 %v3047
    %v3049 = vlaneseq
    %v3050 = vshrl.u32 %v3049, 7
    %v3051 = vsub.s32 %v3048, %v3050
    %v3052 = vrot.slane %v3024, %v3051
    %v3053 = vcombine.high %v3031, %v3031
    %v3054 = vcombine.high %v3038, %v3038
    %v3055 = vcombine.high %v3045, %v3045
    %v3056 = vcombine.high %v3052, %v3052
    %v3057 = vcombine.high %v49, %v49
    %v3059 = vunpack.c.l.s4 1966171168
    %v3060 = vunpack.c.0.s8 %v3059
    %v3061 = vlaneseq
    %v3062 = vshrl.u32 %v3061, 7
    %v3063 = vsub.s32 %v3060, %v3062
    %v3064 = vrot.slane %v49, %v3063
    %v3066 = vunpack.c.l.s4 1966171168
    %v3067 = vunpack.c.0.s8 %v3066
    %v3068 = vlaneseq
    %v3069 = vshrl.u32 %v3068, 7
    %v3070 = vsub.s32 %v3067, %v3069
    %v3071 = vrot.slane %v3057, %v3070
    %v3072 = vcombine.high %v3064, %v3064
    %v3073 = vcombine.high %v3071, %v3071
    %v3075 = vunpack.c.l.s4 1966171168
    %v3076 = vunpack.c.0.s8 %v3075
    %v3077 = vlaneseq
    %v3078 = vshrl.u32 %v3077, 7
    %v3079 = vsub.s32 %v3076, %v3078
    %v3080 = vrot.slane %v3064, %v3079
    %v3082 = vunpack.c.l.s4 1966171168
    %v3083 = vunpack.c.0.s8 %v3082
    %v3084 = vlaneseq
    %v3085 = vshrl.u32 %v3084, 7
    %v3086 = vsub.s32 %v3083, %v3085
    %v3087 = vrot.slane %v3071, %v3086
    %v3089 = vunpack.c.l.s4 1966171168
    %v3090 = vunpack.c.0.s8 %v3089
    %v3091 = vlaneseq
    %v3092 = vshrl.u32 %v3091, 7
    %v3093 = vsub.s32 %v3090, %v3092
    %v3094 = vrot.slane %v3072, %v3093
    %v3096 = vunpack.c.l.s4 1966171168
    %v3097 = vunpack.c.0.s8 %v3096
    %v3098 = vlaneseq
    %v3099 = vshrl.u32 %v3098, 7
    %v3100 = vsub.s32 %v3097, %v3099
    %v3101 = vrot.slane %v3073, %v3100
    %v3102 = vcombine.high %v3080, %v3080
    %v3103 = vcombine.high %v3087, %v3087
    %v3104 = vcombine.high %v3094, %v3094
    %v3105 = vcombine.high %v3101, %v3101
    %v3106 = vcombine.high %v50, %v50
    %v3108 = vunpack.c.l.s4 1966171168
    %v3109 = vunpack.c.0.s8 %v3108
    %v3110 = vlaneseq
    %v3111 = vshrl.u32 %v3110, 7
    %v3112 = vsub.s32 %v3109, %v3111
    %v3113 = vrot.slane %v50, %v3112
    %v3115 = vunpack.c.l.s4 1966171168
    %v3116 = vunpack.c.0.s8 %v3115
    %v3117 = vlaneseq
    %v3118 = vshrl.u32 %v3117, 7
    %v3119 = vsub.s32 %v3116, %v3118
    %v3120 = vrot.slane %v3106, %v3119
    %v3121 = vcombine.high %v3113, %v3113
    %v3122 = vcombine.high %v3120, %v3120
    %v3124 = vunpack.c.l.s4 1966171168
    %v3125 = vunpack.c.0.s8 %v3124
    %v3126 = vlaneseq
    %v3127 = vshrl.u32 %v3126, 7
    %v3128 = vsub.s32 %v3125, %v3127
    %v3129 = vrot.slane %v3113, %v3128
    %v3131 = vunpack.c.l.s4 1966171168
    %v3132 = vunpack.c.0.s8 %v3131
    %v3133 = vlaneseq
    %v3134 = vshrl.u32 %v3133, 7
    %v3135 = vsub.s32 %v3132, %v3134
    %v3136 = vrot.slane %v3120, %v3135
    %v3138 = vunpack.c.l.s4 1966171168
    %v3139 = vunpack.c.0.s8 %v3138
    %v3140 = vlaneseq
    %v3141 = vshrl.u32 %v3140, 7
    %v3142 = vsub.s32 %v3139, %v3141
    %v3143 = vrot.slane %v3121, %v3142
    %v3145 = vunpack.c.l.s4 1966171168
    %v3146 = vunpack.c.0.s8 %v3145
    %v3147 = vlaneseq
    %v3148 = vshrl.u32 %v3147, 7
    %v3149 = vsub.s32 %v3146, %v3148
    %v3150 = vrot.slane %v3122, %v3149
    %v3151 = vcombine.high %v3129, %v3129
    %v3152 = vcombine.high %v3136, %v3136
    %v3153 = vcombine.high %v3143, %v3143
    %v3154 = vcombine.high %v3150, %v3150
    %v3155 = vcombine.high %v51, %v51
    %v3157 = vunpack.c.l.s4 1966171168
    %v3158 = vunpack.c.0.s8 %v3157
    %v3159 = vlaneseq
    %v3160 = vshrl.u32 %v3159, 7
    %v3161 = vsub.s32 %v3158, %v3160
    %v3162 = vrot.slane %v51, %v3161
    %v3164 = vunpack.c.l.s4 1966171168
    %v3165 = vunpack.c.0.s8 %v3164
    %v3166 = vlaneseq
    %v3167 = vshrl.u32 %v3166, 7
    %v3168 = vsub.s32 %v3165, %v3167
    %v3169 = vrot.slane %v3155, %v3168
    %v3170 = vcombine.high %v3162, %v3162
    %v3171 = vcombine.high %v3169, %v3169
    %v3173 = vunpack.c.l.s4 1966171168
    %v3174 = vunpack.c.0.s8 %v3173
    %v3175 = vlaneseq
    %v3176 = vshrl.u32 %v3175, 7
    %v3177 = vsub.s32 %v3174, %v3176
    %v3178 = vrot.slane %v3162, %v3177
    %v3180 = vunpack.c.l.s4 1966171168
    %v3181 = vunpack.c.0.s8 %v3180
    %v3182 = vlaneseq
    %v3183 = vshrl.u32 %v3182, 7
    %v3184 = vsub.s32 %v3181, %v3183
    %v3185 = vrot.slane %v3169, %v3184
    %v3187 = vunpack.c.l.s4 1966171168
    %v3188 = vunpack.c.0.s8 %v3187
    %v3189 = vlaneseq
    %v3190 = vshrl.u32 %v3189, 7
    %v3191 = vsub.s32 %v3188, %v3190
    %v3192 = vrot.slane %v3170, %v3191
    %v3194 = vunpack.c.l.s4 1966171168
    %v3195 = vunpack.c.0.s8 %v3194
    %v3196 = vlaneseq
    %v3197 = vshrl.u32 %v3196, 7
    %v3198 = vsub.s32 %v3195, %v3197
    %v3199 = vrot.slane %v3171, %v3198
    %v3200 = vcombine.high %v3178, %v3178
    %v3201 = vcombine.high %v3185, %v3185
    %v3202 = vcombine.high %v3192, %v3192
    %v3203 = vcombine.high %v3199, %v3199
    %v3204 = vcombine.high %v52, %v52
    %v3206 = vunpack.c.l.s4 1966171168
    %v3207 = vunpack.c.0.s8 %v3206
    %v3208 = vlaneseq
    %v3209 = vshrl.u32 %v3208, 7
    %v3210 = vsub.s32 %v3207, %v3209
    %v3211 = vrot.slane %v52, %v3210
    %v3213 = vunpack.c.l.s4 1966171168
    %v3214 = vunpack.c.0.s8 %v3213
    %v3215 = vlaneseq
    %v3216 = vshrl.u32 %v3215, 7
    %v3217 = vsub.s32 %v3214, %v3216
    %v3218 = vrot.slane %v3204, %v3217
    %v3219 = vcombine.high %v3211, %v3211
    %v3220 = vcombine.high %v3218, %v3218
    %v3222 = vunpack.c.l.s4 1966171168
    %v3223 = vunpack.c.0.s8 %v3222
    %v3224 = vlaneseq
    %v3225 = vshrl.u32 %v3224, 7
    %v3226 = vsub.s32 %v3223, %v3225
    %v3227 = vrot.slane %v3211, %v3226
    %v3229 = vunpack.c.l.s4 1966171168
    %v3230 = vunpack.c.0.s8 %v3229
    %v3231 = vlaneseq
    %v3232 = vshrl.u32 %v3231, 7
    %v3233 = vsub.s32 %v3230, %v3232
    %v3234 = vrot.slane %v3218, %v3233
    %v3236 = vunpack.c.l.s4 1966171168
    %v3237 = vunpack.c.0.s8 %v3236
    %v3238 = vlaneseq
    %v3239 = vshrl.u32 %v3238, 7
    %v3240 = vsub.s32 %v3237, %v3239
    %v3241 = vrot.slane %v3219, %v3240
    %v3243 = vunpack.c.l.s4 1966171168
    %v3244 = vunpack.c.0.s8 %v3243
    %v3245 = vlaneseq
    %v3246 = vshrl.u32 %v3245, 7
    %v3247 = vsub.s32 %v3244, %v3246
    %v3248 = vrot.slane %v3220, %v3247
    %v3249 = vcombine.high %v3227, %v3227
    %v3250 = vcombine.high %v3234, %v3234
    %v3251 = vcombine.high %v3241, %v3241
    %v3252 = vcombine.high %v3248, %v3248
    %v3253 = vcombine.high %v53, %v53
    %v3255 = vunpack.c.l.s4 1966171168
    %v3256 = vunpack.c.0.s8 %v3255
    %v3257 = vlaneseq
    %v3258 = vshrl.u32 %v3257, 7
    %v3259 = vsub.s32 %v3256, %v3258
    %v3260 = vrot.slane %v53, %v3259
    %v3262 = vunpack.c.l.s4 1966171168
    %v3263 = vunpack.c.0.s8 %v3262
    %v3264 = vlaneseq
    %v3265 = vshrl.u32 %v3264, 7
    %v3266 = vsub.s32 %v3263, %v3265
    %v3267 = vrot.slane %v3253, %v3266
    %v3268 = vcombine.high %v3260, %v3260
    %v3269 = vcombine.high %v3267, %v3267
    %v3271 = vunpack.c.l.s4 1966171168
    %v3272 = vunpack.c.0.s8 %v3271
    %v3273 = vlaneseq
    %v3274 = vshrl.u32 %v3273, 7
    %v3275 = vsub.s32 %v3272, %v3274
    %v3276 = vrot.slane %v3260, %v3275
    %v3278 = vunpack.c.l.s4 1966171168
    %v3279 = vunpack.c.0.s8 %v3278
    %v3280 = vlaneseq
    %v3281 = vshrl.u32 %v3280, 7
    %v3282 = vsub.s32 %v3279, %v3281
    %v3283 = vrot.slane %v3267, %v3282
    %v3285 = vunpack.c.l.s4 1966171168
    %v3286 = vunpack.c.0.s8 %v3285
    %v3287 = vlaneseq
    %v3288 = vshrl.u32 %v3287, 7
    %v3289 = vsub.s32 %v3286, %v3288
    %v3290 = vrot.slane %v3268, %v3289
    %v3292 = vunpack.c.l.s4 1966171168
    %v3293 = vunpack.c.0.s8 %v3292
    %v3294 = vlaneseq
    %v3295 = vshrl.u32 %v3294, 7
    %v3296 = vsub.s32 %v3293, %v3295
    %v3297 = vrot.slane %v3269, %v3296
    %v3298 = vcombine.high %v3276, %v3276
    %v3299 = vcombine.high %v3283, %v3283
    %v3300 = vcombine.high %v3290, %v3290
    %v3301 = vcombine.high %v3297, %v3297
    %v3302 = vcombine.high %v54, %v54
    %v3304 = vunpack.c.l.s4 1966171168
    %v3305 = vunpack.c.0.s8 %v3304
    %v3306 = vlaneseq
    %v3307 = vshrl.u32 %v3306, 7
    %v3308 = vsub.s32 %v3305, %v3307
    %v3309 = vrot.slane %v54, %v3308
    %v3311 = vunpack.c.l.s4 1966171168
    %v3312 = vunpack.c.0.s8 %v3311
    %v3313 = vlaneseq
    %v3314 = vshrl.u32 %v3313, 7
    %v3315 = vsub.s32 %v3312, %v3314
    %v3316 = vrot.slane %v3302, %v3315
    %v3317 = vcombine.high %v3309, %v3309
    %v3318 = vcombine.high %v3316, %v3316
    %v3320 = vunpack.c.l.s4 1966171168
    %v3321 = vunpack.c.0.s8 %v3320
    %v3322 = vlaneseq
    %v3323 = vshrl.u32 %v3322, 7
    %v3324 = vsub.s32 %v3321, %v3323
    %v3325 = vrot.slane %v3309, %v3324
    %v3327 = vunpack.c.l.s4 1966171168
    %v3328 = vunpack.c.0.s8 %v3327
    %v3329 = vlaneseq
    %v3330 = vshrl.u32 %v3329, 7
    %v3331 = vsub.s32 %v3328, %v3330
    %v3332 = vrot.slane %v3316, %v3331
    %v3334 = vunpack.c.l.s4 1966171168
    %v3335 = vunpack.c.0.s8 %v3334
    %v3336 = vlaneseq
    %v3337 = vshrl.u32 %v3336, 7
    %v3338 = vsub.s32 %v3335, %v3337
    %v3339 = vrot.slane %v3317, %v3338
    %v3341 = vunpack.c.l.s4 1966171168
    %v3342 = vunpack.c.0.s8 %v3341
    %v3343 = vlaneseq
    %v3344 = vshrl.u32 %v3343, 7
    %v3345 = vsub.s32 %v3342, %v3344
    %v3346 = vrot.slane %v3318, %v3345
    %v3347 = vcombine.high %v3325, %v3325
    %v3348 = vcombine.high %v3332, %v3332
    %v3349 = vcombine.high %v3339, %v3339
    %v3350 = vcombine.high %v3346, %v3346
    %v3351 = vcombine.high %v55, %v55
    %v3353 = vunpack.c.l.s4 1966171168
    %v3354 = vunpack.c.0.s8 %v3353
    %v3355 = vlaneseq
    %v3356 = vshrl.u32 %v3355, 7
    %v3357 = vsub.s32 %v3354, %v3356
    %v3358 = vrot.slane %v55, %v3357
    %v3360 = vunpack.c.l.s4 1966171168
    %v3361 = vunpack.c.0.s8 %v3360
    %v3362 = vlaneseq
    %v3363 = vshrl.u32 %v3362, 7
    %v3364 = vsub.s32 %v3361, %v3363
    %v3365 = vrot.slane %v3351, %v3364
    %v3366 = vcombine.high %v3358, %v3358
    %v3367 = vcombine.high %v3365, %v3365
    %v3369 = vunpack.c.l.s4 1966171168
    %v3370 = vunpack.c.0.s8 %v3369
    %v3371 = vlaneseq
    %v3372 = vshrl.u32 %v3371, 7
    %v3373 = vsub.s32 %v3370, %v3372
    %v3374 = vrot.slane %v3358, %v3373
    %v3376 = vunpack.c.l.s4 1966171168
    %v3377 = vunpack.c.0.s8 %v3376
    %v3378 = vlaneseq
    %v3379 = vshrl.u32 %v3378, 7
    %v3380 = vsub.s32 %v3377, %v3379
    %v3381 = vrot.slane %v3365, %v3380
    %v3383 = vunpack.c.l.s4 1966171168
    %v3384 = vunpack.c.0.s8 %v3383
    %v3385 = vlaneseq
    %v3386 = vshrl.u32 %v3385, 7
    %v3387 = vsub.s32 %v3384, %v3386
    %v3388 = vrot.slane %v3366, %v3387
    %v3390 = vunpack.c.l.s4 1966171168
    %v3391 = vunpack.c.0.s8 %v3390
    %v3392 = vlaneseq
    %v3393 = vshrl.u32 %v3392, 7
    %v3394 = vsub.s32 %v3391, %v3393
    %v3395 = vrot.slane %v3367, %v3394
    %v3396 = vcombine.high %v3374, %v3374
    %v3397 = vcombine.high %v3381, %v3381
    %v3398 = vcombine.high %v3388, %v3388
    %v3399 = vcombine.high %v3395, %v3395
    %v3400 = vcombine.high %v56, %v56
    %v3402 = vunpack.c.l.s4 1966171168
    %v3403 = vunpack.c.0.s8 %v3402
    %v3404 = vlaneseq
    %v3405 = vshrl.u32 %v3404, 7
    %v3406 = vsub.s32 %v3403, %v3405
    %v3407 = vrot.slane %v56, %v3406
    %v3409 = vunpack.c.l.s4 1966171168
    %v3410 = vunpack.c.0.s8 %v3409
    %v3411 = vlaneseq
    %v3412 = vshrl.u32 %v3411, 7
    %v3413 = vsub.s32 %v3410, %v3412
    %v3414 = vrot.slane %v3400, %v3413
    %v3415 = vcombine.high %v3407, %v3407
    %v3416 = vcombine.high %v3414, %v3414
    %v3418 = vunpack.c.l.s4 1966171168
    %v3419 = vunpack.c.0.s8 %v3418
    %v3420 = vlaneseq
    %v3421 = vshrl.u32 %v3420, 7
    %v3422 = vsub.s32 %v3419, %v3421
    %v3423 = vrot.slane %v3407, %v3422
    %v3425 = vunpack.c.l.s4 1966171168
    %v3426 = vunpack.c.0.s8 %v3425
    %v3427 = vlaneseq
    %v3428 = vshrl.u32 %v3427, 7
    %v3429 = vsub.s32 %v3426, %v3428
    %v3430 = vrot.slane %v3414, %v3429
    %v3432 = vunpack.c.l.s4 1966171168
    %v3433 = vunpack.c.0.s8 %v3432
    %v3434 = vlaneseq
    %v3435 = vshrl.u32 %v3434, 7
    %v3436 = vsub.s32 %v3433, %v3435
    %v3437 = vrot.slane %v3415, %v3436
    %v3439 = vunpack.c.l.s4 1966171168
    %v3440 = vunpack.c.0.s8 %v3439
    %v3441 = vlaneseq
    %v3442 = vshrl.u32 %v3441, 7
    %v3443 = vsub.s32 %v3440, %v3442
    %v3444 = vrot.slane %v3416, %v3443
    %v3445 = vcombine.high %v3423, %v3423
    %v3446 = vcombine.high %v3430, %v3430
    %v3447 = vcombine.high %v3437, %v3437
    %v3448 = vcombine.high %v3444, %v3444
    %v3449 = vcombine.high %v57, %v57
    %v3451 = vunpack.c.l.s4 1966171168
    %v3452 = vunpack.c.0.s8 %v3451
    %v3453 = vlaneseq
    %v3454 = vshrl.u32 %v3453, 7
    %v3455 = vsub.s32 %v3452, %v3454
    %v3456 = vrot.slane %v57, %v3455
    %v3458 = vunpack.c.l.s4 1966171168
    %v3459 = vunpack.c.0.s8 %v3458
    %v3460 = vlaneseq
    %v3461 = vshrl.u32 %v3460, 7
    %v3462 = vsub.s32 %v3459, %v3461
    %v3463 = vrot.slane %v3449, %v3462
    %v3464 = vcombine.high %v3456, %v3456
    %v3465 = vcombine.high %v3463, %v3463
    %v3467 = vunpack.c.l.s4 1966171168
    %v3468 = vunpack.c.0.s8 %v3467
    %v3469 = vlaneseq
    %v3470 = vshrl.u32 %v3469, 7
    %v3471 = vsub.s32 %v3468, %v3470
    %v3472 = vrot.slane %v3456, %v3471
    %v3474 = vunpack.c.l.s4 1966171168
    %v3475 = vunpack.c.0.s8 %v3474
    %v3476 = vlaneseq
    %v3477 = vshrl.u32 %v3476, 7
    %v3478 = vsub.s32 %v3475, %v3477
    %v3479 = vrot.slane %v3463, %v3478
    %v3481 = vunpack.c.l.s4 1966171168
    %v3482 = vunpack.c.0.s8 %v3481
    %v3483 = vlaneseq
    %v3484 = vshrl.u32 %v3483, 7
    %v3485 = vsub.s32 %v3482, %v3484
    %v3486 = vrot.slane %v3464, %v3485
    %v3488 = vunpack.c.l.s4 1966171168
    %v3489 = vunpack.c.0.s8 %v3488
    %v3490 = vlaneseq
    %v3491 = vshrl.u32 %v3490, 7
    %v3492 = vsub.s32 %v3489, %v3491
    %v3493 = vrot.slane %v3465, %v3492
    %v3494 = vcombine.high %v3472, %v3472
    %v3495 = vcombine.high %v3479, %v3479
    %v3496 = vcombine.high %v3486, %v3486
    %v3497 = vcombine.high %v3493, %v3493
    %v3498 = vcombine.high %v58, %v58
    %v3500 = vunpack.c.l.s4 1966171168
    %v3501 = vunpack.c.0.s8 %v3500
    %v3502 = vlaneseq
    %v3503 = vshrl.u32 %v3502, 7
    %v3504 = vsub.s32 %v3501, %v3503
    %v3505 = vrot.slane %v58, %v3504
    %v3507 = vunpack.c.l.s4 1966171168
    %v3508 = vunpack.c.0.s8 %v3507
    %v3509 = vlaneseq
    %v3510 = vshrl.u32 %v3509, 7
    %v3511 = vsub.s32 %v3508, %v3510
    %v3512 = vrot.slane %v3498, %v3511
    %v3513 = vcombine.high %v3505, %v3505
    %v3514 = vcombine.high %v3512, %v3512
    %v3516 = vunpack.c.l.s4 1966171168
    %v3517 = vunpack.c.0.s8 %v3516
    %v3518 = vlaneseq
    %v3519 = vshrl.u32 %v3518, 7
    %v3520 = vsub.s32 %v3517, %v3519
    %v3521 = vrot.slane %v3505, %v3520
    %v3523 = vunpack.c.l.s4 1966171168
    %v3524 = vunpack.c.0.s8 %v3523
    %v3525 = vlaneseq
    %v3526 = vshrl.u32 %v3525, 7
    %v3527 = vsub.s32 %v3524, %v3526
    %v3528 = vrot.slane %v3512, %v3527
    %v3530 = vunpack.c.l.s4 1966171168
    %v3531 = vunpack.c.0.s8 %v3530
    %v3532 = vlaneseq
    %v3533 = vshrl.u32 %v3532, 7
    %v3534 = vsub.s32 %v3531, %v3533
    %v3535 = vrot.slane %v3513, %v3534
    %v3537 = vunpack.c.l.s4 1966171168
    %v3538 = vunpack.c.0.s8 %v3537
    %v3539 = vlaneseq
    %v3540 = vshrl.u32 %v3539, 7
    %v3541 = vsub.s32 %v3538, %v3540
    %v3542 = vrot.slane %v3514, %v3541
    %v3543 = vcombine.high %v3521, %v3521
    %v3544 = vcombine.high %v3528, %v3528
    %v3545 = vcombine.high %v3535, %v3535
    %v3546 = vcombine.high %v3542, %v3542
    %v3547 = vlaneseq
    %v3548 = vshrl.u32 %v3547, 7
    %v3549 = vsub.s32 0, %v3548
    %v3550 = vrot.slane %v2002, %v3549
    %v3551 = vlaneseq
    %v3552 = vshrl.u32 %v3551, 7
    %v3553 = vsub.s32 0, %v3552
    %v3554 = vrot.slane %v2016, %v3553
    %v3555 = vlaneseq
    %v3556 = vshrl.u32 %v3555, 7
    %v3557 = vsub.s32 0, %v3556
    %v3558 = vrot.slane %v2024, %v3557
    %v3559 = vlaneseq
    %v3560 = vshrl.u32 %v3559, 7
    %v3561 = vsub.s32 0, %v3560
    %v3562 = vrot.slane %v2026, %v3561
    %v3563 = vlaneseq
    %v3564 = vshrl.u32 %v3563, 7
    %v3565 = vsub.s32 0, %v3564
    %v3566 = vrot.slane %v2009, %v3565
    %v3567 = vlaneseq
    %v3568 = vshrl.u32 %v3567, 7
    %v3569 = vsub.s32 0, %v3568
    %v3570 = vrot.slane %v2023, %v3569
    %v3571 = vlaneseq
    %v3572 = vshrl.u32 %v3571, 7
    %v3573 = vsub.s32 0, %v3572
    %v3574 = vrot.slane %v2025, %v3573
    %v3575 = vlaneseq
    %v3576 = vshrl.u32 %v3575, 7
    %v3577 = vsub.s32 0, %v3576
    %v3578 = vrot.slane %v2027, %v3577
    %v3579 = vlaneseq
    %v3580 = vshrl.u32 %v3579, 7
    %v3581 = vsub.s32 0, %v3580
    %v3582 = vrot.slane %v2051, %v3581
    %v3583 = vlaneseq
    %v3584 = vshrl.u32 %v3583, 7
    %v3585 = vsub.s32 0, %v3584
    %v3586 = vrot.slane %v2065, %v3585
    %v3587 = vlaneseq
    %v3588 = vshrl.u32 %v3587, 7
    %v3589 = vsub.s32 0, %v3588
    %v3590 = vrot.slane %v2073, %v3589
    %v3591 = vlaneseq
    %v3592 = vshrl.u32 %v3591, 7
    %v3593 = vsub.s32 0, %v3592
    %v3594 = vrot.slane %v2075, %v3593
    %v3595 = vlaneseq
    %v3596 = vshrl.u32 %v3595, 7
    %v3597 = vsub.s32 0, %v3596
    %v3598 = vrot.slane %v2058, %v3597
    %v3599 = vlaneseq
    %v3600 = vshrl.u32 %v3599, 7
    %v3601 = vsub.s32 0, %v3600
    %v3602 = vrot.slane %v2072, %v3601
    %v3603 = vlaneseq
    %v3604 = vshrl.u32 %v3603, 7
    %v3605 = vsub.s32 0, %v3604
    %v3606 = vrot.slane %v2074, %v3605
    %v3607 = vlaneseq
    %v3608 = vshrl.u32 %v3607, 7
    %v3609 = vsub.s32 0, %v3608
    %v3610 = vrot.slane %v2076, %v3609
    %v3611 = vlaneseq
    %v3612 = vshrl.u32 %v3611, 7
    %v3613 = vsub.s32 0, %v3612
    %v3614 = vrot.slane %v2100, %v3613
    %v3615 = vlaneseq
    %v3616 = vshrl.u32 %v3615, 7
    %v3617 = vsub.s32 0, %v3616
    %v3618 = vrot.slane %v2114, %v3617
    %v3619 = vlaneseq
    %v3620 = vshrl.u32 %v3619, 7
    %v3621 = vsub.s32 0, %v3620
    %v3622 = vrot.slane %v2122, %v3621
    %v3623 = vlaneseq
    %v3624 = vshrl.u32 %v3623, 7
    %v3625 = vsub.s32 0, %v3624
    %v3626 = vrot.slane %v2124, %v3625
    %v3627 = vlaneseq
    %v3628 = vshrl.u32 %v3627, 7
    %v3629 = vsub.s32 0, %v3628
    %v3630 = vrot.slane %v2107, %v3629
    %v3631 = vlaneseq
    %v3632 = vshrl.u32 %v3631, 7
    %v3633 = vsub.s32 0, %v3632
    %v3634 = vrot.slane %v2121, %v3633
    %v3635 = vlaneseq
    %v3636 = vshrl.u32 %v3635, 7
    %v3637 = vsub.s32 0, %v3636
    %v3638 = vrot.slane %v2123, %v3637
    %v3639 = vlaneseq
    %v3640 = vshrl.u32 %v3639, 7
    %v3641 = vsub.s32 0, %v3640
    %v3642 = vrot.slane %v2125, %v3641
    %v3643 = vlaneseq
    %v3644 = vshrl.u32 %v3643, 7
    %v3645 = vsub.s32 0, %v3644
    %v3646 = vrot.slane %v2149, %v3645
    %v3647 = vlaneseq
    %v3648 = vshrl.u32 %v3647, 7
    %v3649 = vsub.s32 0, %v3648
    %v3650 = vrot.slane %v2163, %v3649
    %v3651 = vlaneseq
    %v3652 = vshrl.u32 %v3651, 7
    %v3653 = vsub.s32 0, %v3652
    %v3654 = vrot.slane %v2171, %v3653
    %v3655 = vlaneseq
    %v3656 = vshrl.u32 %v3655, 7
    %v3657 = vsub.s32 0, %v3656
    %v3658 = vrot.slane %v2173, %v3657
    %v3659 = vlaneseq
    %v3660 = vshrl.u32 %v3659, 7
    %v3661 = vsub.s32 0, %v3660
    %v3662 = vrot.slane %v2156, %v3661
    %v3663 = vlaneseq
    %v3664 = vshrl.u32 %v3663, 7
    %v3665 = vsub.s32 0, %v3664
    %v3666 = vrot.slane %v2170, %v3665
    %v3667 = vlaneseq
    %v3668 = vshrl.u32 %v3667, 7
    %v3669 = vsub.s32 0, %v3668
    %v3670 = vrot.slane %v2172, %v3669
    %v3671 = vlaneseq
    %v3672 = vshrl.u32 %v3671, 7
    %v3673 = vsub.s32 0, %v3672
    %v3674 = vrot.slane %v2174, %v3673
    %v3675 = vlaneseq
    %v3676 = vshrl.u32 %v3675, 7
    %v3677 = vsub.s32 0, %v3676
    %v3678 = vrot.slane %v2198, %v3677
    %v3679 = vlaneseq
    %v3680 = vshrl.u32 %v3679, 7
    %v3681 = vsub.s32 0, %v3680
    %v3682 = vrot.slane %v2212, %v3681
    %v3683 = vlaneseq
    %v3684 = vshrl.u32 %v3683, 7
    %v3685 = vsub.s32 0, %v3684
    %v3686 = vrot.slane %v2220, %v3685
    %v3687 = vlaneseq
    %v3688 = vshrl.u32 %v3687, 7
    %v3689 = vsub.s32 0, %v3688
    %v3690 = vrot.slane %v2222, %v3689
    %v3691 = vlaneseq
    %v3692 = vshrl.u32 %v3691, 7
    %v3693 = vsub.s32 0, %v3692
    %v3694 = vrot.slane %v2205, %v3693
    %v3695 = vlaneseq
    %v3696 = vshrl.u32 %v3695, 7
    %v3697 = vsub.s32 0, %v3696
    %v3698 = vrot.slane %v2219, %v3697
    %v3699 = vlaneseq
    %v3700 = vshrl.u32 %v3699, 7
    %v3701 = vsub.s32 0, %v3700
    %v3702 = vrot.slane %v2221, %v3701
    %v3703 = vlaneseq
    %v3704 = vshrl.u32 %v3703, 7
    %v3705 = vsub.s32 0, %v3704
    %v3706 = vrot.slane %v2223, %v3705
    %v3707 = vlaneseq
    %v3708 = vshrl.u32 %v3707, 7
    %v3709 = vsub.s32 0, %v3708
    %v3710 = vrot.slane %v2247, %v3709
    %v3711 = vlaneseq
    %v3712 = vshrl.u32 %v3711, 7
    %v3713 = vsub.s32 0, %v3712
    %v3714 = vrot.slane %v2261, %v3713
    %v3715 = vlaneseq
    %v3716 = vshrl.u32 %v3715, 7
    %v3717 = vsub.s32 0, %v3716
    %v3718 = vrot.slane %v2269, %v3717
    %v3719 = vlaneseq
    %v3720 = vshrl.u32 %v3719, 7
    %v3721 = vsub.s32 0, %v3720
    %v3722 = vrot.slane %v2271, %v3721
    %v3723 = vlaneseq
    %v3724 = vshrl.u32 %v3723, 7
    %v3725 = vsub.s32 0, %v3724
    %v3726 = vrot.slane %v2254, %v3725
    %v3727 = vlaneseq
    %v3728 = vshrl.u32 %v3727, 7
    %v3729 = vsub.s32 0, %v3728
    %v3730 = vrot.slane %v2268, %v3729
    %v3731 = vlaneseq
    %v3732 = vshrl.u32 %v3731, 7
    %v3733 = vsub.s32 0, %v3732
    %v3734 = vrot.slane %v2270, %v3733
    %v3735 = vlaneseq
    %v3736 = vshrl.u32 %v3735, 7
    %v3737 = vsub.s32 0, %v3736
    %v3738 = vrot.slane %v2272, %v3737
    %v3739 = vlaneseq
    %v3740 = vshrl.u32 %v3739, 7
    %v3741 = vsub.s32 0, %v3740
    %v3742 = vrot.slane %v2296, %v3741
    %v3743 = vlaneseq
    %v3744 = vshrl.u32 %v3743, 7
    %v3745 = vsub.s32 0, %v3744
    %v3746 = vrot.slane %v2310, %v3745
    %v3747 = vlaneseq
    %v3748 = vshrl.u32 %v3747, 7
    %v3749 = vsub.s32 0, %v3748
    %v3750 = vrot.slane %v2318, %v3749
    %v3751 = vlaneseq
    %v3752 = vshrl.u32 %v3751, 7
    %v3753 = vsub.s32 0, %v3752
    %v3754 = vrot.slane %v2320, %v3753
    %v3755 = vlaneseq
    %v3756 = vshrl.u32 %v3755, 7
    %v3757 = vsub.s32 0, %v3756
    %v3758 = vrot.slane %v2303, %v3757
    %v3759 = vlaneseq
    %v3760 = vshrl.u32 %v3759, 7
    %v3761 = vsub.s32 0, %v3760
    %v3762 = vrot.slane %v2317, %v3761
    %v3763 = vlaneseq
    %v3764 = vshrl.u32 %v3763, 7
    %v3765 = vsub.s32 0, %v3764
    %v3766 = vrot.slane %v2319, %v3765
    %v3767 = vlaneseq
    %v3768 = vshrl.u32 %v3767, 7
    %v3769 = vsub.s32 0, %v3768
    %v3770 = vrot.slane %v2321, %v3769
    %v3771 = vlaneseq
    %v3772 = vshrl.u32 %v3771, 7
    %v3773 = vsub.s32 0, %v3772
    %v3774 = vrot.slane %v2345, %v3773
    %v3775 = vlaneseq
    %v3776 = vshrl.u32 %v3775, 7
    %v3777 = vsub.s32 0, %v3776
    %v3778 = vrot.slane %v2359, %v3777
    %v3779 = vlaneseq
    %v3780 = vshrl.u32 %v3779, 7
    %v3781 = vsub.s32 0, %v3780
    %v3782 = vrot.slane %v2367, %v3781
    %v3783 = vlaneseq
    %v3784 = vshrl.u32 %v3783, 7
    %v3785 = vsub.s32 0, %v3784
    %v3786 = vrot.slane %v2369, %v3785
    %v3787 = vlaneseq
    %v3788 = vshrl.u32 %v3787, 7
    %v3789 = vsub.s32 0, %v3788
    %v3790 = vrot.slane %v2352, %v3789
    %v3791 = vlaneseq
    %v3792 = vshrl.u32 %v3791, 7
    %v3793 = vsub.s32 0, %v3792
    %v3794 = vrot.slane %v2366, %v3793
    %v3795 = vlaneseq
    %v3796 = vshrl.u32 %v3795, 7
    %v3797 = vsub.s32 0, %v3796
    %v3798 = vrot.slane %v2368, %v3797
    %v3799 = vlaneseq
    %v3800 = vshrl.u32 %v3799, 7
    %v3801 = vsub.s32 0, %v3800
    %v3802 = vrot.slane %v2370, %v3801
    %v3803 = vlaneseq
    %v3804 = vshrl.u32 %v3803, 7
    %v3805 = vsub.s32 0, %v3804
    %v3806 = vrot.slane %v2394, %v3805
    %v3807 = vlaneseq
    %v3808 = vshrl.u32 %v3807, 7
    %v3809 = vsub.s32 0, %v3808
    %v3810 = vrot.slane %v2408, %v3809
    %v3811 = vlaneseq
    %v3812 = vshrl.u32 %v3811, 7
    %v3813 = vsub.s32 0, %v3812
    %v3814 = vrot.slane %v2416, %v3813
    %v3815 = vlaneseq
    %v3816 = vshrl.u32 %v3815, 7
    %v3817 = vsub.s32 0, %v3816
    %v3818 = vrot.slane %v2418, %v3817
    %v3819 = vlaneseq
    %v3820 = vshrl.u32 %v3819, 7
    %v3821 = vsub.s32 0, %v3820
    %v3822 = vrot.slane %v2401, %v3821
    %v3823 = vlaneseq
    %v3824 = vshrl.u32 %v3823, 7
    %v3825 = vsub.s32 0, %v3824
    %v3826 = vrot.slane %v2415, %v3825
    %v3827 = vlaneseq
    %v3828 = vshrl.u32 %v3827, 7
    %v3829 = vsub.s32 0, %v3828
    %v3830 = vrot.slane %v2417, %v3829
    %v3831 = vlaneseq
    %v3832 = vshrl.u32 %v3831, 7
    %v3833 = vsub.s32 0, %v3832
    %v3834 = vrot.slane %v2419, %v3833
    %v3835 = vlaneseq
    %v3836 = vshrl.u32 %v3835, 7
    %v3837 = vsub.s32 0, %v3836
    %v3838 = vrot.slane %v2443, %v3837
    %v3839 = vlaneseq
    %v3840 = vshrl.u32 %v3839, 7
    %v3841 = vsub.s32 0, %v3840
    %v3842 = vrot.slane %v2457, %v3841
    %v3843 = vlaneseq
    %v3844 = vshrl.u32 %v3843, 7
    %v3845 = vsub.s32 0, %v3844
    %v3846 = vrot.slane %v2465, %v3845
    %v3847 = vlaneseq
    %v3848 = vshrl.u32 %v3847, 7
    %v3849 = vsub.s32 0, %v3848
    %v3850 = vrot.slane %v2467, %v3849
    %v3851 = vlaneseq
    %v3852 = vshrl.u32 %v3851, 7
    %v3853 = vsub.s32 0, %v3852
    %v3854 = vrot.slane %v2450, %v3853
    %v3855 = vlaneseq
    %v3856 = vshrl.u32 %v3855, 7
    %v3857 = vsub.s32 0, %v3856
    %v3858 = vrot.slane %v2464, %v3857
    %v3859 = vlaneseq
    %v3860 = vshrl.u32 %v3859, 7
    %v3861 = vsub.s32 0, %v3860
    %v3862 = vrot.slane %v2466, %v3861
    %v3863 = vlaneseq
    %v3864 = vshrl.u32 %v3863, 7
    %v3865 = vsub.s32 0, %v3864
    %v3866 = vrot.slane %v2468, %v3865
    %v3867 = vlaneseq
    %v3868 = vshrl.u32 %v3867, 7
    %v3869 = vsub.s32 0, %v3868
    %v3870 = vrot.slane %v2492, %v3869
    %v3871 = vlaneseq
    %v3872 = vshrl.u32 %v3871, 7
    %v3873 = vsub.s32 0, %v3872
    %v3874 = vrot.slane %v2506, %v3873
    %v3875 = vlaneseq
    %v3876 = vshrl.u32 %v3875, 7
    %v3877 = vsub.s32 0, %v3876
    %v3878 = vrot.slane %v2514, %v3877
    %v3879 = vlaneseq
    %v3880 = vshrl.u32 %v3879, 7
    %v3881 = vsub.s32 0, %v3880
    %v3882 = vrot.slane %v2516, %v3881
    %v3883 = vlaneseq
    %v3884 = vshrl.u32 %v3883, 7
    %v3885 = vsub.s32 0, %v3884
    %v3886 = vrot.slane %v2499, %v3885
    %v3887 = vlaneseq
    %v3888 = vshrl.u32 %v3887, 7
    %v3889 = vsub.s32 0, %v3888
    %v3890 = vrot.slane %v2513, %v3889
    %v3891 = vlaneseq
    %v3892 = vshrl.u32 %v3891, 7
    %v3893 = vsub.s32 0, %v3892
    %v3894 = vrot.slane %v2515, %v3893
    %v3895 = vlaneseq
    %v3896 = vshrl.u32 %v3895, 7
    %v3897 = vsub.s32 0, %v3896
    %v3898 = vrot.slane %v2517, %v3897
    %v3899 = vlaneseq
    %v3900 = vshrl.u32 %v3899, 7
    %v3901 = vsub.s32 0, %v3900
    %v3902 = vrot.slane %v2541, %v3901
    %v3903 = vlaneseq
    %v3904 = vshrl.u32 %v3903, 7
    %v3905 = vsub.s32 0, %v3904
    %v3906 = vrot.slane %v2555, %v3905
    %v3907 = vlaneseq
    %v3908 = vshrl.u32 %v3907, 7
    %v3909 = vsub.s32 0, %v3908
    %v3910 = vrot.slane %v2563, %v3909
    %v3911 = vlaneseq
    %v3912 = vshrl.u32 %v3911, 7
    %v3913 = vsub.s32 0, %v3912
    %v3914 = vrot.slane %v2565, %v3913
    %v3915 = vlaneseq
    %v3916 = vshrl.u32 %v3915, 7
    %v3917 = vsub.s32 0, %v3916
    %v3918 = vrot.slane %v2548, %v3917
    %v3919 = vlaneseq
    %v3920 = vshrl.u32 %v3919, 7
    %v3921 = vsub.s32 0, %v3920
    %v3922 = vrot.slane %v2562, %v3921
    %v3923 = vlaneseq
    %v3924 = vshrl.u32 %v3923, 7
    %v3925 = vsub.s32 0, %v3924
    %v3926 = vrot.slane %v2564, %v3925
    %v3927 = vlaneseq
    %v3928 = vshrl.u32 %v3927, 7
    %v3929 = vsub.s32 0, %v3928
    %v3930 = vrot.slane %v2566, %v3929
    %v3931 = vlaneseq
    %v3932 = vshrl.u32 %v3931, 7
    %v3933 = vsub.s32 0, %v3932
    %v3934 = vrot.slane %v2590, %v3933
    %v3935 = vlaneseq
    %v3936 = vshrl.u32 %v3935, 7
    %v3937 = vsub.s32 0, %v3936
    %v3938 = vrot.slane %v2604, %v3937
    %v3939 = vlaneseq
    %v3940 = vshrl.u32 %v3939, 7
    %v3941 = vsub.s32 0, %v3940
    %v3942 = vrot.slane %v2612, %v3941
    %v3943 = vlaneseq
    %v3944 = vshrl.u32 %v3943, 7
    %v3945 = vsub.s32 0, %v3944
    %v3946 = vrot.slane %v2614, %v3945
    %v3947 = vlaneseq
    %v3948 = vshrl.u32 %v3947, 7
    %v3949 = vsub.s32 0, %v3948
    %v3950 = vrot.slane %v2597, %v3949
    %v3951 = vlaneseq
    %v3952 = vshrl.u32 %v3951, 7
    %v3953 = vsub.s32 0, %v3952
    %v3954 = vrot.slane %v2611, %v3953
    %v3955 = vlaneseq
    %v3956 = vshrl.u32 %v3955, 7
    %v3957 = vsub.s32 0, %v3956
    %v3958 = vrot.slane %v2613, %v3957
    %v3959 = vlaneseq
    %v3960 = vshrl.u32 %v3959, 7
    %v3961 = vsub.s32 0, %v3960
    %v3962 = vrot.slane %v2615, %v3961
    %v3963 = vlaneseq
    %v3964 = vshrl.u32 %v3963, 7
    %v3965 = vsub.s32 0, %v3964
    %v3966 = vrot.slane %v2639, %v3965
    %v3967 = vlaneseq
    %v3968 = vshrl.u32 %v3967, 7
    %v3969 = vsub.s32 0, %v3968
    %v3970 = vrot.slane %v2653, %v3969
    %v3971 = vlaneseq
    %v3972 = vshrl.u32 %v3971, 7
    %v3973 = vsub.s32 0, %v3972
    %v3974 = vrot.slane %v2661, %v3973
    %v3975 = vlaneseq
    %v3976 = vshrl.u32 %v3975, 7
    %v3977 = vsub.s32 0, %v3976
    %v3978 = vrot.slane %v2663, %v3977
    %v3979 = vlaneseq
    %v3980 = vshrl.u32 %v3979, 7
    %v3981 = vsub.s32 0, %v3980
    %v3982 = vrot.slane %v2646, %v3981
    %v3983 = vlaneseq
    %v3984 = vshrl.u32 %v3983, 7
    %v3985 = vsub.s32 0, %v3984
    %v3986 = vrot.slane %v2660, %v3985
    %v3987 = vlaneseq
    %v3988 = vshrl.u32 %v3987, 7
    %v3989 = vsub.s32 0, %v3988
    %v3990 = vrot.slane %v2662, %v3989
    %v3991 = vlaneseq
    %v3992 = vshrl.u32 %v3991, 7
    %v3993 = vsub.s32 0, %v3992
    %v3994 = vrot.slane %v2664, %v3993
    %v3995 = vlaneseq
    %v3996 = vshrl.u32 %v3995, 7
    %v3997 = vsub.s32 0, %v3996
    %v3998 = vrot.slane %v2688, %v3997
    %v3999 = vlaneseq
    %v4000 = vshrl.u32 %v3999, 7
    %v4001 = vsub.s32 0, %v4000
    %v4002 = vrot.slane %v2702, %v4001
    %v4003 = vlaneseq
    %v4004 = vshrl.u32 %v4003, 7
    %v4005 = vsub.s32 0, %v4004
    %v4006 = vrot.slane %v2710, %v4005
    %v4007 = vlaneseq
    %v4008 = vshrl.u32 %v4007, 7
    %v4009 = vsub.s32 0, %v4008
    %v4010 = vrot.slane %v2712, %v4009
    %v4011 = vlaneseq
    %v4012 = vshrl.u32 %v4011, 7
    %v4013 = vsub.s32 0, %v4012
    %v4014 = vrot.slane %v2695, %v4013
    %v4015 = vlaneseq
    %v4016 = vshrl.u32 %v4015, 7
    %v4017 = vsub.s32 0, %v4016
    %v4018 = vrot.slane %v2709, %v4017
    %v4019 = vlaneseq
    %v4020 = vshrl.u32 %v4019, 7
    %v4021 = vsub.s32 0, %v4020
    %v4022 = vrot.slane %v2711, %v4021
    %v4023 = vlaneseq
    %v4024 = vshrl.u32 %v4023, 7
    %v4025 = vsub.s32 0, %v4024
    %v4026 = vrot.slane %v2713, %v4025
    %v4027 = vlaneseq
    %v4028 = vshrl.u32 %v4027, 7
    %v4029 = vsub.s32 0, %v4028
    %v4030 = vrot.slane %v2737, %v4029
    %v4031 = vlaneseq
    %v4032 = vshrl.u32 %v4031, 7
    %v4033 = vsub.s32 0, %v4032
    %v4034 = vrot.slane %v2751, %v4033
    %v4035 = vlaneseq
    %v4036 = vshrl.u32 %v4035, 7
    %v4037 = vsub.s32 0, %v4036
    %v4038 = vrot.slane %v2759, %v4037
    %v4039 = vlaneseq
    %v4040 = vshrl.u32 %v4039, 7
    %v4041 = vsub.s32 0, %v4040
    %v4042 = vrot.slane %v2761, %v4041
    %v4043 = vlaneseq
    %v4044 = vshrl.u32 %v4043, 7
    %v4045 = vsub.s32 0, %v4044
    %v4046 = vrot.slane %v2744, %v4045
    %v4047 = vlaneseq
    %v4048 = vshrl.u32 %v4047, 7
    %v4049 = vsub.s32 0, %v4048
    %v4050 = vrot.slane %v2758, %v4049
    %v4051 = vlaneseq
    %v4052 = vshrl.u32 %v4051, 7
    %v4053 = vsub.s32 0, %v4052
    %v4054 = vrot.slane %v2760, %v4053
    %v4055 = vlaneseq
    %v4056 = vshrl.u32 %v4055, 7
    %v4057 = vsub.s32 0, %v4056
    %v4058 = vrot.slane %v2762, %v4057
    %v4059 = vlaneseq
    %v4060 = vshrl.u32 %v4059, 7
    %v4061 = vsub.s32 0, %v4060
    %v4062 = vrot.slane %v2786, %v4061
    %v4063 = vlaneseq
    %v4064 = vshrl.u32 %v4063, 7
    %v4065 = vsub.s32 0, %v4064
    %v4066 = vrot.slane %v2800, %v4065
    %v4067 = vlaneseq
    %v4068 = vshrl.u32 %v4067, 7
    %v4069 = vsub.s32 0, %v4068
    %v4070 = vrot.slane %v2808, %v4069
    %v4071 = vlaneseq
    %v4072 = vshrl.u32 %v4071, 7
    %v4073 = vsub.s32 0, %v4072
    %v4074 = vrot.slane %v2810, %v4073
    %v4075 = vlaneseq
    %v4076 = vshrl.u32 %v4075, 7
    %v4077 = vsub.s32 0, %v4076
    %v4078 = vrot.slane %v2793, %v4077
    %v4079 = vlaneseq
    %v4080 = vshrl.u32 %v4079, 7
    %v4081 = vsub.s32 0, %v4080
    %v4082 = vrot.slane %v2807, %v4081
    %v4083 = vlaneseq
    %v4084 = vshrl.u32 %v4083, 7
    %v4085 = vsub.s32 0, %v4084
    %v4086 = vrot.slane %v2809, %v4085
    %v4087 = vlaneseq
    %v4088 = vshrl.u32 %v4087, 7
    %v4089 = vsub.s32 0, %v4088
    %v4090 = vrot.slane %v2811, %v4089
    %v4091 = vlaneseq
    %v4092 = vshrl.u32 %v4091, 7
    %v4093 = vsub.s32 0, %v4092
    %v4094 = vrot.slane %v2835, %v4093
    %v4095 = vlaneseq
    %v4096 = vshrl.u32 %v4095, 7
    %v4097 = vsub.s32 0, %v4096
    %v4098 = vrot.slane %v2849, %v4097
    %v4099 = vlaneseq
    %v4100 = vshrl.u32 %v4099, 7
    %v4101 = vsub.s32 0, %v4100
    %v4102 = vrot.slane %v2857, %v4101
    %v4103 = vlaneseq
    %v4104 = vshrl.u32 %v4103, 7
    %v4105 = vsub.s32 0, %v4104
    %v4106 = vrot.slane %v2859, %v4105
    %v4107 = vlaneseq
    %v4108 = vshrl.u32 %v4107, 7
    %v4109 = vsub.s32 0, %v4108
    %v4110 = vrot.slane %v2842, %v4109
    %v4111 = vlaneseq
    %v4112 = vshrl.u32 %v4111, 7
    %v4113 = vsub.s32 0, %v4112
    %v4114 = vrot.slane %v2856, %v4113
    %v4115 = vlaneseq
    %v4116 = vshrl.u32 %v4115, 7
    %v4117 = vsub.s32 0, %v4116
    %v4118 = vrot.slane %v2858, %v4117
    %v4119 = vlaneseq
    %v4120 = vshrl.u32 %v4119, 7
    %v4121 = vsub.s32 0, %v4120
    %v4122 = vrot.slane %v2860, %v4121
    %v4123 = vlaneseq
    %v4124 = vshrl.u32 %v4123, 7
    %v4125 = vsub.s32 0, %v4124
    %v4126 = vrot.slane %v2884, %v4125
    %v4127 = vlaneseq
    %v4128 = vshrl.u32 %v4127, 7
    %v4129 = vsub.s32 0, %v4128
    %v4130 = vrot.slane %v2898, %v4129
    %v4131 = vlaneseq
    %v4132 = vshrl.u32 %v4131, 7
    %v4133 = vsub.s32 0, %v4132
    %v4134 = vrot.slane %v2906, %v4133
    %v4135 = vlaneseq
    %v4136 = vshrl.u32 %v4135, 7
    %v4137 = vsub.s32 0, %v4136
    %v4138 = vrot.slane %v2908, %v4137
    %v4139 = vlaneseq
    %v4140 = vshrl.u32 %v4139, 7
    %v4141 = vsub.s32 0, %v4140
    %v4142 = vrot.slane %v2891, %v4141
    %v4143 = vlaneseq
    %v4144 = vshrl.u32 %v4143, 7
    %v4145 = vsub.s32 0, %v4144
    %v4146 = vrot.slane %v2905, %v4145
    %v4147 = vlaneseq
    %v4148 = vshrl.u32 %v4147, 7
    %v4149 = vsub.s32 0, %v4148
    %v4150 = vrot.slane %v2907, %v4149
    %v4151 = vlaneseq
    %v4152 = vshrl.u32 %v4151, 7
    %v4153 = vsub.s32 0, %v4152
    %v4154 = vrot.slane %v2909, %v4153
    %v4155 = vlaneseq
    %v4156 = vshrl.u32 %v4155, 7
    %v4157 = vsub.s32 0, %v4156
    %v4158 = vrot.slane %v2933, %v4157
    %v4159 = vlaneseq
    %v4160 = vshrl.u32 %v4159, 7
    %v4161 = vsub.s32 0, %v4160
    %v4162 = vrot.slane %v2947, %v4161
    %v4163 = vlaneseq
    %v4164 = vshrl.u32 %v4163, 7
    %v4165 = vsub.s32 0, %v4164
    %v4166 = vrot.slane %v2955, %v4165
    %v4167 = vlaneseq
    %v4168 = vshrl.u32 %v4167, 7
    %v4169 = vsub.s32 0, %v4168
    %v4170 = vrot.slane %v2957, %v4169
    %v4171 = vlaneseq
    %v4172 = vshrl.u32 %v4171, 7
    %v4173 = vsub.s32 0, %v4172
    %v4174 = vrot.slane %v2940, %v4173
    %v4175 = vlaneseq
    %v4176 = vshrl.u32 %v4175, 7
    %v4177 = vsub.s32 0, %v4176
    %v4178 = vrot.slane %v2954, %v4177
    %v4179 = vlaneseq
    %v4180 = vshrl.u32 %v4179, 7
    %v4181 = vsub.s32 0, %v4180
    %v4182 = vrot.slane %v2956, %v4181
    %v4183 = vlaneseq
    %v4184 = vshrl.u32 %v4183, 7
    %v4185 = vsub.s32 0, %v4184
    %v4186 = vrot.slane %v2958, %v4185
    %v4187 = vlaneseq
    %v4188 = vshrl.u32 %v4187, 7
    %v4189 = vsub.s32 0, %v4188
    %v4190 = vrot.slane %v2982, %v4189
    %v4191 = vlaneseq
    %v4192 = vshrl.u32 %v4191, 7
    %v4193 = vsub.s32 0, %v4192
    %v4194 = vrot.slane %v2996, %v4193
    %v4195 = vlaneseq
    %v4196 = vshrl.u32 %v4195, 7
    %v4197 = vsub.s32 0, %v4196
    %v4198 = vrot.slane %v3004, %v4197
    %v4199 = vlaneseq
    %v4200 = vshrl.u32 %v4199, 7
    %v4201 = vsub.s32 0, %v4200
    %v4202 = vrot.slane %v3006, %v4201
    %v4203 = vlaneseq
    %v4204 = vshrl.u32 %v4203, 7
    %v4205 = vsub.s32 0, %v4204
    %v4206 = vrot.slane %v2989, %v4205
    %v4207 = vlaneseq
    %v4208 = vshrl.u32 %v4207, 7
    %v4209 = vsub.s32 0, %v4208
    %v4210 = vrot.slane %v3003, %v4209
    %v4211 = vlaneseq
    %v4212 = vshrl.u32 %v4211, 7
    %v4213 = vsub.s32 0, %v4212
    %v4214 = vrot.slane %v3005, %v4213
    %v4215 = vlaneseq
    %v4216 = vshrl.u32 %v4215, 7
    %v4217 = vsub.s32 0, %v4216
    %v4218 = vrot.slane %v3007, %v4217
    %v4219 = vlaneseq
    %v4220 = vshrl.u32 %v4219, 7
    %v4221 = vsub.s32 0, %v4220
    %v4222 = vrot.slane %v3031, %v4221
    %v4223 = vlaneseq
    %v4224 = vshrl.u32 %v4223, 7
    %v4225 = vsub.s32 0, %v4224
    %v4226 = vrot.slane %v3045, %v4225
    %v4227 = vlaneseq
    %v4228 = vshrl.u32 %v4227, 7
    %v4229 = vsub.s32 0, %v4228
    %v4230 = vrot.slane %v3053, %v4229
    %v4231 = vlaneseq
    %v4232 = vshrl.u32 %v4231, 7
    %v4233 = vsub.s32 0, %v4232
    %v4234 = vrot.slane %v3055, %v4233
    %v4235 = vlaneseq
    %v4236 = vshrl.u32 %v4235, 7
    %v4237 = vsub.s32 0, %v4236
    %v4238 = vrot.slane %v3038, %v4237
    %v4239 = vlaneseq
    %v4240 = vshrl.u32 %v4239, 7
    %v4241 = vsub.s32 0, %v4240
    %v4242 = vrot.slane %v3052, %v4241
    %v4243 = vlaneseq
    %v4244 = vshrl.u32 %v4243, 7
    %v4245 = vsub.s32 0, %v4244
    %v4246 = vrot.slane %v3054, %v4245
    %v4247 = vlaneseq
    %v4248 = vshrl.u32 %v4247, 7
    %v4249 = vsub.s32 0, %v4248
    %v4250 = vrot.slane %v3056, %v4249
    %v4251 = vlaneseq
    %v4252 = vshrl.u32 %v4251, 7
    %v4253 = vsub.s32 0, %v4252
    %v4254 = vrot.slane %v3080, %v4253
    %v4255 = vlaneseq
    %v4256 = vshrl.u32 %v4255, 7
    %v4257 = vsub.s32 0, %v4256
    %v4258 = vrot.slane %v3094, %v4257
    %v4259 = vlaneseq
    %v4260 = vshrl.u32 %v4259, 7
    %v4261 = vsub.s32 0, %v4260
    %v4262 = vrot.slane %v3102, %v4261
    %v4263 = vlaneseq
    %v4264 = vshrl.u32 %v4263, 7
    %v4265 = vsub.s32 0, %v4264
    %v4266 = vrot.slane %v3104, %v4265
    %v4267 = vlaneseq
    %v4268 = vshrl.u32 %v4267, 7
    %v4269 = vsub.s32 0, %v4268
    %v4270 = vrot.slane %v3087, %v4269
    %v4271 = vlaneseq
    %v4272 = vshrl.u32 %v4271, 7
    %v4273 = vsub.s32 0, %v4272
    %v4274 = vrot.slane %v3101, %v4273
    %v4275 = vlaneseq
    %v4276 = vshrl.u32 %v4275, 7
    %v4277 = vsub.s32 0, %v4276
    %v4278 = vrot.slane %v3103, %v4277
    %v4279 = vlaneseq
    %v4280 = vshrl.u32 %v4279, 7
    %v4281 = vsub.s32 0, %v4280
    %v4282 = vrot.slane %v3105, %v4281
    %v4283 = vlaneseq
    %v4284 = vshrl.u32 %v4283, 7
    %v4285 = vsub.s32 0, %v4284
    %v4286 = vrot.slane %v3129, %v4285
    %v4287 = vlaneseq
    %v4288 = vshrl.u32 %v4287, 7
    %v4289 = vsub.s32 0, %v4288
    %v4290 = vrot.slane %v3143, %v4289
    %v4291 = vlaneseq
    %v4292 = vshrl.u32 %v4291, 7
    %v4293 = vsub.s32 0, %v4292
    %v4294 = vrot.slane %v3151, %v4293
    %v4295 = vlaneseq
    %v4296 = vshrl.u32 %v4295, 7
    %v4297 = vsub.s32 0, %v4296
    %v4298 = vrot.slane %v3153, %v4297
    %v4299 = vlaneseq
    %v4300 = vshrl.u32 %v4299, 7
    %v4301 = vsub.s32 0, %v4300
    %v4302 = vrot.slane %v3136, %v4301
    %v4303 = vlaneseq
    %v4304 = vshrl.u32 %v4303, 7
    %v4305 = vsub.s32 0, %v4304
    %v4306 = vrot.slane %v3150, %v4305
    %v4307 = vlaneseq
    %v4308 = vshrl.u32 %v4307, 7
    %v4309 = vsub.s32 0, %v4308
    %v4310 = vrot.slane %v3152, %v4309
    %v4311 = vlaneseq
    %v4312 = vshrl.u32 %v4311, 7
    %v4313 = vsub.s32 0, %v4312
    %v4314 = vrot.slane %v3154, %v4313
    %v4315 = vlaneseq
    %v4316 = vshrl.u32 %v4315, 7
    %v4317 = vsub.s32 0, %v4316
    %v4318 = vrot.slane %v3178, %v4317
    %v4319 = vlaneseq
    %v4320 = vshrl.u32 %v4319, 7
    %v4321 = vsub.s32 0, %v4320
    %v4322 = vrot.slane %v3192, %v4321
    %v4323 = vlaneseq
    %v4324 = vshrl.u32 %v4323, 7
    %v4325 = vsub.s32 0, %v4324
    %v4326 = vrot.slane %v3200, %v4325
    %v4327 = vlaneseq
    %v4328 = vshrl.u32 %v4327, 7
    %v4329 = vsub.s32 0, %v4328
    %v4330 = vrot.slane %v3202, %v4329
    %v4331 = vlaneseq
    %v4332 = vshrl.u32 %v4331, 7
    %v4333 = vsub.s32 0, %v4332
    %v4334 = vrot.slane %v3185, %v4333
    %v4335 = vlaneseq
    %v4336 = vshrl.u32 %v4335, 7
    %v4337 = vsub.s32 0, %v4336
    %v4338 = vrot.slane %v3199, %v4337
    %v4339 = vlaneseq
    %v4340 = vshrl.u32 %v4339, 7
    %v4341 = vsub.s32 0, %v4340
    %v4342 = vrot.slane %v3201, %v4341
    %v4343 = vlaneseq
    %v4344 = vshrl.u32 %v4343, 7
    %v4345 = vsub.s32 0, %v4344
    %v4346 = vrot.slane %v3203, %v4345
    %v4347 = vlaneseq
    %v4348 = vshrl.u32 %v4347, 7
    %v4349 = vsub.s32 0, %v4348
    %v4350 = vrot.slane %v3227, %v4349
    %v4351 = vlaneseq
    %v4352 = vshrl.u32 %v4351, 7
    %v4353 = vsub.s32 0, %v4352
    %v4354 = vrot.slane %v3241, %v4353
    %v4355 = vlaneseq
    %v4356 = vshrl.u32 %v4355, 7
    %v4357 = vsub.s32 0, %v4356
    %v4358 = vrot.slane %v3249, %v4357
    %v4359 = vlaneseq
    %v4360 = vshrl.u32 %v4359, 7
    %v4361 = vsub.s32 0, %v4360
    %v4362 = vrot.slane %v3251, %v4361
    %v4363 = vlaneseq
    %v4364 = vshrl.u32 %v4363, 7
    %v4365 = vsub.s32 0, %v4364
    %v4366 = vrot.slane %v3234, %v4365
    %v4367 = vlaneseq
    %v4368 = vshrl.u32 %v4367, 7
    %v4369 = vsub.s32 0, %v4368
    %v4370 = vrot.slane %v3248, %v4369
    %v4371 = vlaneseq
    %v4372 = vshrl.u32 %v4371, 7
    %v4373 = vsub.s32 0, %v4372
    %v4374 = vrot.slane %v3250, %v4373
    %v4375 = vlaneseq
    %v4376 = vshrl.u32 %v4375, 7
    %v4377 = vsub.s32 0, %v4376
    %v4378 = vrot.slane %v3252, %v4377
    %v4379 = vlaneseq
    %v4380 = vshrl.u32 %v4379, 7
    %v4381 = vsub.s32 0, %v4380
    %v4382 = vrot.slane %v3276, %v4381
    %v4383 = vlaneseq
    %v4384 = vshrl.u32 %v4383, 7
    %v4385 = vsub.s32 0, %v4384
    %v4386 = vrot.slane %v3290, %v4385
    %v4387 = vlaneseq
    %v4388 = vshrl.u32 %v4387, 7
    %v4389 = vsub.s32 0, %v4388
    %v4390 = vrot.slane %v3298, %v4389
    %v4391 = vlaneseq
    %v4392 = vshrl.u32 %v4391, 7
    %v4393 = vsub.s32 0, %v4392
    %v4394 = vrot.slane %v3300, %v4393
    %v4395 = vlaneseq
    %v4396 = vshrl.u32 %v4395, 7
    %v4397 = vsub.s32 0, %v4396
    %v4398 = vrot.slane %v3283, %v4397
    %v4399 = vlaneseq
    %v4400 = vshrl.u32 %v4399, 7
    %v4401 = vsub.s32 0, %v4400
    %v4402 = vrot.slane %v3297, %v4401
    %v4403 = vlaneseq
    %v4404 = vshrl.u32 %v4403, 7
    %v4405 = vsub.s32 0, %v4404
    %v4406 = vrot.slane %v3299, %v4405
    %v4407 = vlaneseq
    %v4408 = vshrl.u32 %v4407, 7
    %v4409 = vsub.s32 0, %v4408
    %v4410 = vrot.slane %v3301, %v4409
    %v4411 = vlaneseq
    %v4412 = vshrl.u32 %v4411, 7
    %v4413 = vsub.s32 0, %v4412
    %v4414 = vrot.slane %v3325, %v4413
    %v4415 = vlaneseq
    %v4416 = vshrl.u32 %v4415, 7
    %v4417 = vsub.s32 0, %v4416
    %v4418 = vrot.slane %v3339, %v4417
    %v4419 = vlaneseq
    %v4420 = vshrl.u32 %v4419, 7
    %v4421 = vsub.s32 0, %v4420
    %v4422 = vrot.slane %v3347, %v4421
    %v4423 = vlaneseq
    %v4424 = vshrl.u32 %v4423, 7
    %v4425 = vsub.s32 0, %v4424
    %v4426 = vrot.slane %v3349, %v4425
    %v4427 = vlaneseq
    %v4428 = vshrl.u32 %v4427, 7
    %v4429 = vsub.s32 0, %v4428
    %v4430 = vrot.slane %v3332, %v4429
    %v4431 = vlaneseq
    %v4432 = vshrl.u32 %v4431, 7
    %v4433 = vsub.s32 0, %v4432
    %v4434 = vrot.slane %v3346, %v4433
    %v4435 = vlaneseq
    %v4436 = vshrl.u32 %v4435, 7
    %v4437 = vsub.s32 0, %v4436
    %v4438 = vrot.slane %v3348, %v4437
    %v4439 = vlaneseq
    %v4440 = vshrl.u32 %v4439, 7
    %v4441 = vsub.s32 0, %v4440
    %v4442 = vrot.slane %v3350, %v4441
    %v4443 = vlaneseq
    %v4444 = vshrl.u32 %v4443, 7
    %v4445 = vsub.s32 0, %v4444
    %v4446 = vrot.slane %v3374, %v4445
    %v4447 = vlaneseq
    %v4448 = vshrl.u32 %v4447, 7
    %v4449 = vsub.s32 0, %v4448
    %v4450 = vrot.slane %v3388, %v4449
    %v4451 = vlaneseq
    %v4452 = vshrl.u32 %v4451, 7
    %v4453 = vsub.s32 0, %v4452
    %v4454 = vrot.slane %v3396, %v4453
    %v4455 = vlaneseq
    %v4456 = vshrl.u32 %v4455, 7
    %v4457 = vsub.s32 0, %v4456
    %v4458 = vrot.slane %v3398, %v4457
    %v4459 = vlaneseq
    %v4460 = vshrl.u32 %v4459, 7
    %v4461 = vsub.s32 0, %v4460
    %v4462 = vrot.slane %v3381, %v4461
    %v4463 = vlaneseq
    %v4464 = vshrl.u32 %v4463, 7
    %v4465 = vsub.s32 0, %v4464
    %v4466 = vrot.slane %v3395, %v4465
    %v4467 = vlaneseq
    %v4468 = vshrl.u32 %v4467, 7
    %v4469 = vsub.s32 0, %v4468
    %v4470 = vrot.slane %v3397, %v4469
    %v4471 = vlaneseq
    %v4472 = vshrl.u32 %v4471, 7
    %v4473 = vsub.s32 0, %v4472
    %v4474 = vrot.slane %v3399, %v4473
    %v4475 = vlaneseq
    %v4476 = vshrl.u32 %v4475, 7
    %v4477 = vsub.s32 0, %v4476
    %v4478 = vrot.slane %v3423, %v4477
    %v4479 = vlaneseq
    %v4480 = vshrl.u32 %v4479, 7
    %v4481 = vsub.s32 0, %v4480
    %v4482 = vrot.slane %v3437, %v4481
    %v4483 = vlaneseq
    %v4484 = vshrl.u32 %v4483, 7
    %v4485 = vsub.s32 0, %v4484
    %v4486 = vrot.slane %v3445, %v4485
    %v4487 = vlaneseq
    %v4488 = vshrl.u32 %v4487, 7
    %v4489 = vsub.s32 0, %v4488
    %v4490 = vrot.slane %v3447, %v4489
    %v4491 = vlaneseq
    %v4492 = vshrl.u32 %v4491, 7
    %v4493 = vsub.s32 0, %v4492
    %v4494 = vrot.slane %v3430, %v4493
    %v4495 = vlaneseq
    %v4496 = vshrl.u32 %v4495, 7
    %v4497 = vsub.s32 0, %v4496
    %v4498 = vrot.slane %v3444, %v4497
    %v4499 = vlaneseq
    %v4500 = vshrl.u32 %v4499, 7
    %v4501 = vsub.s32 0, %v4500
    %v4502 = vrot.slane %v3446, %v4501
    %v4503 = vlaneseq
    %v4504 = vshrl.u32 %v4503, 7
    %v4505 = vsub.s32 0, %v4504
    %v4506 = vrot.slane %v3448, %v4505
    %v4507 = vlaneseq
    %v4508 = vshrl.u32 %v4507, 7
    %v4509 = vsub.s32 0, %v4508
    %v4510 = vrot.slane %v3472, %v4509
    %v4511 = vlaneseq
    %v4512 = vshrl.u32 %v4511, 7
    %v4513 = vsub.s32 0, %v4512
    %v4514 = vrot.slane %v3486, %v4513
    %v4515 = vlaneseq
    %v4516 = vshrl.u32 %v4515, 7
    %v4517 = vsub.s32 0, %v4516
    %v4518 = vrot.slane %v3494, %v4517
    %v4519 = vlaneseq
    %v4520 = vshrl.u32 %v4519, 7
    %v4521 = vsub.s32 0, %v4520
    %v4522 = vrot.slane %v3496, %v4521
    %v4523 = vlaneseq
    %v4524 = vshrl.u32 %v4523, 7
    %v4525 = vsub.s32 0, %v4524
    %v4526 = vrot.slane %v3479, %v4525
    %v4527 = vlaneseq
    %v4528 = vshrl.u32 %v4527, 7
    %v4529 = vsub.s32 0, %v4528
    %v4530 = vrot.slane %v3493, %v4529
    %v4531 = vlaneseq
    %v4532 = vshrl.u32 %v4531, 7
    %v4533 = vsub.s32 0, %v4532
    %v4534 = vrot.slane %v3495, %v4533
    %v4535 = vlaneseq
    %v4536 = vshrl.u32 %v4535, 7
    %v4537 = vsub.s32 0, %v4536
    %v4538 = vrot.slane %v3497, %v4537
    %v4539 = vlaneseq
    %v4540 = vshrl.u32 %v4539, 7
    %v4541 = vsub.s32 0, %v4540
    %v4542 = vrot.slane %v3521, %v4541
    %v4543 = vlaneseq
    %v4544 = vshrl.u32 %v4543, 7
    %v4545 = vsub.s32 0, %v4544
    %v4546 = vrot.slane %v3535, %v4545
    %v4547 = vlaneseq
    %v4548 = vshrl.u32 %v4547, 7
    %v4549 = vsub.s32 0, %v4548
    %v4550 = vrot.slane %v3543, %v4549
    %v4551 = vlaneseq
    %v4552 = vshrl.u32 %v4551, 7
    %v4553 = vsub.s32 0, %v4552
    %v4554 = vrot.slane %v3545, %v4553
    %v4555 = vlaneseq
    %v4556 = vshrl.u32 %v4555, 7
    %v4557 = vsub.s32 0, %v4556
    %v4558 = vrot.slane %v3528, %v4557
    %v4559 = vlaneseq
    %v4560 = vshrl.u32 %v4559, 7
    %v4561 = vsub.s32 0, %v4560
    %v4562 = vrot.slane %v3542, %v4561
    %v4563 = vlaneseq
    %v4564 = vshrl.u32 %v4563, 7
    %v4565 = vsub.s32 0, %v4564
    %v4566 = vrot.slane %v3544, %v4565
    %v4567 = vlaneseq
    %v4568 = vshrl.u32 %v4567, 7
    %v4569 = vsub.s32 0, %v4568
    %v4570 = vrot.slane %v3546, %v4569
    %v4827 = vadd.f32 %v161, %v3550
    %v4828 = vadd.f32 %v168, %v3554
    %v4829 = vadd.f32 %v175, %v3558
    %v4830 = vadd.f32 %v182, %v3562
    %v4831 = vadd.f32 %v189, %v3566
    %v4832 = vadd.f32 %v196, %v3570
    %v4833 = vadd.f32 %v203, %v3574
    %v4834 = vadd.f32 %v210, %v3578
    %v4835 = vadd.f32 %v217, %v3582
    %v4836 = vadd.f32 %v224, %v3586
    %v4837 = vadd.f32 %v231, %v3590
    %v4838 = vadd.f32 %v238, %v3594
    %v4839 = vadd.f32 %v245, %v3598
    %v4840 = vadd.f32 %v252, %v3602
    %v4841 = vadd.f32 %v259, %v3606
    %v4842 = vadd.f32 %v266, %v3610
    %v4843 = vadd.f32 %v273, %v3614
    %v4844 = vadd.f32 %v280, %v3618
    %v4845 = vadd.f32 %v287, %v3622
    %v4846 = vadd.f32 %v294, %v3626
    %v4847 = vadd.f32 %v301, %v3630
    %v4848 = vadd.f32 %v308, %v3634
    %v4849 = vadd.f32 %v315, %v3638
    %v4850 = vadd.f32 %v322, %v3642
    %v4851 = vadd.f32 %v329, %v3646
    %v4852 = vadd.f32 %v336, %v3650
    %v4853 = vadd.f32 %v343, %v3654
    %v4854 = vadd.f32 %v350, %v3658
    %v4855 = vadd.f32 %v357, %v3662
    %v4856 = vadd.f32 %v364, %v3666
    %v4857 = vadd.f32 %v371, %v3670
    %v4858 = vadd.f32 %v378, %v3674
    %v4859 = vadd.f32 %v385, %v3678
    %v4860 = vadd.f32 %v392, %v3682
    %v4861 = vadd.f32 %v399, %v3686
    %v4862 = vadd.f32 %v406, %v3690
    %v4863 = vadd.f32 %v413, %v3694
    %v4864 = vadd.f32 %v420, %v3698
    %v4865 = vadd.f32 %v427, %v3702
    %v4866 = vadd.f32 %v434, %v3706
    %v4867 = vadd.f32 %v441, %v3710
    %v4868 = vadd.f32 %v448, %v3714
    %v4869 = vadd.f32 %v455, %v3718
    %v4870 = vadd.f32 %v462, %v3722
    %v4871 = vadd.f32 %v469, %v3726
    %v4872 = vadd.f32 %v476, %v3730
    %v4873 = vadd.f32 %v483, %v3734
    %v4874 = vadd.f32 %v490, %v3738
    %v4875 = vadd.f32 %v497, %v3742
    %v4876 = vadd.f32 %v504, %v3746
    %v4877 = vadd.f32 %v511, %v3750
    %v4878 = vadd.f32 %v518, %v3754
    %v4879 = vadd.f32 %v525, %v3758
    %v4880 = vadd.f32 %v532, %v3762
    %v4881 = vadd.f32 %v539, %v3766
    %v4882 = vadd.f32 %v546, %v3770
    %v4883 = vadd.f32 %v553, %v3774
    %v4884 = vadd.f32 %v560, %v3778
    %v4885 = vadd.f32 %v567, %v3782
    %v4886 = vadd.f32 %v574, %v3786
    %v4887 = vadd.f32 %v581, %v3790
    %v4888 = vadd.f32 %v588, %v3794
    %v4889 = vadd.f32 %v595, %v3798
    %v4890 = vadd.f32 %v602, %v3802
    %v4891 = vadd.f32 %v609, %v3806
    %v4892 = vadd.f32 %v616, %v3810
    %v4893 = vadd.f32 %v623, %v3814
    %v4894 = vadd.f32 %v630, %v3818
    %v4895 = vadd.f32 %v637, %v3822
    %v4896 = vadd.f32 %v644, %v3826
    %v4897 = vadd.f32 %v651, %v3830
    %v4898 = vadd.f32 %v658, %v3834
    %v4899 = vadd.f32 %v665, %v3838
    %v4900 = vadd.f32 %v672, %v3842
    %v4901 = vadd.f32 %v679, %v3846
    %v4902 = vadd.f32 %v686, %v3850
    %v4903 = vadd.f32 %v693, %v3854
    %v4904 = vadd.f32 %v700, %v3858
    %v4905 = vadd.f32 %v707, %v3862
    %v4906 = vadd.f32 %v714, %v3866
    %v4907 = vadd.f32 %v721, %v3870
    %v4908 = vadd.f32 %v728, %v3874
    %v4909 = vadd.f32 %v735, %v3878
    %v4910 = vadd.f32 %v742, %v3882
    %v4911 = vadd.f32 %v749, %v3886
    %v4912 = vadd.f32 %v756, %v3890
    %v4913 = vadd.f32 %v763, %v3894
    %v4914 = vadd.f32 %v770, %v3898
    %v4915 = vadd.f32 %v777, %v3902
    %v4916 = vadd.f32 %v784, %v3906
    %v4917 = vadd.f32 %v791, %v3910
    %v4918 = vadd.f32 %v798, %v3914
    %v4919 = vadd.f32 %v805, %v3918
    %v4920 = vadd.f32 %v812, %v3922
    %v4921 = vadd.f32 %v819, %v3926
    %v4922 = vadd.f32 %v826, %v3930
    %v4923 = vadd.f32 %v833, %v3934
    %v4924 = vadd.f32 %v840, %v3938
    %v4925 = vadd.f32 %v847, %v3942
    %v4926 = vadd.f32 %v854, %v3946
    %v4927 = vadd.f32 %v861, %v3950
    %v4928 = vadd.f32 %v868, %v3954
    %v4929 = vadd.f32 %v875, %v3958
    %v4930 = vadd.f32 %v882, %v3962
    %v4931 = vadd.f32 %v889, %v3966
    %v4932 = vadd.f32 %v896, %v3970
    %v4933 = vadd.f32 %v903, %v3974
    %v4934 = vadd.f32 %v910, %v3978
    %v4935 = vadd.f32 %v917, %v3982
    %v4936 = vadd.f32 %v924, %v3986
    %v4937 = vadd.f32 %v931, %v3990
    %v4938 = vadd.f32 %v938, %v3994
    %v4939 = vadd.f32 %v945, %v3998
    %v4940 = vadd.f32 %v952, %v4002
    %v4941 = vadd.f32 %v959, %v4006
    %v4942 = vadd.f32 %v966, %v4010
    %v4943 = vadd.f32 %v973, %v4014
    %v4944 = vadd.f32 %v980, %v4018
    %v4945 = vadd.f32 %v987, %v4022
    %v4946 = vadd.f32 %v994, %v4026
    %v4947 = vadd.f32 %v1001, %v4030
    %v4948 = vadd.f32 %v1008, %v4034
    %v4949 = vadd.f32 %v1015, %v4038
    %v4950 = vadd.f32 %v1022, %v4042
    %v4951 = vadd.f32 %v1029, %v4046
    %v4952 = vadd.f32 %v1036, %v4050
    %v4953 = vadd.f32 %v1043, %v4054
    %v4954 = vadd.f32 %v1050, %v4058
    %v4955 = vadd.f32 %v1057, %v4062
    %v4956 = vadd.f32 %v1064, %v4066
    %v4957 = vadd.f32 %v1071, %v4070
    %v4958 = vadd.f32 %v1078, %v4074
    %v4959 = vadd.f32 %v1085, %v4078
    %v4960 = vadd.f32 %v1092, %v4082
    %v4961 = vadd.f32 %v1099, %v4086
    %v4962 = vadd.f32 %v1106, %v4090
    %v4963 = vadd.f32 %v1113, %v4094
    %v4964 = vadd.f32 %v1120, %v4098
    %v4965 = vadd.f32 %v1127, %v4102
    %v4966 = vadd.f32 %v1134, %v4106
    %v4967 = vadd.f32 %v1141, %v4110
    %v4968 = vadd.f32 %v1148, %v4114
    %v4969 = vadd.f32 %v1155, %v4118
    %v4970 = vadd.f32 %v1162, %v4122
    %v4971 = vadd.f32 %v1169, %v4126
    %v4972 = vadd.f32 %v1176, %v4130
    %v4973 = vadd.f32 %v1183, %v4134
    %v4974 = vadd.f32 %v1190, %v4138
    %v4975 = vadd.f32 %v1197, %v4142
    %v4976 = vadd.f32 %v1204, %v4146
    %v4977 = vadd.f32 %v1211, %v4150
    %v4978 = vadd.f32 %v1218, %v4154
    %v4979 = vadd.f32 %v1225, %v4158
    %v4980 = vadd.f32 %v1232, %v4162
    %v4981 = vadd.f32 %v1239, %v4166
    %v4982 = vadd.f32 %v1246, %v4170
    %v4983 = vadd.f32 %v1253, %v4174
    %v4984 = vadd.f32 %v1260, %v4178
    %v4985 = vadd.f32 %v1267, %v4182
    %v4986 = vadd.f32 %v1274, %v4186
    %v4987 = vadd.f32 %v1281, %v4190
    %v4988 = vadd.f32 %v1288, %v4194
    %v4989 = vadd.f32 %v1295, %v4198
    %v4990 = vadd.f32 %v1302, %v4202
    %v4991 = vadd.f32 %v1309, %v4206
    %v4992 = vadd.f32 %v1316, %v4210
    %v4993 = vadd.f32 %v1323, %v4214
    %v4994 = vadd.f32 %v1330, %v4218
    %v4995 = vadd.f32 %v1337, %v4222
    %v4996 = vadd.f32 %v1344, %v4226
    %v4997 = vadd.f32 %v1351, %v4230
    %v4998 = vadd.f32 %v1358, %v4234
    %v4999 = vadd.f32 %v1365, %v4238
    %v5000 = vadd.f32 %v1372, %v4242
    %v5001 = vadd.f32 %v1379, %v4246
    %v5002 = vadd.f32 %v1386, %v4250
    %v5003 = vadd.f32 %v1393, %v4254
    %v5004 = vadd.f32 %v1400, %v4258
    %v5005 = vadd.f32 %v1407, %v4262
    %v5006 = vadd.f32 %v1414, %v4266
    %v5007 = vadd.f32 %v1421, %v4270
    %v5008 = vadd.f32 %v1428, %v4274
    %v5009 = vadd.f32 %v1435, %v4278
    %v5010 = vadd.f32 %v1442, %v4282
    %v5011 = vadd.f32 %v1449, %v4286
    %v5012 = vadd.f32 %v1456, %v4290
    %v5013 = vadd.f32 %v1463, %v4294
    %v5014 = vadd.f32 %v1470, %v4298
    %v5015 = vadd.f32 %v1477, %v4302
    %v5016 = vadd.f32 %v1484, %v4306
    %v5017 = vadd.f32 %v1491, %v4310
    %v5018 = vadd.f32 %v1498, %v4314
    %v5019 = vadd.f32 %v1505, %v4318
    %v5020 = vadd.f32 %v1512, %v4322
    %v5021 = vadd.f32 %v1519, %v4326
    %v5022 = vadd.f32 %v1526, %v4330
    %v5023 = vadd.f32 %v1533, %v4334
    %v5024 = vadd.f32 %v1540, %v4338
    %v5025 = vadd.f32 %v1547, %v4342
    %v5026 = vadd.f32 %v1554, %v4346
    %v5027 = vadd.f32 %v1561, %v4350
    %v5028 = vadd.f32 %v1568, %v4354
    %v5029 = vadd.f32 %v1575, %v4358
    %v5030 = vadd.f32 %v1582, %v4362
    %v5031 = vadd.f32 %v1589, %v4366
    %v5032 = vadd.f32 %v1596, %v4370
    %v5033 = vadd.f32 %v1603, %v4374
    %v5034 = vadd.f32 %v1610, %v4378
    %v5035 = vadd.f32 %v1617, %v4382
    %v5036 = vadd.f32 %v1624, %v4386
    %v5037 = vadd.f32 %v1631, %v4390
    %v5038 = vadd.f32 %v1638, %v4394
    %v5039 = vadd.f32 %v1645, %v4398
    %v5040 = vadd.f32 %v1652, %v4402
    %v5041 = vadd.f32 %v1659, %v4406
    %v5042 = vadd.f32 %v1666, %v4410
    %v5043 = vadd.f32 %v1673, %v4414
    %v5044 = vadd.f32 %v1680, %v4418
    %v5045 = vadd.f32 %v1687, %v4422
    %v5046 = vadd.f32 %v1694, %v4426
    %v5047 = vadd.f32 %v1701, %v4430
    %v5048 = vadd.f32 %v1708, %v4434
    %v5049 = vadd.f32 %v1715, %v4438
    %v5050 = vadd.f32 %v1722, %v4442
    %v5051 = vadd.f32 %v1729, %v4446
    %v5052 = vadd.f32 %v1736, %v4450
    %v5053 = vadd.f32 %v1743, %v4454
    %v5054 = vadd.f32 %v1750, %v4458
    %v5055 = vadd.f32 %v1757, %v4462
    %v5056 = vadd.f32 %v1764, %v4466
    %v5057 = vadd.f32 %v1771, %v4470
    %v5058 = vadd.f32 %v1778, %v4474
    %v5059 = vadd.f32 %v1785, %v4478
    %v5060 = vadd.f32 %v1792, %v4482
    %v5061 = vadd.f32 %v1799, %v4486
    %v5062 = vadd.f32 %v1806, %v4490
    %v5063 = vadd.f32 %v1813, %v4494
    %v5064 = vadd.f32 %v1820, %v4498
    %v5065 = vadd.f32 %v1827, %v4502
    %v5066 = vadd.f32 %v1834, %v4506
    %v5067 = vadd.f32 %v1841, %v4510
    %v5068 = vadd.f32 %v1848, %v4514
    %v5069 = vadd.f32 %v1855, %v4518
    %v5070 = vadd.f32 %v1862, %v4522
    %v5071 = vadd.f32 %v1869, %v4526
    %v5072 = vadd.f32 %v1876, %v4530
    %v5073 = vadd.f32 %v1883, %v4534
    %v5074 = vadd.f32 %v1890, %v4538
    %v5075 = vadd.f32 %v1897, %v4542
    %v5076 = vadd.f32 %v1904, %v4546
    %v5077 = vadd.f32 %v1911, %v4550
    %v5078 = vadd.f32 %v1918, %v4554
    %v5079 = vadd.f32 %v1925, %v4558
    %v5080 = vadd.f32 %v1932, %v4562
    %v5081 = vadd.f32 %v1939, %v4566
    %v5082 = vadd.f32 %v1946, %v4570
    %vm5083 = vcmask 261120
    %v5084 = vsel %vm5083, %v4827, -inf
    %v5085 = vsel %vm5083, %v4828, -inf
    %v5086 = vsel %vm5083, %v4829, -inf
    %v5087 = vsel %vm5083, %v4830, -inf
    %v5088 = vsel %vm5083, %v4831, -inf
    %v5089 = vmax.f32 %v5084, %v5088
    %v5090 = vsel %vm5083, %v4832, -inf
    %v5091 = vmax.f32 %v5085, %v5090
    %v5092 = vsel %vm5083, %v4833, -inf
    %v5093 = vmax.f32 %v5086, %v5092
    %v5094 = vsel %vm5083, %v4834, -inf
    %v5095 = vmax.f32 %v5087, %v5094
    %v5096 = vsel %vm5083, %v4835, -inf
    %v5097 = vmax.f32 %v5089, %v5096
    %v5098 = vsel %vm5083, %v4836, -inf
    %v5099 = vmax.f32 %v5091, %v5098
    %v5100 = vsel %vm5083, %v4837, -inf
    %v5101 = vmax.f32 %v5093, %v5100
    %v5102 = vsel %vm5083, %v4838, -inf
    %v5103 = vmax.f32 %v5095, %v5102
    %v5104 = vsel %vm5083, %v4839, -inf
    %v5105 = vmax.f32 %v5097, %v5104
    %v5106 = vsel %vm5083, %v4840, -inf
    %v5107 = vmax.f32 %v5099, %v5106
    %v5108 = vsel %vm5083, %v4841, -inf
    %v5109 = vmax.f32 %v5101, %v5108
    %v5110 = vsel %vm5083, %v4842, -inf
    %v5111 = vmax.f32 %v5103, %v5110
    %v5112 = vsel %vm5083, %v4843, -inf
    %v5113 = vmax.f32 %v5105, %v5112
    %v5114 = vsel %vm5083, %v4844, -inf
    %v5115 = vmax.f32 %v5107, %v5114
    %v5116 = vsel %vm5083, %v4845, -inf
    %v5117 = vmax.f32 %v5109, %v5116
    %v5118 = vsel %vm5083, %v4846, -inf
    %v5119 = vmax.f32 %v5111, %v5118
    %v5120 = vsel %vm5083, %v4847, -inf
    %v5121 = vmax.f32 %v5113, %v5120
    %v5122 = vsel %vm5083, %v4848, -inf
    %v5123 = vmax.f32 %v5115, %v5122
    %v5124 = vsel %vm5083, %v4849, -inf
    %v5125 = vmax.f32 %v5117, %v5124
    %v5126 = vsel %vm5083, %v4850, -inf
    %v5127 = vmax.f32 %v5119, %v5126
    %v5128 = vsel %vm5083, %v4851, -inf
    %v5129 = vmax.f32 %v5121, %v5128
    %v5130 = vsel %vm5083, %v4852, -inf
    %v5131 = vmax.f32 %v5123, %v5130
    %v5132 = vsel %vm5083, %v4853, -inf
    %v5133 = vmax.f32 %v5125, %v5132
    %v5134 = vsel %vm5083, %v4854, -inf
    %v5135 = vmax.f32 %v5127, %v5134
    %v5136 = vsel %vm5083, %v4855, -inf
    %v5137 = vmax.f32 %v5129, %v5136
    %v5138 = vsel %vm5083, %v4856, -inf
    %v5139 = vmax.f32 %v5131, %v5138
    %v5140 = vsel %vm5083, %v4857, -inf
    %v5141 = vmax.f32 %v5133, %v5140
    %v5142 = vsel %vm5083, %v4858, -inf
    %v5143 = vmax.f32 %v5135, %v5142
    %v5144 = vsel %vm5083, %v4859, -inf
    %v5145 = vmax.f32 %v5137, %v5144
    %v5146 = vsel %vm5083, %v4860, -inf
    %v5147 = vmax.f32 %v5139, %v5146
    %v5148 = vsel %vm5083, %v4861, -inf
    %v5149 = vmax.f32 %v5141, %v5148
    %v5150 = vsel %vm5083, %v4862, -inf
    %v5151 = vmax.f32 %v5143, %v5150
    %v5152 = vsel %vm5083, %v4863, -inf
    %v5153 = vmax.f32 %v5145, %v5152
    %v5154 = vsel %vm5083, %v4864, -inf
    %v5155 = vmax.f32 %v5147, %v5154
    %v5156 = vsel %vm5083, %v4865, -inf
    %v5157 = vmax.f32 %v5149, %v5156
    %v5158 = vsel %vm5083, %v4866, -inf
    %v5159 = vmax.f32 %v5151, %v5158
    %v5160 = vsel %vm5083, %v4867, -inf
    %v5161 = vmax.f32 %v5153, %v5160
    %v5162 = vsel %vm5083, %v4868, -inf
    %v5163 = vmax.f32 %v5155, %v5162
    %v5164 = vsel %vm5083, %v4869, -inf
    %v5165 = vmax.f32 %v5157, %v5164
    %v5166 = vsel %vm5083, %v4870, -inf
    %v5167 = vmax.f32 %v5159, %v5166
    %v5168 = vsel %vm5083, %v4871, -inf
    %v5169 = vmax.f32 %v5161, %v5168
    %v5170 = vsel %vm5083, %v4872, -inf
    %v5171 = vmax.f32 %v5163, %v5170
    %v5172 = vsel %vm5083, %v4873, -inf
    %v5173 = vmax.f32 %v5165, %v5172
    %v5174 = vsel %vm5083, %v4874, -inf
    %v5175 = vmax.f32 %v5167, %v5174
    %v5176 = vsel %vm5083, %v4875, -inf
    %v5177 = vmax.f32 %v5169, %v5176
    %v5178 = vsel %vm5083, %v4876, -inf
    %v5179 = vmax.f32 %v5171, %v5178
    %v5180 = vsel %vm5083, %v4877, -inf
    %v5181 = vmax.f32 %v5173, %v5180
    %v5182 = vsel %vm5083, %v4878, -inf
    %v5183 = vmax.f32 %v5175, %v5182
    %v5184 = vsel %vm5083, %v4879, -inf
    %v5185 = vmax.f32 %v5177, %v5184
    %v5186 = vsel %vm5083, %v4880, -inf
    %v5187 = vmax.f32 %v5179, %v5186
    %v5188 = vsel %vm5083, %v4881, -inf
    %v5189 = vmax.f32 %v5181, %v5188
    %v5190 = vsel %vm5083, %v4882, -inf
    %v5191 = vmax.f32 %v5183, %v5190
    %v5192 = vsel %vm5083, %v4883, -inf
    %v5193 = vmax.f32 %v5185, %v5192
    %v5194 = vsel %vm5083, %v4884, -inf
    %v5195 = vmax.f32 %v5187, %v5194
    %v5196 = vsel %vm5083, %v4885, -inf
    %v5197 = vmax.f32 %v5189, %v5196
    %v5198 = vsel %vm5083, %v4886, -inf
    %v5199 = vmax.f32 %v5191, %v5198
    %v5200 = vsel %vm5083, %v4887, -inf
    %v5201 = vmax.f32 %v5193, %v5200
    %v5202 = vsel %vm5083, %v4888, -inf
    %v5203 = vmax.f32 %v5195, %v5202
    %v5204 = vsel %vm5083, %v4889, -inf
    %v5205 = vmax.f32 %v5197, %v5204
    %v5206 = vsel %vm5083, %v4890, -inf
    %v5207 = vmax.f32 %v5199, %v5206
    %v5208 = vsel %vm5083, %v4891, -inf
    %v5209 = vmax.f32 %v5201, %v5208
    %v5210 = vsel %vm5083, %v4892, -inf
    %v5211 = vmax.f32 %v5203, %v5210
    %v5212 = vsel %vm5083, %v4893, -inf
    %v5213 = vmax.f32 %v5205, %v5212
    %v5214 = vsel %vm5083, %v4894, -inf
    %v5215 = vmax.f32 %v5207, %v5214
    %v5216 = vsel %vm5083, %v4895, -inf
    %v5217 = vmax.f32 %v5209, %v5216
    %v5218 = vsel %vm5083, %v4896, -inf
    %v5219 = vmax.f32 %v5211, %v5218
    %v5220 = vsel %vm5083, %v4897, -inf
    %v5221 = vmax.f32 %v5213, %v5220
    %v5222 = vsel %vm5083, %v4898, -inf
    %v5223 = vmax.f32 %v5215, %v5222
    %v5224 = vsel %vm5083, %v4899, -inf
    %v5225 = vmax.f32 %v5217, %v5224
    %v5226 = vsel %vm5083, %v4900, -inf
    %v5227 = vmax.f32 %v5219, %v5226
    %v5228 = vsel %vm5083, %v4901, -inf
    %v5229 = vmax.f32 %v5221, %v5228
    %v5230 = vsel %vm5083, %v4902, -inf
    %v5231 = vmax.f32 %v5223, %v5230
    %v5232 = vsel %vm5083, %v4903, -inf
    %v5233 = vmax.f32 %v5225, %v5232
    %v5234 = vsel %vm5083, %v4904, -inf
    %v5235 = vmax.f32 %v5227, %v5234
    %v5236 = vsel %vm5083, %v4905, -inf
    %v5237 = vmax.f32 %v5229, %v5236
    %v5238 = vsel %vm5083, %v4906, -inf
    %v5239 = vmax.f32 %v5231, %v5238
    %v5240 = vsel %vm5083, %v4907, -inf
    %v5241 = vmax.f32 %v5233, %v5240
    %v5242 = vsel %vm5083, %v4908, -inf
    %v5243 = vmax.f32 %v5235, %v5242
    %v5244 = vsel %vm5083, %v4909, -inf
    %v5245 = vmax.f32 %v5237, %v5244
    %v5246 = vsel %vm5083, %v4910, -inf
    %v5247 = vmax.f32 %v5239, %v5246
    %v5248 = vsel %vm5083, %v4911, -inf
    %v5249 = vmax.f32 %v5241, %v5248
    %v5250 = vsel %vm5083, %v4912, -inf
    %v5251 = vmax.f32 %v5243, %v5250
    %v5252 = vsel %vm5083, %v4913, -inf
    %v5253 = vmax.f32 %v5245, %v5252
    %v5254 = vsel %vm5083, %v4914, -inf
    %v5255 = vmax.f32 %v5247, %v5254
    %v5256 = vsel %vm5083, %v4915, -inf
    %v5257 = vmax.f32 %v5249, %v5256
    %v5258 = vsel %vm5083, %v4916, -inf
    %v5259 = vmax.f32 %v5251, %v5258
    %v5260 = vsel %vm5083, %v4917, -inf
    %v5261 = vmax.f32 %v5253, %v5260
    %v5262 = vsel %vm5083, %v4918, -inf
    %v5263 = vmax.f32 %v5255, %v5262
    %v5264 = vsel %vm5083, %v4919, -inf
    %v5265 = vmax.f32 %v5257, %v5264
    %v5266 = vsel %vm5083, %v4920, -inf
    %v5267 = vmax.f32 %v5259, %v5266
    %v5268 = vsel %vm5083, %v4921, -inf
    %v5269 = vmax.f32 %v5261, %v5268
    %v5270 = vsel %vm5083, %v4922, -inf
    %v5271 = vmax.f32 %v5263, %v5270
    %v5272 = vsel %vm5083, %v4923, -inf
    %v5273 = vmax.f32 %v5265, %v5272
    %v5274 = vsel %vm5083, %v4924, -inf
    %v5275 = vmax.f32 %v5267, %v5274
    %v5276 = vsel %vm5083, %v4925, -inf
    %v5277 = vmax.f32 %v5269, %v5276
    %v5278 = vsel %vm5083, %v4926, -inf
    %v5279 = vmax.f32 %v5271, %v5278
    %v5280 = vsel %vm5083, %v4927, -inf
    %v5281 = vmax.f32 %v5273, %v5280
    %v5282 = vsel %vm5083, %v4928, -inf
    %v5283 = vmax.f32 %v5275, %v5282
    %v5284 = vsel %vm5083, %v4929, -inf
    %v5285 = vmax.f32 %v5277, %v5284
    %v5286 = vsel %vm5083, %v4930, -inf
    %v5287 = vmax.f32 %v5279, %v5286
    %v5288 = vsel %vm5083, %v4931, -inf
    %v5289 = vmax.f32 %v5281, %v5288
    %v5290 = vsel %vm5083, %v4932, -inf
    %v5291 = vmax.f32 %v5283, %v5290
    %v5292 = vsel %vm5083, %v4933, -inf
    %v5293 = vmax.f32 %v5285, %v5292
    %v5294 = vsel %vm5083, %v4934, -inf
    %v5295 = vmax.f32 %v5287, %v5294
    %v5296 = vsel %vm5083, %v4935, -inf
    %v5297 = vmax.f32 %v5289, %v5296
    %v5298 = vsel %vm5083, %v4936, -inf
    %v5299 = vmax.f32 %v5291, %v5298
    %v5300 = vsel %vm5083, %v4937, -inf
    %v5301 = vmax.f32 %v5293, %v5300
    %v5302 = vsel %vm5083, %v4938, -inf
    %v5303 = vmax.f32 %v5295, %v5302
    %v5304 = vsel %vm5083, %v4939, -inf
    %v5305 = vmax.f32 %v5297, %v5304
    %v5306 = vsel %vm5083, %v4940, -inf
    %v5307 = vmax.f32 %v5299, %v5306
    %v5308 = vsel %vm5083, %v4941, -inf
    %v5309 = vmax.f32 %v5301, %v5308
    %v5310 = vsel %vm5083, %v4942, -inf
    %v5311 = vmax.f32 %v5303, %v5310
    %v5312 = vsel %vm5083, %v4943, -inf
    %v5313 = vmax.f32 %v5305, %v5312
    %v5314 = vsel %vm5083, %v4944, -inf
    %v5315 = vmax.f32 %v5307, %v5314
    %v5316 = vsel %vm5083, %v4945, -inf
    %v5317 = vmax.f32 %v5309, %v5316
    %v5318 = vsel %vm5083, %v4946, -inf
    %v5319 = vmax.f32 %v5311, %v5318
    %v5320 = vsel %vm5083, %v4947, -inf
    %v5321 = vmax.f32 %v5313, %v5320
    %v5322 = vsel %vm5083, %v4948, -inf
    %v5323 = vmax.f32 %v5315, %v5322
    %v5324 = vsel %vm5083, %v4949, -inf
    %v5325 = vmax.f32 %v5317, %v5324
    %v5326 = vsel %vm5083, %v4950, -inf
    %v5327 = vmax.f32 %v5319, %v5326
    %v5328 = vsel %vm5083, %v4951, -inf
    %v5329 = vmax.f32 %v5321, %v5328
    %v5330 = vsel %vm5083, %v4952, -inf
    %v5331 = vmax.f32 %v5323, %v5330
    %v5332 = vsel %vm5083, %v4953, -inf
    %v5333 = vmax.f32 %v5325, %v5332
    %v5334 = vsel %vm5083, %v4954, -inf
    %v5335 = vmax.f32 %v5327, %v5334
    %v5336 = vsel %vm5083, %v4955, -inf
    %v5337 = vmax.f32 %v5329, %v5336
    %v5338 = vsel %vm5083, %v4956, -inf
    %v5339 = vmax.f32 %v5331, %v5338
    %v5340 = vsel %vm5083, %v4957, -inf
    %v5341 = vmax.f32 %v5333, %v5340
    %v5342 = vsel %vm5083, %v4958, -inf
    %v5343 = vmax.f32 %v5335, %v5342
    %v5344 = vsel %vm5083, %v4959, -inf
    %v5345 = vmax.f32 %v5337, %v5344
    %v5346 = vsel %vm5083, %v4960, -inf
    %v5347 = vmax.f32 %v5339, %v5346
    %v5348 = vsel %vm5083, %v4961, -inf
    %v5349 = vmax.f32 %v5341, %v5348
    %v5350 = vsel %vm5083, %v4962, -inf
    %v5351 = vmax.f32 %v5343, %v5350
    %v5352 = vsel %vm5083, %v4963, -inf
    %v5353 = vmax.f32 %v5345, %v5352
    %v5354 = vsel %vm5083, %v4964, -inf
    %v5355 = vmax.f32 %v5347, %v5354
    %v5356 = vsel %vm5083, %v4965, -inf
    %v5357 = vmax.f32 %v5349, %v5356
    %v5358 = vsel %vm5083, %v4966, -inf
    %v5359 = vmax.f32 %v5351, %v5358
    %v5360 = vsel %vm5083, %v4967, -inf
    %v5361 = vmax.f32 %v5353, %v5360
    %v5362 = vsel %vm5083, %v4968, -inf
    %v5363 = vmax.f32 %v5355, %v5362
    %v5364 = vsel %vm5083, %v4969, -inf
    %v5365 = vmax.f32 %v5357, %v5364
    %v5366 = vsel %vm5083, %v4970, -inf
    %v5367 = vmax.f32 %v5359, %v5366
    %v5368 = vsel %vm5083, %v4971, -inf
    %v5369 = vmax.f32 %v5361, %v5368
    %v5370 = vsel %vm5083, %v4972, -inf
    %v5371 = vmax.f32 %v5363, %v5370
    %v5372 = vsel %vm5083, %v4973, -inf
    %v5373 = vmax.f32 %v5365, %v5372
    %v5374 = vsel %vm5083, %v4974, -inf
    %v5375 = vmax.f32 %v5367, %v5374
    %v5376 = vsel %vm5083, %v4975, -inf
    %v5377 = vmax.f32 %v5369, %v5376
    %v5378 = vsel %vm5083, %v4976, -inf
    %v5379 = vmax.f32 %v5371, %v5378
    %v5380 = vsel %vm5083, %v4977, -inf
    %v5381 = vmax.f32 %v5373, %v5380
    %v5382 = vsel %vm5083, %v4978, -inf
    %v5383 = vmax.f32 %v5375, %v5382
    %v5384 = vsel %vm5083, %v4979, -inf
    %v5385 = vmax.f32 %v5377, %v5384
    %v5386 = vsel %vm5083, %v4980, -inf
    %v5387 = vmax.f32 %v5379, %v5386
    %v5388 = vsel %vm5083, %v4981, -inf
    %v5389 = vmax.f32 %v5381, %v5388
    %v5390 = vsel %vm5083, %v4982, -inf
    %v5391 = vmax.f32 %v5383, %v5390
    %v5392 = vsel %vm5083, %v4983, -inf
    %v5393 = vmax.f32 %v5385, %v5392
    %v5394 = vsel %vm5083, %v4984, -inf
    %v5395 = vmax.f32 %v5387, %v5394
    %v5396 = vsel %vm5083, %v4985, -inf
    %v5397 = vmax.f32 %v5389, %v5396
    %v5398 = vsel %vm5083, %v4986, -inf
    %v5399 = vmax.f32 %v5391, %v5398
    %v5400 = vsel %vm5083, %v4987, -inf
    %v5401 = vmax.f32 %v5393, %v5400
    %v5402 = vsel %vm5083, %v4988, -inf
    %v5403 = vmax.f32 %v5395, %v5402
    %v5404 = vsel %vm5083, %v4989, -inf
    %v5405 = vmax.f32 %v5397, %v5404
    %v5406 = vsel %vm5083, %v4990, -inf
    %v5407 = vmax.f32 %v5399, %v5406
    %v5408 = vsel %vm5083, %v4991, -inf
    %v5409 = vmax.f32 %v5401, %v5408
    %v5410 = vsel %vm5083, %v4992, -inf
    %v5411 = vmax.f32 %v5403, %v5410
    %v5412 = vsel %vm5083, %v4993, -inf
    %v5413 = vmax.f32 %v5405, %v5412
    %v5414 = vsel %vm5083, %v4994, -inf
    %v5415 = vmax.f32 %v5407, %v5414
    %v5416 = vsel %vm5083, %v4995, -inf
    %v5417 = vmax.f32 %v5409, %v5416
    %v5418 = vsel %vm5083, %v4996, -inf
    %v5419 = vmax.f32 %v5411, %v5418
    %v5420 = vsel %vm5083, %v4997, -inf
    %v5421 = vmax.f32 %v5413, %v5420
    %v5422 = vsel %vm5083, %v4998, -inf
    %v5423 = vmax.f32 %v5415, %v5422
    %v5424 = vsel %vm5083, %v4999, -inf
    %v5425 = vmax.f32 %v5417, %v5424
    %v5426 = vsel %vm5083, %v5000, -inf
    %v5427 = vmax.f32 %v5419, %v5426
    %v5428 = vsel %vm5083, %v5001, -inf
    %v5429 = vmax.f32 %v5421, %v5428
    %v5430 = vsel %vm5083, %v5002, -inf
    %v5431 = vmax.f32 %v5423, %v5430
    %v5432 = vsel %vm5083, %v5003, -inf
    %v5433 = vmax.f32 %v5425, %v5432
    %v5434 = vsel %vm5083, %v5004, -inf
    %v5435 = vmax.f32 %v5427, %v5434
    %v5436 = vsel %vm5083, %v5005, -inf
    %v5437 = vmax.f32 %v5429, %v5436
    %v5438 = vsel %vm5083, %v5006, -inf
    %v5439 = vmax.f32 %v5431, %v5438
    %v5440 = vsel %vm5083, %v5007, -inf
    %v5441 = vmax.f32 %v5433, %v5440
    %v5442 = vsel %vm5083, %v5008, -inf
    %v5443 = vmax.f32 %v5435, %v5442
    %v5444 = vsel %vm5083, %v5009, -inf
    %v5445 = vmax.f32 %v5437, %v5444
    %v5446 = vsel %vm5083, %v5010, -inf
    %v5447 = vmax.f32 %v5439, %v5446
    %v5448 = vsel %vm5083, %v5011, -inf
    %v5449 = vmax.f32 %v5441, %v5448
    %v5450 = vsel %vm5083, %v5012, -inf
    %v5451 = vmax.f32 %v5443, %v5450
    %v5452 = vsel %vm5083, %v5013, -inf
    %v5453 = vmax.f32 %v5445, %v5452
    %v5454 = vsel %vm5083, %v5014, -inf
    %v5455 = vmax.f32 %v5447, %v5454
    %v5456 = vsel %vm5083, %v5015, -inf
    %v5457 = vmax.f32 %v5449, %v5456
    %v5458 = vsel %vm5083, %v5016, -inf
    %v5459 = vmax.f32 %v5451, %v5458
    %v5460 = vsel %vm5083, %v5017, -inf
    %v5461 = vmax.f32 %v5453, %v5460
    %v5462 = vsel %vm5083, %v5018, -inf
    %v5463 = vmax.f32 %v5455, %v5462
    %v5464 = vsel %vm5083, %v5019, -inf
    %v5465 = vmax.f32 %v5457, %v5464
    %v5466 = vsel %vm5083, %v5020, -inf
    %v5467 = vmax.f32 %v5459, %v5466
    %v5468 = vsel %vm5083, %v5021, -inf
    %v5469 = vmax.f32 %v5461, %v5468
    %v5470 = vsel %vm5083, %v5022, -inf
    %v5471 = vmax.f32 %v5463, %v5470
    %v5472 = vsel %vm5083, %v5023, -inf
    %v5473 = vmax.f32 %v5465, %v5472
    %v5474 = vsel %vm5083, %v5024, -inf
    %v5475 = vmax.f32 %v5467, %v5474
    %v5476 = vsel %vm5083, %v5025, -inf
    %v5477 = vmax.f32 %v5469, %v5476
    %v5478 = vsel %vm5083, %v5026, -inf
    %v5479 = vmax.f32 %v5471, %v5478
    %v5480 = vsel %vm5083, %v5027, -inf
    %v5481 = vmax.f32 %v5473, %v5480
    %v5482 = vsel %vm5083, %v5028, -inf
    %v5483 = vmax.f32 %v5475, %v5482
    %v5484 = vsel %vm5083, %v5029, -inf
    %v5485 = vmax.f32 %v5477, %v5484
    %v5486 = vsel %vm5083, %v5030, -inf
    %v5487 = vmax.f32 %v5479, %v5486
    %v5488 = vsel %vm5083, %v5031, -inf
    %v5489 = vmax.f32 %v5481, %v5488
    %v5490 = vsel %vm5083, %v5032, -inf
    %v5491 = vmax.f32 %v5483, %v5490
    %v5492 = vsel %vm5083, %v5033, -inf
    %v5493 = vmax.f32 %v5485, %v5492
    %v5494 = vsel %vm5083, %v5034, -inf
    %v5495 = vmax.f32 %v5487, %v5494
    %v5496 = vsel %vm5083, %v5035, -inf
    %v5497 = vmax.f32 %v5489, %v5496
    %v5498 = vsel %vm5083, %v5036, -inf
    %v5499 = vmax.f32 %v5491, %v5498
    %v5500 = vsel %vm5083, %v5037, -inf
    %v5501 = vmax.f32 %v5493, %v5500
    %v5502 = vsel %vm5083, %v5038, -inf
    %v5503 = vmax.f32 %v5495, %v5502
    %v5504 = vsel %vm5083, %v5039, -inf
    %v5505 = vmax.f32 %v5497, %v5504
    %v5506 = vsel %vm5083, %v5040, -inf
    %v5507 = vmax.f32 %v5499, %v5506
    %v5508 = vsel %vm5083, %v5041, -inf
    %v5509 = vmax.f32 %v5501, %v5508
    %v5510 = vsel %vm5083, %v5042, -inf
    %v5511 = vmax.f32 %v5503, %v5510
    %v5512 = vsel %vm5083, %v5043, -inf
    %v5513 = vmax.f32 %v5505, %v5512
    %v5514 = vsel %vm5083, %v5044, -inf
    %v5515 = vmax.f32 %v5507, %v5514
    %v5516 = vsel %vm5083, %v5045, -inf
    %v5517 = vmax.f32 %v5509, %v5516
    %v5518 = vsel %vm5083, %v5046, -inf
    %v5519 = vmax.f32 %v5511, %v5518
    %v5520 = vsel %vm5083, %v5047, -inf
    %v5521 = vmax.f32 %v5513, %v5520
    %v5522 = vsel %vm5083, %v5048, -inf
    %v5523 = vmax.f32 %v5515, %v5522
    %v5524 = vsel %vm5083, %v5049, -inf
    %v5525 = vmax.f32 %v5517, %v5524
    %v5526 = vsel %vm5083, %v5050, -inf
    %v5527 = vmax.f32 %v5519, %v5526
    %v5528 = vsel %vm5083, %v5051, -inf
    %v5529 = vmax.f32 %v5521, %v5528
    %v5530 = vsel %vm5083, %v5052, -inf
    %v5531 = vmax.f32 %v5523, %v5530
    %v5532 = vsel %vm5083, %v5053, -inf
    %v5533 = vmax.f32 %v5525, %v5532
    %v5534 = vsel %vm5083, %v5054, -inf
    %v5535 = vmax.f32 %v5527, %v5534
    %v5536 = vsel %vm5083, %v5055, -inf
    %v5537 = vmax.f32 %v5529, %v5536
    %v5538 = vsel %vm5083, %v5056, -inf
    %v5539 = vmax.f32 %v5531, %v5538
    %v5540 = vsel %vm5083, %v5057, -inf
    %v5541 = vmax.f32 %v5533, %v5540
    %v5542 = vsel %vm5083, %v5058, -inf
    %v5543 = vmax.f32 %v5535, %v5542
    %v5544 = vsel %vm5083, %v5059, -inf
    %v5545 = vmax.f32 %v5537, %v5544
    %v5546 = vsel %vm5083, %v5060, -inf
    %v5547 = vmax.f32 %v5539, %v5546
    %v5548 = vsel %vm5083, %v5061, -inf
    %v5549 = vmax.f32 %v5541, %v5548
    %v5550 = vsel %vm5083, %v5062, -inf
    %v5551 = vmax.f32 %v5543, %v5550
    %v5552 = vsel %vm5083, %v5063, -inf
    %v5553 = vmax.f32 %v5545, %v5552
    %v5554 = vsel %vm5083, %v5064, -inf
    %v5555 = vmax.f32 %v5547, %v5554
    %v5556 = vsel %vm5083, %v5065, -inf
    %v5557 = vmax.f32 %v5549, %v5556
    %v5558 = vsel %vm5083, %v5066, -inf
    %v5559 = vmax.f32 %v5551, %v5558
    %v5560 = vsel %vm5083, %v5067, -inf
    %v5561 = vmax.f32 %v5553, %v5560
    %v5562 = vsel %vm5083, %v5068, -inf
    %v5563 = vmax.f32 %v5555, %v5562
    %v5564 = vsel %vm5083, %v5069, -inf
    %v5565 = vmax.f32 %v5557, %v5564
    %v5566 = vsel %vm5083, %v5070, -inf
    %v5567 = vmax.f32 %v5559, %v5566
    %v5568 = vsel %vm5083, %v5071, -inf
    %v5569 = vmax.f32 %v5561, %v5568
    %v5570 = vsel %vm5083, %v5072, -inf
    %v5571 = vmax.f32 %v5563, %v5570
    %v5572 = vsel %vm5083, %v5073, -inf
    %v5573 = vmax.f32 %v5565, %v5572
    %v5574 = vsel %vm5083, %v5074, -inf
    %v5575 = vmax.f32 %v5567, %v5574
    %v5576 = vsel %vm5083, %v5075, -inf
    %v5577 = vmax.f32 %v5569, %v5576
    %v5578 = vsel %vm5083, %v5076, -inf
    %v5579 = vmax.f32 %v5571, %v5578
    %v5580 = vsel %vm5083, %v5077, -inf
    %v5581 = vmax.f32 %v5573, %v5580
    %v5582 = vsel %vm5083, %v5078, -inf
    %v5583 = vmax.f32 %v5575, %v5582
    %v5584 = vsel %vm5083, %v5079, -inf
    %v5585 = vmax.f32 %v5577, %v5584
    %v5586 = vsel %vm5083, %v5080, -inf
    %v5587 = vmax.f32 %v5579, %v5586
    %v5588 = vsel %vm5083, %v5081, -inf
    %v5589 = vmax.f32 %v5581, %v5588
    %v5590 = vsel %vm5083, %v5082, -inf
    %v5591 = vmax.f32 %v5583, %v5590
    %v5592 = vmax.f32 %v5585, %v5587
    %v5593 = vmax.f32 %v5589, %v5591
    %v5594 = vmax.f32 %v5592, %v5593
    %5595 = vst.msk [vmem:[#allocation2] sm:$0xff] %vm5083, %v5594
    %s5596 = scalar_lea.vmem %s0, 256
    %v5597 = vld [vmem:[%s5596] sm:$0xff]
    %v5598 = vld [vmem:[%s5596 + $0x8] sm:$0xff]
    %v5599 = vld [vmem:[%s5596 + $0x10] sm:$0xff]
    %v5600 = vld [vmem:[%s5596 + $0x18] sm:$0xff]
    %v5601 = vld [vmem:[%s5596 + $0x20] sm:$0xff]
    %v5602 = vld [vmem:[%s5596 + $0x28] sm:$0xff]
    %v5603 = vld [vmem:[%s5596 + $0x30] sm:$0xff]
    %v5604 = vld [vmem:[%s5596 + $0x38] sm:$0xff]
    %v5605 = vld [vmem:[%s5596 + $0x40] sm:$0xff]
    %v5606 = vld [vmem:[%s5596 + $0x48] sm:$0xff]
    %v5607 = vld [vmem:[%s5596 + $0x50] sm:$0xff]
    %v5608 = vld [vmem:[%s5596 + $0x58] sm:$0xff]
    %v5609 = vld [vmem:[%s5596 + $0x60] sm:$0xff]
    %v5610 = vld [vmem:[%s5596 + $0x68] sm:$0xff]
    %v5611 = vld [vmem:[%s5596 + $0x70] sm:$0xff]
    %v5612 = vld [vmem:[%s5596 + $0x78] sm:$0xff]
    %v5613 = vld [vmem:[%s5596 + $0x80] sm:$0xff]
    %v5614 = vld [vmem:[%s5596 + $0x88] sm:$0xff]
    %v5615 = vld [vmem:[%s5596 + $0x90] sm:$0xff]
    %v5616 = vld [vmem:[%s5596 + $0x98] sm:$0xff]
    %v5617 = vld [vmem:[%s5596 + $0xa0] sm:$0xff]
    %v5618 = vld [vmem:[%s5596 + $0xa8] sm:$0xff]
    %v5619 = vld [vmem:[%s5596 + $0xb0] sm:$0xff]
    %v5620 = vld [vmem:[%s5596 + $0xb8] sm:$0xff]
    %v5621 = vld [vmem:[%s5596 + $0xc0] sm:$0xff]
    %v5622 = vld [vmem:[%s5596 + $0xc8] sm:$0xff]
    %v5623 = vld [vmem:[%s5596 + $0xd0] sm:$0xff]
    %v5624 = vld [vmem:[%s5596 + $0xd8] sm:$0xff]
    %v5625 = vld [vmem:[%s5596 + $0xe0] sm:$0xff]
    %v5626 = vld [vmem:[%s5596 + $0xe8] sm:$0xff]
    %v5627 = vld [vmem:[%s5596 + $0xf0] sm:$0xff]
    %v5628 = vld [vmem:[%s5596 + $0xf8] sm:$0xff]
    %s5629 = scalar_lea.vmem %s1, 256
    %v5630 = vld [vmem:[%s5629] sm:$0xff]
    %v5631 = vld [vmem:[%s5629 + $0x8] sm:$0xff]
    %v5632 = vld [vmem:[%s5629 + $0x10] sm:$0xff]
    %v5633 = vld [vmem:[%s5629 + $0x18] sm:$0xff]
    %v5634 = vld [vmem:[%s5629 + $0x20] sm:$0xff]
    %v5635 = vld [vmem:[%s5629 + $0x28] sm:$0xff]
    %v5636 = vld [vmem:[%s5629 + $0x30] sm:$0xff]
    %v5637 = vld [vmem:[%s5629 + $0x38] sm:$0xff]
    %v5638 = vld [vmem:[%s5629 + $0x40] sm:$0xff]
    %v5639 = vld [vmem:[%s5629 + $0x48] sm:$0xff]
    %v5640 = vld [vmem:[%s5629 + $0x50] sm:$0xff]
    %v5641 = vld [vmem:[%s5629 + $0x58] sm:$0xff]
    %v5642 = vld [vmem:[%s5629 + $0x60] sm:$0xff]
    %v5643 = vld [vmem:[%s5629 + $0x68] sm:$0xff]
    %v5644 = vld [vmem:[%s5629 + $0x70] sm:$0xff]
    %v5645 = vld [vmem:[%s5629 + $0x78] sm:$0xff]
    %v5646 = vld [vmem:[%s5629 + $0x80] sm:$0xff]
    %v5647 = vld [vmem:[%s5629 + $0x88] sm:$0xff]
    %v5648 = vld [vmem:[%s5629 + $0x90] sm:$0xff]
    %v5649 = vld [vmem:[%s5629 + $0x98] sm:$0xff]
    %v5650 = vld [vmem:[%s5629 + $0xa0] sm:$0xff]
    %v5651 = vld [vmem:[%s5629 + $0xa8] sm:$0xff]
    %v5652 = vld [vmem:[%s5629 + $0xb0] sm:$0xff]
    %v5653 = vld [vmem:[%s5629 + $0xb8] sm:$0xff]
    %v5654 = vld [vmem:[%s5629 + $0xc0] sm:$0xff]
    %v5655 = vld [vmem:[%s5629 + $0xc8] sm:$0xff]
    %v5656 = vld [vmem:[%s5629 + $0xd0] sm:$0xff]
    %v5657 = vld [vmem:[%s5629 + $0xd8] sm:$0xff]
    %v5658 = vld [vmem:[%s5629 + $0xe0] sm:$0xff]
    %v5659 = vld [vmem:[%s5629 + $0xe8] sm:$0xff]
    %v5660 = vld [vmem:[%s5629 + $0xf0] sm:$0xff]
    %v5661 = vld [vmem:[%s5629 + $0xf8] sm:$0xff]
    %vm5662 = vcmp.eq.f32.partialorder %v5630, 0.0
    %vm5663 = vcmp.eq.f32.partialorder %v5631, 0.0
    %vm5664 = vcmp.eq.f32.partialorder %v5632, 0.0
    %vm5665 = vcmp.eq.f32.partialorder %v5633, 0.0
    %vm5666 = vcmp.eq.f32.partialorder %v5634, 0.0
    %vm5667 = vcmp.eq.f32.partialorder %v5635, 0.0
    %vm5668 = vcmp.eq.f32.partialorder %v5636, 0.0
    %vm5669 = vcmp.eq.f32.partialorder %v5637, 0.0
    %vm5670 = vcmp.eq.f32.partialorder %v5638, 0.0
    %vm5671 = vcmp.eq.f32.partialorder %v5639, 0.0
    %vm5672 = vcmp.eq.f32.partialorder %v5640, 0.0
    %vm5673 = vcmp.eq.f32.partialorder %v5641, 0.0
    %vm5674 = vcmp.eq.f32.partialorder %v5642, 0.0
    %vm5675 = vcmp.eq.f32.partialorder %v5643, 0.0
    %vm5676 = vcmp.eq.f32.partialorder %v5644, 0.0
    %vm5677 = vcmp.eq.f32.partialorder %v5645, 0.0
    %vm5678 = vcmp.eq.f32.partialorder %v5646, 0.0
    %vm5679 = vcmp.eq.f32.partialorder %v5647, 0.0
    %vm5680 = vcmp.eq.f32.partialorder %v5648, 0.0
    %vm5681 = vcmp.eq.f32.partialorder %v5649, 0.0
    %vm5682 = vcmp.eq.f32.partialorder %v5650, 0.0
    %vm5683 = vcmp.eq.f32.partialorder %v5651, 0.0
    %vm5684 = vcmp.eq.f32.partialorder %v5652, 0.0
    %vm5685 = vcmp.eq.f32.partialorder %v5653, 0.0
    %vm5686 = vcmp.eq.f32.partialorder %v5654, 0.0
    %vm5687 = vcmp.eq.f32.partialorder %v5655, 0.0
    %vm5688 = vcmp.eq.f32.partialorder %v5656, 0.0
    %vm5689 = vcmp.eq.f32.partialorder %v5657, 0.0
    %vm5690 = vcmp.eq.f32.partialorder %v5658, 0.0
    %vm5691 = vcmp.eq.f32.partialorder %v5659, 0.0
    %vm5692 = vcmp.eq.f32.partialorder %v5660, 0.0
    %vm5693 = vcmp.eq.f32.partialorder %v5661, 0.0
    %v5694 = vsel %vm5662, -1e+10, 0.0
    %v5695 = vsel %vm5663, -1e+10, 0.0
    %v5696 = vsel %vm5664, -1e+10, 0.0
    %v5697 = vsel %vm5665, -1e+10, 0.0
    %v5698 = vsel %vm5666, -1e+10, 0.0
    %v5699 = vsel %vm5667, -1e+10, 0.0
    %v5700 = vsel %vm5668, -1e+10, 0.0
    %v5701 = vsel %vm5669, -1e+10, 0.0
    %v5702 = vsel %vm5670, -1e+10, 0.0
    %v5703 = vsel %vm5671, -1e+10, 0.0
    %v5704 = vsel %vm5672, -1e+10, 0.0
    %v5705 = vsel %vm5673, -1e+10, 0.0
    %v5706 = vsel %vm5674, -1e+10, 0.0
    %v5707 = vsel %vm5675, -1e+10, 0.0
    %v5708 = vsel %vm5676, -1e+10, 0.0
    %v5709 = vsel %vm5677, -1e+10, 0.0
    %v5710 = vsel %vm5678, -1e+10, 0.0
    %v5711 = vsel %vm5679, -1e+10, 0.0
    %v5712 = vsel %vm5680, -1e+10, 0.0
    %v5713 = vsel %vm5681, -1e+10, 0.0
    %v5714 = vsel %vm5682, -1e+10, 0.0
    %v5715 = vsel %vm5683, -1e+10, 0.0
    %v5716 = vsel %vm5684, -1e+10, 0.0
    %v5717 = vsel %vm5685, -1e+10, 0.0
    %v5718 = vsel %vm5686, -1e+10, 0.0
    %v5719 = vsel %vm5687, -1e+10, 0.0
    %v5720 = vsel %vm5688, -1e+10, 0.0
    %v5721 = vsel %vm5689, -1e+10, 0.0
    %v5722 = vsel %vm5690, -1e+10, 0.0
    %v5723 = vsel %vm5691, -1e+10, 0.0
    %v5724 = vsel %vm5692, -1e+10, 0.0
    %v5725 = vsel %vm5693, -1e+10, 0.0
    %v5726 = vlaneseq
    %v5727 = vshrl.u32 %v5726, 7
    %v5728 = vsub.s32 0, %v5727
    %v5729 = vrot.slane %v5694, %v5728
    %5731 = vbcast.lane.b32.xlu0 %v5729, 256
    %v5732 = vpop.permute.xlu0 %5731
    %v5733 = vlaneseq
    %v5734 = vshrl.u32 %v5733, 7
    %v5735 = vsub.s32 1, %v5734
    %v5736 = vrot.slane %v5694, %v5735
    %5738 = vbcast.lane.b32.xlu0 %v5736, 256
    %v5739 = vpop.permute.xlu0 %5738
    %v5740 = vlaneseq
    %v5741 = vshrl.u32 %v5740, 7
    %v5742 = vsub.s32 2, %v5741
    %v5743 = vrot.slane %v5694, %v5742
    %5745 = vbcast.lane.b32.xlu0 %v5743, 256
    %v5746 = vpop.permute.xlu0 %5745
    %v5747 = vlaneseq
    %v5748 = vshrl.u32 %v5747, 7
    %v5749 = vsub.s32 3, %v5748
    %v5750 = vrot.slane %v5694, %v5749
    %5752 = vbcast.lane.b32.xlu0 %v5750, 256
    %v5753 = vpop.permute.xlu0 %5752
    %v5754 = vlaneseq
    %v5755 = vshrl.u32 %v5754, 7
    %v5756 = vsub.s32 4, %v5755
    %v5757 = vrot.slane %v5694, %v5756
    %5759 = vbcast.lane.b32.xlu0 %v5757, 256
    %v5760 = vpop.permute.xlu0 %5759
    %v5761 = vlaneseq
    %v5762 = vshrl.u32 %v5761, 7
    %v5763 = vsub.s32 5, %v5762
    %v5764 = vrot.slane %v5694, %v5763
    %5766 = vbcast.lane.b32.xlu0 %v5764, 256
    %v5767 = vpop.permute.xlu0 %5766
    %v5768 = vlaneseq
    %v5769 = vshrl.u32 %v5768, 7
    %v5770 = vsub.s32 6, %v5769
    %v5771 = vrot.slane %v5694, %v5770
    %5773 = vbcast.lane.b32.xlu0 %v5771, 256
    %v5774 = vpop.permute.xlu0 %5773
    %v5775 = vlaneseq
    %v5776 = vshrl.u32 %v5775, 7
    %v5777 = vsub.s32 7, %v5776
    %v5778 = vrot.slane %v5694, %v5777
    %5780 = vbcast.lane.b32.xlu0 %v5778, 256
    %v5781 = vpop.permute.xlu0 %5780
    %v5782 = vlaneseq
    %v5783 = vshrl.u32 %v5782, 7
    %v5784 = vsub.s32 0, %v5783
    %v5785 = vrot.slane %v5695, %v5784
    %5787 = vbcast.lane.b32.xlu0 %v5785, 256
    %v5788 = vpop.permute.xlu0 %5787
    %v5789 = vlaneseq
    %v5790 = vshrl.u32 %v5789, 7
    %v5791 = vsub.s32 1, %v5790
    %v5792 = vrot.slane %v5695, %v5791
    %5794 = vbcast.lane.b32.xlu0 %v5792, 256
    %v5795 = vpop.permute.xlu0 %5794
    %v5796 = vlaneseq
    %v5797 = vshrl.u32 %v5796, 7
    %v5798 = vsub.s32 2, %v5797
    %v5799 = vrot.slane %v5695, %v5798
    %5801 = vbcast.lane.b32.xlu0 %v5799, 256
    %v5802 = vpop.permute.xlu0 %5801
    %v5803 = vlaneseq
    %v5804 = vshrl.u32 %v5803, 7
    %v5805 = vsub.s32 3, %v5804
    %v5806 = vrot.slane %v5695, %v5805
    %5808 = vbcast.lane.b32.xlu0 %v5806, 256
    %v5809 = vpop.permute.xlu0 %5808
    %v5810 = vlaneseq
    %v5811 = vshrl.u32 %v5810, 7
    %v5812 = vsub.s32 4, %v5811
    %v5813 = vrot.slane %v5695, %v5812
    %5815 = vbcast.lane.b32.xlu0 %v5813, 256
    %v5816 = vpop.permute.xlu0 %5815
    %v5817 = vlaneseq
    %v5818 = vshrl.u32 %v5817, 7
    %v5819 = vsub.s32 5, %v5818
    %v5820 = vrot.slane %v5695, %v5819
    %5822 = vbcast.lane.b32.xlu0 %v5820, 256
    %v5823 = vpop.permute.xlu0 %5822
    %v5824 = vlaneseq
    %v5825 = vshrl.u32 %v5824, 7
    %v5826 = vsub.s32 6, %v5825
    %v5827 = vrot.slane %v5695, %v5826
    %5829 = vbcast.lane.b32.xlu0 %v5827, 256
    %v5830 = vpop.permute.xlu0 %5829
    %v5831 = vlaneseq
    %v5832 = vshrl.u32 %v5831, 7
    %v5833 = vsub.s32 7, %v5832
    %v5834 = vrot.slane %v5695, %v5833
    %5836 = vbcast.lane.b32.xlu0 %v5834, 256
    %v5837 = vpop.permute.xlu0 %5836
    %v5838 = vlaneseq
    %v5839 = vshrl.u32 %v5838, 7
    %v5840 = vsub.s32 0, %v5839
    %v5841 = vrot.slane %v5696, %v5840
    %5843 = vbcast.lane.b32.xlu0 %v5841, 256
    %v5844 = vpop.permute.xlu0 %5843
    %v5845 = vlaneseq
    %v5846 = vshrl.u32 %v5845, 7
    %v5847 = vsub.s32 1, %v5846
    %v5848 = vrot.slane %v5696, %v5847
    %5850 = vbcast.lane.b32.xlu0 %v5848, 256
    %v5851 = vpop.permute.xlu0 %5850
    %v5852 = vlaneseq
    %v5853 = vshrl.u32 %v5852, 7
    %v5854 = vsub.s32 2, %v5853
    %v5855 = vrot.slane %v5696, %v5854
    %5857 = vbcast.lane.b32.xlu0 %v5855, 256
    %v5858 = vpop.permute.xlu0 %5857
    %v5859 = vlaneseq
    %v5860 = vshrl.u32 %v5859, 7
    %v5861 = vsub.s32 3, %v5860
    %v5862 = vrot.slane %v5696, %v5861
    %5864 = vbcast.lane.b32.xlu0 %v5862, 256
    %v5865 = vpop.permute.xlu0 %5864
    %v5866 = vlaneseq
    %v5867 = vshrl.u32 %v5866, 7
    %v5868 = vsub.s32 4, %v5867
    %v5869 = vrot.slane %v5696, %v5868
    %5871 = vbcast.lane.b32.xlu0 %v5869, 256
    %v5872 = vpop.permute.xlu0 %5871
    %v5873 = vlaneseq
    %v5874 = vshrl.u32 %v5873, 7
    %v5875 = vsub.s32 5, %v5874
    %v5876 = vrot.slane %v5696, %v5875
    %5878 = vbcast.lane.b32.xlu0 %v5876, 256
    %v5879 = vpop.permute.xlu0 %5878
    %v5880 = vlaneseq
    %v5881 = vshrl.u32 %v5880, 7
    %v5882 = vsub.s32 6, %v5881
    %v5883 = vrot.slane %v5696, %v5882
    %5885 = vbcast.lane.b32.xlu0 %v5883, 256
    %v5886 = vpop.permute.xlu0 %5885
    %v5887 = vlaneseq
    %v5888 = vshrl.u32 %v5887, 7
    %v5889 = vsub.s32 7, %v5888
    %v5890 = vrot.slane %v5696, %v5889
    %5892 = vbcast.lane.b32.xlu0 %v5890, 256
    %v5893 = vpop.permute.xlu0 %5892
    %v5894 = vlaneseq
    %v5895 = vshrl.u32 %v5894, 7
    %v5896 = vsub.s32 0, %v5895
    %v5897 = vrot.slane %v5697, %v5896
    %5899 = vbcast.lane.b32.xlu0 %v5897, 256
    %v5900 = vpop.permute.xlu0 %5899
    %v5901 = vlaneseq
    %v5902 = vshrl.u32 %v5901, 7
    %v5903 = vsub.s32 1, %v5902
    %v5904 = vrot.slane %v5697, %v5903
    %5906 = vbcast.lane.b32.xlu0 %v5904, 256
    %v5907 = vpop.permute.xlu0 %5906
    %v5908 = vlaneseq
    %v5909 = vshrl.u32 %v5908, 7
    %v5910 = vsub.s32 2, %v5909
    %v5911 = vrot.slane %v5697, %v5910
    %5913 = vbcast.lane.b32.xlu0 %v5911, 256
    %v5914 = vpop.permute.xlu0 %5913
    %v5915 = vlaneseq
    %v5916 = vshrl.u32 %v5915, 7
    %v5917 = vsub.s32 3, %v5916
    %v5918 = vrot.slane %v5697, %v5917
    %5920 = vbcast.lane.b32.xlu0 %v5918, 256
    %v5921 = vpop.permute.xlu0 %5920
    %v5922 = vlaneseq
    %v5923 = vshrl.u32 %v5922, 7
    %v5924 = vsub.s32 4, %v5923
    %v5925 = vrot.slane %v5697, %v5924
    %5927 = vbcast.lane.b32.xlu0 %v5925, 256
    %v5928 = vpop.permute.xlu0 %5927
    %v5929 = vlaneseq
    %v5930 = vshrl.u32 %v5929, 7
    %v5931 = vsub.s32 5, %v5930
    %v5932 = vrot.slane %v5697, %v5931
    %5934 = vbcast.lane.b32.xlu0 %v5932, 256
    %v5935 = vpop.permute.xlu0 %5934
    %v5936 = vlaneseq
    %v5937 = vshrl.u32 %v5936, 7
    %v5938 = vsub.s32 6, %v5937
    %v5939 = vrot.slane %v5697, %v5938
    %5941 = vbcast.lane.b32.xlu0 %v5939, 256
    %v5942 = vpop.permute.xlu0 %5941
    %v5943 = vlaneseq
    %v5944 = vshrl.u32 %v5943, 7
    %v5945 = vsub.s32 7, %v5944
    %v5946 = vrot.slane %v5697, %v5945
    %5948 = vbcast.lane.b32.xlu0 %v5946, 256
    %v5949 = vpop.permute.xlu0 %5948
    %v5950 = vlaneseq
    %v5951 = vshrl.u32 %v5950, 7
    %v5952 = vsub.s32 0, %v5951
    %v5953 = vrot.slane %v5698, %v5952
    %5955 = vbcast.lane.b32.xlu0 %v5953, 256
    %v5956 = vpop.permute.xlu0 %5955
    %v5957 = vlaneseq
    %v5958 = vshrl.u32 %v5957, 7
    %v5959 = vsub.s32 1, %v5958
    %v5960 = vrot.slane %v5698, %v5959
    %5962 = vbcast.lane.b32.xlu0 %v5960, 256
    %v5963 = vpop.permute.xlu0 %5962
    %v5964 = vlaneseq
    %v5965 = vshrl.u32 %v5964, 7
    %v5966 = vsub.s32 2, %v5965
    %v5967 = vrot.slane %v5698, %v5966
    %5969 = vbcast.lane.b32.xlu0 %v5967, 256
    %v5970 = vpop.permute.xlu0 %5969
    %v5971 = vlaneseq
    %v5972 = vshrl.u32 %v5971, 7
    %v5973 = vsub.s32 3, %v5972
    %v5974 = vrot.slane %v5698, %v5973
    %5976 = vbcast.lane.b32.xlu0 %v5974, 256
    %v5977 = vpop.permute.xlu0 %5976
    %v5978 = vlaneseq
    %v5979 = vshrl.u32 %v5978, 7
    %v5980 = vsub.s32 4, %v5979
    %v5981 = vrot.slane %v5698, %v5980
    %5983 = vbcast.lane.b32.xlu0 %v5981, 256
    %v5984 = vpop.permute.xlu0 %5983
    %v5985 = vlaneseq
    %v5986 = vshrl.u32 %v5985, 7
    %v5987 = vsub.s32 5, %v5986
    %v5988 = vrot.slane %v5698, %v5987
    %5990 = vbcast.lane.b32.xlu0 %v5988, 256
    %v5991 = vpop.permute.xlu0 %5990
    %v5992 = vlaneseq
    %v5993 = vshrl.u32 %v5992, 7
    %v5994 = vsub.s32 6, %v5993
    %v5995 = vrot.slane %v5698, %v5994
    %5997 = vbcast.lane.b32.xlu0 %v5995, 256
    %v5998 = vpop.permute.xlu0 %5997
    %v5999 = vlaneseq
    %v6000 = vshrl.u32 %v5999, 7
    %v6001 = vsub.s32 7, %v6000
    %v6002 = vrot.slane %v5698, %v6001
    %6004 = vbcast.lane.b32.xlu0 %v6002, 256
    %v6005 = vpop.permute.xlu0 %6004
    %v6006 = vlaneseq
    %v6007 = vshrl.u32 %v6006, 7
    %v6008 = vsub.s32 0, %v6007
    %v6009 = vrot.slane %v5699, %v6008
    %6011 = vbcast.lane.b32.xlu0 %v6009, 256
    %v6012 = vpop.permute.xlu0 %6011
    %v6013 = vlaneseq
    %v6014 = vshrl.u32 %v6013, 7
    %v6015 = vsub.s32 1, %v6014
    %v6016 = vrot.slane %v5699, %v6015
    %6018 = vbcast.lane.b32.xlu0 %v6016, 256
    %v6019 = vpop.permute.xlu0 %6018
    %v6020 = vlaneseq
    %v6021 = vshrl.u32 %v6020, 7
    %v6022 = vsub.s32 2, %v6021
    %v6023 = vrot.slane %v5699, %v6022
    %6025 = vbcast.lane.b32.xlu0 %v6023, 256
    %v6026 = vpop.permute.xlu0 %6025
    %v6027 = vlaneseq
    %v6028 = vshrl.u32 %v6027, 7
    %v6029 = vsub.s32 3, %v6028
    %v6030 = vrot.slane %v5699, %v6029
    %6032 = vbcast.lane.b32.xlu0 %v6030, 256
    %v6033 = vpop.permute.xlu0 %6032
    %v6034 = vlaneseq
    %v6035 = vshrl.u32 %v6034, 7
    %v6036 = vsub.s32 4, %v6035
    %v6037 = vrot.slane %v5699, %v6036
    %6039 = vbcast.lane.b32.xlu0 %v6037, 256
    %v6040 = vpop.permute.xlu0 %6039
    %v6041 = vlaneseq
    %v6042 = vshrl.u32 %v6041, 7
    %v6043 = vsub.s32 5, %v6042
    %v6044 = vrot.slane %v5699, %v6043
    %6046 = vbcast.lane.b32.xlu0 %v6044, 256
    %v6047 = vpop.permute.xlu0 %6046
    %v6048 = vlaneseq
    %v6049 = vshrl.u32 %v6048, 7
    %v6050 = vsub.s32 6, %v6049
    %v6051 = vrot.slane %v5699, %v6050
    %6053 = vbcast.lane.b32.xlu0 %v6051, 256
    %v6054 = vpop.permute.xlu0 %6053
    %v6055 = vlaneseq
    %v6056 = vshrl.u32 %v6055, 7
    %v6057 = vsub.s32 7, %v6056
    %v6058 = vrot.slane %v5699, %v6057
    %6060 = vbcast.lane.b32.xlu0 %v6058, 256
    %v6061 = vpop.permute.xlu0 %6060
    %v6062 = vlaneseq
    %v6063 = vshrl.u32 %v6062, 7
    %v6064 = vsub.s32 0, %v6063
    %v6065 = vrot.slane %v5700, %v6064
    %6067 = vbcast.lane.b32.xlu0 %v6065, 256
    %v6068 = vpop.permute.xlu0 %6067
    %v6069 = vlaneseq
    %v6070 = vshrl.u32 %v6069, 7
    %v6071 = vsub.s32 1, %v6070
    %v6072 = vrot.slane %v5700, %v6071
    %6074 = vbcast.lane.b32.xlu0 %v6072, 256
    %v6075 = vpop.permute.xlu0 %6074
    %v6076 = vlaneseq
    %v6077 = vshrl.u32 %v6076, 7
    %v6078 = vsub.s32 2, %v6077
    %v6079 = vrot.slane %v5700, %v6078
    %6081 = vbcast.lane.b32.xlu0 %v6079, 256
    %v6082 = vpop.permute.xlu0 %6081
    %v6083 = vlaneseq
    %v6084 = vshrl.u32 %v6083, 7
    %v6085 = vsub.s32 3, %v6084
    %v6086 = vrot.slane %v5700, %v6085
    %6088 = vbcast.lane.b32.xlu0 %v6086, 256
    %v6089 = vpop.permute.xlu0 %6088
    %v6090 = vlaneseq
    %v6091 = vshrl.u32 %v6090, 7
    %v6092 = vsub.s32 4, %v6091
    %v6093 = vrot.slane %v5700, %v6092
    %6095 = vbcast.lane.b32.xlu0 %v6093, 256
    %v6096 = vpop.permute.xlu0 %6095
    %v6097 = vlaneseq
    %v6098 = vshrl.u32 %v6097, 7
    %v6099 = vsub.s32 5, %v6098
    %v6100 = vrot.slane %v5700, %v6099
    %6102 = vbcast.lane.b32.xlu0 %v6100, 256
    %v6103 = vpop.permute.xlu0 %6102
    %v6104 = vlaneseq
    %v6105 = vshrl.u32 %v6104, 7
    %v6106 = vsub.s32 6, %v6105
    %v6107 = vrot.slane %v5700, %v6106
    %6109 = vbcast.lane.b32.xlu0 %v6107, 256
    %v6110 = vpop.permute.xlu0 %6109
    %v6111 = vlaneseq
    %v6112 = vshrl.u32 %v6111, 7
    %v6113 = vsub.s32 7, %v6112
    %v6114 = vrot.slane %v5700, %v6113
    %6116 = vbcast.lane.b32.xlu0 %v6114, 256
    %v6117 = vpop.permute.xlu0 %6116
    %v6118 = vlaneseq
    %v6119 = vshrl.u32 %v6118, 7
    %v6120 = vsub.s32 0, %v6119
    %v6121 = vrot.slane %v5701, %v6120
    %6123 = vbcast.lane.b32.xlu0 %v6121, 256
    %v6124 = vpop.permute.xlu0 %6123
    %v6125 = vlaneseq
    %v6126 = vshrl.u32 %v6125, 7
    %v6127 = vsub.s32 1, %v6126
    %v6128 = vrot.slane %v5701, %v6127
    %6130 = vbcast.lane.b32.xlu0 %v6128, 256
    %v6131 = vpop.permute.xlu0 %6130
    %v6132 = vlaneseq
    %v6133 = vshrl.u32 %v6132, 7
    %v6134 = vsub.s32 2, %v6133
    %v6135 = vrot.slane %v5701, %v6134
    %6137 = vbcast.lane.b32.xlu0 %v6135, 256
    %v6138 = vpop.permute.xlu0 %6137
    %v6139 = vlaneseq
    %v6140 = vshrl.u32 %v6139, 7
    %v6141 = vsub.s32 3, %v6140
    %v6142 = vrot.slane %v5701, %v6141
    %6144 = vbcast.lane.b32.xlu0 %v6142, 256
    %v6145 = vpop.permute.xlu0 %6144
    %v6146 = vlaneseq
    %v6147 = vshrl.u32 %v6146, 7
    %v6148 = vsub.s32 4, %v6147
    %v6149 = vrot.slane %v5701, %v6148
    %6151 = vbcast.lane.b32.xlu0 %v6149, 256
    %v6152 = vpop.permute.xlu0 %6151
    %v6153 = vlaneseq
    %v6154 = vshrl.u32 %v6153, 7
    %v6155 = vsub.s32 5, %v6154
    %v6156 = vrot.slane %v5701, %v6155
    %6158 = vbcast.lane.b32.xlu0 %v6156, 256
    %v6159 = vpop.permute.xlu0 %6158
    %v6160 = vlaneseq
    %v6161 = vshrl.u32 %v6160, 7
    %v6162 = vsub.s32 6, %v6161
    %v6163 = vrot.slane %v5701, %v6162
    %6165 = vbcast.lane.b32.xlu0 %v6163, 256
    %v6166 = vpop.permute.xlu0 %6165
    %v6167 = vlaneseq
    %v6168 = vshrl.u32 %v6167, 7
    %v6169 = vsub.s32 7, %v6168
    %v6170 = vrot.slane %v5701, %v6169
    %6172 = vbcast.lane.b32.xlu0 %v6170, 256
    %v6173 = vpop.permute.xlu0 %6172
    %v6174 = vlaneseq
    %v6175 = vshrl.u32 %v6174, 7
    %v6176 = vsub.s32 0, %v6175
    %v6177 = vrot.slane %v5702, %v6176
    %6179 = vbcast.lane.b32.xlu0 %v6177, 256
    %v6180 = vpop.permute.xlu0 %6179
    %v6181 = vlaneseq
    %v6182 = vshrl.u32 %v6181, 7
    %v6183 = vsub.s32 1, %v6182
    %v6184 = vrot.slane %v5702, %v6183
    %6186 = vbcast.lane.b32.xlu0 %v6184, 256
    %v6187 = vpop.permute.xlu0 %6186
    %v6188 = vlaneseq
    %v6189 = vshrl.u32 %v6188, 7
    %v6190 = vsub.s32 2, %v6189
    %v6191 = vrot.slane %v5702, %v6190
    %6193 = vbcast.lane.b32.xlu0 %v6191, 256
    %v6194 = vpop.permute.xlu0 %6193
    %v6195 = vlaneseq
    %v6196 = vshrl.u32 %v6195, 7
    %v6197 = vsub.s32 3, %v6196
    %v6198 = vrot.slane %v5702, %v6197
    %6200 = vbcast.lane.b32.xlu0 %v6198, 256
    %v6201 = vpop.permute.xlu0 %6200
    %v6202 = vlaneseq
    %v6203 = vshrl.u32 %v6202, 7
    %v6204 = vsub.s32 4, %v6203
    %v6205 = vrot.slane %v5702, %v6204
    %6207 = vbcast.lane.b32.xlu0 %v6205, 256
    %v6208 = vpop.permute.xlu0 %6207
    %v6209 = vlaneseq
    %v6210 = vshrl.u32 %v6209, 7
    %v6211 = vsub.s32 5, %v6210
    %v6212 = vrot.slane %v5702, %v6211
    %6214 = vbcast.lane.b32.xlu0 %v6212, 256
    %v6215 = vpop.permute.xlu0 %6214
    %v6216 = vlaneseq
    %v6217 = vshrl.u32 %v6216, 7
    %v6218 = vsub.s32 6, %v6217
    %v6219 = vrot.slane %v5702, %v6218
    %6221 = vbcast.lane.b32.xlu0 %v6219, 256
    %v6222 = vpop.permute.xlu0 %6221
    %v6223 = vlaneseq
    %v6224 = vshrl.u32 %v6223, 7
    %v6225 = vsub.s32 7, %v6224
    %v6226 = vrot.slane %v5702, %v6225
    %6228 = vbcast.lane.b32.xlu0 %v6226, 256
    %v6229 = vpop.permute.xlu0 %6228
    %v6230 = vlaneseq
    %v6231 = vshrl.u32 %v6230, 7
    %v6232 = vsub.s32 0, %v6231
    %v6233 = vrot.slane %v5703, %v6232
    %6235 = vbcast.lane.b32.xlu0 %v6233, 256
    %v6236 = vpop.permute.xlu0 %6235
    %v6237 = vlaneseq
    %v6238 = vshrl.u32 %v6237, 7
    %v6239 = vsub.s32 1, %v6238
    %v6240 = vrot.slane %v5703, %v6239
    %6242 = vbcast.lane.b32.xlu0 %v6240, 256
    %v6243 = vpop.permute.xlu0 %6242
    %v6244 = vlaneseq
    %v6245 = vshrl.u32 %v6244, 7
    %v6246 = vsub.s32 2, %v6245
    %v6247 = vrot.slane %v5703, %v6246
    %6249 = vbcast.lane.b32.xlu0 %v6247, 256
    %v6250 = vpop.permute.xlu0 %6249
    %v6251 = vlaneseq
    %v6252 = vshrl.u32 %v6251, 7
    %v6253 = vsub.s32 3, %v6252
    %v6254 = vrot.slane %v5703, %v6253
    %6256 = vbcast.lane.b32.xlu0 %v6254, 256
    %v6257 = vpop.permute.xlu0 %6256
    %v6258 = vlaneseq
    %v6259 = vshrl.u32 %v6258, 7
    %v6260 = vsub.s32 4, %v6259
    %v6261 = vrot.slane %v5703, %v6260
    %6263 = vbcast.lane.b32.xlu0 %v6261, 256
    %v6264 = vpop.permute.xlu0 %6263
    %v6265 = vlaneseq
    %v6266 = vshrl.u32 %v6265, 7
    %v6267 = vsub.s32 5, %v6266
    %v6268 = vrot.slane %v5703, %v6267
    %6270 = vbcast.lane.b32.xlu0 %v6268, 256
    %v6271 = vpop.permute.xlu0 %6270
    %v6272 = vlaneseq
    %v6273 = vshrl.u32 %v6272, 7
    %v6274 = vsub.s32 6, %v6273
    %v6275 = vrot.slane %v5703, %v6274
    %6277 = vbcast.lane.b32.xlu0 %v6275, 256
    %v6278 = vpop.permute.xlu0 %6277
    %v6279 = vlaneseq
    %v6280 = vshrl.u32 %v6279, 7
    %v6281 = vsub.s32 7, %v6280
    %v6282 = vrot.slane %v5703, %v6281
    %6284 = vbcast.lane.b32.xlu0 %v6282, 256
    %v6285 = vpop.permute.xlu0 %6284
    %v6286 = vlaneseq
    %v6287 = vshrl.u32 %v6286, 7
    %v6288 = vsub.s32 0, %v6287
    %v6289 = vrot.slane %v5704, %v6288
    %6291 = vbcast.lane.b32.xlu0 %v6289, 256
    %v6292 = vpop.permute.xlu0 %6291
    %v6293 = vlaneseq
    %v6294 = vshrl.u32 %v6293, 7
    %v6295 = vsub.s32 1, %v6294
    %v6296 = vrot.slane %v5704, %v6295
    %6298 = vbcast.lane.b32.xlu0 %v6296, 256
    %v6299 = vpop.permute.xlu0 %6298
    %v6300 = vlaneseq
    %v6301 = vshrl.u32 %v6300, 7
    %v6302 = vsub.s32 2, %v6301
    %v6303 = vrot.slane %v5704, %v6302
    %6305 = vbcast.lane.b32.xlu0 %v6303, 256
    %v6306 = vpop.permute.xlu0 %6305
    %v6307 = vlaneseq
    %v6308 = vshrl.u32 %v6307, 7
    %v6309 = vsub.s32 3, %v6308
    %v6310 = vrot.slane %v5704, %v6309
    %6312 = vbcast.lane.b32.xlu0 %v6310, 256
    %v6313 = vpop.permute.xlu0 %6312
    %v6314 = vlaneseq
    %v6315 = vshrl.u32 %v6314, 7
    %v6316 = vsub.s32 4, %v6315
    %v6317 = vrot.slane %v5704, %v6316
    %6319 = vbcast.lane.b32.xlu0 %v6317, 256
    %v6320 = vpop.permute.xlu0 %6319
    %v6321 = vlaneseq
    %v6322 = vshrl.u32 %v6321, 7
    %v6323 = vsub.s32 5, %v6322
    %v6324 = vrot.slane %v5704, %v6323
    %6326 = vbcast.lane.b32.xlu0 %v6324, 256
    %v6327 = vpop.permute.xlu0 %6326
    %v6328 = vlaneseq
    %v6329 = vshrl.u32 %v6328, 7
    %v6330 = vsub.s32 6, %v6329
    %v6331 = vrot.slane %v5704, %v6330
    %6333 = vbcast.lane.b32.xlu0 %v6331, 256
    %v6334 = vpop.permute.xlu0 %6333
    %v6335 = vlaneseq
    %v6336 = vshrl.u32 %v6335, 7
    %v6337 = vsub.s32 7, %v6336
    %v6338 = vrot.slane %v5704, %v6337
    %6340 = vbcast.lane.b32.xlu0 %v6338, 256
    %v6341 = vpop.permute.xlu0 %6340
    %v6342 = vlaneseq
    %v6343 = vshrl.u32 %v6342, 7
    %v6344 = vsub.s32 0, %v6343
    %v6345 = vrot.slane %v5705, %v6344
    %6347 = vbcast.lane.b32.xlu0 %v6345, 256
    %v6348 = vpop.permute.xlu0 %6347
    %v6349 = vlaneseq
    %v6350 = vshrl.u32 %v6349, 7
    %v6351 = vsub.s32 1, %v6350
    %v6352 = vrot.slane %v5705, %v6351
    %6354 = vbcast.lane.b32.xlu0 %v6352, 256
    %v6355 = vpop.permute.xlu0 %6354
    %v6356 = vlaneseq
    %v6357 = vshrl.u32 %v6356, 7
    %v6358 = vsub.s32 2, %v6357
    %v6359 = vrot.slane %v5705, %v6358
    %6361 = vbcast.lane.b32.xlu0 %v6359, 256
    %v6362 = vpop.permute.xlu0 %6361
    %v6363 = vlaneseq
    %v6364 = vshrl.u32 %v6363, 7
    %v6365 = vsub.s32 3, %v6364
    %v6366 = vrot.slane %v5705, %v6365
    %6368 = vbcast.lane.b32.xlu0 %v6366, 256
    %v6369 = vpop.permute.xlu0 %6368
    %v6370 = vlaneseq
    %v6371 = vshrl.u32 %v6370, 7
    %v6372 = vsub.s32 4, %v6371
    %v6373 = vrot.slane %v5705, %v6372
    %6375 = vbcast.lane.b32.xlu0 %v6373, 256
    %v6376 = vpop.permute.xlu0 %6375
    %v6377 = vlaneseq
    %v6378 = vshrl.u32 %v6377, 7
    %v6379 = vsub.s32 5, %v6378
    %v6380 = vrot.slane %v5705, %v6379
    %6382 = vbcast.lane.b32.xlu0 %v6380, 256
    %v6383 = vpop.permute.xlu0 %6382
    %v6384 = vlaneseq
    %v6385 = vshrl.u32 %v6384, 7
    %v6386 = vsub.s32 6, %v6385
    %v6387 = vrot.slane %v5705, %v6386
    %6389 = vbcast.lane.b32.xlu0 %v6387, 256
    %v6390 = vpop.permute.xlu0 %6389
    %v6391 = vlaneseq
    %v6392 = vshrl.u32 %v6391, 7
    %v6393 = vsub.s32 7, %v6392
    %v6394 = vrot.slane %v5705, %v6393
    %6396 = vbcast.lane.b32.xlu0 %v6394, 256
    %v6397 = vpop.permute.xlu0 %6396
    %v6398 = vlaneseq
    %v6399 = vshrl.u32 %v6398, 7
    %v6400 = vsub.s32 0, %v6399
    %v6401 = vrot.slane %v5706, %v6400
    %6403 = vbcast.lane.b32.xlu0 %v6401, 256
    %v6404 = vpop.permute.xlu0 %6403
    %v6405 = vlaneseq
    %v6406 = vshrl.u32 %v6405, 7
    %v6407 = vsub.s32 1, %v6406
    %v6408 = vrot.slane %v5706, %v6407
    %6410 = vbcast.lane.b32.xlu0 %v6408, 256
    %v6411 = vpop.permute.xlu0 %6410
    %v6412 = vlaneseq
    %v6413 = vshrl.u32 %v6412, 7
    %v6414 = vsub.s32 2, %v6413
    %v6415 = vrot.slane %v5706, %v6414
    %6417 = vbcast.lane.b32.xlu0 %v6415, 256
    %v6418 = vpop.permute.xlu0 %6417
    %v6419 = vlaneseq
    %v6420 = vshrl.u32 %v6419, 7
    %v6421 = vsub.s32 3, %v6420
    %v6422 = vrot.slane %v5706, %v6421
    %6424 = vbcast.lane.b32.xlu0 %v6422, 256
    %v6425 = vpop.permute.xlu0 %6424
    %v6426 = vlaneseq
    %v6427 = vshrl.u32 %v6426, 7
    %v6428 = vsub.s32 4, %v6427
    %v6429 = vrot.slane %v5706, %v6428
    %6431 = vbcast.lane.b32.xlu0 %v6429, 256
    %v6432 = vpop.permute.xlu0 %6431
    %v6433 = vlaneseq
    %v6434 = vshrl.u32 %v6433, 7
    %v6435 = vsub.s32 5, %v6434
    %v6436 = vrot.slane %v5706, %v6435
    %6438 = vbcast.lane.b32.xlu0 %v6436, 256
    %v6439 = vpop.permute.xlu0 %6438
    %v6440 = vlaneseq
    %v6441 = vshrl.u32 %v6440, 7
    %v6442 = vsub.s32 6, %v6441
    %v6443 = vrot.slane %v5706, %v6442
    %6445 = vbcast.lane.b32.xlu0 %v6443, 256
    %v6446 = vpop.permute.xlu0 %6445
    %v6447 = vlaneseq
    %v6448 = vshrl.u32 %v6447, 7
    %v6449 = vsub.s32 7, %v6448
    %v6450 = vrot.slane %v5706, %v6449
    %6452 = vbcast.lane.b32.xlu0 %v6450, 256
    %v6453 = vpop.permute.xlu0 %6452
    %v6454 = vlaneseq
    %v6455 = vshrl.u32 %v6454, 7
    %v6456 = vsub.s32 0, %v6455
    %v6457 = vrot.slane %v5707, %v6456
    %6459 = vbcast.lane.b32.xlu0 %v6457, 256
    %v6460 = vpop.permute.xlu0 %6459
    %v6461 = vlaneseq
    %v6462 = vshrl.u32 %v6461, 7
    %v6463 = vsub.s32 1, %v6462
    %v6464 = vrot.slane %v5707, %v6463
    %6466 = vbcast.lane.b32.xlu0 %v6464, 256
    %v6467 = vpop.permute.xlu0 %6466
    %v6468 = vlaneseq
    %v6469 = vshrl.u32 %v6468, 7
    %v6470 = vsub.s32 2, %v6469
    %v6471 = vrot.slane %v5707, %v6470
    %6473 = vbcast.lane.b32.xlu0 %v6471, 256
    %v6474 = vpop.permute.xlu0 %6473
    %v6475 = vlaneseq
    %v6476 = vshrl.u32 %v6475, 7
    %v6477 = vsub.s32 3, %v6476
    %v6478 = vrot.slane %v5707, %v6477
    %6480 = vbcast.lane.b32.xlu0 %v6478, 256
    %v6481 = vpop.permute.xlu0 %6480
    %v6482 = vlaneseq
    %v6483 = vshrl.u32 %v6482, 7
    %v6484 = vsub.s32 4, %v6483
    %v6485 = vrot.slane %v5707, %v6484
    %6487 = vbcast.lane.b32.xlu0 %v6485, 256
    %v6488 = vpop.permute.xlu0 %6487
    %v6489 = vlaneseq
    %v6490 = vshrl.u32 %v6489, 7
    %v6491 = vsub.s32 5, %v6490
    %v6492 = vrot.slane %v5707, %v6491
    %6494 = vbcast.lane.b32.xlu0 %v6492, 256
    %v6495 = vpop.permute.xlu0 %6494
    %v6496 = vlaneseq
    %v6497 = vshrl.u32 %v6496, 7
    %v6498 = vsub.s32 6, %v6497
    %v6499 = vrot.slane %v5707, %v6498
    %6501 = vbcast.lane.b32.xlu0 %v6499, 256
    %v6502 = vpop.permute.xlu0 %6501
    %v6503 = vlaneseq
    %v6504 = vshrl.u32 %v6503, 7
    %v6505 = vsub.s32 7, %v6504
    %v6506 = vrot.slane %v5707, %v6505
    %6508 = vbcast.lane.b32.xlu0 %v6506, 256
    %v6509 = vpop.permute.xlu0 %6508
    %v6510 = vlaneseq
    %v6511 = vshrl.u32 %v6510, 7
    %v6512 = vsub.s32 0, %v6511
    %v6513 = vrot.slane %v5708, %v6512
    %6515 = vbcast.lane.b32.xlu0 %v6513, 256
    %v6516 = vpop.permute.xlu0 %6515
    %v6517 = vlaneseq
    %v6518 = vshrl.u32 %v6517, 7
    %v6519 = vsub.s32 1, %v6518
    %v6520 = vrot.slane %v5708, %v6519
    %6522 = vbcast.lane.b32.xlu0 %v6520, 256
    %v6523 = vpop.permute.xlu0 %6522
    %v6524 = vlaneseq
    %v6525 = vshrl.u32 %v6524, 7
    %v6526 = vsub.s32 2, %v6525
    %v6527 = vrot.slane %v5708, %v6526
    %6529 = vbcast.lane.b32.xlu0 %v6527, 256
    %v6530 = vpop.permute.xlu0 %6529
    %v6531 = vlaneseq
    %v6532 = vshrl.u32 %v6531, 7
    %v6533 = vsub.s32 3, %v6532
    %v6534 = vrot.slane %v5708, %v6533
    %6536 = vbcast.lane.b32.xlu0 %v6534, 256
    %v6537 = vpop.permute.xlu0 %6536
    %v6538 = vlaneseq
    %v6539 = vshrl.u32 %v6538, 7
    %v6540 = vsub.s32 4, %v6539
    %v6541 = vrot.slane %v5708, %v6540
    %6543 = vbcast.lane.b32.xlu0 %v6541, 256
    %v6544 = vpop.permute.xlu0 %6543
    %v6545 = vlaneseq
    %v6546 = vshrl.u32 %v6545, 7
    %v6547 = vsub.s32 5, %v6546
    %v6548 = vrot.slane %v5708, %v6547
    %6550 = vbcast.lane.b32.xlu0 %v6548, 256
    %v6551 = vpop.permute.xlu0 %6550
    %v6552 = vlaneseq
    %v6553 = vshrl.u32 %v6552, 7
    %v6554 = vsub.s32 6, %v6553
    %v6555 = vrot.slane %v5708, %v6554
    %6557 = vbcast.lane.b32.xlu0 %v6555, 256
    %v6558 = vpop.permute.xlu0 %6557
    %v6559 = vlaneseq
    %v6560 = vshrl.u32 %v6559, 7
    %v6561 = vsub.s32 7, %v6560
    %v6562 = vrot.slane %v5708, %v6561
    %6564 = vbcast.lane.b32.xlu0 %v6562, 256
    %v6565 = vpop.permute.xlu0 %6564
    %v6566 = vlaneseq
    %v6567 = vshrl.u32 %v6566, 7
    %v6568 = vsub.s32 0, %v6567
    %v6569 = vrot.slane %v5709, %v6568
    %6571 = vbcast.lane.b32.xlu0 %v6569, 256
    %v6572 = vpop.permute.xlu0 %6571
    %v6573 = vlaneseq
    %v6574 = vshrl.u32 %v6573, 7
    %v6575 = vsub.s32 1, %v6574
    %v6576 = vrot.slane %v5709, %v6575
    %6578 = vbcast.lane.b32.xlu0 %v6576, 256
    %v6579 = vpop.permute.xlu0 %6578
    %v6580 = vlaneseq
    %v6581 = vshrl.u32 %v6580, 7
    %v6582 = vsub.s32 2, %v6581
    %v6583 = vrot.slane %v5709, %v6582
    %6585 = vbcast.lane.b32.xlu0 %v6583, 256
    %v6586 = vpop.permute.xlu0 %6585
    %v6587 = vlaneseq
    %v6588 = vshrl.u32 %v6587, 7
    %v6589 = vsub.s32 3, %v6588
    %v6590 = vrot.slane %v5709, %v6589
    %6592 = vbcast.lane.b32.xlu0 %v6590, 256
    %v6593 = vpop.permute.xlu0 %6592
    %v6594 = vlaneseq
    %v6595 = vshrl.u32 %v6594, 7
    %v6596 = vsub.s32 4, %v6595
    %v6597 = vrot.slane %v5709, %v6596
    %6599 = vbcast.lane.b32.xlu0 %v6597, 256
    %v6600 = vpop.permute.xlu0 %6599
    %v6601 = vlaneseq
    %v6602 = vshrl.u32 %v6601, 7
    %v6603 = vsub.s32 5, %v6602
    %v6604 = vrot.slane %v5709, %v6603
    %6606 = vbcast.lane.b32.xlu0 %v6604, 256
    %v6607 = vpop.permute.xlu0 %6606
    %v6608 = vlaneseq
    %v6609 = vshrl.u32 %v6608, 7
    %v6610 = vsub.s32 6, %v6609
    %v6611 = vrot.slane %v5709, %v6610
    %6613 = vbcast.lane.b32.xlu0 %v6611, 256
    %v6614 = vpop.permute.xlu0 %6613
    %v6615 = vlaneseq
    %v6616 = vshrl.u32 %v6615, 7
    %v6617 = vsub.s32 7, %v6616
    %v6618 = vrot.slane %v5709, %v6617
    %6620 = vbcast.lane.b32.xlu0 %v6618, 256
    %v6621 = vpop.permute.xlu0 %6620
    %v6622 = vlaneseq
    %v6623 = vshrl.u32 %v6622, 7
    %v6624 = vsub.s32 0, %v6623
    %v6625 = vrot.slane %v5710, %v6624
    %6627 = vbcast.lane.b32.xlu0 %v6625, 256
    %v6628 = vpop.permute.xlu0 %6627
    %v6629 = vlaneseq
    %v6630 = vshrl.u32 %v6629, 7
    %v6631 = vsub.s32 1, %v6630
    %v6632 = vrot.slane %v5710, %v6631
    %6634 = vbcast.lane.b32.xlu0 %v6632, 256
    %v6635 = vpop.permute.xlu0 %6634
    %v6636 = vlaneseq
    %v6637 = vshrl.u32 %v6636, 7
    %v6638 = vsub.s32 2, %v6637
    %v6639 = vrot.slane %v5710, %v6638
    %6641 = vbcast.lane.b32.xlu0 %v6639, 256
    %v6642 = vpop.permute.xlu0 %6641
    %v6643 = vlaneseq
    %v6644 = vshrl.u32 %v6643, 7
    %v6645 = vsub.s32 3, %v6644
    %v6646 = vrot.slane %v5710, %v6645
    %6648 = vbcast.lane.b32.xlu0 %v6646, 256
    %v6649 = vpop.permute.xlu0 %6648
    %v6650 = vlaneseq
    %v6651 = vshrl.u32 %v6650, 7
    %v6652 = vsub.s32 4, %v6651
    %v6653 = vrot.slane %v5710, %v6652
    %6655 = vbcast.lane.b32.xlu0 %v6653, 256
    %v6656 = vpop.permute.xlu0 %6655
    %v6657 = vlaneseq
    %v6658 = vshrl.u32 %v6657, 7
    %v6659 = vsub.s32 5, %v6658
    %v6660 = vrot.slane %v5710, %v6659
    %6662 = vbcast.lane.b32.xlu0 %v6660, 256
    %v6663 = vpop.permute.xlu0 %6662
    %v6664 = vlaneseq
    %v6665 = vshrl.u32 %v6664, 7
    %v6666 = vsub.s32 6, %v6665
    %v6667 = vrot.slane %v5710, %v6666
    %6669 = vbcast.lane.b32.xlu0 %v6667, 256
    %v6670 = vpop.permute.xlu0 %6669
    %v6671 = vlaneseq
    %v6672 = vshrl.u32 %v6671, 7
    %v6673 = vsub.s32 7, %v6672
    %v6674 = vrot.slane %v5710, %v6673
    %6676 = vbcast.lane.b32.xlu0 %v6674, 256
    %v6677 = vpop.permute.xlu0 %6676
    %v6678 = vlaneseq
    %v6679 = vshrl.u32 %v6678, 7
    %v6680 = vsub.s32 0, %v6679
    %v6681 = vrot.slane %v5711, %v6680
    %6683 = vbcast.lane.b32.xlu0 %v6681, 256
    %v6684 = vpop.permute.xlu0 %6683
    %v6685 = vlaneseq
    %v6686 = vshrl.u32 %v6685, 7
    %v6687 = vsub.s32 1, %v6686
    %v6688 = vrot.slane %v5711, %v6687
    %6690 = vbcast.lane.b32.xlu0 %v6688, 256
    %v6691 = vpop.permute.xlu0 %6690
    %v6692 = vlaneseq
    %v6693 = vshrl.u32 %v6692, 7
    %v6694 = vsub.s32 2, %v6693
    %v6695 = vrot.slane %v5711, %v6694
    %6697 = vbcast.lane.b32.xlu0 %v6695, 256
    %v6698 = vpop.permute.xlu0 %6697
    %v6699 = vlaneseq
    %v6700 = vshrl.u32 %v6699, 7
    %v6701 = vsub.s32 3, %v6700
    %v6702 = vrot.slane %v5711, %v6701
    %6704 = vbcast.lane.b32.xlu0 %v6702, 256
    %v6705 = vpop.permute.xlu0 %6704
    %v6706 = vlaneseq
    %v6707 = vshrl.u32 %v6706, 7
    %v6708 = vsub.s32 4, %v6707
    %v6709 = vrot.slane %v5711, %v6708
    %6711 = vbcast.lane.b32.xlu0 %v6709, 256
    %v6712 = vpop.permute.xlu0 %6711
    %v6713 = vlaneseq
    %v6714 = vshrl.u32 %v6713, 7
    %v6715 = vsub.s32 5, %v6714
    %v6716 = vrot.slane %v5711, %v6715
    %6718 = vbcast.lane.b32.xlu0 %v6716, 256
    %v6719 = vpop.permute.xlu0 %6718
    %v6720 = vlaneseq
    %v6721 = vshrl.u32 %v6720, 7
    %v6722 = vsub.s32 6, %v6721
    %v6723 = vrot.slane %v5711, %v6722
    %6725 = vbcast.lane.b32.xlu0 %v6723, 256
    %v6726 = vpop.permute.xlu0 %6725
    %v6727 = vlaneseq
    %v6728 = vshrl.u32 %v6727, 7
    %v6729 = vsub.s32 7, %v6728
    %v6730 = vrot.slane %v5711, %v6729
    %6732 = vbcast.lane.b32.xlu0 %v6730, 256
    %v6733 = vpop.permute.xlu0 %6732
    %v6734 = vlaneseq
    %v6735 = vshrl.u32 %v6734, 7
    %v6736 = vsub.s32 0, %v6735
    %v6737 = vrot.slane %v5712, %v6736
    %6739 = vbcast.lane.b32.xlu0 %v6737, 256
    %v6740 = vpop.permute.xlu0 %6739
    %v6741 = vlaneseq
    %v6742 = vshrl.u32 %v6741, 7
    %v6743 = vsub.s32 1, %v6742
    %v6744 = vrot.slane %v5712, %v6743
    %6746 = vbcast.lane.b32.xlu0 %v6744, 256
    %v6747 = vpop.permute.xlu0 %6746
    %v6748 = vlaneseq
    %v6749 = vshrl.u32 %v6748, 7
    %v6750 = vsub.s32 2, %v6749
    %v6751 = vrot.slane %v5712, %v6750
    %6753 = vbcast.lane.b32.xlu0 %v6751, 256
    %v6754 = vpop.permute.xlu0 %6753
    %v6755 = vlaneseq
    %v6756 = vshrl.u32 %v6755, 7
    %v6757 = vsub.s32 3, %v6756
    %v6758 = vrot.slane %v5712, %v6757
    %6760 = vbcast.lane.b32.xlu0 %v6758, 256
    %v6761 = vpop.permute.xlu0 %6760
    %v6762 = vlaneseq
    %v6763 = vshrl.u32 %v6762, 7
    %v6764 = vsub.s32 4, %v6763
    %v6765 = vrot.slane %v5712, %v6764
    %6767 = vbcast.lane.b32.xlu0 %v6765, 256
    %v6768 = vpop.permute.xlu0 %6767
    %v6769 = vlaneseq
    %v6770 = vshrl.u32 %v6769, 7
    %v6771 = vsub.s32 5, %v6770
    %v6772 = vrot.slane %v5712, %v6771
    %6774 = vbcast.lane.b32.xlu0 %v6772, 256
    %v6775 = vpop.permute.xlu0 %6774
    %v6776 = vlaneseq
    %v6777 = vshrl.u32 %v6776, 7
    %v6778 = vsub.s32 6, %v6777
    %v6779 = vrot.slane %v5712, %v6778
    %6781 = vbcast.lane.b32.xlu0 %v6779, 256
    %v6782 = vpop.permute.xlu0 %6781
    %v6783 = vlaneseq
    %v6784 = vshrl.u32 %v6783, 7
    %v6785 = vsub.s32 7, %v6784
    %v6786 = vrot.slane %v5712, %v6785
    %6788 = vbcast.lane.b32.xlu0 %v6786, 256
    %v6789 = vpop.permute.xlu0 %6788
    %v6790 = vlaneseq
    %v6791 = vshrl.u32 %v6790, 7
    %v6792 = vsub.s32 0, %v6791
    %v6793 = vrot.slane %v5713, %v6792
    %6795 = vbcast.lane.b32.xlu0 %v6793, 256
    %v6796 = vpop.permute.xlu0 %6795
    %v6797 = vlaneseq
    %v6798 = vshrl.u32 %v6797, 7
    %v6799 = vsub.s32 1, %v6798
    %v6800 = vrot.slane %v5713, %v6799
    %6802 = vbcast.lane.b32.xlu0 %v6800, 256
    %v6803 = vpop.permute.xlu0 %6802
    %v6804 = vlaneseq
    %v6805 = vshrl.u32 %v6804, 7
    %v6806 = vsub.s32 2, %v6805
    %v6807 = vrot.slane %v5713, %v6806
    %6809 = vbcast.lane.b32.xlu0 %v6807, 256
    %v6810 = vpop.permute.xlu0 %6809
    %v6811 = vlaneseq
    %v6812 = vshrl.u32 %v6811, 7
    %v6813 = vsub.s32 3, %v6812
    %v6814 = vrot.slane %v5713, %v6813
    %6816 = vbcast.lane.b32.xlu0 %v6814, 256
    %v6817 = vpop.permute.xlu0 %6816
    %v6818 = vlaneseq
    %v6819 = vshrl.u32 %v6818, 7
    %v6820 = vsub.s32 4, %v6819
    %v6821 = vrot.slane %v5713, %v6820
    %6823 = vbcast.lane.b32.xlu0 %v6821, 256
    %v6824 = vpop.permute.xlu0 %6823
    %v6825 = vlaneseq
    %v6826 = vshrl.u32 %v6825, 7
    %v6827 = vsub.s32 5, %v6826
    %v6828 = vrot.slane %v5713, %v6827
    %6830 = vbcast.lane.b32.xlu0 %v6828, 256
    %v6831 = vpop.permute.xlu0 %6830
    %v6832 = vlaneseq
    %v6833 = vshrl.u32 %v6832, 7
    %v6834 = vsub.s32 6, %v6833
    %v6835 = vrot.slane %v5713, %v6834
    %6837 = vbcast.lane.b32.xlu0 %v6835, 256
    %v6838 = vpop.permute.xlu0 %6837
    %v6839 = vlaneseq
    %v6840 = vshrl.u32 %v6839, 7
    %v6841 = vsub.s32 7, %v6840
    %v6842 = vrot.slane %v5713, %v6841
    %6844 = vbcast.lane.b32.xlu0 %v6842, 256
    %v6845 = vpop.permute.xlu0 %6844
    %v6846 = vlaneseq
    %v6847 = vshrl.u32 %v6846, 7
    %v6848 = vsub.s32 0, %v6847
    %v6849 = vrot.slane %v5714, %v6848
    %6851 = vbcast.lane.b32.xlu0 %v6849, 256
    %v6852 = vpop.permute.xlu0 %6851
    %v6853 = vlaneseq
    %v6854 = vshrl.u32 %v6853, 7
    %v6855 = vsub.s32 1, %v6854
    %v6856 = vrot.slane %v5714, %v6855
    %6858 = vbcast.lane.b32.xlu0 %v6856, 256
    %v6859 = vpop.permute.xlu0 %6858
    %v6860 = vlaneseq
    %v6861 = vshrl.u32 %v6860, 7
    %v6862 = vsub.s32 2, %v6861
    %v6863 = vrot.slane %v5714, %v6862
    %6865 = vbcast.lane.b32.xlu0 %v6863, 256
    %v6866 = vpop.permute.xlu0 %6865
    %v6867 = vlaneseq
    %v6868 = vshrl.u32 %v6867, 7
    %v6869 = vsub.s32 3, %v6868
    %v6870 = vrot.slane %v5714, %v6869
    %6872 = vbcast.lane.b32.xlu0 %v6870, 256
    %v6873 = vpop.permute.xlu0 %6872
    %v6874 = vlaneseq
    %v6875 = vshrl.u32 %v6874, 7
    %v6876 = vsub.s32 4, %v6875
    %v6877 = vrot.slane %v5714, %v6876
    %6879 = vbcast.lane.b32.xlu0 %v6877, 256
    %v6880 = vpop.permute.xlu0 %6879
    %v6881 = vlaneseq
    %v6882 = vshrl.u32 %v6881, 7
    %v6883 = vsub.s32 5, %v6882
    %v6884 = vrot.slane %v5714, %v6883
    %6886 = vbcast.lane.b32.xlu0 %v6884, 256
    %v6887 = vpop.permute.xlu0 %6886
    %v6888 = vlaneseq
    %v6889 = vshrl.u32 %v6888, 7
    %v6890 = vsub.s32 6, %v6889
    %v6891 = vrot.slane %v5714, %v6890
    %6893 = vbcast.lane.b32.xlu0 %v6891, 256
    %v6894 = vpop.permute.xlu0 %6893
    %v6895 = vlaneseq
    %v6896 = vshrl.u32 %v6895, 7
    %v6897 = vsub.s32 7, %v6896
    %v6898 = vrot.slane %v5714, %v6897
    %6900 = vbcast.lane.b32.xlu0 %v6898, 256
    %v6901 = vpop.permute.xlu0 %6900
    %v6902 = vlaneseq
    %v6903 = vshrl.u32 %v6902, 7
    %v6904 = vsub.s32 0, %v6903
    %v6905 = vrot.slane %v5715, %v6904
    %6907 = vbcast.lane.b32.xlu0 %v6905, 256
    %v6908 = vpop.permute.xlu0 %6907
    %v6909 = vlaneseq
    %v6910 = vshrl.u32 %v6909, 7
    %v6911 = vsub.s32 1, %v6910
    %v6912 = vrot.slane %v5715, %v6911
    %6914 = vbcast.lane.b32.xlu0 %v6912, 256
    %v6915 = vpop.permute.xlu0 %6914
    %v6916 = vlaneseq
    %v6917 = vshrl.u32 %v6916, 7
    %v6918 = vsub.s32 2, %v6917
    %v6919 = vrot.slane %v5715, %v6918
    %6921 = vbcast.lane.b32.xlu0 %v6919, 256
    %v6922 = vpop.permute.xlu0 %6921
    %v6923 = vlaneseq
    %v6924 = vshrl.u32 %v6923, 7
    %v6925 = vsub.s32 3, %v6924
    %v6926 = vrot.slane %v5715, %v6925
    %6928 = vbcast.lane.b32.xlu0 %v6926, 256
    %v6929 = vpop.permute.xlu0 %6928
    %v6930 = vlaneseq
    %v6931 = vshrl.u32 %v6930, 7
    %v6932 = vsub.s32 4, %v6931
    %v6933 = vrot.slane %v5715, %v6932
    %6935 = vbcast.lane.b32.xlu0 %v6933, 256
    %v6936 = vpop.permute.xlu0 %6935
    %v6937 = vlaneseq
    %v6938 = vshrl.u32 %v6937, 7
    %v6939 = vsub.s32 5, %v6938
    %v6940 = vrot.slane %v5715, %v6939
    %6942 = vbcast.lane.b32.xlu0 %v6940, 256
    %v6943 = vpop.permute.xlu0 %6942
    %v6944 = vlaneseq
    %v6945 = vshrl.u32 %v6944, 7
    %v6946 = vsub.s32 6, %v6945
    %v6947 = vrot.slane %v5715, %v6946
    %6949 = vbcast.lane.b32.xlu0 %v6947, 256
    %v6950 = vpop.permute.xlu0 %6949
    %v6951 = vlaneseq
    %v6952 = vshrl.u32 %v6951, 7
    %v6953 = vsub.s32 7, %v6952
    %v6954 = vrot.slane %v5715, %v6953
    %6956 = vbcast.lane.b32.xlu0 %v6954, 256
    %v6957 = vpop.permute.xlu0 %6956
    %v6958 = vlaneseq
    %v6959 = vshrl.u32 %v6958, 7
    %v6960 = vsub.s32 0, %v6959
    %v6961 = vrot.slane %v5716, %v6960
    %6963 = vbcast.lane.b32.xlu0 %v6961, 256
    %v6964 = vpop.permute.xlu0 %6963
    %v6965 = vlaneseq
    %v6966 = vshrl.u32 %v6965, 7
    %v6967 = vsub.s32 1, %v6966
    %v6968 = vrot.slane %v5716, %v6967
    %6970 = vbcast.lane.b32.xlu0 %v6968, 256
    %v6971 = vpop.permute.xlu0 %6970
    %v6972 = vlaneseq
    %v6973 = vshrl.u32 %v6972, 7
    %v6974 = vsub.s32 2, %v6973
    %v6975 = vrot.slane %v5716, %v6974
    %6977 = vbcast.lane.b32.xlu0 %v6975, 256
    %v6978 = vpop.permute.xlu0 %6977
    %v6979 = vlaneseq
    %v6980 = vshrl.u32 %v6979, 7
    %v6981 = vsub.s32 3, %v6980
    %v6982 = vrot.slane %v5716, %v6981
    %6984 = vbcast.lane.b32.xlu0 %v6982, 256
    %v6985 = vpop.permute.xlu0 %6984
    %v6986 = vlaneseq
    %v6987 = vshrl.u32 %v6986, 7
    %v6988 = vsub.s32 4, %v6987
    %v6989 = vrot.slane %v5716, %v6988
    %6991 = vbcast.lane.b32.xlu0 %v6989, 256
    %v6992 = vpop.permute.xlu0 %6991
    %v6993 = vlaneseq
    %v6994 = vshrl.u32 %v6993, 7
    %v6995 = vsub.s32 5, %v6994
    %v6996 = vrot.slane %v5716, %v6995
    %6998 = vbcast.lane.b32.xlu0 %v6996, 256
    %v6999 = vpop.permute.xlu0 %6998
    %v7000 = vlaneseq
    %v7001 = vshrl.u32 %v7000, 7
    %v7002 = vsub.s32 6, %v7001
    %v7003 = vrot.slane %v5716, %v7002
    %7005 = vbcast.lane.b32.xlu0 %v7003, 256
    %v7006 = vpop.permute.xlu0 %7005
    %v7007 = vlaneseq
    %v7008 = vshrl.u32 %v7007, 7
    %v7009 = vsub.s32 7, %v7008
    %v7010 = vrot.slane %v5716, %v7009
    %7012 = vbcast.lane.b32.xlu0 %v7010, 256
    %v7013 = vpop.permute.xlu0 %7012
    %v7014 = vlaneseq
    %v7015 = vshrl.u32 %v7014, 7
    %v7016 = vsub.s32 0, %v7015
    %v7017 = vrot.slane %v5717, %v7016
    %7019 = vbcast.lane.b32.xlu0 %v7017, 256
    %v7020 = vpop.permute.xlu0 %7019
    %v7021 = vlaneseq
    %v7022 = vshrl.u32 %v7021, 7
    %v7023 = vsub.s32 1, %v7022
    %v7024 = vrot.slane %v5717, %v7023
    %7026 = vbcast.lane.b32.xlu0 %v7024, 256
    %v7027 = vpop.permute.xlu0 %7026
    %v7028 = vlaneseq
    %v7029 = vshrl.u32 %v7028, 7
    %v7030 = vsub.s32 2, %v7029
    %v7031 = vrot.slane %v5717, %v7030
    %7033 = vbcast.lane.b32.xlu0 %v7031, 256
    %v7034 = vpop.permute.xlu0 %7033
    %v7035 = vlaneseq
    %v7036 = vshrl.u32 %v7035, 7
    %v7037 = vsub.s32 3, %v7036
    %v7038 = vrot.slane %v5717, %v7037
    %7040 = vbcast.lane.b32.xlu0 %v7038, 256
    %v7041 = vpop.permute.xlu0 %7040
    %v7042 = vlaneseq
    %v7043 = vshrl.u32 %v7042, 7
    %v7044 = vsub.s32 4, %v7043
    %v7045 = vrot.slane %v5717, %v7044
    %7047 = vbcast.lane.b32.xlu0 %v7045, 256
    %v7048 = vpop.permute.xlu0 %7047
    %v7049 = vlaneseq
    %v7050 = vshrl.u32 %v7049, 7
    %v7051 = vsub.s32 5, %v7050
    %v7052 = vrot.slane %v5717, %v7051
    %7054 = vbcast.lane.b32.xlu0 %v7052, 256
    %v7055 = vpop.permute.xlu0 %7054
    %v7056 = vlaneseq
    %v7057 = vshrl.u32 %v7056, 7
    %v7058 = vsub.s32 6, %v7057
    %v7059 = vrot.slane %v5717, %v7058
    %7061 = vbcast.lane.b32.xlu0 %v7059, 256
    %v7062 = vpop.permute.xlu0 %7061
    %v7063 = vlaneseq
    %v7064 = vshrl.u32 %v7063, 7
    %v7065 = vsub.s32 7, %v7064
    %v7066 = vrot.slane %v5717, %v7065
    %7068 = vbcast.lane.b32.xlu0 %v7066, 256
    %v7069 = vpop.permute.xlu0 %7068
    %v7070 = vlaneseq
    %v7071 = vshrl.u32 %v7070, 7
    %v7072 = vsub.s32 0, %v7071
    %v7073 = vrot.slane %v5718, %v7072
    %7075 = vbcast.lane.b32.xlu0 %v7073, 256
    %v7076 = vpop.permute.xlu0 %7075
    %v7077 = vlaneseq
    %v7078 = vshrl.u32 %v7077, 7
    %v7079 = vsub.s32 1, %v7078
    %v7080 = vrot.slane %v5718, %v7079
    %7082 = vbcast.lane.b32.xlu0 %v7080, 256
    %v7083 = vpop.permute.xlu0 %7082
    %v7084 = vlaneseq
    %v7085 = vshrl.u32 %v7084, 7
    %v7086 = vsub.s32 2, %v7085
    %v7087 = vrot.slane %v5718, %v7086
    %7089 = vbcast.lane.b32.xlu0 %v7087, 256
    %v7090 = vpop.permute.xlu0 %7089
    %v7091 = vlaneseq
    %v7092 = vshrl.u32 %v7091, 7
    %v7093 = vsub.s32 3, %v7092
    %v7094 = vrot.slane %v5718, %v7093
    %7096 = vbcast.lane.b32.xlu0 %v7094, 256
    %v7097 = vpop.permute.xlu0 %7096
    %v7098 = vlaneseq
    %v7099 = vshrl.u32 %v7098, 7
    %v7100 = vsub.s32 4, %v7099
    %v7101 = vrot.slane %v5718, %v7100
    %7103 = vbcast.lane.b32.xlu0 %v7101, 256
    %v7104 = vpop.permute.xlu0 %7103
    %v7105 = vlaneseq
    %v7106 = vshrl.u32 %v7105, 7
    %v7107 = vsub.s32 5, %v7106
    %v7108 = vrot.slane %v5718, %v7107
    %7110 = vbcast.lane.b32.xlu0 %v7108, 256
    %v7111 = vpop.permute.xlu0 %7110
    %v7112 = vlaneseq
    %v7113 = vshrl.u32 %v7112, 7
    %v7114 = vsub.s32 6, %v7113
    %v7115 = vrot.slane %v5718, %v7114
    %7117 = vbcast.lane.b32.xlu0 %v7115, 256
    %v7118 = vpop.permute.xlu0 %7117
    %v7119 = vlaneseq
    %v7120 = vshrl.u32 %v7119, 7
    %v7121 = vsub.s32 7, %v7120
    %v7122 = vrot.slane %v5718, %v7121
    %7124 = vbcast.lane.b32.xlu0 %v7122, 256
    %v7125 = vpop.permute.xlu0 %7124
    %v7126 = vlaneseq
    %v7127 = vshrl.u32 %v7126, 7
    %v7128 = vsub.s32 0, %v7127
    %v7129 = vrot.slane %v5719, %v7128
    %7131 = vbcast.lane.b32.xlu0 %v7129, 256
    %v7132 = vpop.permute.xlu0 %7131
    %v7133 = vlaneseq
    %v7134 = vshrl.u32 %v7133, 7
    %v7135 = vsub.s32 1, %v7134
    %v7136 = vrot.slane %v5719, %v7135
    %7138 = vbcast.lane.b32.xlu0 %v7136, 256
    %v7139 = vpop.permute.xlu0 %7138
    %v7140 = vlaneseq
    %v7141 = vshrl.u32 %v7140, 7
    %v7142 = vsub.s32 2, %v7141
    %v7143 = vrot.slane %v5719, %v7142
    %7145 = vbcast.lane.b32.xlu0 %v7143, 256
    %v7146 = vpop.permute.xlu0 %7145
    %v7147 = vlaneseq
    %v7148 = vshrl.u32 %v7147, 7
    %v7149 = vsub.s32 3, %v7148
    %v7150 = vrot.slane %v5719, %v7149
    %7152 = vbcast.lane.b32.xlu0 %v7150, 256
    %v7153 = vpop.permute.xlu0 %7152
    %v7154 = vlaneseq
    %v7155 = vshrl.u32 %v7154, 7
    %v7156 = vsub.s32 4, %v7155
    %v7157 = vrot.slane %v5719, %v7156
    %7159 = vbcast.lane.b32.xlu0 %v7157, 256
    %v7160 = vpop.permute.xlu0 %7159
    %v7161 = vlaneseq
    %v7162 = vshrl.u32 %v7161, 7
    %v7163 = vsub.s32 5, %v7162
    %v7164 = vrot.slane %v5719, %v7163
    %7166 = vbcast.lane.b32.xlu0 %v7164, 256
    %v7167 = vpop.permute.xlu0 %7166
    %v7168 = vlaneseq
    %v7169 = vshrl.u32 %v7168, 7
    %v7170 = vsub.s32 6, %v7169
    %v7171 = vrot.slane %v5719, %v7170
    %7173 = vbcast.lane.b32.xlu0 %v7171, 256
    %v7174 = vpop.permute.xlu0 %7173
    %v7175 = vlaneseq
    %v7176 = vshrl.u32 %v7175, 7
    %v7177 = vsub.s32 7, %v7176
    %v7178 = vrot.slane %v5719, %v7177
    %7180 = vbcast.lane.b32.xlu0 %v7178, 256
    %v7181 = vpop.permute.xlu0 %7180
    %v7182 = vlaneseq
    %v7183 = vshrl.u32 %v7182, 7
    %v7184 = vsub.s32 0, %v7183
    %v7185 = vrot.slane %v5720, %v7184
    %7187 = vbcast.lane.b32.xlu0 %v7185, 256
    %v7188 = vpop.permute.xlu0 %7187
    %v7189 = vlaneseq
    %v7190 = vshrl.u32 %v7189, 7
    %v7191 = vsub.s32 1, %v7190
    %v7192 = vrot.slane %v5720, %v7191
    %7194 = vbcast.lane.b32.xlu0 %v7192, 256
    %v7195 = vpop.permute.xlu0 %7194
    %v7196 = vlaneseq
    %v7197 = vshrl.u32 %v7196, 7
    %v7198 = vsub.s32 2, %v7197
    %v7199 = vrot.slane %v5720, %v7198
    %7201 = vbcast.lane.b32.xlu0 %v7199, 256
    %v7202 = vpop.permute.xlu0 %7201
    %v7203 = vlaneseq
    %v7204 = vshrl.u32 %v7203, 7
    %v7205 = vsub.s32 3, %v7204
    %v7206 = vrot.slane %v5720, %v7205
    %7208 = vbcast.lane.b32.xlu0 %v7206, 256
    %v7209 = vpop.permute.xlu0 %7208
    %v7210 = vlaneseq
    %v7211 = vshrl.u32 %v7210, 7
    %v7212 = vsub.s32 4, %v7211
    %v7213 = vrot.slane %v5720, %v7212
    %7215 = vbcast.lane.b32.xlu0 %v7213, 256
    %v7216 = vpop.permute.xlu0 %7215
    %v7217 = vlaneseq
    %v7218 = vshrl.u32 %v7217, 7
    %v7219 = vsub.s32 5, %v7218
    %v7220 = vrot.slane %v5720, %v7219
    %7222 = vbcast.lane.b32.xlu0 %v7220, 256
    %v7223 = vpop.permute.xlu0 %7222
    %v7224 = vlaneseq
    %v7225 = vshrl.u32 %v7224, 7
    %v7226 = vsub.s32 6, %v7225
    %v7227 = vrot.slane %v5720, %v7226
    %7229 = vbcast.lane.b32.xlu0 %v7227, 256
    %v7230 = vpop.permute.xlu0 %7229
    %v7231 = vlaneseq
    %v7232 = vshrl.u32 %v7231, 7
    %v7233 = vsub.s32 7, %v7232
    %v7234 = vrot.slane %v5720, %v7233
    %7236 = vbcast.lane.b32.xlu0 %v7234, 256
    %v7237 = vpop.permute.xlu0 %7236
    %v7238 = vlaneseq
    %v7239 = vshrl.u32 %v7238, 7
    %v7240 = vsub.s32 0, %v7239
    %v7241 = vrot.slane %v5721, %v7240
    %7243 = vbcast.lane.b32.xlu0 %v7241, 256
    %v7244 = vpop.permute.xlu0 %7243
    %v7245 = vlaneseq
    %v7246 = vshrl.u32 %v7245, 7
    %v7247 = vsub.s32 1, %v7246
    %v7248 = vrot.slane %v5721, %v7247
    %7250 = vbcast.lane.b32.xlu0 %v7248, 256
    %v7251 = vpop.permute.xlu0 %7250
    %v7252 = vlaneseq
    %v7253 = vshrl.u32 %v7252, 7
    %v7254 = vsub.s32 2, %v7253
    %v7255 = vrot.slane %v5721, %v7254
    %7257 = vbcast.lane.b32.xlu0 %v7255, 256
    %v7258 = vpop.permute.xlu0 %7257
    %v7259 = vlaneseq
    %v7260 = vshrl.u32 %v7259, 7
    %v7261 = vsub.s32 3, %v7260
    %v7262 = vrot.slane %v5721, %v7261
    %7264 = vbcast.lane.b32.xlu0 %v7262, 256
    %v7265 = vpop.permute.xlu0 %7264
    %v7266 = vlaneseq
    %v7267 = vshrl.u32 %v7266, 7
    %v7268 = vsub.s32 4, %v7267
    %v7269 = vrot.slane %v5721, %v7268
    %7271 = vbcast.lane.b32.xlu0 %v7269, 256
    %v7272 = vpop.permute.xlu0 %7271
    %v7273 = vlaneseq
    %v7274 = vshrl.u32 %v7273, 7
    %v7275 = vsub.s32 5, %v7274
    %v7276 = vrot.slane %v5721, %v7275
    %7278 = vbcast.lane.b32.xlu0 %v7276, 256
    %v7279 = vpop.permute.xlu0 %7278
    %v7280 = vlaneseq
    %v7281 = vshrl.u32 %v7280, 7
    %v7282 = vsub.s32 6, %v7281
    %v7283 = vrot.slane %v5721, %v7282
    %7285 = vbcast.lane.b32.xlu0 %v7283, 256
    %v7286 = vpop.permute.xlu0 %7285
    %v7287 = vlaneseq
    %v7288 = vshrl.u32 %v7287, 7
    %v7289 = vsub.s32 7, %v7288
    %v7290 = vrot.slane %v5721, %v7289
    %7292 = vbcast.lane.b32.xlu0 %v7290, 256
    %v7293 = vpop.permute.xlu0 %7292
    %v7294 = vlaneseq
    %v7295 = vshrl.u32 %v7294, 7
    %v7296 = vsub.s32 0, %v7295
    %v7297 = vrot.slane %v5722, %v7296
    %7299 = vbcast.lane.b32.xlu0 %v7297, 256
    %v7300 = vpop.permute.xlu0 %7299
    %v7301 = vlaneseq
    %v7302 = vshrl.u32 %v7301, 7
    %v7303 = vsub.s32 1, %v7302
    %v7304 = vrot.slane %v5722, %v7303
    %7306 = vbcast.lane.b32.xlu0 %v7304, 256
    %v7307 = vpop.permute.xlu0 %7306
    %v7308 = vlaneseq
    %v7309 = vshrl.u32 %v7308, 7
    %v7310 = vsub.s32 2, %v7309
    %v7311 = vrot.slane %v5722, %v7310
    %7313 = vbcast.lane.b32.xlu0 %v7311, 256
    %v7314 = vpop.permute.xlu0 %7313
    %v7315 = vlaneseq
    %v7316 = vshrl.u32 %v7315, 7
    %v7317 = vsub.s32 3, %v7316
    %v7318 = vrot.slane %v5722, %v7317
    %7320 = vbcast.lane.b32.xlu0 %v7318, 256
    %v7321 = vpop.permute.xlu0 %7320
    %v7322 = vlaneseq
    %v7323 = vshrl.u32 %v7322, 7
    %v7324 = vsub.s32 4, %v7323
    %v7325 = vrot.slane %v5722, %v7324
    %7327 = vbcast.lane.b32.xlu0 %v7325, 256
    %v7328 = vpop.permute.xlu0 %7327
    %v7329 = vlaneseq
    %v7330 = vshrl.u32 %v7329, 7
    %v7331 = vsub.s32 5, %v7330
    %v7332 = vrot.slane %v5722, %v7331
    %7334 = vbcast.lane.b32.xlu0 %v7332, 256
    %v7335 = vpop.permute.xlu0 %7334
    %v7336 = vlaneseq
    %v7337 = vshrl.u32 %v7336, 7
    %v7338 = vsub.s32 6, %v7337
    %v7339 = vrot.slane %v5722, %v7338
    %7341 = vbcast.lane.b32.xlu0 %v7339, 256
    %v7342 = vpop.permute.xlu0 %7341
    %v7343 = vlaneseq
    %v7344 = vshrl.u32 %v7343, 7
    %v7345 = vsub.s32 7, %v7344
    %v7346 = vrot.slane %v5722, %v7345
    %7348 = vbcast.lane.b32.xlu0 %v7346, 256
    %v7349 = vpop.permute.xlu0 %7348
    %v7350 = vlaneseq
    %v7351 = vshrl.u32 %v7350, 7
    %v7352 = vsub.s32 0, %v7351
    %v7353 = vrot.slane %v5723, %v7352
    %7355 = vbcast.lane.b32.xlu0 %v7353, 256
    %v7356 = vpop.permute.xlu0 %7355
    %v7357 = vlaneseq
    %v7358 = vshrl.u32 %v7357, 7
    %v7359 = vsub.s32 1, %v7358
    %v7360 = vrot.slane %v5723, %v7359
    %7362 = vbcast.lane.b32.xlu0 %v7360, 256
    %v7363 = vpop.permute.xlu0 %7362
    %v7364 = vlaneseq
    %v7365 = vshrl.u32 %v7364, 7
    %v7366 = vsub.s32 2, %v7365
    %v7367 = vrot.slane %v5723, %v7366
    %7369 = vbcast.lane.b32.xlu0 %v7367, 256
    %v7370 = vpop.permute.xlu0 %7369
    %v7371 = vlaneseq
    %v7372 = vshrl.u32 %v7371, 7
    %v7373 = vsub.s32 3, %v7372
    %v7374 = vrot.slane %v5723, %v7373
    %7376 = vbcast.lane.b32.xlu0 %v7374, 256
    %v7377 = vpop.permute.xlu0 %7376
    %v7378 = vlaneseq
    %v7379 = vshrl.u32 %v7378, 7
    %v7380 = vsub.s32 4, %v7379
    %v7381 = vrot.slane %v5723, %v7380
    %7383 = vbcast.lane.b32.xlu0 %v7381, 256
    %v7384 = vpop.permute.xlu0 %7383
    %v7385 = vlaneseq
    %v7386 = vshrl.u32 %v7385, 7
    %v7387 = vsub.s32 5, %v7386
    %v7388 = vrot.slane %v5723, %v7387
    %7390 = vbcast.lane.b32.xlu0 %v7388, 256
    %v7391 = vpop.permute.xlu0 %7390
    %v7392 = vlaneseq
    %v7393 = vshrl.u32 %v7392, 7
    %v7394 = vsub.s32 6, %v7393
    %v7395 = vrot.slane %v5723, %v7394
    %7397 = vbcast.lane.b32.xlu0 %v7395, 256
    %v7398 = vpop.permute.xlu0 %7397
    %v7399 = vlaneseq
    %v7400 = vshrl.u32 %v7399, 7
    %v7401 = vsub.s32 7, %v7400
    %v7402 = vrot.slane %v5723, %v7401
    %7404 = vbcast.lane.b32.xlu0 %v7402, 256
    %v7405 = vpop.permute.xlu0 %7404
    %v7406 = vlaneseq
    %v7407 = vshrl.u32 %v7406, 7
    %v7408 = vsub.s32 0, %v7407
    %v7409 = vrot.slane %v5724, %v7408
    %7411 = vbcast.lane.b32.xlu0 %v7409, 256
    %v7412 = vpop.permute.xlu0 %7411
    %v7413 = vlaneseq
    %v7414 = vshrl.u32 %v7413, 7
    %v7415 = vsub.s32 1, %v7414
    %v7416 = vrot.slane %v5724, %v7415
    %7418 = vbcast.lane.b32.xlu0 %v7416, 256
    %v7419 = vpop.permute.xlu0 %7418
    %v7420 = vlaneseq
    %v7421 = vshrl.u32 %v7420, 7
    %v7422 = vsub.s32 2, %v7421
    %v7423 = vrot.slane %v5724, %v7422
    %7425 = vbcast.lane.b32.xlu0 %v7423, 256
    %v7426 = vpop.permute.xlu0 %7425
    %v7427 = vlaneseq
    %v7428 = vshrl.u32 %v7427, 7
    %v7429 = vsub.s32 3, %v7428
    %v7430 = vrot.slane %v5724, %v7429
    %7432 = vbcast.lane.b32.xlu0 %v7430, 256
    %v7433 = vpop.permute.xlu0 %7432
    %v7434 = vlaneseq
    %v7435 = vshrl.u32 %v7434, 7
    %v7436 = vsub.s32 4, %v7435
    %v7437 = vrot.slane %v5724, %v7436
    %7439 = vbcast.lane.b32.xlu0 %v7437, 256
    %v7440 = vpop.permute.xlu0 %7439
    %v7441 = vlaneseq
    %v7442 = vshrl.u32 %v7441, 7
    %v7443 = vsub.s32 5, %v7442
    %v7444 = vrot.slane %v5724, %v7443
    %7446 = vbcast.lane.b32.xlu0 %v7444, 256
    %v7447 = vpop.permute.xlu0 %7446
    %v7448 = vlaneseq
    %v7449 = vshrl.u32 %v7448, 7
    %v7450 = vsub.s32 6, %v7449
    %v7451 = vrot.slane %v5724, %v7450
    %7453 = vbcast.lane.b32.xlu0 %v7451, 256
    %v7454 = vpop.permute.xlu0 %7453
    %v7455 = vlaneseq
    %v7456 = vshrl.u32 %v7455, 7
    %v7457 = vsub.s32 7, %v7456
    %v7458 = vrot.slane %v5724, %v7457
    %7460 = vbcast.lane.b32.xlu0 %v7458, 256
    %v7461 = vpop.permute.xlu0 %7460
    %v7462 = vlaneseq
    %v7463 = vshrl.u32 %v7462, 7
    %v7464 = vsub.s32 0, %v7463
    %v7465 = vrot.slane %v5725, %v7464
    %7467 = vbcast.lane.b32.xlu0 %v7465, 256
    %v7468 = vpop.permute.xlu0 %7467
    %v7469 = vlaneseq
    %v7470 = vshrl.u32 %v7469, 7
    %v7471 = vsub.s32 1, %v7470
    %v7472 = vrot.slane %v5725, %v7471
    %7474 = vbcast.lane.b32.xlu0 %v7472, 256
    %v7475 = vpop.permute.xlu0 %7474
    %v7476 = vlaneseq
    %v7477 = vshrl.u32 %v7476, 7
    %v7478 = vsub.s32 2, %v7477
    %v7479 = vrot.slane %v5725, %v7478
    %7481 = vbcast.lane.b32.xlu0 %v7479, 256
    %v7482 = vpop.permute.xlu0 %7481
    %v7483 = vlaneseq
    %v7484 = vshrl.u32 %v7483, 7
    %v7485 = vsub.s32 3, %v7484
    %v7486 = vrot.slane %v5725, %v7485
    %7488 = vbcast.lane.b32.xlu0 %v7486, 256
    %v7489 = vpop.permute.xlu0 %7488
    %v7490 = vlaneseq
    %v7491 = vshrl.u32 %v7490, 7
    %v7492 = vsub.s32 4, %v7491
    %v7493 = vrot.slane %v5725, %v7492
    %7495 = vbcast.lane.b32.xlu0 %v7493, 256
    %v7496 = vpop.permute.xlu0 %7495
    %v7497 = vlaneseq
    %v7498 = vshrl.u32 %v7497, 7
    %v7499 = vsub.s32 5, %v7498
    %v7500 = vrot.slane %v5725, %v7499
    %7502 = vbcast.lane.b32.xlu0 %v7500, 256
    %v7503 = vpop.permute.xlu0 %7502
    %v7504 = vlaneseq
    %v7505 = vshrl.u32 %v7504, 7
    %v7506 = vsub.s32 6, %v7505
    %v7507 = vrot.slane %v5725, %v7506
    %7509 = vbcast.lane.b32.xlu0 %v7507, 256
    %v7510 = vpop.permute.xlu0 %7509
    %v7511 = vlaneseq
    %v7512 = vshrl.u32 %v7511, 7
    %v7513 = vsub.s32 7, %v7512
    %v7514 = vrot.slane %v5725, %v7513
    %7516 = vbcast.lane.b32.xlu0 %v7514, 256
    %v7517 = vpop.permute.xlu0 %7516
    %v7550 = vcombine.high %v5597, %v5597
    %v7552 = vunpack.c.l.s4 1966171168
    %v7553 = vunpack.c.0.s8 %v7552
    %v7554 = vlaneseq
    %v7555 = vshrl.u32 %v7554, 7
    %v7556 = vsub.s32 %v7553, %v7555
    %v7557 = vrot.slane %v5597, %v7556
    %v7559 = vunpack.c.l.s4 1966171168
    %v7560 = vunpack.c.0.s8 %v7559
    %v7561 = vlaneseq
    %v7562 = vshrl.u32 %v7561, 7
    %v7563 = vsub.s32 %v7560, %v7562
    %v7564 = vrot.slane %v7550, %v7563
    %v7565 = vcombine.high %v7557, %v7557
    %v7566 = vcombine.high %v7564, %v7564
    %v7568 = vunpack.c.l.s4 1966171168
    %v7569 = vunpack.c.0.s8 %v7568
    %v7570 = vlaneseq
    %v7571 = vshrl.u32 %v7570, 7
    %v7572 = vsub.s32 %v7569, %v7571
    %v7573 = vrot.slane %v7557, %v7572
    %v7575 = vunpack.c.l.s4 1966171168
    %v7576 = vunpack.c.0.s8 %v7575
    %v7577 = vlaneseq
    %v7578 = vshrl.u32 %v7577, 7
    %v7579 = vsub.s32 %v7576, %v7578
    %v7580 = vrot.slane %v7564, %v7579
    %v7582 = vunpack.c.l.s4 1966171168
    %v7583 = vunpack.c.0.s8 %v7582
    %v7584 = vlaneseq
    %v7585 = vshrl.u32 %v7584, 7
    %v7586 = vsub.s32 %v7583, %v7585
    %v7587 = vrot.slane %v7565, %v7586
    %v7589 = vunpack.c.l.s4 1966171168
    %v7590 = vunpack.c.0.s8 %v7589
    %v7591 = vlaneseq
    %v7592 = vshrl.u32 %v7591, 7
    %v7593 = vsub.s32 %v7590, %v7592
    %v7594 = vrot.slane %v7566, %v7593
    %v7595 = vcombine.high %v7573, %v7573
    %v7596 = vcombine.high %v7580, %v7580
    %v7597 = vcombine.high %v7587, %v7587
    %v7598 = vcombine.high %v7594, %v7594
    %v7599 = vcombine.high %v5598, %v5598
    %v7601 = vunpack.c.l.s4 1966171168
    %v7602 = vunpack.c.0.s8 %v7601
    %v7603 = vlaneseq
    %v7604 = vshrl.u32 %v7603, 7
    %v7605 = vsub.s32 %v7602, %v7604
    %v7606 = vrot.slane %v5598, %v7605
    %v7608 = vunpack.c.l.s4 1966171168
    %v7609 = vunpack.c.0.s8 %v7608
    %v7610 = vlaneseq
    %v7611 = vshrl.u32 %v7610, 7
    %v7612 = vsub.s32 %v7609, %v7611
    %v7613 = vrot.slane %v7599, %v7612
    %v7614 = vcombine.high %v7606, %v7606
    %v7615 = vcombine.high %v7613, %v7613
    %v7617 = vunpack.c.l.s4 1966171168
    %v7618 = vunpack.c.0.s8 %v7617
    %v7619 = vlaneseq
    %v7620 = vshrl.u32 %v7619, 7
    %v7621 = vsub.s32 %v7618, %v7620
    %v7622 = vrot.slane %v7606, %v7621
    %v7624 = vunpack.c.l.s4 1966171168
    %v7625 = vunpack.c.0.s8 %v7624
    %v7626 = vlaneseq
    %v7627 = vshrl.u32 %v7626, 7
    %v7628 = vsub.s32 %v7625, %v7627
    %v7629 = vrot.slane %v7613, %v7628
    %v7631 = vunpack.c.l.s4 1966171168
    %v7632 = vunpack.c.0.s8 %v7631
    %v7633 = vlaneseq
    %v7634 = vshrl.u32 %v7633, 7
    %v7635 = vsub.s32 %v7632, %v7634
    %v7636 = vrot.slane %v7614, %v7635
    %v7638 = vunpack.c.l.s4 1966171168
    %v7639 = vunpack.c.0.s8 %v7638
    %v7640 = vlaneseq
    %v7641 = vshrl.u32 %v7640, 7
    %v7642 = vsub.s32 %v7639, %v7641
    %v7643 = vrot.slane %v7615, %v7642
    %v7644 = vcombine.high %v7622, %v7622
    %v7645 = vcombine.high %v7629, %v7629
    %v7646 = vcombine.high %v7636, %v7636
    %v7647 = vcombine.high %v7643, %v7643
    %v7648 = vcombine.high %v5599, %v5599
    %v7650 = vunpack.c.l.s4 1966171168
    %v7651 = vunpack.c.0.s8 %v7650
    %v7652 = vlaneseq
    %v7653 = vshrl.u32 %v7652, 7
    %v7654 = vsub.s32 %v7651, %v7653
    %v7655 = vrot.slane %v5599, %v7654
    %v7657 = vunpack.c.l.s4 1966171168
    %v7658 = vunpack.c.0.s8 %v7657
    %v7659 = vlaneseq
    %v7660 = vshrl.u32 %v7659, 7
    %v7661 = vsub.s32 %v7658, %v7660
    %v7662 = vrot.slane %v7648, %v7661
    %v7663 = vcombine.high %v7655, %v7655
    %v7664 = vcombine.high %v7662, %v7662
    %v7666 = vunpack.c.l.s4 1966171168
    %v7667 = vunpack.c.0.s8 %v7666
    %v7668 = vlaneseq
    %v7669 = vshrl.u32 %v7668, 7
    %v7670 = vsub.s32 %v7667, %v7669
    %v7671 = vrot.slane %v7655, %v7670
    %v7673 = vunpack.c.l.s4 1966171168
    %v7674 = vunpack.c.0.s8 %v7673
    %v7675 = vlaneseq
    %v7676 = vshrl.u32 %v7675, 7
    %v7677 = vsub.s32 %v7674, %v7676
    %v7678 = vrot.slane %v7662, %v7677
    %v7680 = vunpack.c.l.s4 1966171168
    %v7681 = vunpack.c.0.s8 %v7680
    %v7682 = vlaneseq
    %v7683 = vshrl.u32 %v7682, 7
    %v7684 = vsub.s32 %v7681, %v7683
    %v7685 = vrot.slane %v7663, %v7684
    %v7687 = vunpack.c.l.s4 1966171168
    %v7688 = vunpack.c.0.s8 %v7687
    %v7689 = vlaneseq
    %v7690 = vshrl.u32 %v7689, 7
    %v7691 = vsub.s32 %v7688, %v7690
    %v7692 = vrot.slane %v7664, %v7691
    %v7693 = vcombine.high %v7671, %v7671
    %v7694 = vcombine.high %v7678, %v7678
    %v7695 = vcombine.high %v7685, %v7685
    %v7696 = vcombine.high %v7692, %v7692
    %v7697 = vcombine.high %v5600, %v5600
    %v7699 = vunpack.c.l.s4 1966171168
    %v7700 = vunpack.c.0.s8 %v7699
    %v7701 = vlaneseq
    %v7702 = vshrl.u32 %v7701, 7
    %v7703 = vsub.s32 %v7700, %v7702
    %v7704 = vrot.slane %v5600, %v7703
    %v7706 = vunpack.c.l.s4 1966171168
    %v7707 = vunpack.c.0.s8 %v7706
    %v7708 = vlaneseq
    %v7709 = vshrl.u32 %v7708, 7
    %v7710 = vsub.s32 %v7707, %v7709
    %v7711 = vrot.slane %v7697, %v7710
    %v7712 = vcombine.high %v7704, %v7704
    %v7713 = vcombine.high %v7711, %v7711
    %v7715 = vunpack.c.l.s4 1966171168
    %v7716 = vunpack.c.0.s8 %v7715
    %v7717 = vlaneseq
    %v7718 = vshrl.u32 %v7717, 7
    %v7719 = vsub.s32 %v7716, %v7718
    %v7720 = vrot.slane %v7704, %v7719
    %v7722 = vunpack.c.l.s4 1966171168
    %v7723 = vunpack.c.0.s8 %v7722
    %v7724 = vlaneseq
    %v7725 = vshrl.u32 %v7724, 7
    %v7726 = vsub.s32 %v7723, %v7725
    %v7727 = vrot.slane %v7711, %v7726
    %v7729 = vunpack.c.l.s4 1966171168
    %v7730 = vunpack.c.0.s8 %v7729
    %v7731 = vlaneseq
    %v7732 = vshrl.u32 %v7731, 7
    %v7733 = vsub.s32 %v7730, %v7732
    %v7734 = vrot.slane %v7712, %v7733
    %v7736 = vunpack.c.l.s4 1966171168
    %v7737 = vunpack.c.0.s8 %v7736
    %v7738 = vlaneseq
    %v7739 = vshrl.u32 %v7738, 7
    %v7740 = vsub.s32 %v7737, %v7739
    %v7741 = vrot.slane %v7713, %v7740
    %v7742 = vcombine.high %v7720, %v7720
    %v7743 = vcombine.high %v7727, %v7727
    %v7744 = vcombine.high %v7734, %v7734
    %v7745 = vcombine.high %v7741, %v7741
    %v7746 = vcombine.high %v5601, %v5601
    %v7748 = vunpack.c.l.s4 1966171168
    %v7749 = vunpack.c.0.s8 %v7748
    %v7750 = vlaneseq
    %v7751 = vshrl.u32 %v7750, 7
    %v7752 = vsub.s32 %v7749, %v7751
    %v7753 = vrot.slane %v5601, %v7752
    %v7755 = vunpack.c.l.s4 1966171168
    %v7756 = vunpack.c.0.s8 %v7755
    %v7757 = vlaneseq
    %v7758 = vshrl.u32 %v7757, 7
    %v7759 = vsub.s32 %v7756, %v7758
    %v7760 = vrot.slane %v7746, %v7759
    %v7761 = vcombine.high %v7753, %v7753
    %v7762 = vcombine.high %v7760, %v7760
    %v7764 = vunpack.c.l.s4 1966171168
    %v7765 = vunpack.c.0.s8 %v7764
    %v7766 = vlaneseq
    %v7767 = vshrl.u32 %v7766, 7
    %v7768 = vsub.s32 %v7765, %v7767
    %v7769 = vrot.slane %v7753, %v7768
    %v7771 = vunpack.c.l.s4 1966171168
    %v7772 = vunpack.c.0.s8 %v7771
    %v7773 = vlaneseq
    %v7774 = vshrl.u32 %v7773, 7
    %v7775 = vsub.s32 %v7772, %v7774
    %v7776 = vrot.slane %v7760, %v7775
    %v7778 = vunpack.c.l.s4 1966171168
    %v7779 = vunpack.c.0.s8 %v7778
    %v7780 = vlaneseq
    %v7781 = vshrl.u32 %v7780, 7
    %v7782 = vsub.s32 %v7779, %v7781
    %v7783 = vrot.slane %v7761, %v7782
    %v7785 = vunpack.c.l.s4 1966171168
    %v7786 = vunpack.c.0.s8 %v7785
    %v7787 = vlaneseq
    %v7788 = vshrl.u32 %v7787, 7
    %v7789 = vsub.s32 %v7786, %v7788
    %v7790 = vrot.slane %v7762, %v7789
    %v7791 = vcombine.high %v7769, %v7769
    %v7792 = vcombine.high %v7776, %v7776
    %v7793 = vcombine.high %v7783, %v7783
    %v7794 = vcombine.high %v7790, %v7790
    %v7795 = vcombine.high %v5602, %v5602
    %v7797 = vunpack.c.l.s4 1966171168
    %v7798 = vunpack.c.0.s8 %v7797
    %v7799 = vlaneseq
    %v7800 = vshrl.u32 %v7799, 7
    %v7801 = vsub.s32 %v7798, %v7800
    %v7802 = vrot.slane %v5602, %v7801
    %v7804 = vunpack.c.l.s4 1966171168
    %v7805 = vunpack.c.0.s8 %v7804
    %v7806 = vlaneseq
    %v7807 = vshrl.u32 %v7806, 7
    %v7808 = vsub.s32 %v7805, %v7807
    %v7809 = vrot.slane %v7795, %v7808
    %v7810 = vcombine.high %v7802, %v7802
    %v7811 = vcombine.high %v7809, %v7809
    %v7813 = vunpack.c.l.s4 1966171168
    %v7814 = vunpack.c.0.s8 %v7813
    %v7815 = vlaneseq
    %v7816 = vshrl.u32 %v7815, 7
    %v7817 = vsub.s32 %v7814, %v7816
    %v7818 = vrot.slane %v7802, %v7817
    %v7820 = vunpack.c.l.s4 1966171168
    %v7821 = vunpack.c.0.s8 %v7820
    %v7822 = vlaneseq
    %v7823 = vshrl.u32 %v7822, 7
    %v7824 = vsub.s32 %v7821, %v7823
    %v7825 = vrot.slane %v7809, %v7824
    %v7827 = vunpack.c.l.s4 1966171168
    %v7828 = vunpack.c.0.s8 %v7827
    %v7829 = vlaneseq
    %v7830 = vshrl.u32 %v7829, 7
    %v7831 = vsub.s32 %v7828, %v7830
    %v7832 = vrot.slane %v7810, %v7831
    %v7834 = vunpack.c.l.s4 1966171168
    %v7835 = vunpack.c.0.s8 %v7834
    %v7836 = vlaneseq
    %v7837 = vshrl.u32 %v7836, 7
    %v7838 = vsub.s32 %v7835, %v7837
    %v7839 = vrot.slane %v7811, %v7838
    %v7840 = vcombine.high %v7818, %v7818
    %v7841 = vcombine.high %v7825, %v7825
    %v7842 = vcombine.high %v7832, %v7832
    %v7843 = vcombine.high %v7839, %v7839
    %v7844 = vcombine.high %v5603, %v5603
    %v7846 = vunpack.c.l.s4 1966171168
    %v7847 = vunpack.c.0.s8 %v7846
    %v7848 = vlaneseq
    %v7849 = vshrl.u32 %v7848, 7
    %v7850 = vsub.s32 %v7847, %v7849
    %v7851 = vrot.slane %v5603, %v7850
    %v7853 = vunpack.c.l.s4 1966171168
    %v7854 = vunpack.c.0.s8 %v7853
    %v7855 = vlaneseq
    %v7856 = vshrl.u32 %v7855, 7
    %v7857 = vsub.s32 %v7854, %v7856
    %v7858 = vrot.slane %v7844, %v7857
    %v7859 = vcombine.high %v7851, %v7851
    %v7860 = vcombine.high %v7858, %v7858
    %v7862 = vunpack.c.l.s4 1966171168
    %v7863 = vunpack.c.0.s8 %v7862
    %v7864 = vlaneseq
    %v7865 = vshrl.u32 %v7864, 7
    %v7866 = vsub.s32 %v7863, %v7865
    %v7867 = vrot.slane %v7851, %v7866
    %v7869 = vunpack.c.l.s4 1966171168
    %v7870 = vunpack.c.0.s8 %v7869
    %v7871 = vlaneseq
    %v7872 = vshrl.u32 %v7871, 7
    %v7873 = vsub.s32 %v7870, %v7872
    %v7874 = vrot.slane %v7858, %v7873
    %v7876 = vunpack.c.l.s4 1966171168
    %v7877 = vunpack.c.0.s8 %v7876
    %v7878 = vlaneseq
    %v7879 = vshrl.u32 %v7878, 7
    %v7880 = vsub.s32 %v7877, %v7879
    %v7881 = vrot.slane %v7859, %v7880
    %v7883 = vunpack.c.l.s4 1966171168
    %v7884 = vunpack.c.0.s8 %v7883
    %v7885 = vlaneseq
    %v7886 = vshrl.u32 %v7885, 7
    %v7887 = vsub.s32 %v7884, %v7886
    %v7888 = vrot.slane %v7860, %v7887
    %v7889 = vcombine.high %v7867, %v7867
    %v7890 = vcombine.high %v7874, %v7874
    %v7891 = vcombine.high %v7881, %v7881
    %v7892 = vcombine.high %v7888, %v7888
    %v7893 = vcombine.high %v5604, %v5604
    %v7895 = vunpack.c.l.s4 1966171168
    %v7896 = vunpack.c.0.s8 %v7895
    %v7897 = vlaneseq
    %v7898 = vshrl.u32 %v7897, 7
    %v7899 = vsub.s32 %v7896, %v7898
    %v7900 = vrot.slane %v5604, %v7899
    %v7902 = vunpack.c.l.s4 1966171168
    %v7903 = vunpack.c.0.s8 %v7902
    %v7904 = vlaneseq
    %v7905 = vshrl.u32 %v7904, 7
    %v7906 = vsub.s32 %v7903, %v7905
    %v7907 = vrot.slane %v7893, %v7906
    %v7908 = vcombine.high %v7900, %v7900
    %v7909 = vcombine.high %v7907, %v7907
    %v7911 = vunpack.c.l.s4 1966171168
    %v7912 = vunpack.c.0.s8 %v7911
    %v7913 = vlaneseq
    %v7914 = vshrl.u32 %v7913, 7
    %v7915 = vsub.s32 %v7912, %v7914
    %v7916 = vrot.slane %v7900, %v7915
    %v7918 = vunpack.c.l.s4 1966171168
    %v7919 = vunpack.c.0.s8 %v7918
    %v7920 = vlaneseq
    %v7921 = vshrl.u32 %v7920, 7
    %v7922 = vsub.s32 %v7919, %v7921
    %v7923 = vrot.slane %v7907, %v7922
    %v7925 = vunpack.c.l.s4 1966171168
    %v7926 = vunpack.c.0.s8 %v7925
    %v7927 = vlaneseq
    %v7928 = vshrl.u32 %v7927, 7
    %v7929 = vsub.s32 %v7926, %v7928
    %v7930 = vrot.slane %v7908, %v7929
    %v7932 = vunpack.c.l.s4 1966171168
    %v7933 = vunpack.c.0.s8 %v7932
    %v7934 = vlaneseq
    %v7935 = vshrl.u32 %v7934, 7
    %v7936 = vsub.s32 %v7933, %v7935
    %v7937 = vrot.slane %v7909, %v7936
    %v7938 = vcombine.high %v7916, %v7916
    %v7939 = vcombine.high %v7923, %v7923
    %v7940 = vcombine.high %v7930, %v7930
    %v7941 = vcombine.high %v7937, %v7937
    %v7942 = vcombine.high %v5605, %v5605
    %v7944 = vunpack.c.l.s4 1966171168
    %v7945 = vunpack.c.0.s8 %v7944
    %v7946 = vlaneseq
    %v7947 = vshrl.u32 %v7946, 7
    %v7948 = vsub.s32 %v7945, %v7947
    %v7949 = vrot.slane %v5605, %v7948
    %v7951 = vunpack.c.l.s4 1966171168
    %v7952 = vunpack.c.0.s8 %v7951
    %v7953 = vlaneseq
    %v7954 = vshrl.u32 %v7953, 7
    %v7955 = vsub.s32 %v7952, %v7954
    %v7956 = vrot.slane %v7942, %v7955
    %v7957 = vcombine.high %v7949, %v7949
    %v7958 = vcombine.high %v7956, %v7956
    %v7960 = vunpack.c.l.s4 1966171168
    %v7961 = vunpack.c.0.s8 %v7960
    %v7962 = vlaneseq
    %v7963 = vshrl.u32 %v7962, 7
    %v7964 = vsub.s32 %v7961, %v7963
    %v7965 = vrot.slane %v7949, %v7964
    %v7967 = vunpack.c.l.s4 1966171168
    %v7968 = vunpack.c.0.s8 %v7967
    %v7969 = vlaneseq
    %v7970 = vshrl.u32 %v7969, 7
    %v7971 = vsub.s32 %v7968, %v7970
    %v7972 = vrot.slane %v7956, %v7971
    %v7974 = vunpack.c.l.s4 1966171168
    %v7975 = vunpack.c.0.s8 %v7974
    %v7976 = vlaneseq
    %v7977 = vshrl.u32 %v7976, 7
    %v7978 = vsub.s32 %v7975, %v7977
    %v7979 = vrot.slane %v7957, %v7978
    %v7981 = vunpack.c.l.s4 1966171168
    %v7982 = vunpack.c.0.s8 %v7981
    %v7983 = vlaneseq
    %v7984 = vshrl.u32 %v7983, 7
    %v7985 = vsub.s32 %v7982, %v7984
    %v7986 = vrot.slane %v7958, %v7985
    %v7987 = vcombine.high %v7965, %v7965
    %v7988 = vcombine.high %v7972, %v7972
    %v7989 = vcombine.high %v7979, %v7979
    %v7990 = vcombine.high %v7986, %v7986
    %v7991 = vcombine.high %v5606, %v5606
    %v7993 = vunpack.c.l.s4 1966171168
    %v7994 = vunpack.c.0.s8 %v7993
    %v7995 = vlaneseq
    %v7996 = vshrl.u32 %v7995, 7
    %v7997 = vsub.s32 %v7994, %v7996
    %v7998 = vrot.slane %v5606, %v7997
    %v8000 = vunpack.c.l.s4 1966171168
    %v8001 = vunpack.c.0.s8 %v8000
    %v8002 = vlaneseq
    %v8003 = vshrl.u32 %v8002, 7
    %v8004 = vsub.s32 %v8001, %v8003
    %v8005 = vrot.slane %v7991, %v8004
    %v8006 = vcombine.high %v7998, %v7998
    %v8007 = vcombine.high %v8005, %v8005
    %v8009 = vunpack.c.l.s4 1966171168
    %v8010 = vunpack.c.0.s8 %v8009
    %v8011 = vlaneseq
    %v8012 = vshrl.u32 %v8011, 7
    %v8013 = vsub.s32 %v8010, %v8012
    %v8014 = vrot.slane %v7998, %v8013
    %v8016 = vunpack.c.l.s4 1966171168
    %v8017 = vunpack.c.0.s8 %v8016
    %v8018 = vlaneseq
    %v8019 = vshrl.u32 %v8018, 7
    %v8020 = vsub.s32 %v8017, %v8019
    %v8021 = vrot.slane %v8005, %v8020
    %v8023 = vunpack.c.l.s4 1966171168
    %v8024 = vunpack.c.0.s8 %v8023
    %v8025 = vlaneseq
    %v8026 = vshrl.u32 %v8025, 7
    %v8027 = vsub.s32 %v8024, %v8026
    %v8028 = vrot.slane %v8006, %v8027
    %v8030 = vunpack.c.l.s4 1966171168
    %v8031 = vunpack.c.0.s8 %v8030
    %v8032 = vlaneseq
    %v8033 = vshrl.u32 %v8032, 7
    %v8034 = vsub.s32 %v8031, %v8033
    %v8035 = vrot.slane %v8007, %v8034
    %v8036 = vcombine.high %v8014, %v8014
    %v8037 = vcombine.high %v8021, %v8021
    %v8038 = vcombine.high %v8028, %v8028
    %v8039 = vcombine.high %v8035, %v8035
    %v8040 = vcombine.high %v5607, %v5607
    %v8042 = vunpack.c.l.s4 1966171168
    %v8043 = vunpack.c.0.s8 %v8042
    %v8044 = vlaneseq
    %v8045 = vshrl.u32 %v8044, 7
    %v8046 = vsub.s32 %v8043, %v8045
    %v8047 = vrot.slane %v5607, %v8046
    %v8049 = vunpack.c.l.s4 1966171168
    %v8050 = vunpack.c.0.s8 %v8049
    %v8051 = vlaneseq
    %v8052 = vshrl.u32 %v8051, 7
    %v8053 = vsub.s32 %v8050, %v8052
    %v8054 = vrot.slane %v8040, %v8053
    %v8055 = vcombine.high %v8047, %v8047
    %v8056 = vcombine.high %v8054, %v8054
    %v8058 = vunpack.c.l.s4 1966171168
    %v8059 = vunpack.c.0.s8 %v8058
    %v8060 = vlaneseq
    %v8061 = vshrl.u32 %v8060, 7
    %v8062 = vsub.s32 %v8059, %v8061
    %v8063 = vrot.slane %v8047, %v8062
    %v8065 = vunpack.c.l.s4 1966171168
    %v8066 = vunpack.c.0.s8 %v8065
    %v8067 = vlaneseq
    %v8068 = vshrl.u32 %v8067, 7
    %v8069 = vsub.s32 %v8066, %v8068
    %v8070 = vrot.slane %v8054, %v8069
    %v8072 = vunpack.c.l.s4 1966171168
    %v8073 = vunpack.c.0.s8 %v8072
    %v8074 = vlaneseq
    %v8075 = vshrl.u32 %v8074, 7
    %v8076 = vsub.s32 %v8073, %v8075
    %v8077 = vrot.slane %v8055, %v8076
    %v8079 = vunpack.c.l.s4 1966171168
    %v8080 = vunpack.c.0.s8 %v8079
    %v8081 = vlaneseq
    %v8082 = vshrl.u32 %v8081, 7
    %v8083 = vsub.s32 %v8080, %v8082
    %v8084 = vrot.slane %v8056, %v8083
    %v8085 = vcombine.high %v8063, %v8063
    %v8086 = vcombine.high %v8070, %v8070
    %v8087 = vcombine.high %v8077, %v8077
    %v8088 = vcombine.high %v8084, %v8084
    %v8089 = vcombine.high %v5608, %v5608
    %v8091 = vunpack.c.l.s4 1966171168
    %v8092 = vunpack.c.0.s8 %v8091
    %v8093 = vlaneseq
    %v8094 = vshrl.u32 %v8093, 7
    %v8095 = vsub.s32 %v8092, %v8094
    %v8096 = vrot.slane %v5608, %v8095
    %v8098 = vunpack.c.l.s4 1966171168
    %v8099 = vunpack.c.0.s8 %v8098
    %v8100 = vlaneseq
    %v8101 = vshrl.u32 %v8100, 7
    %v8102 = vsub.s32 %v8099, %v8101
    %v8103 = vrot.slane %v8089, %v8102
    %v8104 = vcombine.high %v8096, %v8096
    %v8105 = vcombine.high %v8103, %v8103
    %v8107 = vunpack.c.l.s4 1966171168
    %v8108 = vunpack.c.0.s8 %v8107
    %v8109 = vlaneseq
    %v8110 = vshrl.u32 %v8109, 7
    %v8111 = vsub.s32 %v8108, %v8110
    %v8112 = vrot.slane %v8096, %v8111
    %v8114 = vunpack.c.l.s4 1966171168
    %v8115 = vunpack.c.0.s8 %v8114
    %v8116 = vlaneseq
    %v8117 = vshrl.u32 %v8116, 7
    %v8118 = vsub.s32 %v8115, %v8117
    %v8119 = vrot.slane %v8103, %v8118
    %v8121 = vunpack.c.l.s4 1966171168
    %v8122 = vunpack.c.0.s8 %v8121
    %v8123 = vlaneseq
    %v8124 = vshrl.u32 %v8123, 7
    %v8125 = vsub.s32 %v8122, %v8124
    %v8126 = vrot.slane %v8104, %v8125
    %v8128 = vunpack.c.l.s4 1966171168
    %v8129 = vunpack.c.0.s8 %v8128
    %v8130 = vlaneseq
    %v8131 = vshrl.u32 %v8130, 7
    %v8132 = vsub.s32 %v8129, %v8131
    %v8133 = vrot.slane %v8105, %v8132
    %v8134 = vcombine.high %v8112, %v8112
    %v8135 = vcombine.high %v8119, %v8119
    %v8136 = vcombine.high %v8126, %v8126
    %v8137 = vcombine.high %v8133, %v8133
    %v8138 = vcombine.high %v5609, %v5609
    %v8140 = vunpack.c.l.s4 1966171168
    %v8141 = vunpack.c.0.s8 %v8140
    %v8142 = vlaneseq
    %v8143 = vshrl.u32 %v8142, 7
    %v8144 = vsub.s32 %v8141, %v8143
    %v8145 = vrot.slane %v5609, %v8144
    %v8147 = vunpack.c.l.s4 1966171168
    %v8148 = vunpack.c.0.s8 %v8147
    %v8149 = vlaneseq
    %v8150 = vshrl.u32 %v8149, 7
    %v8151 = vsub.s32 %v8148, %v8150
    %v8152 = vrot.slane %v8138, %v8151
    %v8153 = vcombine.high %v8145, %v8145
    %v8154 = vcombine.high %v8152, %v8152
    %v8156 = vunpack.c.l.s4 1966171168
    %v8157 = vunpack.c.0.s8 %v8156
    %v8158 = vlaneseq
    %v8159 = vshrl.u32 %v8158, 7
    %v8160 = vsub.s32 %v8157, %v8159
    %v8161 = vrot.slane %v8145, %v8160
    %v8163 = vunpack.c.l.s4 1966171168
    %v8164 = vunpack.c.0.s8 %v8163
    %v8165 = vlaneseq
    %v8166 = vshrl.u32 %v8165, 7
    %v8167 = vsub.s32 %v8164, %v8166
    %v8168 = vrot.slane %v8152, %v8167
    %v8170 = vunpack.c.l.s4 1966171168
    %v8171 = vunpack.c.0.s8 %v8170
    %v8172 = vlaneseq
    %v8173 = vshrl.u32 %v8172, 7
    %v8174 = vsub.s32 %v8171, %v8173
    %v8175 = vrot.slane %v8153, %v8174
    %v8177 = vunpack.c.l.s4 1966171168
    %v8178 = vunpack.c.0.s8 %v8177
    %v8179 = vlaneseq
    %v8180 = vshrl.u32 %v8179, 7
    %v8181 = vsub.s32 %v8178, %v8180
    %v8182 = vrot.slane %v8154, %v8181
    %v8183 = vcombine.high %v8161, %v8161
    %v8184 = vcombine.high %v8168, %v8168
    %v8185 = vcombine.high %v8175, %v8175
    %v8186 = vcombine.high %v8182, %v8182
    %v8187 = vcombine.high %v5610, %v5610
    %v8189 = vunpack.c.l.s4 1966171168
    %v8190 = vunpack.c.0.s8 %v8189
    %v8191 = vlaneseq
    %v8192 = vshrl.u32 %v8191, 7
    %v8193 = vsub.s32 %v8190, %v8192
    %v8194 = vrot.slane %v5610, %v8193
    %v8196 = vunpack.c.l.s4 1966171168
    %v8197 = vunpack.c.0.s8 %v8196
    %v8198 = vlaneseq
    %v8199 = vshrl.u32 %v8198, 7
    %v8200 = vsub.s32 %v8197, %v8199
    %v8201 = vrot.slane %v8187, %v8200
    %v8202 = vcombine.high %v8194, %v8194
    %v8203 = vcombine.high %v8201, %v8201
    %v8205 = vunpack.c.l.s4 1966171168
    %v8206 = vunpack.c.0.s8 %v8205
    %v8207 = vlaneseq
    %v8208 = vshrl.u32 %v8207, 7
    %v8209 = vsub.s32 %v8206, %v8208
    %v8210 = vrot.slane %v8194, %v8209
    %v8212 = vunpack.c.l.s4 1966171168
    %v8213 = vunpack.c.0.s8 %v8212
    %v8214 = vlaneseq
    %v8215 = vshrl.u32 %v8214, 7
    %v8216 = vsub.s32 %v8213, %v8215
    %v8217 = vrot.slane %v8201, %v8216
    %v8219 = vunpack.c.l.s4 1966171168
    %v8220 = vunpack.c.0.s8 %v8219
    %v8221 = vlaneseq
    %v8222 = vshrl.u32 %v8221, 7
    %v8223 = vsub.s32 %v8220, %v8222
    %v8224 = vrot.slane %v8202, %v8223
    %v8226 = vunpack.c.l.s4 1966171168
    %v8227 = vunpack.c.0.s8 %v8226
    %v8228 = vlaneseq
    %v8229 = vshrl.u32 %v8228, 7
    %v8230 = vsub.s32 %v8227, %v8229
    %v8231 = vrot.slane %v8203, %v8230
    %v8232 = vcombine.high %v8210, %v8210
    %v8233 = vcombine.high %v8217, %v8217
    %v8234 = vcombine.high %v8224, %v8224
    %v8235 = vcombine.high %v8231, %v8231
    %v8236 = vcombine.high %v5611, %v5611
    %v8238 = vunpack.c.l.s4 1966171168
    %v8239 = vunpack.c.0.s8 %v8238
    %v8240 = vlaneseq
    %v8241 = vshrl.u32 %v8240, 7
    %v8242 = vsub.s32 %v8239, %v8241
    %v8243 = vrot.slane %v5611, %v8242
    %v8245 = vunpack.c.l.s4 1966171168
    %v8246 = vunpack.c.0.s8 %v8245
    %v8247 = vlaneseq
    %v8248 = vshrl.u32 %v8247, 7
    %v8249 = vsub.s32 %v8246, %v8248
    %v8250 = vrot.slane %v8236, %v8249
    %v8251 = vcombine.high %v8243, %v8243
    %v8252 = vcombine.high %v8250, %v8250
    %v8254 = vunpack.c.l.s4 1966171168
    %v8255 = vunpack.c.0.s8 %v8254
    %v8256 = vlaneseq
    %v8257 = vshrl.u32 %v8256, 7
    %v8258 = vsub.s32 %v8255, %v8257
    %v8259 = vrot.slane %v8243, %v8258
    %v8261 = vunpack.c.l.s4 1966171168
    %v8262 = vunpack.c.0.s8 %v8261
    %v8263 = vlaneseq
    %v8264 = vshrl.u32 %v8263, 7
    %v8265 = vsub.s32 %v8262, %v8264
    %v8266 = vrot.slane %v8250, %v8265
    %v8268 = vunpack.c.l.s4 1966171168
    %v8269 = vunpack.c.0.s8 %v8268
    %v8270 = vlaneseq
    %v8271 = vshrl.u32 %v8270, 7
    %v8272 = vsub.s32 %v8269, %v8271
    %v8273 = vrot.slane %v8251, %v8272
    %v8275 = vunpack.c.l.s4 1966171168
    %v8276 = vunpack.c.0.s8 %v8275
    %v8277 = vlaneseq
    %v8278 = vshrl.u32 %v8277, 7
    %v8279 = vsub.s32 %v8276, %v8278
    %v8280 = vrot.slane %v8252, %v8279
    %v8281 = vcombine.high %v8259, %v8259
    %v8282 = vcombine.high %v8266, %v8266
    %v8283 = vcombine.high %v8273, %v8273
    %v8284 = vcombine.high %v8280, %v8280
    %v8285 = vcombine.high %v5612, %v5612
    %v8287 = vunpack.c.l.s4 1966171168
    %v8288 = vunpack.c.0.s8 %v8287
    %v8289 = vlaneseq
    %v8290 = vshrl.u32 %v8289, 7
    %v8291 = vsub.s32 %v8288, %v8290
    %v8292 = vrot.slane %v5612, %v8291
    %v8294 = vunpack.c.l.s4 1966171168
    %v8295 = vunpack.c.0.s8 %v8294
    %v8296 = vlaneseq
    %v8297 = vshrl.u32 %v8296, 7
    %v8298 = vsub.s32 %v8295, %v8297
    %v8299 = vrot.slane %v8285, %v8298
    %v8300 = vcombine.high %v8292, %v8292
    %v8301 = vcombine.high %v8299, %v8299
    %v8303 = vunpack.c.l.s4 1966171168
    %v8304 = vunpack.c.0.s8 %v8303
    %v8305 = vlaneseq
    %v8306 = vshrl.u32 %v8305, 7
    %v8307 = vsub.s32 %v8304, %v8306
    %v8308 = vrot.slane %v8292, %v8307
    %v8310 = vunpack.c.l.s4 1966171168
    %v8311 = vunpack.c.0.s8 %v8310
    %v8312 = vlaneseq
    %v8313 = vshrl.u32 %v8312, 7
    %v8314 = vsub.s32 %v8311, %v8313
    %v8315 = vrot.slane %v8299, %v8314
    %v8317 = vunpack.c.l.s4 1966171168
    %v8318 = vunpack.c.0.s8 %v8317
    %v8319 = vlaneseq
    %v8320 = vshrl.u32 %v8319, 7
    %v8321 = vsub.s32 %v8318, %v8320
    %v8322 = vrot.slane %v8300, %v8321
    %v8324 = vunpack.c.l.s4 1966171168
    %v8325 = vunpack.c.0.s8 %v8324
    %v8326 = vlaneseq
    %v8327 = vshrl.u32 %v8326, 7
    %v8328 = vsub.s32 %v8325, %v8327
    %v8329 = vrot.slane %v8301, %v8328
    %v8330 = vcombine.high %v8308, %v8308
    %v8331 = vcombine.high %v8315, %v8315
    %v8332 = vcombine.high %v8322, %v8322
    %v8333 = vcombine.high %v8329, %v8329
    %v8334 = vcombine.high %v5613, %v5613
    %v8336 = vunpack.c.l.s4 1966171168
    %v8337 = vunpack.c.0.s8 %v8336
    %v8338 = vlaneseq
    %v8339 = vshrl.u32 %v8338, 7
    %v8340 = vsub.s32 %v8337, %v8339
    %v8341 = vrot.slane %v5613, %v8340
    %v8343 = vunpack.c.l.s4 1966171168
    %v8344 = vunpack.c.0.s8 %v8343
    %v8345 = vlaneseq
    %v8346 = vshrl.u32 %v8345, 7
    %v8347 = vsub.s32 %v8344, %v8346
    %v8348 = vrot.slane %v8334, %v8347
    %v8349 = vcombine.high %v8341, %v8341
    %v8350 = vcombine.high %v8348, %v8348
    %v8352 = vunpack.c.l.s4 1966171168
    %v8353 = vunpack.c.0.s8 %v8352
    %v8354 = vlaneseq
    %v8355 = vshrl.u32 %v8354, 7
    %v8356 = vsub.s32 %v8353, %v8355
    %v8357 = vrot.slane %v8341, %v8356
    %v8359 = vunpack.c.l.s4 1966171168
    %v8360 = vunpack.c.0.s8 %v8359
    %v8361 = vlaneseq
    %v8362 = vshrl.u32 %v8361, 7
    %v8363 = vsub.s32 %v8360, %v8362
    %v8364 = vrot.slane %v8348, %v8363
    %v8366 = vunpack.c.l.s4 1966171168
    %v8367 = vunpack.c.0.s8 %v8366
    %v8368 = vlaneseq
    %v8369 = vshrl.u32 %v8368, 7
    %v8370 = vsub.s32 %v8367, %v8369
    %v8371 = vrot.slane %v8349, %v8370
    %v8373 = vunpack.c.l.s4 1966171168
    %v8374 = vunpack.c.0.s8 %v8373
    %v8375 = vlaneseq
    %v8376 = vshrl.u32 %v8375, 7
    %v8377 = vsub.s32 %v8374, %v8376
    %v8378 = vrot.slane %v8350, %v8377
    %v8379 = vcombine.high %v8357, %v8357
    %v8380 = vcombine.high %v8364, %v8364
    %v8381 = vcombine.high %v8371, %v8371
    %v8382 = vcombine.high %v8378, %v8378
    %v8383 = vcombine.high %v5614, %v5614
    %v8385 = vunpack.c.l.s4 1966171168
    %v8386 = vunpack.c.0.s8 %v8385
    %v8387 = vlaneseq
    %v8388 = vshrl.u32 %v8387, 7
    %v8389 = vsub.s32 %v8386, %v8388
    %v8390 = vrot.slane %v5614, %v8389
    %v8392 = vunpack.c.l.s4 1966171168
    %v8393 = vunpack.c.0.s8 %v8392
    %v8394 = vlaneseq
    %v8395 = vshrl.u32 %v8394, 7
    %v8396 = vsub.s32 %v8393, %v8395
    %v8397 = vrot.slane %v8383, %v8396
    %v8398 = vcombine.high %v8390, %v8390
    %v8399 = vcombine.high %v8397, %v8397
    %v8401 = vunpack.c.l.s4 1966171168
    %v8402 = vunpack.c.0.s8 %v8401
    %v8403 = vlaneseq
    %v8404 = vshrl.u32 %v8403, 7
    %v8405 = vsub.s32 %v8402, %v8404
    %v8406 = vrot.slane %v8390, %v8405
    %v8408 = vunpack.c.l.s4 1966171168
    %v8409 = vunpack.c.0.s8 %v8408
    %v8410 = vlaneseq
    %v8411 = vshrl.u32 %v8410, 7
    %v8412 = vsub.s32 %v8409, %v8411
    %v8413 = vrot.slane %v8397, %v8412
    %v8415 = vunpack.c.l.s4 1966171168
    %v8416 = vunpack.c.0.s8 %v8415
    %v8417 = vlaneseq
    %v8418 = vshrl.u32 %v8417, 7
    %v8419 = vsub.s32 %v8416, %v8418
    %v8420 = vrot.slane %v8398, %v8419
    %v8422 = vunpack.c.l.s4 1966171168
    %v8423 = vunpack.c.0.s8 %v8422
    %v8424 = vlaneseq
    %v8425 = vshrl.u32 %v8424, 7
    %v8426 = vsub.s32 %v8423, %v8425
    %v8427 = vrot.slane %v8399, %v8426
    %v8428 = vcombine.high %v8406, %v8406
    %v8429 = vcombine.high %v8413, %v8413
    %v8430 = vcombine.high %v8420, %v8420
    %v8431 = vcombine.high %v8427, %v8427
    %v8432 = vcombine.high %v5615, %v5615
    %v8434 = vunpack.c.l.s4 1966171168
    %v8435 = vunpack.c.0.s8 %v8434
    %v8436 = vlaneseq
    %v8437 = vshrl.u32 %v8436, 7
    %v8438 = vsub.s32 %v8435, %v8437
    %v8439 = vrot.slane %v5615, %v8438
    %v8441 = vunpack.c.l.s4 1966171168
    %v8442 = vunpack.c.0.s8 %v8441
    %v8443 = vlaneseq
    %v8444 = vshrl.u32 %v8443, 7
    %v8445 = vsub.s32 %v8442, %v8444
    %v8446 = vrot.slane %v8432, %v8445
    %v8447 = vcombine.high %v8439, %v8439
    %v8448 = vcombine.high %v8446, %v8446
    %v8450 = vunpack.c.l.s4 1966171168
    %v8451 = vunpack.c.0.s8 %v8450
    %v8452 = vlaneseq
    %v8453 = vshrl.u32 %v8452, 7
    %v8454 = vsub.s32 %v8451, %v8453
    %v8455 = vrot.slane %v8439, %v8454
    %v8457 = vunpack.c.l.s4 1966171168
    %v8458 = vunpack.c.0.s8 %v8457
    %v8459 = vlaneseq
    %v8460 = vshrl.u32 %v8459, 7
    %v8461 = vsub.s32 %v8458, %v8460
    %v8462 = vrot.slane %v8446, %v8461
    %v8464 = vunpack.c.l.s4 1966171168
    %v8465 = vunpack.c.0.s8 %v8464
    %v8466 = vlaneseq
    %v8467 = vshrl.u32 %v8466, 7
    %v8468 = vsub.s32 %v8465, %v8467
    %v8469 = vrot.slane %v8447, %v8468
    %v8471 = vunpack.c.l.s4 1966171168
    %v8472 = vunpack.c.0.s8 %v8471
    %v8473 = vlaneseq
    %v8474 = vshrl.u32 %v8473, 7
    %v8475 = vsub.s32 %v8472, %v8474
    %v8476 = vrot.slane %v8448, %v8475
    %v8477 = vcombine.high %v8455, %v8455
    %v8478 = vcombine.high %v8462, %v8462
    %v8479 = vcombine.high %v8469, %v8469
    %v8480 = vcombine.high %v8476, %v8476
    %v8481 = vcombine.high %v5616, %v5616
    %v8483 = vunpack.c.l.s4 1966171168
    %v8484 = vunpack.c.0.s8 %v8483
    %v8485 = vlaneseq
    %v8486 = vshrl.u32 %v8485, 7
    %v8487 = vsub.s32 %v8484, %v8486
    %v8488 = vrot.slane %v5616, %v8487
    %v8490 = vunpack.c.l.s4 1966171168
    %v8491 = vunpack.c.0.s8 %v8490
    %v8492 = vlaneseq
    %v8493 = vshrl.u32 %v8492, 7
    %v8494 = vsub.s32 %v8491, %v8493
    %v8495 = vrot.slane %v8481, %v8494
    %v8496 = vcombine.high %v8488, %v8488
    %v8497 = vcombine.high %v8495, %v8495
    %v8499 = vunpack.c.l.s4 1966171168
    %v8500 = vunpack.c.0.s8 %v8499
    %v8501 = vlaneseq
    %v8502 = vshrl.u32 %v8501, 7
    %v8503 = vsub.s32 %v8500, %v8502
    %v8504 = vrot.slane %v8488, %v8503
    %v8506 = vunpack.c.l.s4 1966171168
    %v8507 = vunpack.c.0.s8 %v8506
    %v8508 = vlaneseq
    %v8509 = vshrl.u32 %v8508, 7
    %v8510 = vsub.s32 %v8507, %v8509
    %v8511 = vrot.slane %v8495, %v8510
    %v8513 = vunpack.c.l.s4 1966171168
    %v8514 = vunpack.c.0.s8 %v8513
    %v8515 = vlaneseq
    %v8516 = vshrl.u32 %v8515, 7
    %v8517 = vsub.s32 %v8514, %v8516
    %v8518 = vrot.slane %v8496, %v8517
    %v8520 = vunpack.c.l.s4 1966171168
    %v8521 = vunpack.c.0.s8 %v8520
    %v8522 = vlaneseq
    %v8523 = vshrl.u32 %v8522, 7
    %v8524 = vsub.s32 %v8521, %v8523
    %v8525 = vrot.slane %v8497, %v8524
    %v8526 = vcombine.high %v8504, %v8504
    %v8527 = vcombine.high %v8511, %v8511
    %v8528 = vcombine.high %v8518, %v8518
    %v8529 = vcombine.high %v8525, %v8525
    %v8530 = vcombine.high %v5617, %v5617
    %v8532 = vunpack.c.l.s4 1966171168
    %v8533 = vunpack.c.0.s8 %v8532
    %v8534 = vlaneseq
    %v8535 = vshrl.u32 %v8534, 7
    %v8536 = vsub.s32 %v8533, %v8535
    %v8537 = vrot.slane %v5617, %v8536
    %v8539 = vunpack.c.l.s4 1966171168
    %v8540 = vunpack.c.0.s8 %v8539
    %v8541 = vlaneseq
    %v8542 = vshrl.u32 %v8541, 7
    %v8543 = vsub.s32 %v8540, %v8542
    %v8544 = vrot.slane %v8530, %v8543
    %v8545 = vcombine.high %v8537, %v8537
    %v8546 = vcombine.high %v8544, %v8544
    %v8548 = vunpack.c.l.s4 1966171168
    %v8549 = vunpack.c.0.s8 %v8548
    %v8550 = vlaneseq
    %v8551 = vshrl.u32 %v8550, 7
    %v8552 = vsub.s32 %v8549, %v8551
    %v8553 = vrot.slane %v8537, %v8552
    %v8555 = vunpack.c.l.s4 1966171168
    %v8556 = vunpack.c.0.s8 %v8555
    %v8557 = vlaneseq
    %v8558 = vshrl.u32 %v8557, 7
    %v8559 = vsub.s32 %v8556, %v8558
    %v8560 = vrot.slane %v8544, %v8559
    %v8562 = vunpack.c.l.s4 1966171168
    %v8563 = vunpack.c.0.s8 %v8562
    %v8564 = vlaneseq
    %v8565 = vshrl.u32 %v8564, 7
    %v8566 = vsub.s32 %v8563, %v8565
    %v8567 = vrot.slane %v8545, %v8566
    %v8569 = vunpack.c.l.s4 1966171168
    %v8570 = vunpack.c.0.s8 %v8569
    %v8571 = vlaneseq
    %v8572 = vshrl.u32 %v8571, 7
    %v8573 = vsub.s32 %v8570, %v8572
    %v8574 = vrot.slane %v8546, %v8573
    %v8575 = vcombine.high %v8553, %v8553
    %v8576 = vcombine.high %v8560, %v8560
    %v8577 = vcombine.high %v8567, %v8567
    %v8578 = vcombine.high %v8574, %v8574
    %v8579 = vcombine.high %v5618, %v5618
    %v8581 = vunpack.c.l.s4 1966171168
    %v8582 = vunpack.c.0.s8 %v8581
    %v8583 = vlaneseq
    %v8584 = vshrl.u32 %v8583, 7
    %v8585 = vsub.s32 %v8582, %v8584
    %v8586 = vrot.slane %v5618, %v8585
    %v8588 = vunpack.c.l.s4 1966171168
    %v8589 = vunpack.c.0.s8 %v8588
    %v8590 = vlaneseq
    %v8591 = vshrl.u32 %v8590, 7
    %v8592 = vsub.s32 %v8589, %v8591
    %v8593 = vrot.slane %v8579, %v8592
    %v8594 = vcombine.high %v8586, %v8586
    %v8595 = vcombine.high %v8593, %v8593
    %v8597 = vunpack.c.l.s4 1966171168
    %v8598 = vunpack.c.0.s8 %v8597
    %v8599 = vlaneseq
    %v8600 = vshrl.u32 %v8599, 7
    %v8601 = vsub.s32 %v8598, %v8600
    %v8602 = vrot.slane %v8586, %v8601
    %v8604 = vunpack.c.l.s4 1966171168
    %v8605 = vunpack.c.0.s8 %v8604
    %v8606 = vlaneseq
    %v8607 = vshrl.u32 %v8606, 7
    %v8608 = vsub.s32 %v8605, %v8607
    %v8609 = vrot.slane %v8593, %v8608
    %v8611 = vunpack.c.l.s4 1966171168
    %v8612 = vunpack.c.0.s8 %v8611
    %v8613 = vlaneseq
    %v8614 = vshrl.u32 %v8613, 7
    %v8615 = vsub.s32 %v8612, %v8614
    %v8616 = vrot.slane %v8594, %v8615
    %v8618 = vunpack.c.l.s4 1966171168
    %v8619 = vunpack.c.0.s8 %v8618
    %v8620 = vlaneseq
    %v8621 = vshrl.u32 %v8620, 7
    %v8622 = vsub.s32 %v8619, %v8621
    %v8623 = vrot.slane %v8595, %v8622
    %v8624 = vcombine.high %v8602, %v8602
    %v8625 = vcombine.high %v8609, %v8609
    %v8626 = vcombine.high %v8616, %v8616
    %v8627 = vcombine.high %v8623, %v8623
    %v8628 = vcombine.high %v5619, %v5619
    %v8630 = vunpack.c.l.s4 1966171168
    %v8631 = vunpack.c.0.s8 %v8630
    %v8632 = vlaneseq
    %v8633 = vshrl.u32 %v8632, 7
    %v8634 = vsub.s32 %v8631, %v8633
    %v8635 = vrot.slane %v5619, %v8634
    %v8637 = vunpack.c.l.s4 1966171168
    %v8638 = vunpack.c.0.s8 %v8637
    %v8639 = vlaneseq
    %v8640 = vshrl.u32 %v8639, 7
    %v8641 = vsub.s32 %v8638, %v8640
    %v8642 = vrot.slane %v8628, %v8641
    %v8643 = vcombine.high %v8635, %v8635
    %v8644 = vcombine.high %v8642, %v8642
    %v8646 = vunpack.c.l.s4 1966171168
    %v8647 = vunpack.c.0.s8 %v8646
    %v8648 = vlaneseq
    %v8649 = vshrl.u32 %v8648, 7
    %v8650 = vsub.s32 %v8647, %v8649
    %v8651 = vrot.slane %v8635, %v8650
    %v8653 = vunpack.c.l.s4 1966171168
    %v8654 = vunpack.c.0.s8 %v8653
    %v8655 = vlaneseq
    %v8656 = vshrl.u32 %v8655, 7
    %v8657 = vsub.s32 %v8654, %v8656
    %v8658 = vrot.slane %v8642, %v8657
    %v8660 = vunpack.c.l.s4 1966171168
    %v8661 = vunpack.c.0.s8 %v8660
    %v8662 = vlaneseq
    %v8663 = vshrl.u32 %v8662, 7
    %v8664 = vsub.s32 %v8661, %v8663
    %v8665 = vrot.slane %v8643, %v8664
    %v8667 = vunpack.c.l.s4 1966171168
    %v8668 = vunpack.c.0.s8 %v8667
    %v8669 = vlaneseq
    %v8670 = vshrl.u32 %v8669, 7
    %v8671 = vsub.s32 %v8668, %v8670
    %v8672 = vrot.slane %v8644, %v8671
    %v8673 = vcombine.high %v8651, %v8651
    %v8674 = vcombine.high %v8658, %v8658
    %v8675 = vcombine.high %v8665, %v8665
    %v8676 = vcombine.high %v8672, %v8672
    %v8677 = vcombine.high %v5620, %v5620
    %v8679 = vunpack.c.l.s4 1966171168
    %v8680 = vunpack.c.0.s8 %v8679
    %v8681 = vlaneseq
    %v8682 = vshrl.u32 %v8681, 7
    %v8683 = vsub.s32 %v8680, %v8682
    %v8684 = vrot.slane %v5620, %v8683
    %v8686 = vunpack.c.l.s4 1966171168
    %v8687 = vunpack.c.0.s8 %v8686
    %v8688 = vlaneseq
    %v8689 = vshrl.u32 %v8688, 7
    %v8690 = vsub.s32 %v8687, %v8689
    %v8691 = vrot.slane %v8677, %v8690
    %v8692 = vcombine.high %v8684, %v8684
    %v8693 = vcombine.high %v8691, %v8691
    %v8695 = vunpack.c.l.s4 1966171168
    %v8696 = vunpack.c.0.s8 %v8695
    %v8697 = vlaneseq
    %v8698 = vshrl.u32 %v8697, 7
    %v8699 = vsub.s32 %v8696, %v8698
    %v8700 = vrot.slane %v8684, %v8699
    %v8702 = vunpack.c.l.s4 1966171168
    %v8703 = vunpack.c.0.s8 %v8702
    %v8704 = vlaneseq
    %v8705 = vshrl.u32 %v8704, 7
    %v8706 = vsub.s32 %v8703, %v8705
    %v8707 = vrot.slane %v8691, %v8706
    %v8709 = vunpack.c.l.s4 1966171168
    %v8710 = vunpack.c.0.s8 %v8709
    %v8711 = vlaneseq
    %v8712 = vshrl.u32 %v8711, 7
    %v8713 = vsub.s32 %v8710, %v8712
    %v8714 = vrot.slane %v8692, %v8713
    %v8716 = vunpack.c.l.s4 1966171168
    %v8717 = vunpack.c.0.s8 %v8716
    %v8718 = vlaneseq
    %v8719 = vshrl.u32 %v8718, 7
    %v8720 = vsub.s32 %v8717, %v8719
    %v8721 = vrot.slane %v8693, %v8720
    %v8722 = vcombine.high %v8700, %v8700
    %v8723 = vcombine.high %v8707, %v8707
    %v8724 = vcombine.high %v8714, %v8714
    %v8725 = vcombine.high %v8721, %v8721
    %v8726 = vcombine.high %v5621, %v5621
    %v8728 = vunpack.c.l.s4 1966171168
    %v8729 = vunpack.c.0.s8 %v8728
    %v8730 = vlaneseq
    %v8731 = vshrl.u32 %v8730, 7
    %v8732 = vsub.s32 %v8729, %v8731
    %v8733 = vrot.slane %v5621, %v8732
    %v8735 = vunpack.c.l.s4 1966171168
    %v8736 = vunpack.c.0.s8 %v8735
    %v8737 = vlaneseq
    %v8738 = vshrl.u32 %v8737, 7
    %v8739 = vsub.s32 %v8736, %v8738
    %v8740 = vrot.slane %v8726, %v8739
    %v8741 = vcombine.high %v8733, %v8733
    %v8742 = vcombine.high %v8740, %v8740
    %v8744 = vunpack.c.l.s4 1966171168
    %v8745 = vunpack.c.0.s8 %v8744
    %v8746 = vlaneseq
    %v8747 = vshrl.u32 %v8746, 7
    %v8748 = vsub.s32 %v8745, %v8747
    %v8749 = vrot.slane %v8733, %v8748
    %v8751 = vunpack.c.l.s4 1966171168
    %v8752 = vunpack.c.0.s8 %v8751
    %v8753 = vlaneseq
    %v8754 = vshrl.u32 %v8753, 7
    %v8755 = vsub.s32 %v8752, %v8754
    %v8756 = vrot.slane %v8740, %v8755
    %v8758 = vunpack.c.l.s4 1966171168
    %v8759 = vunpack.c.0.s8 %v8758
    %v8760 = vlaneseq
    %v8761 = vshrl.u32 %v8760, 7
    %v8762 = vsub.s32 %v8759, %v8761
    %v8763 = vrot.slane %v8741, %v8762
    %v8765 = vunpack.c.l.s4 1966171168
    %v8766 = vunpack.c.0.s8 %v8765
    %v8767 = vlaneseq
    %v8768 = vshrl.u32 %v8767, 7
    %v8769 = vsub.s32 %v8766, %v8768
    %v8770 = vrot.slane %v8742, %v8769
    %v8771 = vcombine.high %v8749, %v8749
    %v8772 = vcombine.high %v8756, %v8756
    %v8773 = vcombine.high %v8763, %v8763
    %v8774 = vcombine.high %v8770, %v8770
    %v8775 = vcombine.high %v5622, %v5622
    %v8777 = vunpack.c.l.s4 1966171168
    %v8778 = vunpack.c.0.s8 %v8777
    %v8779 = vlaneseq
    %v8780 = vshrl.u32 %v8779, 7
    %v8781 = vsub.s32 %v8778, %v8780
    %v8782 = vrot.slane %v5622, %v8781
    %v8784 = vunpack.c.l.s4 1966171168
    %v8785 = vunpack.c.0.s8 %v8784
    %v8786 = vlaneseq
    %v8787 = vshrl.u32 %v8786, 7
    %v8788 = vsub.s32 %v8785, %v8787
    %v8789 = vrot.slane %v8775, %v8788
    %v8790 = vcombine.high %v8782, %v8782
    %v8791 = vcombine.high %v8789, %v8789
    %v8793 = vunpack.c.l.s4 1966171168
    %v8794 = vunpack.c.0.s8 %v8793
    %v8795 = vlaneseq
    %v8796 = vshrl.u32 %v8795, 7
    %v8797 = vsub.s32 %v8794, %v8796
    %v8798 = vrot.slane %v8782, %v8797
    %v8800 = vunpack.c.l.s4 1966171168
    %v8801 = vunpack.c.0.s8 %v8800
    %v8802 = vlaneseq
    %v8803 = vshrl.u32 %v8802, 7
    %v8804 = vsub.s32 %v8801, %v8803
    %v8805 = vrot.slane %v8789, %v8804
    %v8807 = vunpack.c.l.s4 1966171168
    %v8808 = vunpack.c.0.s8 %v8807
    %v8809 = vlaneseq
    %v8810 = vshrl.u32 %v8809, 7
    %v8811 = vsub.s32 %v8808, %v8810
    %v8812 = vrot.slane %v8790, %v8811
    %v8814 = vunpack.c.l.s4 1966171168
    %v8815 = vunpack.c.0.s8 %v8814
    %v8816 = vlaneseq
    %v8817 = vshrl.u32 %v8816, 7
    %v8818 = vsub.s32 %v8815, %v8817
    %v8819 = vrot.slane %v8791, %v8818
    %v8820 = vcombine.high %v8798, %v8798
    %v8821 = vcombine.high %v8805, %v8805
    %v8822 = vcombine.high %v8812, %v8812
    %v8823 = vcombine.high %v8819, %v8819
    %v8824 = vcombine.high %v5623, %v5623
    %v8826 = vunpack.c.l.s4 1966171168
    %v8827 = vunpack.c.0.s8 %v8826
    %v8828 = vlaneseq
    %v8829 = vshrl.u32 %v8828, 7
    %v8830 = vsub.s32 %v8827, %v8829
    %v8831 = vrot.slane %v5623, %v8830
    %v8833 = vunpack.c.l.s4 1966171168
    %v8834 = vunpack.c.0.s8 %v8833
    %v8835 = vlaneseq
    %v8836 = vshrl.u32 %v8835, 7
    %v8837 = vsub.s32 %v8834, %v8836
    %v8838 = vrot.slane %v8824, %v8837
    %v8839 = vcombine.high %v8831, %v8831
    %v8840 = vcombine.high %v8838, %v8838
    %v8842 = vunpack.c.l.s4 1966171168
    %v8843 = vunpack.c.0.s8 %v8842
    %v8844 = vlaneseq
    %v8845 = vshrl.u32 %v8844, 7
    %v8846 = vsub.s32 %v8843, %v8845
    %v8847 = vrot.slane %v8831, %v8846
    %v8849 = vunpack.c.l.s4 1966171168
    %v8850 = vunpack.c.0.s8 %v8849
    %v8851 = vlaneseq
    %v8852 = vshrl.u32 %v8851, 7
    %v8853 = vsub.s32 %v8850, %v8852
    %v8854 = vrot.slane %v8838, %v8853
    %v8856 = vunpack.c.l.s4 1966171168
    %v8857 = vunpack.c.0.s8 %v8856
    %v8858 = vlaneseq
    %v8859 = vshrl.u32 %v8858, 7
    %v8860 = vsub.s32 %v8857, %v8859
    %v8861 = vrot.slane %v8839, %v8860
    %v8863 = vunpack.c.l.s4 1966171168
    %v8864 = vunpack.c.0.s8 %v8863
    %v8865 = vlaneseq
    %v8866 = vshrl.u32 %v8865, 7
    %v8867 = vsub.s32 %v8864, %v8866
    %v8868 = vrot.slane %v8840, %v8867
    %v8869 = vcombine.high %v8847, %v8847
    %v8870 = vcombine.high %v8854, %v8854
    %v8871 = vcombine.high %v8861, %v8861
    %v8872 = vcombine.high %v8868, %v8868
    %v8873 = vcombine.high %v5624, %v5624
    %v8875 = vunpack.c.l.s4 1966171168
    %v8876 = vunpack.c.0.s8 %v8875
    %v8877 = vlaneseq
    %v8878 = vshrl.u32 %v8877, 7
    %v8879 = vsub.s32 %v8876, %v8878
    %v8880 = vrot.slane %v5624, %v8879
    %v8882 = vunpack.c.l.s4 1966171168
    %v8883 = vunpack.c.0.s8 %v8882
    %v8884 = vlaneseq
    %v8885 = vshrl.u32 %v8884, 7
    %v8886 = vsub.s32 %v8883, %v8885
    %v8887 = vrot.slane %v8873, %v8886
    %v8888 = vcombine.high %v8880, %v8880
    %v8889 = vcombine.high %v8887, %v8887
    %v8891 = vunpack.c.l.s4 1966171168
    %v8892 = vunpack.c.0.s8 %v8891
    %v8893 = vlaneseq
    %v8894 = vshrl.u32 %v8893, 7
    %v8895 = vsub.s32 %v8892, %v8894
    %v8896 = vrot.slane %v8880, %v8895
    %v8898 = vunpack.c.l.s4 1966171168
    %v8899 = vunpack.c.0.s8 %v8898
    %v8900 = vlaneseq
    %v8901 = vshrl.u32 %v8900, 7
    %v8902 = vsub.s32 %v8899, %v8901
    %v8903 = vrot.slane %v8887, %v8902
    %v8905 = vunpack.c.l.s4 1966171168
    %v8906 = vunpack.c.0.s8 %v8905
    %v8907 = vlaneseq
    %v8908 = vshrl.u32 %v8907, 7
    %v8909 = vsub.s32 %v8906, %v8908
    %v8910 = vrot.slane %v8888, %v8909
    %v8912 = vunpack.c.l.s4 1966171168
    %v8913 = vunpack.c.0.s8 %v8912
    %v8914 = vlaneseq
    %v8915 = vshrl.u32 %v8914, 7
    %v8916 = vsub.s32 %v8913, %v8915
    %v8917 = vrot.slane %v8889, %v8916
    %v8918 = vcombine.high %v8896, %v8896
    %v8919 = vcombine.high %v8903, %v8903
    %v8920 = vcombine.high %v8910, %v8910
    %v8921 = vcombine.high %v8917, %v8917
    %v8922 = vcombine.high %v5625, %v5625
    %v8924 = vunpack.c.l.s4 1966171168
    %v8925 = vunpack.c.0.s8 %v8924
    %v8926 = vlaneseq
    %v8927 = vshrl.u32 %v8926, 7
    %v8928 = vsub.s32 %v8925, %v8927
    %v8929 = vrot.slane %v5625, %v8928
    %v8931 = vunpack.c.l.s4 1966171168
    %v8932 = vunpack.c.0.s8 %v8931
    %v8933 = vlaneseq
    %v8934 = vshrl.u32 %v8933, 7
    %v8935 = vsub.s32 %v8932, %v8934
    %v8936 = vrot.slane %v8922, %v8935
    %v8937 = vcombine.high %v8929, %v8929
    %v8938 = vcombine.high %v8936, %v8936
    %v8940 = vunpack.c.l.s4 1966171168
    %v8941 = vunpack.c.0.s8 %v8940
    %v8942 = vlaneseq
    %v8943 = vshrl.u32 %v8942, 7
    %v8944 = vsub.s32 %v8941, %v8943
    %v8945 = vrot.slane %v8929, %v8944
    %v8947 = vunpack.c.l.s4 1966171168
    %v8948 = vunpack.c.0.s8 %v8947
    %v8949 = vlaneseq
    %v8950 = vshrl.u32 %v8949, 7
    %v8951 = vsub.s32 %v8948, %v8950
    %v8952 = vrot.slane %v8936, %v8951
    %v8954 = vunpack.c.l.s4 1966171168
    %v8955 = vunpack.c.0.s8 %v8954
    %v8956 = vlaneseq
    %v8957 = vshrl.u32 %v8956, 7
    %v8958 = vsub.s32 %v8955, %v8957
    %v8959 = vrot.slane %v8937, %v8958
    %v8961 = vunpack.c.l.s4 1966171168
    %v8962 = vunpack.c.0.s8 %v8961
    %v8963 = vlaneseq
    %v8964 = vshrl.u32 %v8963, 7
    %v8965 = vsub.s32 %v8962, %v8964
    %v8966 = vrot.slane %v8938, %v8965
    %v8967 = vcombine.high %v8945, %v8945
    %v8968 = vcombine.high %v8952, %v8952
    %v8969 = vcombine.high %v8959, %v8959
    %v8970 = vcombine.high %v8966, %v8966
    %v8971 = vcombine.high %v5626, %v5626
    %v8973 = vunpack.c.l.s4 1966171168
    %v8974 = vunpack.c.0.s8 %v8973
    %v8975 = vlaneseq
    %v8976 = vshrl.u32 %v8975, 7
    %v8977 = vsub.s32 %v8974, %v8976
    %v8978 = vrot.slane %v5626, %v8977
    %v8980 = vunpack.c.l.s4 1966171168
    %v8981 = vunpack.c.0.s8 %v8980
    %v8982 = vlaneseq
    %v8983 = vshrl.u32 %v8982, 7
    %v8984 = vsub.s32 %v8981, %v8983
    %v8985 = vrot.slane %v8971, %v8984
    %v8986 = vcombine.high %v8978, %v8978
    %v8987 = vcombine.high %v8985, %v8985
    %v8989 = vunpack.c.l.s4 1966171168
    %v8990 = vunpack.c.0.s8 %v8989
    %v8991 = vlaneseq
    %v8992 = vshrl.u32 %v8991, 7
    %v8993 = vsub.s32 %v8990, %v8992
    %v8994 = vrot.slane %v8978, %v8993
    %v8996 = vunpack.c.l.s4 1966171168
    %v8997 = vunpack.c.0.s8 %v8996
    %v8998 = vlaneseq
    %v8999 = vshrl.u32 %v8998, 7
    %v9000 = vsub.s32 %v8997, %v8999
    %v9001 = vrot.slane %v8985, %v9000
    %v9003 = vunpack.c.l.s4 1966171168
    %v9004 = vunpack.c.0.s8 %v9003
    %v9005 = vlaneseq
    %v9006 = vshrl.u32 %v9005, 7
    %v9007 = vsub.s32 %v9004, %v9006
    %v9008 = vrot.slane %v8986, %v9007
    %v9010 = vunpack.c.l.s4 1966171168
    %v9011 = vunpack.c.0.s8 %v9010
    %v9012 = vlaneseq
    %v9013 = vshrl.u32 %v9012, 7
    %v9014 = vsub.s32 %v9011, %v9013
    %v9015 = vrot.slane %v8987, %v9014
    %v9016 = vcombine.high %v8994, %v8994
    %v9017 = vcombine.high %v9001, %v9001
    %v9018 = vcombine.high %v9008, %v9008
    %v9019 = vcombine.high %v9015, %v9015
    %v9020 = vcombine.high %v5627, %v5627
    %v9022 = vunpack.c.l.s4 1966171168
    %v9023 = vunpack.c.0.s8 %v9022
    %v9024 = vlaneseq
    %v9025 = vshrl.u32 %v9024, 7
    %v9026 = vsub.s32 %v9023, %v9025
    %v9027 = vrot.slane %v5627, %v9026
    %v9029 = vunpack.c.l.s4 1966171168
    %v9030 = vunpack.c.0.s8 %v9029
    %v9031 = vlaneseq
    %v9032 = vshrl.u32 %v9031, 7
    %v9033 = vsub.s32 %v9030, %v9032
    %v9034 = vrot.slane %v9020, %v9033
    %v9035 = vcombine.high %v9027, %v9027
    %v9036 = vcombine.high %v9034, %v9034
    %v9038 = vunpack.c.l.s4 1966171168
    %v9039 = vunpack.c.0.s8 %v9038
    %v9040 = vlaneseq
    %v9041 = vshrl.u32 %v9040, 7
    %v9042 = vsub.s32 %v9039, %v9041
    %v9043 = vrot.slane %v9027, %v9042
    %v9045 = vunpack.c.l.s4 1966171168
    %v9046 = vunpack.c.0.s8 %v9045
    %v9047 = vlaneseq
    %v9048 = vshrl.u32 %v9047, 7
    %v9049 = vsub.s32 %v9046, %v9048
    %v9050 = vrot.slane %v9034, %v9049
    %v9052 = vunpack.c.l.s4 1966171168
    %v9053 = vunpack.c.0.s8 %v9052
    %v9054 = vlaneseq
    %v9055 = vshrl.u32 %v9054, 7
    %v9056 = vsub.s32 %v9053, %v9055
    %v9057 = vrot.slane %v9035, %v9056
    %v9059 = vunpack.c.l.s4 1966171168
    %v9060 = vunpack.c.0.s8 %v9059
    %v9061 = vlaneseq
    %v9062 = vshrl.u32 %v9061, 7
    %v9063 = vsub.s32 %v9060, %v9062
    %v9064 = vrot.slane %v9036, %v9063
    %v9065 = vcombine.high %v9043, %v9043
    %v9066 = vcombine.high %v9050, %v9050
    %v9067 = vcombine.high %v9057, %v9057
    %v9068 = vcombine.high %v9064, %v9064
    %v9069 = vcombine.high %v5628, %v5628
    %v9071 = vunpack.c.l.s4 1966171168
    %v9072 = vunpack.c.0.s8 %v9071
    %v9073 = vlaneseq
    %v9074 = vshrl.u32 %v9073, 7
    %v9075 = vsub.s32 %v9072, %v9074
    %v9076 = vrot.slane %v5628, %v9075
    %v9078 = vunpack.c.l.s4 1966171168
    %v9079 = vunpack.c.0.s8 %v9078
    %v9080 = vlaneseq
    %v9081 = vshrl.u32 %v9080, 7
    %v9082 = vsub.s32 %v9079, %v9081
    %v9083 = vrot.slane %v9069, %v9082
    %v9084 = vcombine.high %v9076, %v9076
    %v9085 = vcombine.high %v9083, %v9083
    %v9087 = vunpack.c.l.s4 1966171168
    %v9088 = vunpack.c.0.s8 %v9087
    %v9089 = vlaneseq
    %v9090 = vshrl.u32 %v9089, 7
    %v9091 = vsub.s32 %v9088, %v9090
    %v9092 = vrot.slane %v9076, %v9091
    %v9094 = vunpack.c.l.s4 1966171168
    %v9095 = vunpack.c.0.s8 %v9094
    %v9096 = vlaneseq
    %v9097 = vshrl.u32 %v9096, 7
    %v9098 = vsub.s32 %v9095, %v9097
    %v9099 = vrot.slane %v9083, %v9098
    %v9101 = vunpack.c.l.s4 1966171168
    %v9102 = vunpack.c.0.s8 %v9101
    %v9103 = vlaneseq
    %v9104 = vshrl.u32 %v9103, 7
    %v9105 = vsub.s32 %v9102, %v9104
    %v9106 = vrot.slane %v9084, %v9105
    %v9108 = vunpack.c.l.s4 1966171168
    %v9109 = vunpack.c.0.s8 %v9108
    %v9110 = vlaneseq
    %v9111 = vshrl.u32 %v9110, 7
    %v9112 = vsub.s32 %v9109, %v9111
    %v9113 = vrot.slane %v9085, %v9112
    %v9114 = vcombine.high %v9092, %v9092
    %v9115 = vcombine.high %v9099, %v9099
    %v9116 = vcombine.high %v9106, %v9106
    %v9117 = vcombine.high %v9113, %v9113
    %v9118 = vlaneseq
    %v9119 = vshrl.u32 %v9118, 7
    %v9120 = vsub.s32 0, %v9119
    %v9121 = vrot.slane %v7573, %v9120
    %v9122 = vlaneseq
    %v9123 = vshrl.u32 %v9122, 7
    %v9124 = vsub.s32 0, %v9123
    %v9125 = vrot.slane %v7587, %v9124
    %v9126 = vlaneseq
    %v9127 = vshrl.u32 %v9126, 7
    %v9128 = vsub.s32 0, %v9127
    %v9129 = vrot.slane %v7595, %v9128
    %v9130 = vlaneseq
    %v9131 = vshrl.u32 %v9130, 7
    %v9132 = vsub.s32 0, %v9131
    %v9133 = vrot.slane %v7597, %v9132
    %v9134 = vlaneseq
    %v9135 = vshrl.u32 %v9134, 7
    %v9136 = vsub.s32 0, %v9135
    %v9137 = vrot.slane %v7580, %v9136
    %v9138 = vlaneseq
    %v9139 = vshrl.u32 %v9138, 7
    %v9140 = vsub.s32 0, %v9139
    %v9141 = vrot.slane %v7594, %v9140
    %v9142 = vlaneseq
    %v9143 = vshrl.u32 %v9142, 7
    %v9144 = vsub.s32 0, %v9143
    %v9145 = vrot.slane %v7596, %v9144
    %v9146 = vlaneseq
    %v9147 = vshrl.u32 %v9146, 7
    %v9148 = vsub.s32 0, %v9147
    %v9149 = vrot.slane %v7598, %v9148
    %v9150 = vlaneseq
    %v9151 = vshrl.u32 %v9150, 7
    %v9152 = vsub.s32 0, %v9151
    %v9153 = vrot.slane %v7622, %v9152
    %v9154 = vlaneseq
    %v9155 = vshrl.u32 %v9154, 7
    %v9156 = vsub.s32 0, %v9155
    %v9157 = vrot.slane %v7636, %v9156
    %v9158 = vlaneseq
    %v9159 = vshrl.u32 %v9158, 7
    %v9160 = vsub.s32 0, %v9159
    %v9161 = vrot.slane %v7644, %v9160
    %v9162 = vlaneseq
    %v9163 = vshrl.u32 %v9162, 7
    %v9164 = vsub.s32 0, %v9163
    %v9165 = vrot.slane %v7646, %v9164
    %v9166 = vlaneseq
    %v9167 = vshrl.u32 %v9166, 7
    %v9168 = vsub.s32 0, %v9167
    %v9169 = vrot.slane %v7629, %v9168
    %v9170 = vlaneseq
    %v9171 = vshrl.u32 %v9170, 7
    %v9172 = vsub.s32 0, %v9171
    %v9173 = vrot.slane %v7643, %v9172
    %v9174 = vlaneseq
    %v9175 = vshrl.u32 %v9174, 7
    %v9176 = vsub.s32 0, %v9175
    %v9177 = vrot.slane %v7645, %v9176
    %v9178 = vlaneseq
    %v9179 = vshrl.u32 %v9178, 7
    %v9180 = vsub.s32 0, %v9179
    %v9181 = vrot.slane %v7647, %v9180
    %v9182 = vlaneseq
    %v9183 = vshrl.u32 %v9182, 7
    %v9184 = vsub.s32 0, %v9183
    %v9185 = vrot.slane %v7671, %v9184
    %v9186 = vlaneseq
    %v9187 = vshrl.u32 %v9186, 7
    %v9188 = vsub.s32 0, %v9187
    %v9189 = vrot.slane %v7685, %v9188
    %v9190 = vlaneseq
    %v9191 = vshrl.u32 %v9190, 7
    %v9192 = vsub.s32 0, %v9191
    %v9193 = vrot.slane %v7693, %v9192
    %v9194 = vlaneseq
    %v9195 = vshrl.u32 %v9194, 7
    %v9196 = vsub.s32 0, %v9195
    %v9197 = vrot.slane %v7695, %v9196
    %v9198 = vlaneseq
    %v9199 = vshrl.u32 %v9198, 7
    %v9200 = vsub.s32 0, %v9199
    %v9201 = vrot.slane %v7678, %v9200
    %v9202 = vlaneseq
    %v9203 = vshrl.u32 %v9202, 7
    %v9204 = vsub.s32 0, %v9203
    %v9205 = vrot.slane %v7692, %v9204
    %v9206 = vlaneseq
    %v9207 = vshrl.u32 %v9206, 7
    %v9208 = vsub.s32 0, %v9207
    %v9209 = vrot.slane %v7694, %v9208
    %v9210 = vlaneseq
    %v9211 = vshrl.u32 %v9210, 7
    %v9212 = vsub.s32 0, %v9211
    %v9213 = vrot.slane %v7696, %v9212
    %v9214 = vlaneseq
    %v9215 = vshrl.u32 %v9214, 7
    %v9216 = vsub.s32 0, %v9215
    %v9217 = vrot.slane %v7720, %v9216
    %v9218 = vlaneseq
    %v9219 = vshrl.u32 %v9218, 7
    %v9220 = vsub.s32 0, %v9219
    %v9221 = vrot.slane %v7734, %v9220
    %v9222 = vlaneseq
    %v9223 = vshrl.u32 %v9222, 7
    %v9224 = vsub.s32 0, %v9223
    %v9225 = vrot.slane %v7742, %v9224
    %v9226 = vlaneseq
    %v9227 = vshrl.u32 %v9226, 7
    %v9228 = vsub.s32 0, %v9227
    %v9229 = vrot.slane %v7744, %v9228
    %v9230 = vlaneseq
    %v9231 = vshrl.u32 %v9230, 7
    %v9232 = vsub.s32 0, %v9231
    %v9233 = vrot.slane %v7727, %v9232
    %v9234 = vlaneseq
    %v9235 = vshrl.u32 %v9234, 7
    %v9236 = vsub.s32 0, %v9235
    %v9237 = vrot.slane %v7741, %v9236
    %v9238 = vlaneseq
    %v9239 = vshrl.u32 %v9238, 7
    %v9240 = vsub.s32 0, %v9239
    %v9241 = vrot.slane %v7743, %v9240
    %v9242 = vlaneseq
    %v9243 = vshrl.u32 %v9242, 7
    %v9244 = vsub.s32 0, %v9243
    %v9245 = vrot.slane %v7745, %v9244
    %v9246 = vlaneseq
    %v9247 = vshrl.u32 %v9246, 7
    %v9248 = vsub.s32 0, %v9247
    %v9249 = vrot.slane %v7769, %v9248
    %v9250 = vlaneseq
    %v9251 = vshrl.u32 %v9250, 7
    %v9252 = vsub.s32 0, %v9251
    %v9253 = vrot.slane %v7783, %v9252
    %v9254 = vlaneseq
    %v9255 = vshrl.u32 %v9254, 7
    %v9256 = vsub.s32 0, %v9255
    %v9257 = vrot.slane %v7791, %v9256
    %v9258 = vlaneseq
    %v9259 = vshrl.u32 %v9258, 7
    %v9260 = vsub.s32 0, %v9259
    %v9261 = vrot.slane %v7793, %v9260
    %v9262 = vlaneseq
    %v9263 = vshrl.u32 %v9262, 7
    %v9264 = vsub.s32 0, %v9263
    %v9265 = vrot.slane %v7776, %v9264
    %v9266 = vlaneseq
    %v9267 = vshrl.u32 %v9266, 7
    %v9268 = vsub.s32 0, %v9267
    %v9269 = vrot.slane %v7790, %v9268
    %v9270 = vlaneseq
    %v9271 = vshrl.u32 %v9270, 7
    %v9272 = vsub.s32 0, %v9271
    %v9273 = vrot.slane %v7792, %v9272
    %v9274 = vlaneseq
    %v9275 = vshrl.u32 %v9274, 7
    %v9276 = vsub.s32 0, %v9275
    %v9277 = vrot.slane %v7794, %v9276
    %v9278 = vlaneseq
    %v9279 = vshrl.u32 %v9278, 7
    %v9280 = vsub.s32 0, %v9279
    %v9281 = vrot.slane %v7818, %v9280
    %v9282 = vlaneseq
    %v9283 = vshrl.u32 %v9282, 7
    %v9284 = vsub.s32 0, %v9283
    %v9285 = vrot.slane %v7832, %v9284
    %v9286 = vlaneseq
    %v9287 = vshrl.u32 %v9286, 7
    %v9288 = vsub.s32 0, %v9287
    %v9289 = vrot.slane %v7840, %v9288
    %v9290 = vlaneseq
    %v9291 = vshrl.u32 %v9290, 7
    %v9292 = vsub.s32 0, %v9291
    %v9293 = vrot.slane %v7842, %v9292
    %v9294 = vlaneseq
    %v9295 = vshrl.u32 %v9294, 7
    %v9296 = vsub.s32 0, %v9295
    %v9297 = vrot.slane %v7825, %v9296
    %v9298 = vlaneseq
    %v9299 = vshrl.u32 %v9298, 7
    %v9300 = vsub.s32 0, %v9299
    %v9301 = vrot.slane %v7839, %v9300
    %v9302 = vlaneseq
    %v9303 = vshrl.u32 %v9302, 7
    %v9304 = vsub.s32 0, %v9303
    %v9305 = vrot.slane %v7841, %v9304
    %v9306 = vlaneseq
    %v9307 = vshrl.u32 %v9306, 7
    %v9308 = vsub.s32 0, %v9307
    %v9309 = vrot.slane %v7843, %v9308
    %v9310 = vlaneseq
    %v9311 = vshrl.u32 %v9310, 7
    %v9312 = vsub.s32 0, %v9311
    %v9313 = vrot.slane %v7867, %v9312
    %v9314 = vlaneseq
    %v9315 = vshrl.u32 %v9314, 7
    %v9316 = vsub.s32 0, %v9315
    %v9317 = vrot.slane %v7881, %v9316
    %v9318 = vlaneseq
    %v9319 = vshrl.u32 %v9318, 7
    %v9320 = vsub.s32 0, %v9319
    %v9321 = vrot.slane %v7889, %v9320
    %v9322 = vlaneseq
    %v9323 = vshrl.u32 %v9322, 7
    %v9324 = vsub.s32 0, %v9323
    %v9325 = vrot.slane %v7891, %v9324
    %v9326 = vlaneseq
    %v9327 = vshrl.u32 %v9326, 7
    %v9328 = vsub.s32 0, %v9327
    %v9329 = vrot.slane %v7874, %v9328
    %v9330 = vlaneseq
    %v9331 = vshrl.u32 %v9330, 7
    %v9332 = vsub.s32 0, %v9331
    %v9333 = vrot.slane %v7888, %v9332
    %v9334 = vlaneseq
    %v9335 = vshrl.u32 %v9334, 7
    %v9336 = vsub.s32 0, %v9335
    %v9337 = vrot.slane %v7890, %v9336
    %v9338 = vlaneseq
    %v9339 = vshrl.u32 %v9338, 7
    %v9340 = vsub.s32 0, %v9339
    %v9341 = vrot.slane %v7892, %v9340
    %v9342 = vlaneseq
    %v9343 = vshrl.u32 %v9342, 7
    %v9344 = vsub.s32 0, %v9343
    %v9345 = vrot.slane %v7916, %v9344
    %v9346 = vlaneseq
    %v9347 = vshrl.u32 %v9346, 7
    %v9348 = vsub.s32 0, %v9347
    %v9349 = vrot.slane %v7930, %v9348
    %v9350 = vlaneseq
    %v9351 = vshrl.u32 %v9350, 7
    %v9352 = vsub.s32 0, %v9351
    %v9353 = vrot.slane %v7938, %v9352
    %v9354 = vlaneseq
    %v9355 = vshrl.u32 %v9354, 7
    %v9356 = vsub.s32 0, %v9355
    %v9357 = vrot.slane %v7940, %v9356
    %v9358 = vlaneseq
    %v9359 = vshrl.u32 %v9358, 7
    %v9360 = vsub.s32 0, %v9359
    %v9361 = vrot.slane %v7923, %v9360
    %v9362 = vlaneseq
    %v9363 = vshrl.u32 %v9362, 7
    %v9364 = vsub.s32 0, %v9363
    %v9365 = vrot.slane %v7937, %v9364
    %v9366 = vlaneseq
    %v9367 = vshrl.u32 %v9366, 7
    %v9368 = vsub.s32 0, %v9367
    %v9369 = vrot.slane %v7939, %v9368
    %v9370 = vlaneseq
    %v9371 = vshrl.u32 %v9370, 7
    %v9372 = vsub.s32 0, %v9371
    %v9373 = vrot.slane %v7941, %v9372
    %v9374 = vlaneseq
    %v9375 = vshrl.u32 %v9374, 7
    %v9376 = vsub.s32 0, %v9375
    %v9377 = vrot.slane %v7965, %v9376
    %v9378 = vlaneseq
    %v9379 = vshrl.u32 %v9378, 7
    %v9380 = vsub.s32 0, %v9379
    %v9381 = vrot.slane %v7979, %v9380
    %v9382 = vlaneseq
    %v9383 = vshrl.u32 %v9382, 7
    %v9384 = vsub.s32 0, %v9383
    %v9385 = vrot.slane %v7987, %v9384
    %v9386 = vlaneseq
    %v9387 = vshrl.u32 %v9386, 7
    %v9388 = vsub.s32 0, %v9387
    %v9389 = vrot.slane %v7989, %v9388
    %v9390 = vlaneseq
    %v9391 = vshrl.u32 %v9390, 7
    %v9392 = vsub.s32 0, %v9391
    %v9393 = vrot.slane %v7972, %v9392
    %v9394 = vlaneseq
    %v9395 = vshrl.u32 %v9394, 7
    %v9396 = vsub.s32 0, %v9395
    %v9397 = vrot.slane %v7986, %v9396
    %v9398 = vlaneseq
    %v9399 = vshrl.u32 %v9398, 7
    %v9400 = vsub.s32 0, %v9399
    %v9401 = vrot.slane %v7988, %v9400
    %v9402 = vlaneseq
    %v9403 = vshrl.u32 %v9402, 7
    %v9404 = vsub.s32 0, %v9403
    %v9405 = vrot.slane %v7990, %v9404
    %v9406 = vlaneseq
    %v9407 = vshrl.u32 %v9406, 7
    %v9408 = vsub.s32 0, %v9407
    %v9409 = vrot.slane %v8014, %v9408
    %v9410 = vlaneseq
    %v9411 = vshrl.u32 %v9410, 7
    %v9412 = vsub.s32 0, %v9411
    %v9413 = vrot.slane %v8028, %v9412
    %v9414 = vlaneseq
    %v9415 = vshrl.u32 %v9414, 7
    %v9416 = vsub.s32 0, %v9415
    %v9417 = vrot.slane %v8036, %v9416
    %v9418 = vlaneseq
    %v9419 = vshrl.u32 %v9418, 7
    %v9420 = vsub.s32 0, %v9419
    %v9421 = vrot.slane %v8038, %v9420
    %v9422 = vlaneseq
    %v9423 = vshrl.u32 %v9422, 7
    %v9424 = vsub.s32 0, %v9423
    %v9425 = vrot.slane %v8021, %v9424
    %v9426 = vlaneseq
    %v9427 = vshrl.u32 %v9426, 7
    %v9428 = vsub.s32 0, %v9427
    %v9429 = vrot.slane %v8035, %v9428
    %v9430 = vlaneseq
    %v9431 = vshrl.u32 %v9430, 7
    %v9432 = vsub.s32 0, %v9431
    %v9433 = vrot.slane %v8037, %v9432
    %v9434 = vlaneseq
    %v9435 = vshrl.u32 %v9434, 7
    %v9436 = vsub.s32 0, %v9435
    %v9437 = vrot.slane %v8039, %v9436
    %v9438 = vlaneseq
    %v9439 = vshrl.u32 %v9438, 7
    %v9440 = vsub.s32 0, %v9439
    %v9441 = vrot.slane %v8063, %v9440
    %v9442 = vlaneseq
    %v9443 = vshrl.u32 %v9442, 7
    %v9444 = vsub.s32 0, %v9443
    %v9445 = vrot.slane %v8077, %v9444
    %v9446 = vlaneseq
    %v9447 = vshrl.u32 %v9446, 7
    %v9448 = vsub.s32 0, %v9447
    %v9449 = vrot.slane %v8085, %v9448
    %v9450 = vlaneseq
    %v9451 = vshrl.u32 %v9450, 7
    %v9452 = vsub.s32 0, %v9451
    %v9453 = vrot.slane %v8087, %v9452
    %v9454 = vlaneseq
    %v9455 = vshrl.u32 %v9454, 7
    %v9456 = vsub.s32 0, %v9455
    %v9457 = vrot.slane %v8070, %v9456
    %v9458 = vlaneseq
    %v9459 = vshrl.u32 %v9458, 7
    %v9460 = vsub.s32 0, %v9459
    %v9461 = vrot.slane %v8084, %v9460
    %v9462 = vlaneseq
    %v9463 = vshrl.u32 %v9462, 7
    %v9464 = vsub.s32 0, %v9463
    %v9465 = vrot.slane %v8086, %v9464
    %v9466 = vlaneseq
    %v9467 = vshrl.u32 %v9466, 7
    %v9468 = vsub.s32 0, %v9467
    %v9469 = vrot.slane %v8088, %v9468
    %v9470 = vlaneseq
    %v9471 = vshrl.u32 %v9470, 7
    %v9472 = vsub.s32 0, %v9471
    %v9473 = vrot.slane %v8112, %v9472
    %v9474 = vlaneseq
    %v9475 = vshrl.u32 %v9474, 7
    %v9476 = vsub.s32 0, %v9475
    %v9477 = vrot.slane %v8126, %v9476
    %v9478 = vlaneseq
    %v9479 = vshrl.u32 %v9478, 7
    %v9480 = vsub.s32 0, %v9479
    %v9481 = vrot.slane %v8134, %v9480
    %v9482 = vlaneseq
    %v9483 = vshrl.u32 %v9482, 7
    %v9484 = vsub.s32 0, %v9483
    %v9485 = vrot.slane %v8136, %v9484
    %v9486 = vlaneseq
    %v9487 = vshrl.u32 %v9486, 7
    %v9488 = vsub.s32 0, %v9487
    %v9489 = vrot.slane %v8119, %v9488
    %v9490 = vlaneseq
    %v9491 = vshrl.u32 %v9490, 7
    %v9492 = vsub.s32 0, %v9491
    %v9493 = vrot.slane %v8133, %v9492
    %v9494 = vlaneseq
    %v9495 = vshrl.u32 %v9494, 7
    %v9496 = vsub.s32 0, %v9495
    %v9497 = vrot.slane %v8135, %v9496
    %v9498 = vlaneseq
    %v9499 = vshrl.u32 %v9498, 7
    %v9500 = vsub.s32 0, %v9499
    %v9501 = vrot.slane %v8137, %v9500
    %v9502 = vlaneseq
    %v9503 = vshrl.u32 %v9502, 7
    %v9504 = vsub.s32 0, %v9503
    %v9505 = vrot.slane %v8161, %v9504
    %v9506 = vlaneseq
    %v9507 = vshrl.u32 %v9506, 7
    %v9508 = vsub.s32 0, %v9507
    %v9509 = vrot.slane %v8175, %v9508
    %v9510 = vlaneseq
    %v9511 = vshrl.u32 %v9510, 7
    %v9512 = vsub.s32 0, %v9511
    %v9513 = vrot.slane %v8183, %v9512
    %v9514 = vlaneseq
    %v9515 = vshrl.u32 %v9514, 7
    %v9516 = vsub.s32 0, %v9515
    %v9517 = vrot.slane %v8185, %v9516
    %v9518 = vlaneseq
    %v9519 = vshrl.u32 %v9518, 7
    %v9520 = vsub.s32 0, %v9519
    %v9521 = vrot.slane %v8168, %v9520
    %v9522 = vlaneseq
    %v9523 = vshrl.u32 %v9522, 7
    %v9524 = vsub.s32 0, %v9523
    %v9525 = vrot.slane %v8182, %v9524
    %v9526 = vlaneseq
    %v9527 = vshrl.u32 %v9526, 7
    %v9528 = vsub.s32 0, %v9527
    %v9529 = vrot.slane %v8184, %v9528
    %v9530 = vlaneseq
    %v9531 = vshrl.u32 %v9530, 7
    %v9532 = vsub.s32 0, %v9531
    %v9533 = vrot.slane %v8186, %v9532
    %v9534 = vlaneseq
    %v9535 = vshrl.u32 %v9534, 7
    %v9536 = vsub.s32 0, %v9535
    %v9537 = vrot.slane %v8210, %v9536
    %v9538 = vlaneseq
    %v9539 = vshrl.u32 %v9538, 7
    %v9540 = vsub.s32 0, %v9539
    %v9541 = vrot.slane %v8224, %v9540
    %v9542 = vlaneseq
    %v9543 = vshrl.u32 %v9542, 7
    %v9544 = vsub.s32 0, %v9543
    %v9545 = vrot.slane %v8232, %v9544
    %v9546 = vlaneseq
    %v9547 = vshrl.u32 %v9546, 7
    %v9548 = vsub.s32 0, %v9547
    %v9549 = vrot.slane %v8234, %v9548
    %v9550 = vlaneseq
    %v9551 = vshrl.u32 %v9550, 7
    %v9552 = vsub.s32 0, %v9551
    %v9553 = vrot.slane %v8217, %v9552
    %v9554 = vlaneseq
    %v9555 = vshrl.u32 %v9554, 7
    %v9556 = vsub.s32 0, %v9555
    %v9557 = vrot.slane %v8231, %v9556
    %v9558 = vlaneseq
    %v9559 = vshrl.u32 %v9558, 7
    %v9560 = vsub.s32 0, %v9559
    %v9561 = vrot.slane %v8233, %v9560
    %v9562 = vlaneseq
    %v9563 = vshrl.u32 %v9562, 7
    %v9564 = vsub.s32 0, %v9563
    %v9565 = vrot.slane %v8235, %v9564
    %v9566 = vlaneseq
    %v9567 = vshrl.u32 %v9566, 7
    %v9568 = vsub.s32 0, %v9567
    %v9569 = vrot.slane %v8259, %v9568
    %v9570 = vlaneseq
    %v9571 = vshrl.u32 %v9570, 7
    %v9572 = vsub.s32 0, %v9571
    %v9573 = vrot.slane %v8273, %v9572
    %v9574 = vlaneseq
    %v9575 = vshrl.u32 %v9574, 7
    %v9576 = vsub.s32 0, %v9575
    %v9577 = vrot.slane %v8281, %v9576
    %v9578 = vlaneseq
    %v9579 = vshrl.u32 %v9578, 7
    %v9580 = vsub.s32 0, %v9579
    %v9581 = vrot.slane %v8283, %v9580
    %v9582 = vlaneseq
    %v9583 = vshrl.u32 %v9582, 7
    %v9584 = vsub.s32 0, %v9583
    %v9585 = vrot.slane %v8266, %v9584
    %v9586 = vlaneseq
    %v9587 = vshrl.u32 %v9586, 7
    %v9588 = vsub.s32 0, %v9587
    %v9589 = vrot.slane %v8280, %v9588
    %v9590 = vlaneseq
    %v9591 = vshrl.u32 %v9590, 7
    %v9592 = vsub.s32 0, %v9591
    %v9593 = vrot.slane %v8282, %v9592
    %v9594 = vlaneseq
    %v9595 = vshrl.u32 %v9594, 7
    %v9596 = vsub.s32 0, %v9595
    %v9597 = vrot.slane %v8284, %v9596
    %v9598 = vlaneseq
    %v9599 = vshrl.u32 %v9598, 7
    %v9600 = vsub.s32 0, %v9599
    %v9601 = vrot.slane %v8308, %v9600
    %v9602 = vlaneseq
    %v9603 = vshrl.u32 %v9602, 7
    %v9604 = vsub.s32 0, %v9603
    %v9605 = vrot.slane %v8322, %v9604
    %v9606 = vlaneseq
    %v9607 = vshrl.u32 %v9606, 7
    %v9608 = vsub.s32 0, %v9607
    %v9609 = vrot.slane %v8330, %v9608
    %v9610 = vlaneseq
    %v9611 = vshrl.u32 %v9610, 7
    %v9612 = vsub.s32 0, %v9611
    %v9613 = vrot.slane %v8332, %v9612
    %v9614 = vlaneseq
    %v9615 = vshrl.u32 %v9614, 7
    %v9616 = vsub.s32 0, %v9615
    %v9617 = vrot.slane %v8315, %v9616
    %v9618 = vlaneseq
    %v9619 = vshrl.u32 %v9618, 7
    %v9620 = vsub.s32 0, %v9619
    %v9621 = vrot.slane %v8329, %v9620
    %v9622 = vlaneseq
    %v9623 = vshrl.u32 %v9622, 7
    %v9624 = vsub.s32 0, %v9623
    %v9625 = vrot.slane %v8331, %v9624
    %v9626 = vlaneseq
    %v9627 = vshrl.u32 %v9626, 7
    %v9628 = vsub.s32 0, %v9627
    %v9629 = vrot.slane %v8333, %v9628
    %v9630 = vlaneseq
    %v9631 = vshrl.u32 %v9630, 7
    %v9632 = vsub.s32 0, %v9631
    %v9633 = vrot.slane %v8357, %v9632
    %v9634 = vlaneseq
    %v9635 = vshrl.u32 %v9634, 7
    %v9636 = vsub.s32 0, %v9635
    %v9637 = vrot.slane %v8371, %v9636
    %v9638 = vlaneseq
    %v9639 = vshrl.u32 %v9638, 7
    %v9640 = vsub.s32 0, %v9639
    %v9641 = vrot.slane %v8379, %v9640
    %v9642 = vlaneseq
    %v9643 = vshrl.u32 %v9642, 7
    %v9644 = vsub.s32 0, %v9643
    %v9645 = vrot.slane %v8381, %v9644
    %v9646 = vlaneseq
    %v9647 = vshrl.u32 %v9646, 7
    %v9648 = vsub.s32 0, %v9647
    %v9649 = vrot.slane %v8364, %v9648
    %v9650 = vlaneseq
    %v9651 = vshrl.u32 %v9650, 7
    %v9652 = vsub.s32 0, %v9651
    %v9653 = vrot.slane %v8378, %v9652
    %v9654 = vlaneseq
    %v9655 = vshrl.u32 %v9654, 7
    %v9656 = vsub.s32 0, %v9655
    %v9657 = vrot.slane %v8380, %v9656
    %v9658 = vlaneseq
    %v9659 = vshrl.u32 %v9658, 7
    %v9660 = vsub.s32 0, %v9659
    %v9661 = vrot.slane %v8382, %v9660
    %v9662 = vlaneseq
    %v9663 = vshrl.u32 %v9662, 7
    %v9664 = vsub.s32 0, %v9663
    %v9665 = vrot.slane %v8406, %v9664
    %v9666 = vlaneseq
    %v9667 = vshrl.u32 %v9666, 7
    %v9668 = vsub.s32 0, %v9667
    %v9669 = vrot.slane %v8420, %v9668
    %v9670 = vlaneseq
    %v9671 = vshrl.u32 %v9670, 7
    %v9672 = vsub.s32 0, %v9671
    %v9673 = vrot.slane %v8428, %v9672
    %v9674 = vlaneseq
    %v9675 = vshrl.u32 %v9674, 7
    %v9676 = vsub.s32 0, %v9675
    %v9677 = vrot.slane %v8430, %v9676
    %v9678 = vlaneseq
    %v9679 = vshrl.u32 %v9678, 7
    %v9680 = vsub.s32 0, %v9679
    %v9681 = vrot.slane %v8413, %v9680
    %v9682 = vlaneseq
    %v9683 = vshrl.u32 %v9682, 7
    %v9684 = vsub.s32 0, %v9683
    %v9685 = vrot.slane %v8427, %v9684
    %v9686 = vlaneseq
    %v9687 = vshrl.u32 %v9686, 7
    %v9688 = vsub.s32 0, %v9687
    %v9689 = vrot.slane %v8429, %v9688
    %v9690 = vlaneseq
    %v9691 = vshrl.u32 %v9690, 7
    %v9692 = vsub.s32 0, %v9691
    %v9693 = vrot.slane %v8431, %v9692
    %v9694 = vlaneseq
    %v9695 = vshrl.u32 %v9694, 7
    %v9696 = vsub.s32 0, %v9695
    %v9697 = vrot.slane %v8455, %v9696
    %v9698 = vlaneseq
    %v9699 = vshrl.u32 %v9698, 7
    %v9700 = vsub.s32 0, %v9699
    %v9701 = vrot.slane %v8469, %v9700
    %v9702 = vlaneseq
    %v9703 = vshrl.u32 %v9702, 7
    %v9704 = vsub.s32 0, %v9703
    %v9705 = vrot.slane %v8477, %v9704
    %v9706 = vlaneseq
    %v9707 = vshrl.u32 %v9706, 7
    %v9708 = vsub.s32 0, %v9707
    %v9709 = vrot.slane %v8479, %v9708
    %v9710 = vlaneseq
    %v9711 = vshrl.u32 %v9710, 7
    %v9712 = vsub.s32 0, %v9711
    %v9713 = vrot.slane %v8462, %v9712
    %v9714 = vlaneseq
    %v9715 = vshrl.u32 %v9714, 7
    %v9716 = vsub.s32 0, %v9715
    %v9717 = vrot.slane %v8476, %v9716
    %v9718 = vlaneseq
    %v9719 = vshrl.u32 %v9718, 7
    %v9720 = vsub.s32 0, %v9719
    %v9721 = vrot.slane %v8478, %v9720
    %v9722 = vlaneseq
    %v9723 = vshrl.u32 %v9722, 7
    %v9724 = vsub.s32 0, %v9723
    %v9725 = vrot.slane %v8480, %v9724
    %v9726 = vlaneseq
    %v9727 = vshrl.u32 %v9726, 7
    %v9728 = vsub.s32 0, %v9727
    %v9729 = vrot.slane %v8504, %v9728
    %v9730 = vlaneseq
    %v9731 = vshrl.u32 %v9730, 7
    %v9732 = vsub.s32 0, %v9731
    %v9733 = vrot.slane %v8518, %v9732
    %v9734 = vlaneseq
    %v9735 = vshrl.u32 %v9734, 7
    %v9736 = vsub.s32 0, %v9735
    %v9737 = vrot.slane %v8526, %v9736
    %v9738 = vlaneseq
    %v9739 = vshrl.u32 %v9738, 7
    %v9740 = vsub.s32 0, %v9739
    %v9741 = vrot.slane %v8528, %v9740
    %v9742 = vlaneseq
    %v9743 = vshrl.u32 %v9742, 7
    %v9744 = vsub.s32 0, %v9743
    %v9745 = vrot.slane %v8511, %v9744
    %v9746 = vlaneseq
    %v9747 = vshrl.u32 %v9746, 7
    %v9748 = vsub.s32 0, %v9747
    %v9749 = vrot.slane %v8525, %v9748
    %v9750 = vlaneseq
    %v9751 = vshrl.u32 %v9750, 7
    %v9752 = vsub.s32 0, %v9751
    %v9753 = vrot.slane %v8527, %v9752
    %v9754 = vlaneseq
    %v9755 = vshrl.u32 %v9754, 7
    %v9756 = vsub.s32 0, %v9755
    %v9757 = vrot.slane %v8529, %v9756
    %v9758 = vlaneseq
    %v9759 = vshrl.u32 %v9758, 7
    %v9760 = vsub.s32 0, %v9759
    %v9761 = vrot.slane %v8553, %v9760
    %v9762 = vlaneseq
    %v9763 = vshrl.u32 %v9762, 7
    %v9764 = vsub.s32 0, %v9763
    %v9765 = vrot.slane %v8567, %v9764
    %v9766 = vlaneseq
    %v9767 = vshrl.u32 %v9766, 7
    %v9768 = vsub.s32 0, %v9767
    %v9769 = vrot.slane %v8575, %v9768
    %v9770 = vlaneseq
    %v9771 = vshrl.u32 %v9770, 7
    %v9772 = vsub.s32 0, %v9771
    %v9773 = vrot.slane %v8577, %v9772
    %v9774 = vlaneseq
    %v9775 = vshrl.u32 %v9774, 7
    %v9776 = vsub.s32 0, %v9775
    %v9777 = vrot.slane %v8560, %v9776
    %v9778 = vlaneseq
    %v9779 = vshrl.u32 %v9778, 7
    %v9780 = vsub.s32 0, %v9779
    %v9781 = vrot.slane %v8574, %v9780
    %v9782 = vlaneseq
    %v9783 = vshrl.u32 %v9782, 7
    %v9784 = vsub.s32 0, %v9783
    %v9785 = vrot.slane %v8576, %v9784
    %v9786 = vlaneseq
    %v9787 = vshrl.u32 %v9786, 7
    %v9788 = vsub.s32 0, %v9787
    %v9789 = vrot.slane %v8578, %v9788
    %v9790 = vlaneseq
    %v9791 = vshrl.u32 %v9790, 7
    %v9792 = vsub.s32 0, %v9791
    %v9793 = vrot.slane %v8602, %v9792
    %v9794 = vlaneseq
    %v9795 = vshrl.u32 %v9794, 7
    %v9796 = vsub.s32 0, %v9795
    %v9797 = vrot.slane %v8616, %v9796
    %v9798 = vlaneseq
    %v9799 = vshrl.u32 %v9798, 7
    %v9800 = vsub.s32 0, %v9799
    %v9801 = vrot.slane %v8624, %v9800
    %v9802 = vlaneseq
    %v9803 = vshrl.u32 %v9802, 7
    %v9804 = vsub.s32 0, %v9803
    %v9805 = vrot.slane %v8626, %v9804
    %v9806 = vlaneseq
    %v9807 = vshrl.u32 %v9806, 7
    %v9808 = vsub.s32 0, %v9807
    %v9809 = vrot.slane %v8609, %v9808
    %v9810 = vlaneseq
    %v9811 = vshrl.u32 %v9810, 7
    %v9812 = vsub.s32 0, %v9811
    %v9813 = vrot.slane %v8623, %v9812
    %v9814 = vlaneseq
    %v9815 = vshrl.u32 %v9814, 7
    %v9816 = vsub.s32 0, %v9815
    %v9817 = vrot.slane %v8625, %v9816
    %v9818 = vlaneseq
    %v9819 = vshrl.u32 %v9818, 7
    %v9820 = vsub.s32 0, %v9819
    %v9821 = vrot.slane %v8627, %v9820
    %v9822 = vlaneseq
    %v9823 = vshrl.u32 %v9822, 7
    %v9824 = vsub.s32 0, %v9823
    %v9825 = vrot.slane %v8651, %v9824
    %v9826 = vlaneseq
    %v9827 = vshrl.u32 %v9826, 7
    %v9828 = vsub.s32 0, %v9827
    %v9829 = vrot.slane %v8665, %v9828
    %v9830 = vlaneseq
    %v9831 = vshrl.u32 %v9830, 7
    %v9832 = vsub.s32 0, %v9831
    %v9833 = vrot.slane %v8673, %v9832
    %v9834 = vlaneseq
    %v9835 = vshrl.u32 %v9834, 7
    %v9836 = vsub.s32 0, %v9835
    %v9837 = vrot.slane %v8675, %v9836
    %v9838 = vlaneseq
    %v9839 = vshrl.u32 %v9838, 7
    %v9840 = vsub.s32 0, %v9839
    %v9841 = vrot.slane %v8658, %v9840
    %v9842 = vlaneseq
    %v9843 = vshrl.u32 %v9842, 7
    %v9844 = vsub.s32 0, %v9843
    %v9845 = vrot.slane %v8672, %v9844
    %v9846 = vlaneseq
    %v9847 = vshrl.u32 %v9846, 7
    %v9848 = vsub.s32 0, %v9847
    %v9849 = vrot.slane %v8674, %v9848
    %v9850 = vlaneseq
    %v9851 = vshrl.u32 %v9850, 7
    %v9852 = vsub.s32 0, %v9851
    %v9853 = vrot.slane %v8676, %v9852
    %v9854 = vlaneseq
    %v9855 = vshrl.u32 %v9854, 7
    %v9856 = vsub.s32 0, %v9855
    %v9857 = vrot.slane %v8700, %v9856
    %v9858 = vlaneseq
    %v9859 = vshrl.u32 %v9858, 7
    %v9860 = vsub.s32 0, %v9859
    %v9861 = vrot.slane %v8714, %v9860
    %v9862 = vlaneseq
    %v9863 = vshrl.u32 %v9862, 7
    %v9864 = vsub.s32 0, %v9863
    %v9865 = vrot.slane %v8722, %v9864
    %v9866 = vlaneseq
    %v9867 = vshrl.u32 %v9866, 7
    %v9868 = vsub.s32 0, %v9867
    %v9869 = vrot.slane %v8724, %v9868
    %v9870 = vlaneseq
    %v9871 = vshrl.u32 %v9870, 7
    %v9872 = vsub.s32 0, %v9871
    %v9873 = vrot.slane %v8707, %v9872
    %v9874 = vlaneseq
    %v9875 = vshrl.u32 %v9874, 7
    %v9876 = vsub.s32 0, %v9875
    %v9877 = vrot.slane %v8721, %v9876
    %v9878 = vlaneseq
    %v9879 = vshrl.u32 %v9878, 7
    %v9880 = vsub.s32 0, %v9879
    %v9881 = vrot.slane %v8723, %v9880
    %v9882 = vlaneseq
    %v9883 = vshrl.u32 %v9882, 7
    %v9884 = vsub.s32 0, %v9883
    %v9885 = vrot.slane %v8725, %v9884
    %v9886 = vlaneseq
    %v9887 = vshrl.u32 %v9886, 7
    %v9888 = vsub.s32 0, %v9887
    %v9889 = vrot.slane %v8749, %v9888
    %v9890 = vlaneseq
    %v9891 = vshrl.u32 %v9890, 7
    %v9892 = vsub.s32 0, %v9891
    %v9893 = vrot.slane %v8763, %v9892
    %v9894 = vlaneseq
    %v9895 = vshrl.u32 %v9894, 7
    %v9896 = vsub.s32 0, %v9895
    %v9897 = vrot.slane %v8771, %v9896
    %v9898 = vlaneseq
    %v9899 = vshrl.u32 %v9898, 7
    %v9900 = vsub.s32 0, %v9899
    %v9901 = vrot.slane %v8773, %v9900
    %v9902 = vlaneseq
    %v9903 = vshrl.u32 %v9902, 7
    %v9904 = vsub.s32 0, %v9903
    %v9905 = vrot.slane %v8756, %v9904
    %v9906 = vlaneseq
    %v9907 = vshrl.u32 %v9906, 7
    %v9908 = vsub.s32 0, %v9907
    %v9909 = vrot.slane %v8770, %v9908
    %v9910 = vlaneseq
    %v9911 = vshrl.u32 %v9910, 7
    %v9912 = vsub.s32 0, %v9911
    %v9913 = vrot.slane %v8772, %v9912
    %v9914 = vlaneseq
    %v9915 = vshrl.u32 %v9914, 7
    %v9916 = vsub.s32 0, %v9915
    %v9917 = vrot.slane %v8774, %v9916
    %v9918 = vlaneseq
    %v9919 = vshrl.u32 %v9918, 7
    %v9920 = vsub.s32 0, %v9919
    %v9921 = vrot.slane %v8798, %v9920
    %v9922 = vlaneseq
    %v9923 = vshrl.u32 %v9922, 7
    %v9924 = vsub.s32 0, %v9923
    %v9925 = vrot.slane %v8812, %v9924
    %v9926 = vlaneseq
    %v9927 = vshrl.u32 %v9926, 7
    %v9928 = vsub.s32 0, %v9927
    %v9929 = vrot.slane %v8820, %v9928
    %v9930 = vlaneseq
    %v9931 = vshrl.u32 %v9930, 7
    %v9932 = vsub.s32 0, %v9931
    %v9933 = vrot.slane %v8822, %v9932
    %v9934 = vlaneseq
    %v9935 = vshrl.u32 %v9934, 7
    %v9936 = vsub.s32 0, %v9935
    %v9937 = vrot.slane %v8805, %v9936
    %v9938 = vlaneseq
    %v9939 = vshrl.u32 %v9938, 7
    %v9940 = vsub.s32 0, %v9939
    %v9941 = vrot.slane %v8819, %v9940
    %v9942 = vlaneseq
    %v9943 = vshrl.u32 %v9942, 7
    %v9944 = vsub.s32 0, %v9943
    %v9945 = vrot.slane %v8821, %v9944
    %v9946 = vlaneseq
    %v9947 = vshrl.u32 %v9946, 7
    %v9948 = vsub.s32 0, %v9947
    %v9949 = vrot.slane %v8823, %v9948
    %v9950 = vlaneseq
    %v9951 = vshrl.u32 %v9950, 7
    %v9952 = vsub.s32 0, %v9951
    %v9953 = vrot.slane %v8847, %v9952
    %v9954 = vlaneseq
    %v9955 = vshrl.u32 %v9954, 7
    %v9956 = vsub.s32 0, %v9955
    %v9957 = vrot.slane %v8861, %v9956
    %v9958 = vlaneseq
    %v9959 = vshrl.u32 %v9958, 7
    %v9960 = vsub.s32 0, %v9959
    %v9961 = vrot.slane %v8869, %v9960
    %v9962 = vlaneseq
    %v9963 = vshrl.u32 %v9962, 7
    %v9964 = vsub.s32 0, %v9963
    %v9965 = vrot.slane %v8871, %v9964
    %v9966 = vlaneseq
    %v9967 = vshrl.u32 %v9966, 7
    %v9968 = vsub.s32 0, %v9967
    %v9969 = vrot.slane %v8854, %v9968
    %v9970 = vlaneseq
    %v9971 = vshrl.u32 %v9970, 7
    %v9972 = vsub.s32 0, %v9971
    %v9973 = vrot.slane %v8868, %v9972
    %v9974 = vlaneseq
    %v9975 = vshrl.u32 %v9974, 7
    %v9976 = vsub.s32 0, %v9975
    %v9977 = vrot.slane %v8870, %v9976
    %v9978 = vlaneseq
    %v9979 = vshrl.u32 %v9978, 7
    %v9980 = vsub.s32 0, %v9979
    %v9981 = vrot.slane %v8872, %v9980
    %v9982 = vlaneseq
    %v9983 = vshrl.u32 %v9982, 7
    %v9984 = vsub.s32 0, %v9983
    %v9985 = vrot.slane %v8896, %v9984
    %v9986 = vlaneseq
    %v9987 = vshrl.u32 %v9986, 7
    %v9988 = vsub.s32 0, %v9987
    %v9989 = vrot.slane %v8910, %v9988
    %v9990 = vlaneseq
    %v9991 = vshrl.u32 %v9990, 7
    %v9992 = vsub.s32 0, %v9991
    %v9993 = vrot.slane %v8918, %v9992
    %v9994 = vlaneseq
    %v9995 = vshrl.u32 %v9994, 7
    %v9996 = vsub.s32 0, %v9995
    %v9997 = vrot.slane %v8920, %v9996
    %v9998 = vlaneseq
    %v9999 = vshrl.u32 %v9998, 7
    %v10000 = vsub.s32 0, %v9999
    %v10001 = vrot.slane %v8903, %v10000
    %v10002 = vlaneseq
    %v10003 = vshrl.u32 %v10002, 7
    %v10004 = vsub.s32 0, %v10003
    %v10005 = vrot.slane %v8917, %v10004
    %v10006 = vlaneseq
    %v10007 = vshrl.u32 %v10006, 7
    %v10008 = vsub.s32 0, %v10007
    %v10009 = vrot.slane %v8919, %v10008
    %v10010 = vlaneseq
    %v10011 = vshrl.u32 %v10010, 7
    %v10012 = vsub.s32 0, %v10011
    %v10013 = vrot.slane %v8921, %v10012
    %v10014 = vlaneseq
    %v10015 = vshrl.u32 %v10014, 7
    %v10016 = vsub.s32 0, %v10015
    %v10017 = vrot.slane %v8945, %v10016
    %v10018 = vlaneseq
    %v10019 = vshrl.u32 %v10018, 7
    %v10020 = vsub.s32 0, %v10019
    %v10021 = vrot.slane %v8959, %v10020
    %v10022 = vlaneseq
    %v10023 = vshrl.u32 %v10022, 7
    %v10024 = vsub.s32 0, %v10023
    %v10025 = vrot.slane %v8967, %v10024
    %v10026 = vlaneseq
    %v10027 = vshrl.u32 %v10026, 7
    %v10028 = vsub.s32 0, %v10027
    %v10029 = vrot.slane %v8969, %v10028
    %v10030 = vlaneseq
    %v10031 = vshrl.u32 %v10030, 7
    %v10032 = vsub.s32 0, %v10031
    %v10033 = vrot.slane %v8952, %v10032
    %v10034 = vlaneseq
    %v10035 = vshrl.u32 %v10034, 7
    %v10036 = vsub.s32 0, %v10035
    %v10037 = vrot.slane %v8966, %v10036
    %v10038 = vlaneseq
    %v10039 = vshrl.u32 %v10038, 7
    %v10040 = vsub.s32 0, %v10039
    %v10041 = vrot.slane %v8968, %v10040
    %v10042 = vlaneseq
    %v10043 = vshrl.u32 %v10042, 7
    %v10044 = vsub.s32 0, %v10043
    %v10045 = vrot.slane %v8970, %v10044
    %v10046 = vlaneseq
    %v10047 = vshrl.u32 %v10046, 7
    %v10048 = vsub.s32 0, %v10047
    %v10049 = vrot.slane %v8994, %v10048
    %v10050 = vlaneseq
    %v10051 = vshrl.u32 %v10050, 7
    %v10052 = vsub.s32 0, %v10051
    %v10053 = vrot.slane %v9008, %v10052
    %v10054 = vlaneseq
    %v10055 = vshrl.u32 %v10054, 7
    %v10056 = vsub.s32 0, %v10055
    %v10057 = vrot.slane %v9016, %v10056
    %v10058 = vlaneseq
    %v10059 = vshrl.u32 %v10058, 7
    %v10060 = vsub.s32 0, %v10059
    %v10061 = vrot.slane %v9018, %v10060
    %v10062 = vlaneseq
    %v10063 = vshrl.u32 %v10062, 7
    %v10064 = vsub.s32 0, %v10063
    %v10065 = vrot.slane %v9001, %v10064
    %v10066 = vlaneseq
    %v10067 = vshrl.u32 %v10066, 7
    %v10068 = vsub.s32 0, %v10067
    %v10069 = vrot.slane %v9015, %v10068
    %v10070 = vlaneseq
    %v10071 = vshrl.u32 %v10070, 7
    %v10072 = vsub.s32 0, %v10071
    %v10073 = vrot.slane %v9017, %v10072
    %v10074 = vlaneseq
    %v10075 = vshrl.u32 %v10074, 7
    %v10076 = vsub.s32 0, %v10075
    %v10077 = vrot.slane %v9019, %v10076
    %v10078 = vlaneseq
    %v10079 = vshrl.u32 %v10078, 7
    %v10080 = vsub.s32 0, %v10079
    %v10081 = vrot.slane %v9043, %v10080
    %v10082 = vlaneseq
    %v10083 = vshrl.u32 %v10082, 7
    %v10084 = vsub.s32 0, %v10083
    %v10085 = vrot.slane %v9057, %v10084
    %v10086 = vlaneseq
    %v10087 = vshrl.u32 %v10086, 7
    %v10088 = vsub.s32 0, %v10087
    %v10089 = vrot.slane %v9065, %v10088
    %v10090 = vlaneseq
    %v10091 = vshrl.u32 %v10090, 7
    %v10092 = vsub.s32 0, %v10091
    %v10093 = vrot.slane %v9067, %v10092
    %v10094 = vlaneseq
    %v10095 = vshrl.u32 %v10094, 7
    %v10096 = vsub.s32 0, %v10095
    %v10097 = vrot.slane %v9050, %v10096
    %v10098 = vlaneseq
    %v10099 = vshrl.u32 %v10098, 7
    %v10100 = vsub.s32 0, %v10099
    %v10101 = vrot.slane %v9064, %v10100
    %v10102 = vlaneseq
    %v10103 = vshrl.u32 %v10102, 7
    %v10104 = vsub.s32 0, %v10103
    %v10105 = vrot.slane %v9066, %v10104
    %v10106 = vlaneseq
    %v10107 = vshrl.u32 %v10106, 7
    %v10108 = vsub.s32 0, %v10107
    %v10109 = vrot.slane %v9068, %v10108
    %v10110 = vlaneseq
    %v10111 = vshrl.u32 %v10110, 7
    %v10112 = vsub.s32 0, %v10111
    %v10113 = vrot.slane %v9092, %v10112
    %v10114 = vlaneseq
    %v10115 = vshrl.u32 %v10114, 7
    %v10116 = vsub.s32 0, %v10115
    %v10117 = vrot.slane %v9106, %v10116
    %v10118 = vlaneseq
    %v10119 = vshrl.u32 %v10118, 7
    %v10120 = vsub.s32 0, %v10119
    %v10121 = vrot.slane %v9114, %v10120
    %v10122 = vlaneseq
    %v10123 = vshrl.u32 %v10122, 7
    %v10124 = vsub.s32 0, %v10123
    %v10125 = vrot.slane %v9116, %v10124
    %v10126 = vlaneseq
    %v10127 = vshrl.u32 %v10126, 7
    %v10128 = vsub.s32 0, %v10127
    %v10129 = vrot.slane %v9099, %v10128
    %v10130 = vlaneseq
    %v10131 = vshrl.u32 %v10130, 7
    %v10132 = vsub.s32 0, %v10131
    %v10133 = vrot.slane %v9113, %v10132
    %v10134 = vlaneseq
    %v10135 = vshrl.u32 %v10134, 7
    %v10136 = vsub.s32 0, %v10135
    %v10137 = vrot.slane %v9115, %v10136
    %v10138 = vlaneseq
    %v10139 = vshrl.u32 %v10138, 7
    %v10140 = vsub.s32 0, %v10139
    %v10141 = vrot.slane %v9117, %v10140
    %v10398 = vadd.f32 %v5732, %v9121
    %v10399 = vadd.f32 %v5739, %v9125
    %v10400 = vadd.f32 %v5746, %v9129
    %v10401 = vadd.f32 %v5753, %v9133
    %v10402 = vadd.f32 %v5760, %v9137
    %v10403 = vadd.f32 %v5767, %v9141
    %v10404 = vadd.f32 %v5774, %v9145
    %v10405 = vadd.f32 %v5781, %v9149
    %v10406 = vadd.f32 %v5788, %v9153
    %v10407 = vadd.f32 %v5795, %v9157
    %v10408 = vadd.f32 %v5802, %v9161
    %v10409 = vadd.f32 %v5809, %v9165
    %v10410 = vadd.f32 %v5816, %v9169
    %v10411 = vadd.f32 %v5823, %v9173
    %v10412 = vadd.f32 %v5830, %v9177
    %v10413 = vadd.f32 %v5837, %v9181
    %v10414 = vadd.f32 %v5844, %v9185
    %v10415 = vadd.f32 %v5851, %v9189
    %v10416 = vadd.f32 %v5858, %v9193
    %v10417 = vadd.f32 %v5865, %v9197
    %v10418 = vadd.f32 %v5872, %v9201
    %v10419 = vadd.f32 %v5879, %v9205
    %v10420 = vadd.f32 %v5886, %v9209
    %v10421 = vadd.f32 %v5893, %v9213
    %v10422 = vadd.f32 %v5900, %v9217
    %v10423 = vadd.f32 %v5907, %v9221
    %v10424 = vadd.f32 %v5914, %v9225
    %v10425 = vadd.f32 %v5921, %v9229
    %v10426 = vadd.f32 %v5928, %v9233
    %v10427 = vadd.f32 %v5935, %v9237
    %v10428 = vadd.f32 %v5942, %v9241
    %v10429 = vadd.f32 %v5949, %v9245
    %v10430 = vadd.f32 %v5956, %v9249
    %v10431 = vadd.f32 %v5963, %v9253
    %v10432 = vadd.f32 %v5970, %v9257
    %v10433 = vadd.f32 %v5977, %v9261
    %v10434 = vadd.f32 %v5984, %v9265
    %v10435 = vadd.f32 %v5991, %v9269
    %v10436 = vadd.f32 %v5998, %v9273
    %v10437 = vadd.f32 %v6005, %v9277
    %v10438 = vadd.f32 %v6012, %v9281
    %v10439 = vadd.f32 %v6019, %v9285
    %v10440 = vadd.f32 %v6026, %v9289
    %v10441 = vadd.f32 %v6033, %v9293
    %v10442 = vadd.f32 %v6040, %v9297
    %v10443 = vadd.f32 %v6047, %v9301
    %v10444 = vadd.f32 %v6054, %v9305
    %v10445 = vadd.f32 %v6061, %v9309
    %v10446 = vadd.f32 %v6068, %v9313
    %v10447 = vadd.f32 %v6075, %v9317
    %v10448 = vadd.f32 %v6082, %v9321
    %v10449 = vadd.f32 %v6089, %v9325
    %v10450 = vadd.f32 %v6096, %v9329
    %v10451 = vadd.f32 %v6103, %v9333
    %v10452 = vadd.f32 %v6110, %v9337
    %v10453 = vadd.f32 %v6117, %v9341
    %v10454 = vadd.f32 %v6124, %v9345
    %v10455 = vadd.f32 %v6131, %v9349
    %v10456 = vadd.f32 %v6138, %v9353
    %v10457 = vadd.f32 %v6145, %v9357
    %v10458 = vadd.f32 %v6152, %v9361
    %v10459 = vadd.f32 %v6159, %v9365
    %v10460 = vadd.f32 %v6166, %v9369
    %v10461 = vadd.f32 %v6173, %v9373
    %v10462 = vadd.f32 %v6180, %v9377
    %v10463 = vadd.f32 %v6187, %v9381
    %v10464 = vadd.f32 %v6194, %v9385
    %v10465 = vadd.f32 %v6201, %v9389
    %v10466 = vadd.f32 %v6208, %v9393
    %v10467 = vadd.f32 %v6215, %v9397
    %v10468 = vadd.f32 %v6222, %v9401
    %v10469 = vadd.f32 %v6229, %v9405
    %v10470 = vadd.f32 %v6236, %v9409
    %v10471 = vadd.f32 %v6243, %v9413
    %v10472 = vadd.f32 %v6250, %v9417
    %v10473 = vadd.f32 %v6257, %v9421
    %v10474 = vadd.f32 %v6264, %v9425
    %v10475 = vadd.f32 %v6271, %v9429
    %v10476 = vadd.f32 %v6278, %v9433
    %v10477 = vadd.f32 %v6285, %v9437
    %v10478 = vadd.f32 %v6292, %v9441
    %v10479 = vadd.f32 %v6299, %v9445
    %v10480 = vadd.f32 %v6306, %v9449
    %v10481 = vadd.f32 %v6313, %v9453
    %v10482 = vadd.f32 %v6320, %v9457
    %v10483 = vadd.f32 %v6327, %v9461
    %v10484 = vadd.f32 %v6334, %v9465
    %v10485 = vadd.f32 %v6341, %v9469
    %v10486 = vadd.f32 %v6348, %v9473
    %v10487 = vadd.f32 %v6355, %v9477
    %v10488 = vadd.f32 %v6362, %v9481
    %v10489 = vadd.f32 %v6369, %v9485
    %v10490 = vadd.f32 %v6376, %v9489
    %v10491 = vadd.f32 %v6383, %v9493
    %v10492 = vadd.f32 %v6390, %v9497
    %v10493 = vadd.f32 %v6397, %v9501
    %v10494 = vadd.f32 %v6404, %v9505
    %v10495 = vadd.f32 %v6411, %v9509
    %v10496 = vadd.f32 %v6418, %v9513
    %v10497 = vadd.f32 %v6425, %v9517
    %v10498 = vadd.f32 %v6432, %v9521
    %v10499 = vadd.f32 %v6439, %v9525
    %v10500 = vadd.f32 %v6446, %v9529
    %v10501 = vadd.f32 %v6453, %v9533
    %v10502 = vadd.f32 %v6460, %v9537
    %v10503 = vadd.f32 %v6467, %v9541
    %v10504 = vadd.f32 %v6474, %v9545
    %v10505 = vadd.f32 %v6481, %v9549
    %v10506 = vadd.f32 %v6488, %v9553
    %v10507 = vadd.f32 %v6495, %v9557
    %v10508 = vadd.f32 %v6502, %v9561
    %v10509 = vadd.f32 %v6509, %v9565
    %v10510 = vadd.f32 %v6516, %v9569
    %v10511 = vadd.f32 %v6523, %v9573
    %v10512 = vadd.f32 %v6530, %v9577
    %v10513 = vadd.f32 %v6537, %v9581
    %v10514 = vadd.f32 %v6544, %v9585
    %v10515 = vadd.f32 %v6551, %v9589
    %v10516 = vadd.f32 %v6558, %v9593
    %v10517 = vadd.f32 %v6565, %v9597
    %v10518 = vadd.f32 %v6572, %v9601
    %v10519 = vadd.f32 %v6579, %v9605
    %v10520 = vadd.f32 %v6586, %v9609
    %v10521 = vadd.f32 %v6593, %v9613
    %v10522 = vadd.f32 %v6600, %v9617
    %v10523 = vadd.f32 %v6607, %v9621
    %v10524 = vadd.f32 %v6614, %v9625
    %v10525 = vadd.f32 %v6621, %v9629
    %v10526 = vadd.f32 %v6628, %v9633
    %v10527 = vadd.f32 %v6635, %v9637
    %v10528 = vadd.f32 %v6642, %v9641
    %v10529 = vadd.f32 %v6649, %v9645
    %v10530 = vadd.f32 %v6656, %v9649
    %v10531 = vadd.f32 %v6663, %v9653
    %v10532 = vadd.f32 %v6670, %v9657
    %v10533 = vadd.f32 %v6677, %v9661
    %v10534 = vadd.f32 %v6684, %v9665
    %v10535 = vadd.f32 %v6691, %v9669
    %v10536 = vadd.f32 %v6698, %v9673
    %v10537 = vadd.f32 %v6705, %v9677
    %v10538 = vadd.f32 %v6712, %v9681
    %v10539 = vadd.f32 %v6719, %v9685
    %v10540 = vadd.f32 %v6726, %v9689
    %v10541 = vadd.f32 %v6733, %v9693
    %v10542 = vadd.f32 %v6740, %v9697
    %v10543 = vadd.f32 %v6747, %v9701
    %v10544 = vadd.f32 %v6754, %v9705
    %v10545 = vadd.f32 %v6761, %v9709
    %v10546 = vadd.f32 %v6768, %v9713
    %v10547 = vadd.f32 %v6775, %v9717
    %v10548 = vadd.f32 %v6782, %v9721
    %v10549 = vadd.f32 %v6789, %v9725
    %v10550 = vadd.f32 %v6796, %v9729
    %v10551 = vadd.f32 %v6803, %v9733
    %v10552 = vadd.f32 %v6810, %v9737
    %v10553 = vadd.f32 %v6817, %v9741
    %v10554 = vadd.f32 %v6824, %v9745
    %v10555 = vadd.f32 %v6831, %v9749
    %v10556 = vadd.f32 %v6838, %v9753
    %v10557 = vadd.f32 %v6845, %v9757
    %v10558 = vadd.f32 %v6852, %v9761
    %v10559 = vadd.f32 %v6859, %v9765
    %v10560 = vadd.f32 %v6866, %v9769
    %v10561 = vadd.f32 %v6873, %v9773
    %v10562 = vadd.f32 %v6880, %v9777
    %v10563 = vadd.f32 %v6887, %v9781
    %v10564 = vadd.f32 %v6894, %v9785
    %v10565 = vadd.f32 %v6901, %v9789
    %v10566 = vadd.f32 %v6908, %v9793
    %v10567 = vadd.f32 %v6915, %v9797
    %v10568 = vadd.f32 %v6922, %v9801
    %v10569 = vadd.f32 %v6929, %v9805
    %v10570 = vadd.f32 %v6936, %v9809
    %v10571 = vadd.f32 %v6943, %v9813
    %v10572 = vadd.f32 %v6950, %v9817
    %v10573 = vadd.f32 %v6957, %v9821
    %v10574 = vadd.f32 %v6964, %v9825
    %v10575 = vadd.f32 %v6971, %v9829
    %v10576 = vadd.f32 %v6978, %v9833
    %v10577 = vadd.f32 %v6985, %v9837
    %v10578 = vadd.f32 %v6992, %v9841
    %v10579 = vadd.f32 %v6999, %v9845
    %v10580 = vadd.f32 %v7006, %v9849
    %v10581 = vadd.f32 %v7013, %v9853
    %v10582 = vadd.f32 %v7020, %v9857
    %v10583 = vadd.f32 %v7027, %v9861
    %v10584 = vadd.f32 %v7034, %v9865
    %v10585 = vadd.f32 %v7041, %v9869
    %v10586 = vadd.f32 %v7048, %v9873
    %v10587 = vadd.f32 %v7055, %v9877
    %v10588 = vadd.f32 %v7062, %v9881
    %v10589 = vadd.f32 %v7069, %v9885
    %v10590 = vadd.f32 %v7076, %v9889
    %v10591 = vadd.f32 %v7083, %v9893
    %v10592 = vadd.f32 %v7090, %v9897
    %v10593 = vadd.f32 %v7097, %v9901
    %v10594 = vadd.f32 %v7104, %v9905
    %v10595 = vadd.f32 %v7111, %v9909
    %v10596 = vadd.f32 %v7118, %v9913
    %v10597 = vadd.f32 %v7125, %v9917
    %v10598 = vadd.f32 %v7132, %v9921
    %v10599 = vadd.f32 %v7139, %v9925
    %v10600 = vadd.f32 %v7146, %v9929
    %v10601 = vadd.f32 %v7153, %v9933
    %v10602 = vadd.f32 %v7160, %v9937
    %v10603 = vadd.f32 %v7167, %v9941
    %v10604 = vadd.f32 %v7174, %v9945
    %v10605 = vadd.f32 %v7181, %v9949
    %v10606 = vadd.f32 %v7188, %v9953
    %v10607 = vadd.f32 %v7195, %v9957
    %v10608 = vadd.f32 %v7202, %v9961
    %v10609 = vadd.f32 %v7209, %v9965
    %v10610 = vadd.f32 %v7216, %v9969
    %v10611 = vadd.f32 %v7223, %v9973
    %v10612 = vadd.f32 %v7230, %v9977
    %v10613 = vadd.f32 %v7237, %v9981
    %v10614 = vadd.f32 %v7244, %v9985
    %v10615 = vadd.f32 %v7251, %v9989
    %v10616 = vadd.f32 %v7258, %v9993
    %v10617 = vadd.f32 %v7265, %v9997
    %v10618 = vadd.f32 %v7272, %v10001
    %v10619 = vadd.f32 %v7279, %v10005
    %v10620 = vadd.f32 %v7286, %v10009
    %v10621 = vadd.f32 %v7293, %v10013
    %v10622 = vadd.f32 %v7300, %v10017
    %v10623 = vadd.f32 %v7307, %v10021
    %v10624 = vadd.f32 %v7314, %v10025
    %v10625 = vadd.f32 %v7321, %v10029
    %v10626 = vadd.f32 %v7328, %v10033
    %v10627 = vadd.f32 %v7335, %v10037
    %v10628 = vadd.f32 %v7342, %v10041
    %v10629 = vadd.f32 %v7349, %v10045
    %v10630 = vadd.f32 %v7356, %v10049
    %v10631 = vadd.f32 %v7363, %v10053
    %v10632 = vadd.f32 %v7370, %v10057
    %v10633 = vadd.f32 %v7377, %v10061
    %v10634 = vadd.f32 %v7384, %v10065
    %v10635 = vadd.f32 %v7391, %v10069
    %v10636 = vadd.f32 %v7398, %v10073
    %v10637 = vadd.f32 %v7405, %v10077
    %v10638 = vadd.f32 %v7412, %v10081
    %v10639 = vadd.f32 %v7419, %v10085
    %v10640 = vadd.f32 %v7426, %v10089
    %v10641 = vadd.f32 %v7433, %v10093
    %v10642 = vadd.f32 %v7440, %v10097
    %v10643 = vadd.f32 %v7447, %v10101
    %v10644 = vadd.f32 %v7454, %v10105
    %v10645 = vadd.f32 %v7461, %v10109
    %v10646 = vadd.f32 %v7468, %v10113
    %v10647 = vadd.f32 %v7475, %v10117
    %v10648 = vadd.f32 %v7482, %v10121
    %v10649 = vadd.f32 %v7489, %v10125
    %v10650 = vadd.f32 %v7496, %v10129
    %v10651 = vadd.f32 %v7503, %v10133
    %v10652 = vadd.f32 %v7510, %v10137
    %v10653 = vadd.f32 %v7517, %v10141
    %v10654 = vsel %vm5083, %v10398, -inf
    %v10655 = vsel %vm5083, %v10399, -inf
    %v10656 = vsel %vm5083, %v10400, -inf
    %v10657 = vsel %vm5083, %v10401, -inf
    %v10658 = vsel %vm5083, %v10402, -inf
    %v10659 = vmax.f32 %v10654, %v10658
    %v10660 = vsel %vm5083, %v10403, -inf
    %v10661 = vmax.f32 %v10655, %v10660
    %v10662 = vsel %vm5083, %v10404, -inf
    %v10663 = vmax.f32 %v10656, %v10662
    %v10664 = vsel %vm5083, %v10405, -inf
    %v10665 = vmax.f32 %v10657, %v10664
    %v10666 = vsel %vm5083, %v10406, -inf
    %v10667 = vmax.f32 %v10659, %v10666
    %v10668 = vsel %vm5083, %v10407, -inf
    %v10669 = vmax.f32 %v10661, %v10668
    %v10670 = vsel %vm5083, %v10408, -inf
    %v10671 = vmax.f32 %v10663, %v10670
    %v10672 = vsel %vm5083, %v10409, -inf
    %v10673 = vmax.f32 %v10665, %v10672
    %v10674 = vsel %vm5083, %v10410, -inf
    %v10675 = vmax.f32 %v10667, %v10674
    %v10676 = vsel %vm5083, %v10411, -inf
    %v10677 = vmax.f32 %v10669, %v10676
    %v10678 = vsel %vm5083, %v10412, -inf
    %v10679 = vmax.f32 %v10671, %v10678
    %v10680 = vsel %vm5083, %v10413, -inf
    %v10681 = vmax.f32 %v10673, %v10680
    %v10682 = vsel %vm5083, %v10414, -inf
    %v10683 = vmax.f32 %v10675, %v10682
    %v10684 = vsel %vm5083, %v10415, -inf
    %v10685 = vmax.f32 %v10677, %v10684
    %v10686 = vsel %vm5083, %v10416, -inf
    %v10687 = vmax.f32 %v10679, %v10686
    %v10688 = vsel %vm5083, %v10417, -inf
    %v10689 = vmax.f32 %v10681, %v10688
    %v10690 = vsel %vm5083, %v10418, -inf
    %v10691 = vmax.f32 %v10683, %v10690
    %v10692 = vsel %vm5083, %v10419, -inf
    %v10693 = vmax.f32 %v10685, %v10692
    %v10694 = vsel %vm5083, %v10420, -inf
    %v10695 = vmax.f32 %v10687, %v10694
    %v10696 = vsel %vm5083, %v10421, -inf
    %v10697 = vmax.f32 %v10689, %v10696
    %v10698 = vsel %vm5083, %v10422, -inf
    %v10699 = vmax.f32 %v10691, %v10698
    %v10700 = vsel %vm5083, %v10423, -inf
    %v10701 = vmax.f32 %v10693, %v10700
    %v10702 = vsel %vm5083, %v10424, -inf
    %v10703 = vmax.f32 %v10695, %v10702
    %v10704 = vsel %vm5083, %v10425, -inf
    %v10705 = vmax.f32 %v10697, %v10704
    %v10706 = vsel %vm5083, %v10426, -inf
    %v10707 = vmax.f32 %v10699, %v10706
    %v10708 = vsel %vm5083, %v10427, -inf
    %v10709 = vmax.f32 %v10701, %v10708
    %v10710 = vsel %vm5083, %v10428, -inf
    %v10711 = vmax.f32 %v10703, %v10710
    %v10712 = vsel %vm5083, %v10429, -inf
    %v10713 = vmax.f32 %v10705, %v10712
    %v10714 = vsel %vm5083, %v10430, -inf
    %v10715 = vmax.f32 %v10707, %v10714
    %v10716 = vsel %vm5083, %v10431, -inf
    %v10717 = vmax.f32 %v10709, %v10716
    %v10718 = vsel %vm5083, %v10432, -inf
    %v10719 = vmax.f32 %v10711, %v10718
    %v10720 = vsel %vm5083, %v10433, -inf
    %v10721 = vmax.f32 %v10713, %v10720
    %v10722 = vsel %vm5083, %v10434, -inf
    %v10723 = vmax.f32 %v10715, %v10722
    %v10724 = vsel %vm5083, %v10435, -inf
    %v10725 = vmax.f32 %v10717, %v10724
    %v10726 = vsel %vm5083, %v10436, -inf
    %v10727 = vmax.f32 %v10719, %v10726
    %v10728 = vsel %vm5083, %v10437, -inf
    %v10729 = vmax.f32 %v10721, %v10728
    %v10730 = vsel %vm5083, %v10438, -inf
    %v10731 = vmax.f32 %v10723, %v10730
    %v10732 = vsel %vm5083, %v10439, -inf
    %v10733 = vmax.f32 %v10725, %v10732
    %v10734 = vsel %vm5083, %v10440, -inf
    %v10735 = vmax.f32 %v10727, %v10734
    %v10736 = vsel %vm5083, %v10441, -inf
    %v10737 = vmax.f32 %v10729, %v10736
    %v10738 = vsel %vm5083, %v10442, -inf
    %v10739 = vmax.f32 %v10731, %v10738
    %v10740 = vsel %vm5083, %v10443, -inf
    %v10741 = vmax.f32 %v10733, %v10740
    %v10742 = vsel %vm5083, %v10444, -inf
    %v10743 = vmax.f32 %v10735, %v10742
    %v10744 = vsel %vm5083, %v10445, -inf
    %v10745 = vmax.f32 %v10737, %v10744
    %v10746 = vsel %vm5083, %v10446, -inf
    %v10747 = vmax.f32 %v10739, %v10746
    %v10748 = vsel %vm5083, %v10447, -inf
    %v10749 = vmax.f32 %v10741, %v10748
    %v10750 = vsel %vm5083, %v10448, -inf
    %v10751 = vmax.f32 %v10743, %v10750
    %v10752 = vsel %vm5083, %v10449, -inf
    %v10753 = vmax.f32 %v10745, %v10752
    %v10754 = vsel %vm5083, %v10450, -inf
    %v10755 = vmax.f32 %v10747, %v10754
    %v10756 = vsel %vm5083, %v10451, -inf
    %v10757 = vmax.f32 %v10749, %v10756
    %v10758 = vsel %vm5083, %v10452, -inf
    %v10759 = vmax.f32 %v10751, %v10758
    %v10760 = vsel %vm5083, %v10453, -inf
    %v10761 = vmax.f32 %v10753, %v10760
    %v10762 = vsel %vm5083, %v10454, -inf
    %v10763 = vmax.f32 %v10755, %v10762
    %v10764 = vsel %vm5083, %v10455, -inf
    %v10765 = vmax.f32 %v10757, %v10764
    %v10766 = vsel %vm5083, %v10456, -inf
    %v10767 = vmax.f32 %v10759, %v10766
    %v10768 = vsel %vm5083, %v10457, -inf
    %v10769 = vmax.f32 %v10761, %v10768
    %v10770 = vsel %vm5083, %v10458, -inf
    %v10771 = vmax.f32 %v10763, %v10770
    %v10772 = vsel %vm5083, %v10459, -inf
    %v10773 = vmax.f32 %v10765, %v10772
    %v10774 = vsel %vm5083, %v10460, -inf
    %v10775 = vmax.f32 %v10767, %v10774
    %v10776 = vsel %vm5083, %v10461, -inf
    %v10777 = vmax.f32 %v10769, %v10776
    %v10778 = vsel %vm5083, %v10462, -inf
    %v10779 = vmax.f32 %v10771, %v10778
    %v10780 = vsel %vm5083, %v10463, -inf
    %v10781 = vmax.f32 %v10773, %v10780
    %v10782 = vsel %vm5083, %v10464, -inf
    %v10783 = vmax.f32 %v10775, %v10782
    %v10784 = vsel %vm5083, %v10465, -inf
    %v10785 = vmax.f32 %v10777, %v10784
    %v10786 = vsel %vm5083, %v10466, -inf
    %v10787 = vmax.f32 %v10779, %v10786
    %v10788 = vsel %vm5083, %v10467, -inf
    %v10789 = vmax.f32 %v10781, %v10788
    %v10790 = vsel %vm5083, %v10468, -inf
    %v10791 = vmax.f32 %v10783, %v10790
    %v10792 = vsel %vm5083, %v10469, -inf
    %v10793 = vmax.f32 %v10785, %v10792
    %v10794 = vsel %vm5083, %v10470, -inf
    %v10795 = vmax.f32 %v10787, %v10794
    %v10796 = vsel %vm5083, %v10471, -inf
    %v10797 = vmax.f32 %v10789, %v10796
    %v10798 = vsel %vm5083, %v10472, -inf
    %v10799 = vmax.f32 %v10791, %v10798
    %v10800 = vsel %vm5083, %v10473, -inf
    %v10801 = vmax.f32 %v10793, %v10800
    %v10802 = vsel %vm5083, %v10474, -inf
    %v10803 = vmax.f32 %v10795, %v10802
    %v10804 = vsel %vm5083, %v10475, -inf
    %v10805 = vmax.f32 %v10797, %v10804
    %v10806 = vsel %vm5083, %v10476, -inf
    %v10807 = vmax.f32 %v10799, %v10806
    %v10808 = vsel %vm5083, %v10477, -inf
    %v10809 = vmax.f32 %v10801, %v10808
    %v10810 = vsel %vm5083, %v10478, -inf
    %v10811 = vmax.f32 %v10803, %v10810
    %v10812 = vsel %vm5083, %v10479, -inf
    %v10813 = vmax.f32 %v10805, %v10812
    %v10814 = vsel %vm5083, %v10480, -inf
    %v10815 = vmax.f32 %v10807, %v10814
    %v10816 = vsel %vm5083, %v10481, -inf
    %v10817 = vmax.f32 %v10809, %v10816
    %v10818 = vsel %vm5083, %v10482, -inf
    %v10819 = vmax.f32 %v10811, %v10818
    %v10820 = vsel %vm5083, %v10483, -inf
    %v10821 = vmax.f32 %v10813, %v10820
    %v10822 = vsel %vm5083, %v10484, -inf
    %v10823 = vmax.f32 %v10815, %v10822
    %v10824 = vsel %vm5083, %v10485, -inf
    %v10825 = vmax.f32 %v10817, %v10824
    %v10826 = vsel %vm5083, %v10486, -inf
    %v10827 = vmax.f32 %v10819, %v10826
    %v10828 = vsel %vm5083, %v10487, -inf
    %v10829 = vmax.f32 %v10821, %v10828
    %v10830 = vsel %vm5083, %v10488, -inf
    %v10831 = vmax.f32 %v10823, %v10830
    %v10832 = vsel %vm5083, %v10489, -inf
    %v10833 = vmax.f32 %v10825, %v10832
    %v10834 = vsel %vm5083, %v10490, -inf
    %v10835 = vmax.f32 %v10827, %v10834
    %v10836 = vsel %vm5083, %v10491, -inf
    %v10837 = vmax.f32 %v10829, %v10836
    %v10838 = vsel %vm5083, %v10492, -inf
    %v10839 = vmax.f32 %v10831, %v10838
    %v10840 = vsel %vm5083, %v10493, -inf
    %v10841 = vmax.f32 %v10833, %v10840
    %v10842 = vsel %vm5083, %v10494, -inf
    %v10843 = vmax.f32 %v10835, %v10842
    %v10844 = vsel %vm5083, %v10495, -inf
    %v10845 = vmax.f32 %v10837, %v10844
    %v10846 = vsel %vm5083, %v10496, -inf
    %v10847 = vmax.f32 %v10839, %v10846
    %v10848 = vsel %vm5083, %v10497, -inf
    %v10849 = vmax.f32 %v10841, %v10848
    %v10850 = vsel %vm5083, %v10498, -inf
    %v10851 = vmax.f32 %v10843, %v10850
    %v10852 = vsel %vm5083, %v10499, -inf
    %v10853 = vmax.f32 %v10845, %v10852
    %v10854 = vsel %vm5083, %v10500, -inf
    %v10855 = vmax.f32 %v10847, %v10854
    %v10856 = vsel %vm5083, %v10501, -inf
    %v10857 = vmax.f32 %v10849, %v10856
    %v10858 = vsel %vm5083, %v10502, -inf
    %v10859 = vmax.f32 %v10851, %v10858
    %v10860 = vsel %vm5083, %v10503, -inf
    %v10861 = vmax.f32 %v10853, %v10860
    %v10862 = vsel %vm5083, %v10504, -inf
    %v10863 = vmax.f32 %v10855, %v10862
    %v10864 = vsel %vm5083, %v10505, -inf
    %v10865 = vmax.f32 %v10857, %v10864
    %v10866 = vsel %vm5083, %v10506, -inf
    %v10867 = vmax.f32 %v10859, %v10866
    %v10868 = vsel %vm5083, %v10507, -inf
    %v10869 = vmax.f32 %v10861, %v10868
    %v10870 = vsel %vm5083, %v10508, -inf
    %v10871 = vmax.f32 %v10863, %v10870
    %v10872 = vsel %vm5083, %v10509, -inf
    %v10873 = vmax.f32 %v10865, %v10872
    %v10874 = vsel %vm5083, %v10510, -inf
    %v10875 = vmax.f32 %v10867, %v10874
    %v10876 = vsel %vm5083, %v10511, -inf
    %v10877 = vmax.f32 %v10869, %v10876
    %v10878 = vsel %vm5083, %v10512, -inf
    %v10879 = vmax.f32 %v10871, %v10878
    %v10880 = vsel %vm5083, %v10513, -inf
    %v10881 = vmax.f32 %v10873, %v10880
    %v10882 = vsel %vm5083, %v10514, -inf
    %v10883 = vmax.f32 %v10875, %v10882
    %v10884 = vsel %vm5083, %v10515, -inf
    %v10885 = vmax.f32 %v10877, %v10884
    %v10886 = vsel %vm5083, %v10516, -inf
    %v10887 = vmax.f32 %v10879, %v10886
    %v10888 = vsel %vm5083, %v10517, -inf
    %v10889 = vmax.f32 %v10881, %v10888
    %v10890 = vsel %vm5083, %v10518, -inf
    %v10891 = vmax.f32 %v10883, %v10890
    %v10892 = vsel %vm5083, %v10519, -inf
    %v10893 = vmax.f32 %v10885, %v10892
    %v10894 = vsel %vm5083, %v10520, -inf
    %v10895 = vmax.f32 %v10887, %v10894
    %v10896 = vsel %vm5083, %v10521, -inf
    %v10897 = vmax.f32 %v10889, %v10896
    %v10898 = vsel %vm5083, %v10522, -inf
    %v10899 = vmax.f32 %v10891, %v10898
    %v10900 = vsel %vm5083, %v10523, -inf
    %v10901 = vmax.f32 %v10893, %v10900
    %v10902 = vsel %vm5083, %v10524, -inf
    %v10903 = vmax.f32 %v10895, %v10902
    %v10904 = vsel %vm5083, %v10525, -inf
    %v10905 = vmax.f32 %v10897, %v10904
    %v10906 = vsel %vm5083, %v10526, -inf
    %v10907 = vmax.f32 %v10899, %v10906
    %v10908 = vsel %vm5083, %v10527, -inf
    %v10909 = vmax.f32 %v10901, %v10908
    %v10910 = vsel %vm5083, %v10528, -inf
    %v10911 = vmax.f32 %v10903, %v10910
    %v10912 = vsel %vm5083, %v10529, -inf
    %v10913 = vmax.f32 %v10905, %v10912
    %v10914 = vsel %vm5083, %v10530, -inf
    %v10915 = vmax.f32 %v10907, %v10914
    %v10916 = vsel %vm5083, %v10531, -inf
    %v10917 = vmax.f32 %v10909, %v10916
    %v10918 = vsel %vm5083, %v10532, -inf
    %v10919 = vmax.f32 %v10911, %v10918
    %v10920 = vsel %vm5083, %v10533, -inf
    %v10921 = vmax.f32 %v10913, %v10920
    %v10922 = vsel %vm5083, %v10534, -inf
    %v10923 = vmax.f32 %v10915, %v10922
    %v10924 = vsel %vm5083, %v10535, -inf
    %v10925 = vmax.f32 %v10917, %v10924
    %v10926 = vsel %vm5083, %v10536, -inf
    %v10927 = vmax.f32 %v10919, %v10926
    %v10928 = vsel %vm5083, %v10537, -inf
    %v10929 = vmax.f32 %v10921, %v10928
    %v10930 = vsel %vm5083, %v10538, -inf
    %v10931 = vmax.f32 %v10923, %v10930
    %v10932 = vsel %vm5083, %v10539, -inf
    %v10933 = vmax.f32 %v10925, %v10932
    %v10934 = vsel %vm5083, %v10540, -inf
    %v10935 = vmax.f32 %v10927, %v10934
    %v10936 = vsel %vm5083, %v10541, -inf
    %v10937 = vmax.f32 %v10929, %v10936
    %v10938 = vsel %vm5083, %v10542, -inf
    %v10939 = vmax.f32 %v10931, %v10938
    %v10940 = vsel %vm5083, %v10543, -inf
    %v10941 = vmax.f32 %v10933, %v10940
    %v10942 = vsel %vm5083, %v10544, -inf
    %v10943 = vmax.f32 %v10935, %v10942
    %v10944 = vsel %vm5083, %v10545, -inf
    %v10945 = vmax.f32 %v10937, %v10944
    %v10946 = vsel %vm5083, %v10546, -inf
    %v10947 = vmax.f32 %v10939, %v10946
    %v10948 = vsel %vm5083, %v10547, -inf
    %v10949 = vmax.f32 %v10941, %v10948
    %v10950 = vsel %vm5083, %v10548, -inf
    %v10951 = vmax.f32 %v10943, %v10950
    %v10952 = vsel %vm5083, %v10549, -inf
    %v10953 = vmax.f32 %v10945, %v10952
    %v10954 = vsel %vm5083, %v10550, -inf
    %v10955 = vmax.f32 %v10947, %v10954
    %v10956 = vsel %vm5083, %v10551, -inf
    %v10957 = vmax.f32 %v10949, %v10956
    %v10958 = vsel %vm5083, %v10552, -inf
    %v10959 = vmax.f32 %v10951, %v10958
    %v10960 = vsel %vm5083, %v10553, -inf
    %v10961 = vmax.f32 %v10953, %v10960
    %v10962 = vsel %vm5083, %v10554, -inf
    %v10963 = vmax.f32 %v10955, %v10962
    %v10964 = vsel %vm5083, %v10555, -inf
    %v10965 = vmax.f32 %v10957, %v10964
    %v10966 = vsel %vm5083, %v10556, -inf
    %v10967 = vmax.f32 %v10959, %v10966
    %v10968 = vsel %vm5083, %v10557, -inf
    %v10969 = vmax.f32 %v10961, %v10968
    %v10970 = vsel %vm5083, %v10558, -inf
    %v10971 = vmax.f32 %v10963, %v10970
    %v10972 = vsel %vm5083, %v10559, -inf
    %v10973 = vmax.f32 %v10965, %v10972
    %v10974 = vsel %vm5083, %v10560, -inf
    %v10975 = vmax.f32 %v10967, %v10974
    %v10976 = vsel %vm5083, %v10561, -inf
    %v10977 = vmax.f32 %v10969, %v10976
    %v10978 = vsel %vm5083, %v10562, -inf
    %v10979 = vmax.f32 %v10971, %v10978
    %v10980 = vsel %vm5083, %v10563, -inf
    %v10981 = vmax.f32 %v10973, %v10980
    %v10982 = vsel %vm5083, %v10564, -inf
    %v10983 = vmax.f32 %v10975, %v10982
    %v10984 = vsel %vm5083, %v10565, -inf
    %v10985 = vmax.f32 %v10977, %v10984
    %v10986 = vsel %vm5083, %v10566, -inf
    %v10987 = vmax.f32 %v10979, %v10986
    %v10988 = vsel %vm5083, %v10567, -inf
    %v10989 = vmax.f32 %v10981, %v10988
    %v10990 = vsel %vm5083, %v10568, -inf
    %v10991 = vmax.f32 %v10983, %v10990
    %v10992 = vsel %vm5083, %v10569, -inf
    %v10993 = vmax.f32 %v10985, %v10992
    %v10994 = vsel %vm5083, %v10570, -inf
    %v10995 = vmax.f32 %v10987, %v10994
    %v10996 = vsel %vm5083, %v10571, -inf
    %v10997 = vmax.f32 %v10989, %v10996
    %v10998 = vsel %vm5083, %v10572, -inf
    %v10999 = vmax.f32 %v10991, %v10998
    %v11000 = vsel %vm5083, %v10573, -inf
    %v11001 = vmax.f32 %v10993, %v11000
    %v11002 = vsel %vm5083, %v10574, -inf
    %v11003 = vmax.f32 %v10995, %v11002
    %v11004 = vsel %vm5083, %v10575, -inf
    %v11005 = vmax.f32 %v10997, %v11004
    %v11006 = vsel %vm5083, %v10576, -inf
    %v11007 = vmax.f32 %v10999, %v11006
    %v11008 = vsel %vm5083, %v10577, -inf
    %v11009 = vmax.f32 %v11001, %v11008
    %v11010 = vsel %vm5083, %v10578, -inf
    %v11011 = vmax.f32 %v11003, %v11010
    %v11012 = vsel %vm5083, %v10579, -inf
    %v11013 = vmax.f32 %v11005, %v11012
    %v11014 = vsel %vm5083, %v10580, -inf
    %v11015 = vmax.f32 %v11007, %v11014
    %v11016 = vsel %vm5083, %v10581, -inf
    %v11017 = vmax.f32 %v11009, %v11016
    %v11018 = vsel %vm5083, %v10582, -inf
    %v11019 = vmax.f32 %v11011, %v11018
    %v11020 = vsel %vm5083, %v10583, -inf
    %v11021 = vmax.f32 %v11013, %v11020
    %v11022 = vsel %vm5083, %v10584, -inf
    %v11023 = vmax.f32 %v11015, %v11022
    %v11024 = vsel %vm5083, %v10585, -inf
    %v11025 = vmax.f32 %v11017, %v11024
    %v11026 = vsel %vm5083, %v10586, -inf
    %v11027 = vmax.f32 %v11019, %v11026
    %v11028 = vsel %vm5083, %v10587, -inf
    %v11029 = vmax.f32 %v11021, %v11028
    %v11030 = vsel %vm5083, %v10588, -inf
    %v11031 = vmax.f32 %v11023, %v11030
    %v11032 = vsel %vm5083, %v10589, -inf
    %v11033 = vmax.f32 %v11025, %v11032
    %v11034 = vsel %vm5083, %v10590, -inf
    %v11035 = vmax.f32 %v11027, %v11034
    %v11036 = vsel %vm5083, %v10591, -inf
    %v11037 = vmax.f32 %v11029, %v11036
    %v11038 = vsel %vm5083, %v10592, -inf
    %v11039 = vmax.f32 %v11031, %v11038
    %v11040 = vsel %vm5083, %v10593, -inf
    %v11041 = vmax.f32 %v11033, %v11040
    %v11042 = vsel %vm5083, %v10594, -inf
    %v11043 = vmax.f32 %v11035, %v11042
    %v11044 = vsel %vm5083, %v10595, -inf
    %v11045 = vmax.f32 %v11037, %v11044
    %v11046 = vsel %vm5083, %v10596, -inf
    %v11047 = vmax.f32 %v11039, %v11046
    %v11048 = vsel %vm5083, %v10597, -inf
    %v11049 = vmax.f32 %v11041, %v11048
    %v11050 = vsel %vm5083, %v10598, -inf
    %v11051 = vmax.f32 %v11043, %v11050
    %v11052 = vsel %vm5083, %v10599, -inf
    %v11053 = vmax.f32 %v11045, %v11052
    %v11054 = vsel %vm5083, %v10600, -inf
    %v11055 = vmax.f32 %v11047, %v11054
    %v11056 = vsel %vm5083, %v10601, -inf
    %v11057 = vmax.f32 %v11049, %v11056
    %v11058 = vsel %vm5083, %v10602, -inf
    %v11059 = vmax.f32 %v11051, %v11058
    %v11060 = vsel %vm5083, %v10603, -inf
    %v11061 = vmax.f32 %v11053, %v11060
    %v11062 = vsel %vm5083, %v10604, -inf
    %v11063 = vmax.f32 %v11055, %v11062
    %v11064 = vsel %vm5083, %v10605, -inf
    %v11065 = vmax.f32 %v11057, %v11064
    %v11066 = vsel %vm5083, %v10606, -inf
    %v11067 = vmax.f32 %v11059, %v11066
    %v11068 = vsel %vm5083, %v10607, -inf
    %v11069 = vmax.f32 %v11061, %v11068
    %v11070 = vsel %vm5083, %v10608, -inf
    %v11071 = vmax.f32 %v11063, %v11070
    %v11072 = vsel %vm5083, %v10609, -inf
    %v11073 = vmax.f32 %v11065, %v11072
    %v11074 = vsel %vm5083, %v10610, -inf
    %v11075 = vmax.f32 %v11067, %v11074
    %v11076 = vsel %vm5083, %v10611, -inf
    %v11077 = vmax.f32 %v11069, %v11076
    %v11078 = vsel %vm5083, %v10612, -inf
    %v11079 = vmax.f32 %v11071, %v11078
    %v11080 = vsel %vm5083, %v10613, -inf
    %v11081 = vmax.f32 %v11073, %v11080
    %v11082 = vsel %vm5083, %v10614, -inf
    %v11083 = vmax.f32 %v11075, %v11082
    %v11084 = vsel %vm5083, %v10615, -inf
    %v11085 = vmax.f32 %v11077, %v11084
    %v11086 = vsel %vm5083, %v10616, -inf
    %v11087 = vmax.f32 %v11079, %v11086
    %v11088 = vsel %vm5083, %v10617, -inf
    %v11089 = vmax.f32 %v11081, %v11088
    %v11090 = vsel %vm5083, %v10618, -inf
    %v11091 = vmax.f32 %v11083, %v11090
    %v11092 = vsel %vm5083, %v10619, -inf
    %v11093 = vmax.f32 %v11085, %v11092
    %v11094 = vsel %vm5083, %v10620, -inf
    %v11095 = vmax.f32 %v11087, %v11094
    %v11096 = vsel %vm5083, %v10621, -inf
    %v11097 = vmax.f32 %v11089, %v11096
    %v11098 = vsel %vm5083, %v10622, -inf
    %v11099 = vmax.f32 %v11091, %v11098
    %v11100 = vsel %vm5083, %v10623, -inf
    %v11101 = vmax.f32 %v11093, %v11100
    %v11102 = vsel %vm5083, %v10624, -inf
    %v11103 = vmax.f32 %v11095, %v11102
    %v11104 = vsel %vm5083, %v10625, -inf
    %v11105 = vmax.f32 %v11097, %v11104
    %v11106 = vsel %vm5083, %v10626, -inf
    %v11107 = vmax.f32 %v11099, %v11106
    %v11108 = vsel %vm5083, %v10627, -inf
    %v11109 = vmax.f32 %v11101, %v11108
    %v11110 = vsel %vm5083, %v10628, -inf
    %v11111 = vmax.f32 %v11103, %v11110
    %v11112 = vsel %vm5083, %v10629, -inf
    %v11113 = vmax.f32 %v11105, %v11112
    %v11114 = vsel %vm5083, %v10630, -inf
    %v11115 = vmax.f32 %v11107, %v11114
    %v11116 = vsel %vm5083, %v10631, -inf
    %v11117 = vmax.f32 %v11109, %v11116
    %v11118 = vsel %vm5083, %v10632, -inf
    %v11119 = vmax.f32 %v11111, %v11118
    %v11120 = vsel %vm5083, %v10633, -inf
    %v11121 = vmax.f32 %v11113, %v11120
    %v11122 = vsel %vm5083, %v10634, -inf
    %v11123 = vmax.f32 %v11115, %v11122
    %v11124 = vsel %vm5083, %v10635, -inf
    %v11125 = vmax.f32 %v11117, %v11124
    %v11126 = vsel %vm5083, %v10636, -inf
    %v11127 = vmax.f32 %v11119, %v11126
    %v11128 = vsel %vm5083, %v10637, -inf
    %v11129 = vmax.f32 %v11121, %v11128
    %v11130 = vsel %vm5083, %v10638, -inf
    %v11131 = vmax.f32 %v11123, %v11130
    %v11132 = vsel %vm5083, %v10639, -inf
    %v11133 = vmax.f32 %v11125, %v11132
    %v11134 = vsel %vm5083, %v10640, -inf
    %v11135 = vmax.f32 %v11127, %v11134
    %v11136 = vsel %vm5083, %v10641, -inf
    %v11137 = vmax.f32 %v11129, %v11136
    %v11138 = vsel %vm5083, %v10642, -inf
    %v11139 = vmax.f32 %v11131, %v11138
    %v11140 = vsel %vm5083, %v10643, -inf
    %v11141 = vmax.f32 %v11133, %v11140
    %v11142 = vsel %vm5083, %v10644, -inf
    %v11143 = vmax.f32 %v11135, %v11142
    %v11144 = vsel %vm5083, %v10645, -inf
    %v11145 = vmax.f32 %v11137, %v11144
    %v11146 = vsel %vm5083, %v10646, -inf
    %v11147 = vmax.f32 %v11139, %v11146
    %v11148 = vsel %vm5083, %v10647, -inf
    %v11149 = vmax.f32 %v11141, %v11148
    %v11150 = vsel %vm5083, %v10648, -inf
    %v11151 = vmax.f32 %v11143, %v11150
    %v11152 = vsel %vm5083, %v10649, -inf
    %v11153 = vmax.f32 %v11145, %v11152
    %v11154 = vsel %vm5083, %v10650, -inf
    %v11155 = vmax.f32 %v11147, %v11154
    %v11156 = vsel %vm5083, %v10651, -inf
    %v11157 = vmax.f32 %v11149, %v11156
    %v11158 = vsel %vm5083, %v10652, -inf
    %v11159 = vmax.f32 %v11151, %v11158
    %v11160 = vsel %vm5083, %v10653, -inf
    %v11161 = vmax.f32 %v11153, %v11160
    %v11162 = vmax.f32 %v11155, %v11157
    %v11163 = vmax.f32 %v11159, %v11161
    %v11164 = vmax.f32 %v11162, %v11163
    %11165 = vst.msk [vmem:[#allocation2 + $0x8] sm:$0xff] %vm5083, %v11164
    %v11166 = vld [vmem:[#allocation2] sm:$0xff]
    %v11167 = vld [vmem:[#allocation2 + $0x8] sm:$0xff]
    %v11168 = vld [vmem:[%s2] sm:$0xff]
    %v11169 = vld [vmem:[%s2 + $0x8] sm:$0xff]
    %v11170 = vld [vmem:[%s3] sm:$0xff]
    %v11171 = vld [vmem:[%s3 + $0x8] sm:$0xff]
    %v11172 = vld [vmem:[%s3 + $0x10] sm:$0xff]
    %v11173 = vld [vmem:[%s3 + $0x18] sm:$0xff]
    %v11174 = vld [vmem:[%s4] sm:$0xff]
    %v11175 = vld [vmem:[%s4 + $0x8] sm:$0xff]
    %v11176 = vld [vmem:[%s4 + $0x10] sm:$0xff]
    %v11177 = vld [vmem:[%s4 + $0x18] sm:$0xff]
    %v11178 = vld [vmem:[%s4 + $0x20] sm:$0xff]
    %v11179 = vld [vmem:[%s4 + $0x28] sm:$0xff]
    %v11180 = vld [vmem:[%s4 + $0x30] sm:$0xff]
    %v11181 = vld [vmem:[%s4 + $0x38] sm:$0xff]
    %v11182 = vld [vmem:[%s4 + $0x40] sm:$0xff]
    %v11183 = vld [vmem:[%s4 + $0x48] sm:$0xff]
    %v11184 = vld [vmem:[%s4 + $0x50] sm:$0xff]
    %v11185 = vld [vmem:[%s4 + $0x58] sm:$0xff]
    %v11186 = vld [vmem:[%s4 + $0x60] sm:$0xff]
    %v11187 = vld [vmem:[%s4 + $0x68] sm:$0xff]
    %v11188 = vld [vmem:[%s4 + $0x70] sm:$0xff]
    %v11189 = vld [vmem:[%s4 + $0x78] sm:$0xff]
    %11190 = vmatprep.subr.mxu0 0.0
    %11191 = vmatpush1.msra.mxu0 %v11189
    %11192 = vmatprep.subr.mxu0 0.0
    %11193 = vmatpush1.msra.mxu0 %v11188
    %11194 = vmatprep.subr.mxu0 0.0
    %11195 = vmatpush1.msra.mxu0 %v11187
    %11196 = vmatprep.subr.mxu0 0.0
    %11197 = vmatpush1.msra.mxu0 %v11186
    %11198 = vmatprep.subr.mxu0 0.0
    %11199 = vmatpush1.msra.mxu0 %v11185
    %11200 = vmatprep.subr.mxu0 0.0
    %11201 = vmatpush1.msra.mxu0 %v11184
    %11202 = vmatprep.subr.mxu0 0.0
    %11203 = vmatpush1.msra.mxu0 %v11183
    %11204 = vmatprep.subr.mxu0 0.0
    %11205 = vmatpush1.msra.mxu0 %v11182
    %11206 = vmatprep.subr.mxu0 0.0
    %11207 = vmatpush1.msra.mxu0 %v11181
    %11208 = vmatprep.subr.mxu0 0.0
    %11209 = vmatpush1.msra.mxu0 %v11180
    %11210 = vmatprep.subr.mxu0 0.0
    %11211 = vmatpush1.msra.mxu0 %v11179
    %11212 = vmatprep.subr.mxu0 0.0
    %11213 = vmatpush1.msra.mxu0 %v11178
    %11214 = vmatprep.subr.mxu0 0.0
    %11215 = vmatpush1.msra.mxu0 %v11177
    %11216 = vmatprep.subr.mxu0 0.0
    %11217 = vmatpush1.msra.mxu0 %v11176
    %11218 = vmatprep.subr.mxu0 0.0
    %11219 = vmatpush1.msra.mxu0 %v11175
    %11220 = vmatprep.subr.mxu0 0.0
    %11221 = vmatpush1.msra.mxu0 %v11174
    %11222 = vmatprep.subr.mxu0 0.0
    %11223 = vmatpush2.msra.mxu0 0.0
    %11224 = vmatprep.subr.mxu0 0.0
    %11225 = vmatpush2.msra.mxu0 0.0
    %11226 = vmatprep.subr.mxu0 0.0
    %11227 = vmatpush2.msra.mxu0 0.0
    %11228 = vmatprep.subr.mxu0 0.0
    %11229 = vmatpush2.msra.mxu0 0.0
    %11230 = vmatprep.subr.mxu0 0.0
    %11231 = vmatpush2.msra.mxu0 0.0
    %11232 = vmatprep.subr.mxu0 0.0
    %11233 = vmatpush2.msra.mxu0 0.0
    %11234 = vmatprep.subr.mxu0 0.0
    %11235 = vmatpush2.msra.mxu0 0.0
    %11236 = vmatprep.subr.mxu0 0.0
    %11237 = vmatpush2.msra.mxu0 0.0
    %11238 = vmatprep.subr.mxu0 0.0
    %11239 = vmatpush2.msra.mxu0 0.0
    %11240 = vmatprep.subr.mxu0 0.0
    %11241 = vmatpush2.msra.mxu0 0.0
    %11242 = vmatprep.subr.mxu0 0.0
    %11243 = vmatpush2.msra.mxu0 0.0
    %11244 = vmatprep.subr.mxu0 0.0
    %11245 = vmatpush2.msra.mxu0 0.0
    %11246 = vmatprep.subr.mxu0 0.0
    %11247 = vmatpush2.msra.mxu0 0.0
    %11248 = vmatprep.subr.mxu0 0.0
    %11249 = vmatpush2.msra.mxu0 0.0
    %11250 = vmatprep.subr.mxu0 0.0
    %11251 = vmatpush2.msra.mxu0 0.0
    %11252 = vmatprep.subr.mxu0 0.0
    %11253 = vmatpush2.msra.mxu0 0.0
    %11254 = vmatprep.mubr.f32.mxu0 0.0
    %11255 = vmatmul.mubr.f32.gmra.mxu0 %v11168
    %v11256 = vpop.f32.mrf.mxu0
    %v11257 = vadd.f32 0.0, %v11256
    %v11258 = vpop.f32.mrf.mxu0
    %11259 = vmatprep.mubr.f32.mxu0 0.0
    %11260 = vmatmul.mubr.f32.gmra.mxu0 %v11169
    %v11261 = vpop.f32.mrf.mxu0
    %v11262 = vadd.f32 0.0, %v11261
    %v11263 = vpop.f32.mrf.mxu0
    %11264 = vdwg.mxu0
    %v11266 = vsel %vm5083, %v11166, 0
    %v11269 = vsel %vm5083, %v11167, 0
    %11271 = vmatprep.subr.mxu0 0.0
    %11272 = vmatpush1.msra.mxu0 0.0
    %11273 = vmatprep.subr.mxu0 0.0
    %11274 = vmatpush1.msra.mxu0 0.0
    %11275 = vmatprep.subr.mxu0 0.0
    %11276 = vmatpush1.msra.mxu0 0.0
    %11277 = vmatprep.subr.mxu0 0.0
    %11278 = vmatpush1.msra.mxu0 0.0
    %11279 = vmatprep.subr.mxu0 0.0
    %11280 = vmatpush1.msra.mxu0 0.0
    %11281 = vmatprep.subr.mxu0 0.0
    %11282 = vmatpush1.msra.mxu0 0.0
    %11283 = vmatprep.subr.mxu0 0.0
    %11284 = vmatpush1.msra.mxu0 0.0
    %11285 = vmatprep.subr.mxu0 0.0
    %11286 = vmatpush1.msra.mxu0 0.0
    %11287 = vmatprep.subr.mxu0 0.0
    %11288 = vmatpush1.msra.mxu0 0.0
    %11289 = vmatprep.subr.mxu0 0.0
    %11290 = vmatpush1.msra.mxu0 0.0
    %11291 = vmatprep.subr.mxu0 0.0
    %11292 = vmatpush1.msra.mxu0 0.0
    %11293 = vmatprep.subr.mxu0 0.0
    %11294 = vmatpush1.msra.mxu0 0.0
    %11295 = vmatprep.subr.mxu0 0.0
    %11296 = vmatpush1.msra.mxu0 %v11173
    %11297 = vmatprep.subr.mxu0 0.0
    %11298 = vmatpush1.msra.mxu0 %v11172
    %11299 = vmatprep.subr.mxu0 0.0
    %11300 = vmatpush1.msra.mxu0 %v11171
    %11301 = vmatprep.subr.mxu0 0.0
    %11302 = vmatpush1.msra.mxu0 %v11170
    %11303 = vmatprep.subr.mxu0 0.0
    %11304 = vmatpush2.msra.mxu0 0.0
    %11305 = vmatprep.subr.mxu0 0.0
    %11306 = vmatpush2.msra.mxu0 0.0
    %11307 = vmatprep.subr.mxu0 0.0
    %11308 = vmatpush2.msra.mxu0 0.0
    %11309 = vmatprep.subr.mxu0 0.0
    %11310 = vmatpush2.msra.mxu0 0.0
    %11311 = vmatprep.subr.mxu0 0.0
    %11312 = vmatpush2.msra.mxu0 0.0
    %11313 = vmatprep.subr.mxu0 0.0
    %11314 = vmatpush2.msra.mxu0 0.0
    %11315 = vmatprep.subr.mxu0 0.0
    %11316 = vmatpush2.msra.mxu0 0.0
    %11317 = vmatprep.subr.mxu0 0.0
    %11318 = vmatpush2.msra.mxu0 0.0
    %11319 = vmatprep.subr.mxu0 0.0
    %11320 = vmatpush2.msra.mxu0 0.0
    %11321 = vmatprep.subr.mxu0 0.0
    %11322 = vmatpush2.msra.mxu0 0.0
    %11323 = vmatprep.subr.mxu0 0.0
    %11324 = vmatpush2.msra.mxu0 0.0
    %11325 = vmatprep.subr.mxu0 0.0
    %11326 = vmatpush2.msra.mxu0 0.0
    %11327 = vmatprep.subr.mxu0 0.0
    %11328 = vmatpush2.msra.mxu0 0.0
    %11329 = vmatprep.subr.mxu0 0.0
    %11330 = vmatpush2.msra.mxu0 0.0
    %11331 = vmatprep.subr.mxu0 0.0
    %11332 = vmatpush2.msra.mxu0 0.0
    %11333 = vmatprep.subr.mxu0 0.0
    %11334 = vmatpush2.msra.mxu0 0.0
    %11335 = vmatprep.mubr.f32.mxu0 0.0
    %11336 = vmatmul.mubr.f32.gmra.mxu0 %v11266
    %v11337 = vpop.f32.mrf.mxu0
    %v11338 = vadd.f32 %v11257, %v11337
    %v11339 = vpop.f32.mrf.mxu0
    %11340 = vmatprep.mubr.f32.mxu0 0.0
    %11341 = vmatmul.mubr.f32.gmra.mxu0 %v11269
    %v11342 = vpop.f32.mrf.mxu0
    %v11343 = vadd.f32 %v11262, %v11342
    %v11344 = vpop.f32.mrf.mxu0
    %11345 = vdwg.mxu0
    %v11346 = vld [vmem:[%s6] sm:$0x1]
    %v11348 = vlaneseq
    %v11349 = vshrl.u32 %v11348, 7
    %v11350 = vsub.s32 0, %v11349
    %v11351 = vrot.slane %v11346, %v11350
    %v11353 = vadd.f32 %v11338, %v11351
    %v11354 = vadd.f32 %v11343, %v11351
    %v11355 = vld [vmem:[%s0] sm:$0x1]
    %v11356 = vld [vmem:[%s0 + $0x100] sm:$0x1]
    %v11357 = vld [vmem:[%s5] sm:$0xff]
    %v11358 = vld [vmem:[%s5 + $0x8] sm:$0xff]
    %v11359 = vld [vmem:[%s5 + $0x10] sm:$0xff]
    %v11360 = vld [vmem:[%s5 + $0x18] sm:$0xff]
    %v11363 = vrot.slane %v11356, 7
    %vm11364 = vcmask 1041409
    %v11365 = vsel %vm11364, %v11363, %v11355
    %v11366 = vsel %vm5083, %v11365, 0
    %11368 = vmatprep.subr.mxu0 0.0
    %11369 = vmatpush1.msra.mxu0 0.0
    %11370 = vmatprep.subr.mxu0 0.0
    %11371 = vmatpush1.msra.mxu0 0.0
    %11372 = vmatprep.subr.mxu0 0.0
    %11373 = vmatpush1.msra.mxu0 0.0
    %11374 = vmatprep.subr.mxu0 0.0
    %11375 = vmatpush1.msra.mxu0 0.0
    %11376 = vmatprep.subr.mxu0 0.0
    %11377 = vmatpush1.msra.mxu0 0.0
    %11378 = vmatprep.subr.mxu0 0.0
    %11379 = vmatpush1.msra.mxu0 0.0
    %11380 = vmatprep.subr.mxu0 0.0
    %11381 = vmatpush1.msra.mxu0 0.0
    %11382 = vmatprep.subr.mxu0 0.0
    %11383 = vmatpush1.msra.mxu0 0.0
    %11384 = vmatprep.subr.mxu0 0.0
    %11385 = vmatpush1.msra.mxu0 0.0
    %11386 = vmatprep.subr.mxu0 0.0
    %11387 = vmatpush1.msra.mxu0 0.0
    %11388 = vmatprep.subr.mxu0 0.0
    %11389 = vmatpush1.msra.mxu0 0.0
    %11390 = vmatprep.subr.mxu0 0.0
    %11391 = vmatpush1.msra.mxu0 0.0
    %11392 = vmatprep.subr.mxu0 0.0
    %11393 = vmatpush1.msra.mxu0 %v11360
    %11394 = vmatprep.subr.mxu0 0.0
    %11395 = vmatpush1.msra.mxu0 %v11359
    %11396 = vmatprep.subr.mxu0 0.0
    %11397 = vmatpush1.msra.mxu0 %v11358
    %11398 = vmatprep.subr.mxu0 0.0
    %11399 = vmatpush1.msra.mxu0 %v11357
    %11400 = vmatprep.subr.mxu0 0.0
    %11401 = vmatpush2.msra.mxu0 0.0
    %11402 = vmatprep.subr.mxu0 0.0
    %11403 = vmatpush2.msra.mxu0 0.0
    %11404 = vmatprep.subr.mxu0 0.0
    %11405 = vmatpush2.msra.mxu0 0.0
    %11406 = vmatprep.subr.mxu0 0.0
    %11407 = vmatpush2.msra.mxu0 0.0
    %11408 = vmatprep.subr.mxu0 0.0
    %11409 = vmatpush2.msra.mxu0 0.0
    %11410 = vmatprep.subr.mxu0 0.0
    %11411 = vmatpush2.msra.mxu0 0.0
    %11412 = vmatprep.subr.mxu0 0.0
    %11413 = vmatpush2.msra.mxu0 0.0
    %11414 = vmatprep.subr.mxu0 0.0
    %11415 = vmatpush2.msra.mxu0 0.0
    %11416 = vmatprep.subr.mxu0 0.0
    %11417 = vmatpush2.msra.mxu0 0.0
    %11418 = vmatprep.subr.mxu0 0.0
    %11419 = vmatpush2.msra.mxu0 0.0
    %11420 = vmatprep.subr.mxu0 0.0
    %11421 = vmatpush2.msra.mxu0 0.0
    %11422 = vmatprep.subr.mxu0 0.0
    %11423 = vmatpush2.msra.mxu0 0.0
    %11424 = vmatprep.subr.mxu0 0.0
    %11425 = vmatpush2.msra.mxu0 0.0
    %11426 = vmatprep.subr.mxu0 0.0
    %11427 = vmatpush2.msra.mxu0 0.0
    %11428 = vmatprep.subr.mxu0 0.0
    %11429 = vmatpush2.msra.mxu0 0.0
    %11430 = vmatprep.subr.mxu0 0.0
    %11431 = vmatpush2.msra.mxu0 0.0
    %11432 = vmatprep.mubr.f32.mxu0 0.0
    %11433 = vmatmul.mubr.f32.gmra.mxu0 %v11366
    %v11434 = vpop.f32.mrf.mxu0
    %v11435 = vadd.f32 0.0, %v11434
    %v11436 = vpop.f32.mrf.mxu0
    %11437 = vdwg.mxu0
    %v11440 = vunpack.c.l.s4 1966171168
    %v11441 = vunpack.c.0.s8 %v11440
    %v11442 = vlaneseq
    %v11443 = vshrl.u32 %v11442, 7
    %v11444 = vsub.s32 %v11441, %v11443
    %v11445 = vrot.slane %v11435, %v11444
    %v11446 = vcombine.high %v11445, %v11445
    %v11448 = vunpack.c.l.s4 1966171168
    %v11449 = vunpack.c.0.s8 %v11448
    %v11450 = vlaneseq
    %v11451 = vshrl.u32 %v11450, 7
    %v11452 = vsub.s32 %v11449, %v11451
    %v11453 = vrot.slane %v11445, %v11452
    %v11455 = vunpack.c.l.s4 1966171168
    %v11456 = vunpack.c.0.s8 %v11455
    %v11457 = vlaneseq
    %v11458 = vshrl.u32 %v11457, 7
    %v11459 = vsub.s32 %v11456, %v11458
    %v11460 = vrot.slane %v11446, %v11459
    %v11461 = vlaneseq
    %v11462 = vshrl.u32 %v11461, 7
    %v11463 = vsub.s32 0, %v11462
    %v11464 = vrot.slane %v11453, %v11463
    %v11465 = vlaneseq
    %v11466 = vshrl.u32 %v11465, 7
    %v11467 = vsub.s32 0, %v11466
    %v11468 = vrot.slane %v11460, %v11467
    %v11471 = vadd.f32 %v11353, %v11464
    %v11472 = vadd.f32 %v11354, %v11468
    %11473 = vmax.xlane.f32.xlu0 %v11471
    %v11474 = vpop.xlane.xlu0 %11473
    %11475 = vmax.xlane.f32.xlu0 %v11472
    %v11476 = vpop.xlane.xlu0 %11475
    %v11477 = vsub.f32 %v11471, %v11474
    %v11478 = vsub.f32 %v11472, %v11476
    %v11479 = vmul.f32 %v11477, 1.442695
    %v11480 = vpow.pop %v11479
    %v11481 = vmul.f32 %v11478, 1.442695
    %v11482 = vpow.pop %v11481
    %11483 = vadd.xlane.f32.xlu0 %v11480
    %v11484 = vpop.xlane.xlu0 %11483
    %11485 = vadd.xlane.f32.xlu0 %v11482
    %v11486 = vpop.xlane.xlu0 %11485
    %v11487 = vrcp.pop %v11484
    %v11488 = vmul.f32 %v11480, %v11487
    %v11489 = vrcp.pop %v11486
    %v11490 = vmul.f32 %v11482, %v11489
    %11491 = vst [vmem:[#allocation3] sm:$0xff] %v11488
    %11492 = vst [vmem:[#allocation3 + $0x8] sm:$0xff] %v11490
    // Predicated region
    $region30: #{tpu_custom_call.1} parent=1 // pred_check
      _
    $region31: #{tpu_custom_call.1} parent=1 // pred_check_branch
      %11494 = sbr.rel (0) target = $region33
    $region32: #{tpu_custom_call.1} parent=1 // pred_region
      %s11496 = ssub.s32 256, 256
      %11497 = vsyncadd [#allocation4], %s11496
      %s11498 = sshll.u32 [#allocation3], 4
      %s11499 = int_to_ptr.vmem [resolvable:$true] %s11498
      %11504 = dma.vmem_to_hbm [thread:$0]  %s11499, 256, %s7, [#allocation4], 128, 128, 8
    $region33: #{tpu_custom_call.1} parent=1 // pred_fallthru
      _
    // Predicated region
    $region34: #{tpu_custom_call.1} parent=1 // pred_check
      _
    $region35: #{tpu_custom_call.1} parent=1 // pred_check_branch
      %11506 = sbr.rel (0) target = $region37
    $region36: #{tpu_custom_call.1} parent=1 // pred_region
      %11507 = dma.done [#allocation4], 256
    $region37: #{tpu_custom_call.1} parent=1 // pred_fallthru
      _
    %11508 = vsyncpa [#allocation4], 1

</llo_original>
